<compile_context>
chip_gen: v7x
topology: tpu7x:2x2x1
jax: 0.10.0
libtpu: 0.0.40
codegen_flags: <defaults>
</compile_context>

<pallas_src>
import functools

import jax
import jax.numpy as jnp
from jax.experimental import pallas as pl
from jax.experimental.pallas import tpu as pltpu


# --------------------------------- fused kernel ---------------------------------
def _lstm_cell(gates, c_prev, hidden_dim):
    """PyTorch gate order (i, f, g, o); all element-wise math in f32."""
    H = hidden_dim
    i_g = jax.nn.sigmoid(gates[:, 0 * H:1 * H])
    f_g = jax.nn.sigmoid(gates[:, 1 * H:2 * H])
    g_g = jnp.tanh(gates[:, 2 * H:3 * H])
    o_g = jax.nn.sigmoid(gates[:, 3 * H:4 * H])
    c_new = f_g * c_prev + i_g * g_g
    h_new = o_g * jnp.tanh(c_new)
    return h_new, c_new


def fused_sentiment_kernel(*refs, seq_len, chunk_t, batch_tile, hidden_dim,
                           no_layers, unroll):
    """Fused multi-layer LSTM + last-step FC + sigmoid for one batch tile.

    ref order (inputs):
      emb (T, TB, E) f32, W_ih0^T (E,4H) bf16, W_hh0^T (H,4H) bf16, b0 (1,4H) f32,
      [for each layer l>=1: W_ih_l^T (H,4H) bf16, W_hh_l^T (H,4H) bf16, b_l (1,4H) f32],
      fc_w (1,H) f32, fc_b (1,1) f32, h0 (L,TB,H) f32, c0 (L,TB,H) f32
    outputs:
      sig (TB,1) f32, h_N (L,TB,H) f32, c_N (L,TB,H) f32
    scratch:
      gx (chunk_t*TB, 4H) f32 VMEM
    """
    n_deep = no_layers - 1
    emb_ref, w0x_ref, w0h_ref, b0_ref = refs[:4]
    deep_refs = refs[4:4 + 3 * n_deep]
    base = 4 + 3 * n_deep
    fcw_ref, fcb_ref, h0_ref, c0_ref = refs[base:base + 4]
    sig_ref, hN_ref, cN_ref = refs[base + 4:base + 7]
    gx_sc = refs[base + 7]

    H = hidden_dim
    TB = batch_tile
    E = emb_ref.shape[-1]
    n_chunks = seq_len // chunk_t

    # State lives in the VMEM-resident output blocks (updated in place) instead
    # of fori_loop carries: no vreg-file pressure at large batch tiles, and the
    # final h_N / c_N writeback to HBM happens exactly once.
    hN_ref[...] = h0_ref[...]
    cN_ref[...] = c0_ref[...]

    # Hoisted deep-layer bias broadcasts (JAX does not CSE broadcast_in_dim;
    # keep them out of the unrolled recurrence body).
    deep_b = [jnp.broadcast_to(deep_refs[3 * (l - 1) + 2][...], (TB, 4 * H))
              for l in range(1, no_layers)]

    def chunk_body(c, _):
        # Layer-0 input projection for `chunk_t` timesteps in ONE MXU pass,
        # off the sequential critical path; scratch stays fixed-size in T.
        t0 = pl.multiple_of(c * chunk_t, chunk_t)
        x_chunk = emb_ref[pl.ds(t0, chunk_t), :, :].reshape(chunk_t * TB, E)
        gx_sc[...] = (
            jnp.dot(x_chunk.astype(w0x_ref.dtype), w0x_ref[...],
                    preferred_element_type=jnp.float32)
            + b0_ref[...])

        def step(tl, _):
            # Layer 0: only h_prev @ W_hh stays on the serial path.
            r = pl.multiple_of(tl * TB, 8)            # aligned, unmasked loads
            gx_t = gx_sc[pl.ds(r, TB), :]              # (TB, 4H) f32
            h_prev = hN_ref[0]
            gates = gx_t + jnp.dot(h_prev.astype(w0h_ref.dtype), w0h_ref[...],
                                   preferred_element_type=jnp.float32)
            h_in, c_new = _lstm_cell(gates, cN_ref[0], H)
            hN_ref[0] = h_in
            cN_ref[0] = c_new
            # Deeper layers: two small dots, no per-step concat/relayout.
            for l in range(1, no_layers):
                w_ih_ref = deep_refs[3 * (l - 1) + 0]
                w_hh_ref = deep_refs[3 * (l - 1) + 1]
                h_prev = hN_ref[l]
                gates = (jnp.dot(h_in.astype(w_ih_ref.dtype), w_ih_ref[...],
                                 preferred_element_type=jnp.float32)
                         + jnp.dot(h_prev.astype(w_hh_ref.dtype), w_hh_ref[...],
                                   preferred_element_type=jnp.float32)
                         + deep_b[l - 1])
                h_in, c_new = _lstm_cell(gates, cN_ref[l], H)
                hN_ref[l] = h_in
                cN_ref[l] = c_new
            return 0

        jax.lax.fori_loop(0, chunk_t, step, 0, unroll=unroll)
        return 0

    jax.lax.fori_loop(0, n_chunks, chunk_body, 0)

    # lstm_out[:, -1, :] of the last layer == h_N[-1]; Dropout(0.3) is identity
    # in eval mode; FC(out_dim=1) + sigmoid on the (TB, H) final state only.
    # TODO(synk): nn.Dropout(0.3) treated as identity (inference / eval mode).
    h_last = hN_ref[no_layers - 1]                                  # (TB, H) f32
    logits = jnp.sum(h_last * fcw_ref[...], axis=-1, keepdims=True) + fcb_ref[...]
    sig_ref[...] = jax.nn.sigmoid(logits)


# --------------------------------- forward pass ---------------------------------
def sentiment_rnn_forward(params, x_tokens, hidden, *, batch_tiles=1,
                          max_time_chunk=64, max_unroll=8):
    """x_tokens: (B, T) int32 token ids; hidden = (h0, c0) each (no_layers, B, H).

    batch_tiles: number of batch tiles on the grid axis (set to 2 on v7x with a
    large enough batch so both TensorCores run the recurrence in parallel).
    """
    h0, c0 = hidden
    no_layers, _, H = h0.shape
    B, T = x_tokens.shape
    E = params["embedding"].shape[-1]

    assert B % 8 == 0, "pad batch to a multiple of 8 (f32 sublane alignment)"
    assert B % batch_tiles == 0
    TB = B // batch_tiles
    assert TB % 8 == 0

    # Largest time-chunk that divides T and is <= max_time_chunk: bounds the
    # gx scratch to (chunk_t*TB, 4H) regardless of sequence length.
    chunk_t = 1
    for d in range(1, min(T, max_time_chunk) + 1):
        if T % d == 0:
            chunk_t = d
    unroll = max(1, min(max_unroll, chunk_t))

    # Embedding gather, TIME-major (T, B, E), f32 (cast to bf16 in-kernel for the
    # matmul; keeping f32 here makes the in-kernel (chunk_t,TB,E) flatten free).
    # TODO(synk): fuse the gather into the kernel (scalar-prefetch token ids +
    # DMA row gather) to drop this (T,B,E) HBM round-trip.
    emb = params["embedding"][x_tokens.T].astype(jnp.float32)       # (T, B, E)

    p0 = params["lstm"][0]
    w0x = jnp.transpose(p0["w_ih"]).astype(jnp.bfloat16)            # (E, 4H)
    w0h = jnp.transpose(p0["w_hh"]).astype(jnp.bfloat16)            # (H, 4H)
    b0 = (p0["b_ih"] + p0["b_hh"]).reshape(1, 4 * H).astype(jnp.float32)

    deep_args, deep_specs = [], []
    for l in range(1, no_layers):
        p = params["lstm"][l]
        w_ih = jnp.transpose(p["w_ih"]).astype(jnp.bfloat16)        # (H, 4H)
        w_hh = jnp.transpose(p["w_hh"]).astype(jnp.bfloat16)        # (H, 4H)
        b = (p["b_ih"] + p["b_hh"]).reshape(1, 4 * H).astype(jnp.float32)
        deep_args += [w_ih, w_hh, b]
        deep_specs += [pl.BlockSpec((H, 4 * H), lambda i: (0, 0)),
                       pl.BlockSpec((H, 4 * H), lambda i: (0, 0)),
                       pl.BlockSpec((1, 4 * H), lambda i: (0, 0))]

    fcw = params["fc_w"].reshape(1, H).astype(jnp.float32)
    fcb = params["fc_b"].reshape(1, 1).astype(jnp.float32)
    h0f = h0.astype(jnp.float32)
    c0f = c0.astype(jnp.float32)

    kernel = functools.partial(fused_sentiment_kernel, seq_len=T, chunk_t=chunk_t,
                               batch_tile=TB, hidden_dim=H, no_layers=no_layers,
                               unroll=unroll)

    in_specs = (
        [pl.BlockSpec((T, TB, E), lambda i: (0, i, 0)),              # emb
         pl.BlockSpec((E, 4 * H), lambda i: (0, 0)),                 # W_ih0^T
         pl.BlockSpec((H, 4 * H), lambda i: (0, 0)),                 # W_hh0^T
         pl.BlockSpec((1, 4 * H), lambda i: (0, 0))]                 # b0
        + deep_specs
        + [pl.BlockSpec((1, H), lambda i: (0, 0)),                   # fc_w
           pl.BlockSpec((1, 1), lambda i: (0, 0)),                   # fc_b
           pl.BlockSpec((no_layers, TB, H), lambda i: (0, i, 0)),    # h0
           pl.BlockSpec((no_layers, TB, H), lambda i: (0, i, 0))]    # c0
    )
    out_specs = (pl.BlockSpec((TB, 1), lambda i: (i, 0)),            # sigmoid
                 pl.BlockSpec((no_layers, TB, H), lambda i: (0, i, 0)),  # h_N
                 pl.BlockSpec((no_layers, TB, H), lambda i: (0, i, 0)))  # c_N

    sig, h_n, c_n = pl.pallas_call(
        kernel,
        out_shape=(jax.ShapeDtypeStruct((B, 1), jnp.float32),
                   jax.ShapeDtypeStruct((no_layers, B, H), jnp.float32),
                   jax.ShapeDtypeStruct((no_layers, B, H), jnp.float32)),
        grid_spec=pltpu.PrefetchScalarGridSpec(
            num_scalar_prefetch=0,
            grid=(batch_tiles,),
            in_specs=in_specs,
            out_specs=out_specs,
            scratch_shapes=[pltpu.VMEM((chunk_t * TB, 4 * H), jnp.float32)]),
        compiler_params=pltpu.CompilerParams(
            dimension_semantics=("parallel",),          # v7x: 2 TCs over batch tiles
            vmem_limit_bytes=32 * 1024 * 1024),         # explicit, fits all chips
    )(emb, w0x, w0h, b0, *deep_args, fcw, fcb, h0f, c0f)

    return sig[:, 0], (h_n, c_n)


# ----------------------------- pure-JAX reference -----------------------------
def reference_forward(params, x_tokens, hidden, matmul_dtype=jnp.float32):
    """matmul_dtype=f32: PyTorch-semantics reference.
    matmul_dtype=bf16: numerics-matched reference (bf16 operands, f32 accum)."""
    h0, c0 = hidden
    no_layers = h0.shape[0]
    embeds = params["embedding"][x_tokens]                  # (B, T, E) f32
    layer_in = embeds
    h_list, c_list = [], []
    for l in range(no_layers):
        p = params["lstm"][l]
        H = p["w_hh"].shape[1]
        w_ih = jnp.transpose(p["w_ih"]).astype(matmul_dtype)
        w_hh = jnp.transpose(p["w_hh"]).astype(matmul_dtype)
        b = (p["b_ih"] + p["b_hh"]).astype(jnp.float32)

        def cell(carry, x_t, w_ih=w_ih, w_hh=w_hh, b=b, H=H):
            h, c = carry
            gates = (jnp.dot(x_t.astype(matmul_dtype), w_ih,
                             preferred_element_type=jnp.float32)
                     + jnp.dot(h.astype(matmul_dtype), w_hh,
                               preferred_element_type=jnp.float32)
                     + b)
            i = jax.nn.sigmoid(gates[:, 0 * H:1 * H])
            f = jax.nn.sigmoid(gates[:, 1 * H:2 * H])
            g = jnp.tanh(gates[:, 2 * H:3 * H])
            o = jax.nn.sigmoid(gates[:, 3 * H:4 * H])
            c = f * c + i * g
            h = o * jnp.tanh(c)
            return (h, c), h

        (h_n, c_n), out = jax.lax.scan(cell, (h0[l], c0[l]),
                                       jnp.transpose(layer_in, (1, 0, 2)))
        layer_in = jnp.transpose(out, (1, 0, 2))
        h_list.append(h_n)
        c_list.append(c_n)
    logits = layer_in[:, -1, :] @ params["fc_w"].T + params["fc_b"]
    return jax.nn.sigmoid(logits)[:, 0], (jnp.stack(h_list), jnp.stack(c_list))


# ----------------------------------- params -----------------------------------
def init_params(key, vocab_size, embedding_dim, hidden_dim, no_layers, output_dim=1):
    k = 1.0 / jnp.sqrt(jnp.float32(hidden_dim))
    keys = jax.random.split(key, 2 + 4 * no_layers + 2)
    params = {}
    params["embedding"] = jax.random.normal(keys[0], (vocab_size, embedding_dim), jnp.float32)
    lstm_params = []
    for l in range(no_layers):
        d_in = embedding_dim if l == 0 else hidden_dim
        base = 1 + 4 * l
        lstm_params.append({
            "w_ih": jax.random.uniform(keys[base + 0], (4 * hidden_dim, d_in), jnp.float32, -k, k),
            "w_hh": jax.random.uniform(keys[base + 1], (4 * hidden_dim, hidden_dim), jnp.float32, -k, k),
            "b_ih": jax.random.uniform(keys[base + 2], (4 * hidden_dim,), jnp.float32, -k, k),
            "b_hh": jax.random.uniform(keys[base + 3], (4 * hidden_dim,), jnp.float32, -k, k),
        })
    params["lstm"] = lstm_params
    params["fc_w"] = jax.random.uniform(keys[-2], (output_dim, hidden_dim), jnp.float32, -k, k)
    params["fc_b"] = jax.random.uniform(keys[-1], (output_dim,), jnp.float32, -k, k)
    return params


if __name__ == "__main__":
    # Small shapes consistent with the module's forward (batch padded to 8,
    # hidden kept small for a fast self-test).
    B, T = 8, 8
    vocab_size = 50
    embedding_dim = 64
    hidden_dim = 128
    no_layers = 2
    output_dim = 1

    key = jax.random.PRNGKey(0)
    k_params, k_x = jax.random.split(key)
    params = init_params(k_params, vocab_size, embedding_dim, hidden_dim, no_layers, output_dim)

    x = jax.random.randint(k_x, (B, T), 0, vocab_size, dtype=jnp.int32)
    # init_hidden(batch_size): zeros of shape (no_layers, B, H)
    h0 = jnp.zeros((no_layers, B, hidden_dim), jnp.float32)
    c0 = jnp.zeros((no_layers, B, hidden_dim), jnp.float32)

    sig_out, (h_n, c_n) = sentiment_rnn_forward(params, x, (h0, c0))
    jax.block_until_ready((sig_out, h_n, c_n))

    assert sig_out.shape == (B,)
    assert h_n.shape == (no_layers, B, hidden_dim)
    assert c_n.shape == (no_layers, B, hidden_dim)

    # 1) Numerics-matched reference (bf16 matmul operands, f32 accumulation):
    #    tight tolerance, catches real regressions.
    ref_sig_m, (ref_h_m, ref_c_m) = reference_forward(
        params, x, (h0, c0), matmul_dtype=jnp.bfloat16)
    assert float(jnp.max(jnp.abs(sig_out - ref_sig_m))) < 1e-2
    assert float(jnp.max(jnp.abs(h_n - ref_h_m))) < 3e-2
    assert float(jnp.max(jnp.abs(c_n - ref_c_m))) < 3e-2

    # 2) Full-f32 (PyTorch-semantics) reference: loose tolerance accounts for
    #    bf16 matmul operands in the kernel.
    ref_sig, (ref_h, ref_c) = reference_forward(
        params, x, (h0, c0), matmul_dtype=jnp.float32)
    assert float(jnp.max(jnp.abs(sig_out - ref_sig))) < 5e-2
    assert float(jnp.max(jnp.abs(h_n - ref_h))) < 1e-1
    assert float(jnp.max(jnp.abs(c_n - ref_c))) < 1e-1

    print("KERNEL_OK")
</pallas_src>

<mosaic_0001>
module attributes {stable_mosaic.version = 11 : i64} {
  func.func @fused_sentiment_kernel(%arg0: i32, %arg1: memref<8x8x64xf32, #tpu.memory_space<vmem>>, %arg2: memref<64x512xbf16, #tpu.memory_space<vmem>>, %arg3: memref<128x512xbf16, #tpu.memory_space<vmem>>, %arg4: memref<1x512xf32, #tpu.memory_space<vmem>>, %arg5: memref<128x512xbf16, #tpu.memory_space<vmem>>, %arg6: memref<128x512xbf16, #tpu.memory_space<vmem>>, %arg7: memref<1x512xf32, #tpu.memory_space<vmem>>, %arg8: memref<1x128xf32, #tpu.memory_space<vmem>>, %arg9: memref<1x1xf32, #tpu.memory_space<vmem>>, %arg10: memref<2x8x128xf32, #tpu.memory_space<vmem>>, %arg11: memref<2x8x128xf32, #tpu.memory_space<vmem>>, %arg12: memref<8x1xf32, #tpu.memory_space<vmem>>, %arg13: memref<2x8x128xf32, #tpu.memory_space<vmem>>, %arg14: memref<2x8x128xf32, #tpu.memory_space<vmem>>, %arg15: memref<64x512xf32, #tpu.memory_space<vmem>>) attributes {dimension_semantics = [#tpu.dimension_semantics<parallel>], iteration_bounds = array<i64: 1>, scalar_prefetch = 0 : i64, scratch_operands = 1 : i64, tpu.core_type = #tpu.core_type<tc>, window_params = [{transform_indices = @transform_0, window_bounds = array<i64: 8, 8, 64>}, {pipeline_mode = #tpu.pipeline_mode<synchronous>, transform_indices = @transform_1, window_bounds = array<i64: 64, 512>}, {pipeline_mode = #tpu.pipeline_mode<synchronous>, transform_indices = @transform_2, window_bounds = array<i64: 128, 512>}, {pipeline_mode = #tpu.pipeline_mode<synchronous>, transform_indices = @transform_3, window_bounds = array<i64: 1, 512>}, {pipeline_mode = #tpu.pipeline_mode<synchronous>, transform_indices = @transform_4, window_bounds = array<i64: 128, 512>}, {pipeline_mode = #tpu.pipeline_mode<synchronous>, transform_indices = @transform_5, window_bounds = array<i64: 128, 512>}, {pipeline_mode = #tpu.pipeline_mode<synchronous>, transform_indices = @transform_6, window_bounds = array<i64: 1, 512>}, {pipeline_mode = #tpu.pipeline_mode<synchronous>, transform_indices = @transform_7, window_bounds = array<i64: 1, 128>}, {pipeline_mode = #tpu.pipeline_mode<synchronous>, transform_indices = @transform_8, window_bounds = array<i64: 1, 1>}, {transform_indices = @transform_9, window_bounds = array<i64: 2, 8, 128>}, {transform_indices = @transform_10, window_bounds = array<i64: 2, 8, 128>}, {transform_indices = @transform_11, window_bounds = array<i64: 8, 1>}, {transform_indices = @transform_12, window_bounds = array<i64: 2, 8, 128>}, {transform_indices = @transform_13, window_bounds = array<i64: 2, 8, 128>}]} {
    %c0 = arith.constant 0 : index
    %c0_0 = arith.constant 0 : index
    %c0_1 = arith.constant 0 : index
    %0 = vector.load %arg10[%c0, %c0_0, %c0_1] : memref<2x8x128xf32, #tpu.memory_space<vmem>>, vector<2x8x128xf32>
    %c0_2 = arith.constant 0 : index
    %c0_3 = arith.constant 0 : index
    %c0_4 = arith.constant 0 : index
    %1 = vector.load %arg13[%c0_2, %c0_3, %c0_4] : memref<2x8x128xf32, #tpu.memory_space<vmem>>, vector<2x8x128xf32>
    tpu.vector_store %arg13[%c0_2, %c0_3, %c0_4], %0 {strides = array<i32>} : memref<2x8x128xf32, #tpu.memory_space<vmem>>, vector<2x8x128xf32>,
    %c0_5 = arith.constant 0 : index
    %c0_6 = arith.constant 0 : index
    %c0_7 = arith.constant 0 : index
    %2 = vector.load %arg11[%c0_5, %c0_6, %c0_7] : memref<2x8x128xf32, #tpu.memory_space<vmem>>, vector<2x8x128xf32>
    %c0_8 = arith.constant 0 : index
    %c0_9 = arith.constant 0 : index
    %c0_10 = arith.constant 0 : index
    %3 = vector.load %arg14[%c0_8, %c0_9, %c0_10] : memref<2x8x128xf32, #tpu.memory_space<vmem>>, vector<2x8x128xf32>
    tpu.vector_store %arg14[%c0_8, %c0_9, %c0_10], %2 {strides = array<i32>} : memref<2x8x128xf32, #tpu.memory_space<vmem>>, vector<2x8x128xf32>,
    %c0_11 = arith.constant 0 : index
    %c0_12 = arith.constant 0 : index
    %4 = vector.load %arg7[%c0_11, %c0_12] : memref<1x512xf32, #tpu.memory_space<vmem>>, vector<1x512xf32>
    %5 = vector.shape_cast %4 : vector<1x512xf32> to vector<1x512xf32>
    %6 = vector.broadcast %5 : vector<1x512xf32> to vector<8x512xf32>
    %c0_i32 = arith.constant 0 : i32
    %c8_i32 = arith.constant 8 : i32
    %7 = arith.muli %c0_i32, %c8_i32 : i32
    %8 = tpu.assume_multiple %7, 8 : i32
    %9 = arith.index_cast %8 : i32 to index
    %c0_13 = arith.constant 0 : index
    %c0_14 = arith.constant 0 : index
    %10 = vector.load %arg1[%9, %c0_13, %c0_14] : memref<8x8x64xf32, #tpu.memory_space<vmem>>, vector<8x8x64xf32>
    %11 = vector.shape_cast %10 : vector<8x8x64xf32> to vector<64x64xf32>
    %12 = arith.truncf %11 : vector<64x64xf32> to vector<64x64xbf16>
    %c0_15 = arith.constant 0 : index
    %c0_16 = arith.constant 0 : index
    %13 = vector.load %arg2[%c0_15, %c0_16] : memref<64x512xbf16, #tpu.memory_space<vmem>>, vector<64x512xbf16>
    %cst = arith.constant dense<0.000000e+00> : vector<64x512xf32>
    %14 = tpu.matmul %12, %13, %cst {dimension_numbers = #tpu.dot_dimension_numbers<[1], [0], [0], [1], [0, 0, 1, 1], [], []>} : vector<64x64xbf16>, vector<64x512xbf16>, vector<64x512xf32> -> vector<64x512xf32>
    %c0_17 = arith.constant 0 : index
    %c0_18 = arith.constant 0 : index
    %15 = vector.load %arg4[%c0_17, %c0_18] : memref<1x512xf32, #tpu.memory_space<vmem>>, vector<1x512xf32>
    %16 = vector.broadcast %15 : vector<1x512xf32> to vector<64x512xf32>
    %17 = arith.addf %14, %16 : vector<64x512xf32>
    %c0_19 = arith.constant 0 : index
    %c0_20 = arith.constant 0 : index
    %18 = vector.load %arg15[%c0_19, %c0_20] : memref<64x512xf32, #tpu.memory_space<vmem>>, vector<64x512xf32>
    tpu.vector_store %arg15[%c0_19, %c0_20], %17 {strides = array<i32>} : memref<64x512xf32, #tpu.memory_space<vmem>>, vector<64x512xf32>,
    %c0_i32_21 = arith.constant 0 : i32
    %c8_i32_22 = arith.constant 8 : i32
    %19 = arith.muli %c0_i32_21, %c8_i32_22 : i32
    %20 = tpu.assume_multiple %19, 8 : i32
    %21 = arith.index_cast %20 : i32 to index
    %c0_23 = arith.constant 0 : index
    %22 = vector.load %arg15[%21, %c0_23] : memref<64x512xf32, #tpu.memory_space<vmem>>, vector<8x512xf32>
    %c0_24 = arith.constant 0 : index
    %c0_25 = arith.constant 0 : index
    %c0_26 = arith.constant 0 : index
    %23 = vector.load %arg13[%c0_24, %c0_25, %c0_26] : memref<2x8x128xf32, #tpu.memory_space<vmem>>, vector<1x8x128xf32>
    %24 = vector.shape_cast %23 : vector<1x8x128xf32> to vector<8x128xf32>
    %25 = arith.truncf %24 : vector<8x128xf32> to vector<8x128xbf16>
    %c0_27 = arith.constant 0 : index
    %c0_28 = arith.constant 0 : index
    %26 = vector.load %arg3[%c0_27, %c0_28] : memref<128x512xbf16, #tpu.memory_space<vmem>>, vector<128x512xbf16>
    %cst_29 = arith.constant dense<0.000000e+00> : vector<8x512xf32>
    %27 = tpu.matmul %25, %26, %cst_29 {dimension_numbers = #tpu.dot_dimension_numbers<[1], [0], [0], [1], [0, 0, 1, 1], [], []>} : vector<8x128xbf16>, vector<128x512xbf16>, vector<8x512xf32> -> vector<8x512xf32>
    %28 = arith.addf %22, %27 : vector<8x512xf32>
    %c0_30 = arith.constant 0 : index
    %c0_31 = arith.constant 0 : index
    %c0_32 = arith.constant 0 : index
    %29 = vector.load %arg14[%c0_30, %c0_31, %c0_32] : memref<2x8x128xf32, #tpu.memory_space<vmem>>, vector<1x8x128xf32>
    %30 = vector.shape_cast %29 : vector<1x8x128xf32> to vector<8x128xf32>
    %31 = vector.extract_strided_slice %28 {offsets = [0, 0], sizes = [8, 128], strides = [1, 1]} : vector<8x512xf32> to vector<8x128xf32>
    %32 = arith.negf %31 : vector<8x128xf32>
    %33 = math.exp %32 : vector<8x128xf32>
    %cst_33 = arith.constant 1.000000e+00 : f32
    %34 = vector.broadcast %cst_33 : f32 to vector<8x128xf32>
    %35 = arith.addf %34, %33 : vector<8x128xf32>
    %36 = arith.divf %34, %35 : vector<8x128xf32>
    %37 = vector.extract_strided_slice %28 {offsets = [0, 128], sizes = [8, 128], strides = [1, 1]} : vector<8x512xf32> to vector<8x128xf32>
    %38 = arith.negf %37 : vector<8x128xf32>
    %39 = math.exp %38 : vector<8x128xf32>
    %cst_34 = arith.constant 1.000000e+00 : f32
    %40 = vector.broadcast %cst_34 : f32 to vector<8x128xf32>
    %41 = arith.addf %40, %39 : vector<8x128xf32>
    %42 = arith.divf %40, %41 : vector<8x128xf32>
    %43 = vector.extract_strided_slice %28 {offsets = [0, 256], sizes = [8, 128], strides = [1, 1]} : vector<8x512xf32> to vector<8x128xf32>
    %44 = math.tanh %43 : vector<8x128xf32>
    %45 = vector.extract_strided_slice %28 {offsets = [0, 384], sizes = [8, 128], strides = [1, 1]} : vector<8x512xf32> to vector<8x128xf32>
    %46 = arith.negf %45 : vector<8x128xf32>
    %47 = math.exp %46 : vector<8x128xf32>
    %cst_35 = arith.constant 1.000000e+00 : f32
    %48 = vector.broadcast %cst_35 : f32 to vector<8x128xf32>
    %49 = arith.addf %48, %47 : vector<8x128xf32>
    %50 = arith.divf %48, %49 : vector<8x128xf32>
    %51 = arith.mulf %42, %30 : vector<8x128xf32>
    %52 = arith.mulf %36, %44 : vector<8x128xf32>
    %53 = arith.addf %51, %52 : vector<8x128xf32>
    %54 = math.tanh %53 : vector<8x128xf32>
    %55 = arith.mulf %50, %54 : vector<8x128xf32>
    %c0_36 = arith.constant 0 : index
    %c0_37 = arith.constant 0 : index
    %c0_38 = arith.constant 0 : index
    %56 = vector.load %arg13[%c0_36, %c0_37, %c0_38] : memref<2x8x128xf32, #tpu.memory_space<vmem>>, vector<1x8x128xf32>
    %57 = vector.shape_cast %56 : vector<1x8x128xf32> to vector<8x128xf32>
    %58 = vector.shape_cast %55 : vector<8x128xf32> to vector<1x8x128xf32>
    tpu.vector_store %arg13[%c0_36, %c0_37, %c0_38], %58 {strides = array<i32>} : memref<2x8x128xf32, #tpu.memory_space<vmem>>, vector<1x8x128xf32>,
    %c0_39 = arith.constant 0 : index
    %c0_40 = arith.constant 0 : index
    %c0_41 = arith.constant 0 : index
    %59 = vector.load %arg14[%c0_39, %c0_40, %c0_41] : memref<2x8x128xf32, #tpu.memory_space<vmem>>, vector<1x8x128xf32>
    %60 = vector.shape_cast %59 : vector<1x8x128xf32> to vector<8x128xf32>
    %61 = vector.shape_cast %53 : vector<8x128xf32> to vector<1x8x128xf32>
    tpu.vector_store %arg14[%c0_39, %c0_40, %c0_41], %61 {strides = array<i32>} : memref<2x8x128xf32, #tpu.memory_space<vmem>>, vector<1x8x128xf32>,
    %c1 = arith.constant 1 : index
    %c0_42 = arith.constant 0 : index
    %c0_43 = arith.constant 0 : index
    %62 = vector.load %arg13[%c1, %c0_42, %c0_43] : memref<2x8x128xf32, #tpu.memory_space<vmem>>, vector<1x8x128xf32>
    %63 = vector.shape_cast %62 : vector<1x8x128xf32> to vector<8x128xf32>
    %64 = arith.truncf %55 : vector<8x128xf32> to vector<8x128xbf16>
    %c0_44 = arith.constant 0 : index
    %c0_45 = arith.constant 0 : index
    %65 = vector.load %arg5[%c0_44, %c0_45] : memref<128x512xbf16, #tpu.memory_space<vmem>>, vector<128x512xbf16>
    %cst_46 = arith.constant dense<0.000000e+00> : vector<8x512xf32>
    %66 = tpu.matmul %64, %65, %cst_46 {dimension_numbers = #tpu.dot_dimension_numbers<[1], [0], [0], [1], [0, 0, 1, 1], [], []>} : vector<8x128xbf16>, vector<128x512xbf16>, vector<8x512xf32> -> vector<8x512xf32>
    %67 = arith.truncf %63 : vector<8x128xf32> to vector<8x128xbf16>
    %c0_47 = arith.constant 0 : index
    %c0_48 = arith.constant 0 : index
    %68 = vector.load %arg6[%c0_47, %c0_48] : memref<128x512xbf16, #tpu.memory_space<vmem>>, vector<128x512xbf16>
    %cst_49 = arith.constant dense<0.000000e+00> : vector<8x512xf32>
    %69 = tpu.matmul %67, %68, %cst_49 {dimension_numbers = #tpu.dot_dimension_numbers<[1], [0], [0], [1], [0, 0, 1, 1], [], []>} : vector<8x128xbf16>, vector<128x512xbf16>, vector<8x512xf32> -> vector<8x512xf32>
    %70 = arith.addf %66, %69 : vector<8x512xf32>
    %71 = arith.addf %70, %6 : vector<8x512xf32>
    %c1_50 = arith.constant 1 : index
    %c0_51 = arith.constant 0 : index
    %c0_52 = arith.constant 0 : index
    %72 = vector.load %arg14[%c1_50, %c0_51, %c0_52] : memref<2x8x128xf32, #tpu.memory_space<vmem>>, vector<1x8x128xf32>
    %73 = vector.shape_cast %72 : vector<1x8x128xf32> to vector<8x128xf32>
    %74 = vector.extract_strided_slice %71 {offsets = [0, 0], sizes = [8, 128], strides = [1, 1]} : vector<8x512xf32> to vector<8x128xf32>
    %75 = arith.negf %74 : vector<8x128xf32>
    %76 = math.exp %75 : vector<8x128xf32>
    %cst_53 = arith.constant 1.000000e+00 : f32
    %77 = vector.broadcast %cst_53 : f32 to vector<8x128xf32>
    %78 = arith.addf %77, %76 : vector<8x128xf32>
    %79 = arith.divf %77, %78 : vector<8x128xf32>
    %80 = vector.extract_strided_slice %71 {offsets = [0, 128], sizes = [8, 128], strides = [1, 1]} : vector<8x512xf32> to vector<8x128xf32>
    %81 = arith.negf %80 : vector<8x128xf32>
    %82 = math.exp %81 : vector<8x128xf32>
    %cst_54 = arith.constant 1.000000e+00 : f32
    %83 = vector.broadcast %cst_54 : f32 to vector<8x128xf32>
    %84 = arith.addf %83, %82 : vector<8x128xf32>
    %85 = arith.divf %83, %84 : vector<8x128xf32>
    %86 = vector.extract_strided_slice %71 {offsets = [0, 256], sizes = [8, 128], strides = [1, 1]} : vector<8x512xf32> to vector<8x128xf32>
    %87 = math.tanh %86 : vector<8x128xf32>
    %88 = vector.extract_strided_slice %71 {offsets = [0, 384], sizes = [8, 128], strides = [1, 1]} : vector<8x512xf32> to vector<8x128xf32>
    %89 = arith.negf %88 : vector<8x128xf32>
    %90 = math.exp %89 : vector<8x128xf32>
    %cst_55 = arith.constant 1.000000e+00 : f32
    %91 = vector.broadcast %cst_55 : f32 to vector<8x128xf32>
    %92 = arith.addf %91, %90 : vector<8x128xf32>
    %93 = arith.divf %91, %92 : vector<8x128xf32>
    %94 = arith.mulf %85, %73 : vector<8x128xf32>
    %95 = arith.mulf %79, %87 : vector<8x128xf32>
    %96 = arith.addf %94, %95 : vector<8x128xf32>
    %97 = math.tanh %96 : vector<8x128xf32>
    %98 = arith.mulf %93, %97 : vector<8x128xf32>
    %c1_56 = arith.constant 1 : index
    %c0_57 = arith.constant 0 : index
    %c0_58 = arith.constant 0 : index
    %99 = vector.load %arg13[%c1_56, %c0_57, %c0_58] : memref<2x8x128xf32, #tpu.memory_space<vmem>>, vector<1x8x128xf32>
    %100 = vector.shape_cast %99 : vector<1x8x128xf32> to vector<8x128xf32>
    %101 = vector.shape_cast %98 : vector<8x128xf32> to vector<1x8x128xf32>
    tpu.vector_store %arg13[%c1_56, %c0_57, %c0_58], %101 {strides = array<i32>} : memref<2x8x128xf32, #tpu.memory_space<vmem>>, vector<1x8x128xf32>,
    %c1_59 = arith.constant 1 : index
    %c0_60 = arith.constant 0 : index
    %c0_61 = arith.constant 0 : index
    %102 = vector.load %arg14[%c1_59, %c0_60, %c0_61] : memref<2x8x128xf32, #tpu.memory_space<vmem>>, vector<1x8x128xf32>
    %103 = vector.shape_cast %102 : vector<1x8x128xf32> to vector<8x128xf32>
    %104 = vector.shape_cast %96 : vector<8x128xf32> to vector<1x8x128xf32>
    tpu.vector_store %arg14[%c1_59, %c0_60, %c0_61], %104 {strides = array<i32>} : memref<2x8x128xf32, #tpu.memory_space<vmem>>, vector<1x8x128xf32>,
    %c1_i32 = arith.constant 1 : i32
    %c8_i32_62 = arith.constant 8 : i32
    %105 = arith.muli %c1_i32, %c8_i32_62 : i32
    %106 = tpu.assume_multiple %105, 8 : i32
    %107 = arith.index_cast %106 : i32 to index
    %c0_63 = arith.constant 0 : index
    %108 = vector.load %arg15[%107, %c0_63] : memref<64x512xf32, #tpu.memory_space<vmem>>, vector<8x512xf32>
    %c0_64 = arith.constant 0 : index
    %c0_65 = arith.constant 0 : index
    %c0_66 = arith.constant 0 : index
    %109 = vector.load %arg13[%c0_64, %c0_65, %c0_66] : memref<2x8x128xf32, #tpu.memory_space<vmem>>, vector<1x8x128xf32>
    %110 = vector.shape_cast %109 : vector<1x8x128xf32> to vector<8x128xf32>
    %111 = arith.truncf %110 : vector<8x128xf32> to vector<8x128xbf16>
    %c0_67 = arith.constant 0 : index
    %c0_68 = arith.constant 0 : index
    %112 = vector.load %arg3[%c0_67, %c0_68] : memref<128x512xbf16, #tpu.memory_space<vmem>>, vector<128x512xbf16>
    %cst_69 = arith.constant dense<0.000000e+00> : vector<8x512xf32>
    %113 = tpu.matmul %111, %112, %cst_69 {dimension_numbers = #tpu.dot_dimension_numbers<[1], [0], [0], [1], [0, 0, 1, 1], [], []>} : vector<8x128xbf16>, vector<128x512xbf16>, vector<8x512xf32> -> vector<8x512xf32>
    %114 = arith.addf %108, %113 : vector<8x512xf32>
    %c0_70 = arith.constant 0 : index
    %c0_71 = arith.constant 0 : index
    %c0_72 = arith.constant 0 : index
    %115 = vector.load %arg14[%c0_70, %c0_71, %c0_72] : memref<2x8x128xf32, #tpu.memory_space<vmem>>, vector<1x8x128xf32>
    %116 = vector.shape_cast %115 : vector<1x8x128xf32> to vector<8x128xf32>
    %117 = vector.extract_strided_slice %114 {offsets = [0, 0], sizes = [8, 128], strides = [1, 1]} : vector<8x512xf32> to vector<8x128xf32>
    %118 = arith.negf %117 : vector<8x128xf32>
    %119 = math.exp %118 : vector<8x128xf32>
    %cst_73 = arith.constant 1.000000e+00 : f32
    %120 = vector.broadcast %cst_73 : f32 to vector<8x128xf32>
    %121 = arith.addf %120, %119 : vector<8x128xf32>
    %122 = arith.divf %120, %121 : vector<8x128xf32>
    %123 = vector.extract_strided_slice %114 {offsets = [0, 128], sizes = [8, 128], strides = [1, 1]} : vector<8x512xf32> to vector<8x128xf32>
    %124 = arith.negf %123 : vector<8x128xf32>
    %125 = math.exp %124 : vector<8x128xf32>
    %cst_74 = arith.constant 1.000000e+00 : f32
    %126 = vector.broadcast %cst_74 : f32 to vector<8x128xf32>
    %127 = arith.addf %126, %125 : vector<8x128xf32>
    %128 = arith.divf %126, %127 : vector<8x128xf32>
    %129 = vector.extract_strided_slice %114 {offsets = [0, 256], sizes = [8, 128], strides = [1, 1]} : vector<8x512xf32> to vector<8x128xf32>
    %130 = math.tanh %129 : vector<8x128xf32>
    %131 = vector.extract_strided_slice %114 {offsets = [0, 384], sizes = [8, 128], strides = [1, 1]} : vector<8x512xf32> to vector<8x128xf32>
    %132 = arith.negf %131 : vector<8x128xf32>
    %133 = math.exp %132 : vector<8x128xf32>
    %cst_75 = arith.constant 1.000000e+00 : f32
    %134 = vector.broadcast %cst_75 : f32 to vector<8x128xf32>
    %135 = arith.addf %134, %133 : vector<8x128xf32>
    %136 = arith.divf %134, %135 : vector<8x128xf32>
    %137 = arith.mulf %128, %116 : vector<8x128xf32>
    %138 = arith.mulf %122, %130 : vector<8x128xf32>
    %139 = arith.addf %137, %138 : vector<8x128xf32>
    %140 = math.tanh %139 : vector<8x128xf32>
    %141 = arith.mulf %136, %140 : vector<8x128xf32>
    %c0_76 = arith.constant 0 : index
    %c0_77 = arith.constant 0 : index
    %c0_78 = arith.constant 0 : index
    %142 = vector.load %arg13[%c0_76, %c0_77, %c0_78] : memref<2x8x128xf32, #tpu.memory_space<vmem>>, vector<1x8x128xf32>
    %143 = vector.shape_cast %142 : vector<1x8x128xf32> to vector<8x128xf32>
    %144 = vector.shape_cast %141 : vector<8x128xf32> to vector<1x8x128xf32>
    tpu.vector_store %arg13[%c0_76, %c0_77, %c0_78], %144 {strides = array<i32>} : memref<2x8x128xf32, #tpu.memory_space<vmem>>, vector<1x8x128xf32>,
    %c0_79 = arith.constant 0 : index
    %c0_80 = arith.constant 0 : index
    %c0_81 = arith.constant 0 : index
    %145 = vector.load %arg14[%c0_79, %c0_80, %c0_81] : memref<2x8x128xf32, #tpu.memory_space<vmem>>, vector<1x8x128xf32>
    %146 = vector.shape_cast %145 : vector<1x8x128xf32> to vector<8x128xf32>
    %147 = vector.shape_cast %139 : vector<8x128xf32> to vector<1x8x128xf32>
    tpu.vector_store %arg14[%c0_79, %c0_80, %c0_81], %147 {strides = array<i32>} : memref<2x8x128xf32, #tpu.memory_space<vmem>>, vector<1x8x128xf32>,
    %c1_82 = arith.constant 1 : index
    %c0_83 = arith.constant 0 : index
    %c0_84 = arith.constant 0 : index
    %148 = vector.load %arg13[%c1_82, %c0_83, %c0_84] : memref<2x8x128xf32, #tpu.memory_space<vmem>>, vector<1x8x128xf32>
    %149 = vector.shape_cast %148 : vector<1x8x128xf32> to vector<8x128xf32>
    %150 = arith.truncf %141 : vector<8x128xf32> to vector<8x128xbf16>
    %c0_85 = arith.constant 0 : index
    %c0_86 = arith.constant 0 : index
    %151 = vector.load %arg5[%c0_85, %c0_86] : memref<128x512xbf16, #tpu.memory_space<vmem>>, vector<128x512xbf16>
    %cst_87 = arith.constant dense<0.000000e+00> : vector<8x512xf32>
    %152 = tpu.matmul %150, %151, %cst_87 {dimension_numbers = #tpu.dot_dimension_numbers<[1], [0], [0], [1], [0, 0, 1, 1], [], []>} : vector<8x128xbf16>, vector<128x512xbf16>, vector<8x512xf32> -> vector<8x512xf32>
    %153 = arith.truncf %149 : vector<8x128xf32> to vector<8x128xbf16>
    %c0_88 = arith.constant 0 : index
    %c0_89 = arith.constant 0 : index
    %154 = vector.load %arg6[%c0_88, %c0_89] : memref<128x512xbf16, #tpu.memory_space<vmem>>, vector<128x512xbf16>
    %cst_90 = arith.constant dense<0.000000e+00> : vector<8x512xf32>
    %155 = tpu.matmul %153, %154, %cst_90 {dimension_numbers = #tpu.dot_dimension_numbers<[1], [0], [0], [1], [0, 0, 1, 1], [], []>} : vector<8x128xbf16>, vector<128x512xbf16>, vector<8x512xf32> -> vector<8x512xf32>
    %156 = arith.addf %152, %155 : vector<8x512xf32>
    %157 = arith.addf %156, %6 : vector<8x512xf32>
    %c1_91 = arith.constant 1 : index
    %c0_92 = arith.constant 0 : index
    %c0_93 = arith.constant 0 : index
    %158 = vector.load %arg14[%c1_91, %c0_92, %c0_93] : memref<2x8x128xf32, #tpu.memory_space<vmem>>, vector<1x8x128xf32>
    %159 = vector.shape_cast %158 : vector<1x8x128xf32> to vector<8x128xf32>
    %160 = vector.extract_strided_slice %157 {offsets = [0, 0], sizes = [8, 128], strides = [1, 1]} : vector<8x512xf32> to vector<8x128xf32>
    %161 = arith.negf %160 : vector<8x128xf32>
    %162 = math.exp %161 : vector<8x128xf32>
    %cst_94 = arith.constant 1.000000e+00 : f32
    %163 = vector.broadcast %cst_94 : f32 to vector<8x128xf32>
    %164 = arith.addf %163, %162 : vector<8x128xf32>
    %165 = arith.divf %163, %164 : vector<8x128xf32>
    %166 = vector.extract_strided_slice %157 {offsets = [0, 128], sizes = [8, 128], strides = [1, 1]} : vector<8x512xf32> to vector<8x128xf32>
    %167 = arith.negf %166 : vector<8x128xf32>
    %168 = math.exp %167 : vector<8x128xf32>
    %cst_95 = arith.constant 1.000000e+00 : f32
    %169 = vector.broadcast %cst_95 : f32 to vector<8x128xf32>
    %170 = arith.addf %169, %168 : vector<8x128xf32>
    %171 = arith.divf %169, %170 : vector<8x128xf32>
    %172 = vector.extract_strided_slice %157 {offsets = [0, 256], sizes = [8, 128], strides = [1, 1]} : vector<8x512xf32> to vector<8x128xf32>
    %173 = math.tanh %172 : vector<8x128xf32>
    %174 = vector.extract_strided_slice %157 {offsets = [0, 384], sizes = [8, 128], strides = [1, 1]} : vector<8x512xf32> to vector<8x128xf32>
    %175 = arith.negf %174 : vector<8x128xf32>
    %176 = math.exp %175 : vector<8x128xf32>
    %cst_96 = arith.constant 1.000000e+00 : f32
    %177 = vector.broadcast %cst_96 : f32 to vector<8x128xf32>
    %178 = arith.addf %177, %176 : vector<8x128xf32>
    %179 = arith.divf %177, %178 : vector<8x128xf32>
    %180 = arith.mulf %171, %159 : vector<8x128xf32>
    %181 = arith.mulf %165, %173 : vector<8x128xf32>
    %182 = arith.addf %180, %181 : vector<8x128xf32>
    %183 = math.tanh %182 : vector<8x128xf32>
    %184 = arith.mulf %179, %183 : vector<8x128xf32>
    %c1_97 = arith.constant 1 : index
    %c0_98 = arith.constant 0 : index
    %c0_99 = arith.constant 0 : index
    %185 = vector.load %arg13[%c1_97, %c0_98, %c0_99] : memref<2x8x128xf32, #tpu.memory_space<vmem>>, vector<1x8x128xf32>
    %186 = vector.shape_cast %185 : vector<1x8x128xf32> to vector<8x128xf32>
    %187 = vector.shape_cast %184 : vector<8x128xf32> to vector<1x8x128xf32>
    tpu.vector_store %arg13[%c1_97, %c0_98, %c0_99], %187 {strides = array<i32>} : memref<2x8x128xf32, #tpu.memory_space<vmem>>, vector<1x8x128xf32>,
    %c1_100 = arith.constant 1 : index
    %c0_101 = arith.constant 0 : index
    %c0_102 = arith.constant 0 : index
    %188 = vector.load %arg14[%c1_100, %c0_101, %c0_102] : memref<2x8x128xf32, #tpu.memory_space<vmem>>, vector<1x8x128xf32>
    %189 = vector.shape_cast %188 : vector<1x8x128xf32> to vector<8x128xf32>
    %190 = vector.shape_cast %182 : vector<8x128xf32> to vector<1x8x128xf32>
    tpu.vector_store %arg14[%c1_100, %c0_101, %c0_102], %190 {strides = array<i32>} : memref<2x8x128xf32, #tpu.memory_space<vmem>>, vector<1x8x128xf32>,
    %c2_i32 = arith.constant 2 : i32
    %c8_i32_103 = arith.constant 8 : i32
    %191 = arith.muli %c2_i32, %c8_i32_103 : i32
    %192 = tpu.assume_multiple %191, 8 : i32
    %193 = arith.index_cast %192 : i32 to index
    %c0_104 = arith.constant 0 : index
    %194 = vector.load %arg15[%193, %c0_104] : memref<64x512xf32, #tpu.memory_space<vmem>>, vector<8x512xf32>
    %c0_105 = arith.constant 0 : index
    %c0_106 = arith.constant 0 : index
    %c0_107 = arith.constant 0 : index
    %195 = vector.load %arg13[%c0_105, %c0_106, %c0_107] : memref<2x8x128xf32, #tpu.memory_space<vmem>>, vector<1x8x128xf32>
    %196 = vector.shape_cast %195 : vector<1x8x128xf32> to vector<8x128xf32>
    %197 = arith.truncf %196 : vector<8x128xf32> to vector<8x128xbf16>
    %c0_108 = arith.constant 0 : index
    %c0_109 = arith.constant 0 : index
    %198 = vector.load %arg3[%c0_108, %c0_109] : memref<128x512xbf16, #tpu.memory_space<vmem>>, vector<128x512xbf16>
    %cst_110 = arith.constant dense<0.000000e+00> : vector<8x512xf32>
    %199 = tpu.matmul %197, %198, %cst_110 {dimension_numbers = #tpu.dot_dimension_numbers<[1], [0], [0], [1], [0, 0, 1, 1], [], []>} : vector<8x128xbf16>, vector<128x512xbf16>, vector<8x512xf32> -> vector<8x512xf32>
    %200 = arith.addf %194, %199 : vector<8x512xf32>
    %c0_111 = arith.constant 0 : index
    %c0_112 = arith.constant 0 : index
    %c0_113 = arith.constant 0 : index
    %201 = vector.load %arg14[%c0_111, %c0_112, %c0_113] : memref<2x8x128xf32, #tpu.memory_space<vmem>>, vector<1x8x128xf32>
    %202 = vector.shape_cast %201 : vector<1x8x128xf32> to vector<8x128xf32>
    %203 = vector.extract_strided_slice %200 {offsets = [0, 0], sizes = [8, 128], strides = [1, 1]} : vector<8x512xf32> to vector<8x128xf32>
    %204 = arith.negf %203 : vector<8x128xf32>
    %205 = math.exp %204 : vector<8x128xf32>
    %cst_114 = arith.constant 1.000000e+00 : f32
    %206 = vector.broadcast %cst_114 : f32 to vector<8x128xf32>
    %207 = arith.addf %206, %205 : vector<8x128xf32>
    %208 = arith.divf %206, %207 : vector<8x128xf32>
    %209 = vector.extract_strided_slice %200 {offsets = [0, 128], sizes = [8, 128], strides = [1, 1]} : vector<8x512xf32> to vector<8x128xf32>
    %210 = arith.negf %209 : vector<8x128xf32>
    %211 = math.exp %210 : vector<8x128xf32>
    %cst_115 = arith.constant 1.000000e+00 : f32
    %212 = vector.broadcast %cst_115 : f32 to vector<8x128xf32>
    %213 = arith.addf %212, %211 : vector<8x128xf32>
    %214 = arith.divf %212, %213 : vector<8x128xf32>
    %215 = vector.extract_strided_slice %200 {offsets = [0, 256], sizes = [8, 128], strides = [1, 1]} : vector<8x512xf32> to vector<8x128xf32>
    %216 = math.tanh %215 : vector<8x128xf32>
    %217 = vector.extract_strided_slice %200 {offsets = [0, 384], sizes = [8, 128], strides = [1, 1]} : vector<8x512xf32> to vector<8x128xf32>
    %218 = arith.negf %217 : vector<8x128xf32>
    %219 = math.exp %218 : vector<8x128xf32>
    %cst_116 = arith.constant 1.000000e+00 : f32
    %220 = vector.broadcast %cst_116 : f32 to vector<8x128xf32>
    %221 = arith.addf %220, %219 : vector<8x128xf32>
    %222 = arith.divf %220, %221 : vector<8x128xf32>
    %223 = arith.mulf %214, %202 : vector<8x128xf32>
    %224 = arith.mulf %208, %216 : vector<8x128xf32>
    %225 = arith.addf %223, %224 : vector<8x128xf32>
    %226 = math.tanh %225 : vector<8x128xf32>
    %227 = arith.mulf %222, %226 : vector<8x128xf32>
    %c0_117 = arith.constant 0 : index
    %c0_118 = arith.constant 0 : index
    %c0_119 = arith.constant 0 : index
    %228 = vector.load %arg13[%c0_117, %c0_118, %c0_119] : memref<2x8x128xf32, #tpu.memory_space<vmem>>, vector<1x8x128xf32>
    %229 = vector.shape_cast %228 : vector<1x8x128xf32> to vector<8x128xf32>
    %230 = vector.shape_cast %227 : vector<8x128xf32> to vector<1x8x128xf32>
    tpu.vector_store %arg13[%c0_117, %c0_118, %c0_119], %230 {strides = array<i32>} : memref<2x8x128xf32, #tpu.memory_space<vmem>>, vector<1x8x128xf32>,
    %c0_120 = arith.constant 0 : index
    %c0_121 = arith.constant 0 : index
    %c0_122 = arith.constant 0 : index
    %231 = vector.load %arg14[%c0_120, %c0_121, %c0_122] : memref<2x8x128xf32, #tpu.memory_space<vmem>>, vector<1x8x128xf32>
    %232 = vector.shape_cast %231 : vector<1x8x128xf32> to vector<8x128xf32>
    %233 = vector.shape_cast %225 : vector<8x128xf32> to vector<1x8x128xf32>
    tpu.vector_store %arg14[%c0_120, %c0_121, %c0_122], %233 {strides = array<i32>} : memref<2x8x128xf32, #tpu.memory_space<vmem>>, vector<1x8x128xf32>,
    %c1_123 = arith.constant 1 : index
    %c0_124 = arith.constant 0 : index
    %c0_125 = arith.constant 0 : index
    %234 = vector.load %arg13[%c1_123, %c0_124, %c0_125] : memref<2x8x128xf32, #tpu.memory_space<vmem>>, vector<1x8x128xf32>
    %235 = vector.shape_cast %234 : vector<1x8x128xf32> to vector<8x128xf32>
    %236 = arith.truncf %227 : vector<8x128xf32> to vector<8x128xbf16>
    %c0_126 = arith.constant 0 : index
    %c0_127 = arith.constant 0 : index
    %237 = vector.load %arg5[%c0_126, %c0_127] : memref<128x512xbf16, #tpu.memory_space<vmem>>, vector<128x512xbf16>
    %cst_128 = arith.constant dense<0.000000e+00> : vector<8x512xf32>
    %238 = tpu.matmul %236, %237, %cst_128 {dimension_numbers = #tpu.dot_dimension_numbers<[1], [0], [0], [1], [0, 0, 1, 1], [], []>} : vector<8x128xbf16>, vector<128x512xbf16>, vector<8x512xf32> -> vector<8x512xf32>
    %239 = arith.truncf %235 : vector<8x128xf32> to vector<8x128xbf16>
    %c0_129 = arith.constant 0 : index
    %c0_130 = arith.constant 0 : index
    %240 = vector.load %arg6[%c0_129, %c0_130] : memref<128x512xbf16, #tpu.memory_space<vmem>>, vector<128x512xbf16>
    %cst_131 = arith.constant dense<0.000000e+00> : vector<8x512xf32>
    %241 = tpu.matmul %239, %240, %cst_131 {dimension_numbers = #tpu.dot_dimension_numbers<[1], [0], [0], [1], [0, 0, 1, 1], [], []>} : vector<8x128xbf16>, vector<128x512xbf16>, vector<8x512xf32> -> vector<8x512xf32>
    %242 = arith.addf %238, %241 : vector<8x512xf32>
    %243 = arith.addf %242, %6 : vector<8x512xf32>
    %c1_132 = arith.constant 1 : index
    %c0_133 = arith.constant 0 : index
    %c0_134 = arith.constant 0 : index
    %244 = vector.load %arg14[%c1_132, %c0_133, %c0_134] : memref<2x8x128xf32, #tpu.memory_space<vmem>>, vector<1x8x128xf32>
    %245 = vector.shape_cast %244 : vector<1x8x128xf32> to vector<8x128xf32>
    %246 = vector.extract_strided_slice %243 {offsets = [0, 0], sizes = [8, 128], strides = [1, 1]} : vector<8x512xf32> to vector<8x128xf32>
    %247 = arith.negf %246 : vector<8x128xf32>
    %248 = math.exp %247 : vector<8x128xf32>
    %cst_135 = arith.constant 1.000000e+00 : f32
    %249 = vector.broadcast %cst_135 : f32 to vector<8x128xf32>
    %250 = arith.addf %249, %248 : vector<8x128xf32>
    %251 = arith.divf %249, %250 : vector<8x128xf32>
    %252 = vector.extract_strided_slice %243 {offsets = [0, 128], sizes = [8, 128], strides = [1, 1]} : vector<8x512xf32> to vector<8x128xf32>
    %253 = arith.negf %252 : vector<8x128xf32>
    %254 = math.exp %253 : vector<8x128xf32>
    %cst_136 = arith.constant 1.000000e+00 : f32
    %255 = vector.broadcast %cst_136 : f32 to vector<8x128xf32>
    %256 = arith.addf %255, %254 : vector<8x128xf32>
    %257 = arith.divf %255, %256 : vector<8x128xf32>
    %258 = vector.extract_strided_slice %243 {offsets = [0, 256], sizes = [8, 128], strides = [1, 1]} : vector<8x512xf32> to vector<8x128xf32>
    %259 = math.tanh %258 : vector<8x128xf32>
    %260 = vector.extract_strided_slice %243 {offsets = [0, 384], sizes = [8, 128], strides = [1, 1]} : vector<8x512xf32> to vector<8x128xf32>
    %261 = arith.negf %260 : vector<8x128xf32>
    %262 = math.exp %261 : vector<8x128xf32>
    %cst_137 = arith.constant 1.000000e+00 : f32
    %263 = vector.broadcast %cst_137 : f32 to vector<8x128xf32>
    %264 = arith.addf %263, %262 : vector<8x128xf32>
    %265 = arith.divf %263, %264 : vector<8x128xf32>
    %266 = arith.mulf %257, %245 : vector<8x128xf32>
    %267 = arith.mulf %251, %259 : vector<8x128xf32>
    %268 = arith.addf %266, %267 : vector<8x128xf32>
    %269 = math.tanh %268 : vector<8x128xf32>
    %270 = arith.mulf %265, %269 : vector<8x128xf32>
    %c1_138 = arith.constant 1 : index
    %c0_139 = arith.constant 0 : index
    %c0_140 = arith.constant 0 : index
    %271 = vector.load %arg13[%c1_138, %c0_139, %c0_140] : memref<2x8x128xf32, #tpu.memory_space<vmem>>, vector<1x8x128xf32>
    %272 = vector.shape_cast %271 : vector<1x8x128xf32> to vector<8x128xf32>
    %273 = vector.shape_cast %270 : vector<8x128xf32> to vector<1x8x128xf32>
    tpu.vector_store %arg13[%c1_138, %c0_139, %c0_140], %273 {strides = array<i32>} : memref<2x8x128xf32, #tpu.memory_space<vmem>>, vector<1x8x128xf32>,
    %c1_141 = arith.constant 1 : index
    %c0_142 = arith.constant 0 : index
    %c0_143 = arith.constant 0 : index
    %274 = vector.load %arg14[%c1_141, %c0_142, %c0_143] : memref<2x8x128xf32, #tpu.memory_space<vmem>>, vector<1x8x128xf32>
    %275 = vector.shape_cast %274 : vector<1x8x128xf32> to vector<8x128xf32>
    %276 = vector.shape_cast %268 : vector<8x128xf32> to vector<1x8x128xf32>
    tpu.vector_store %arg14[%c1_141, %c0_142, %c0_143], %276 {strides = array<i32>} : memref<2x8x128xf32, #tpu.memory_space<vmem>>, vector<1x8x128xf32>,
    %c3_i32 = arith.constant 3 : i32
    %c8_i32_144 = arith.constant 8 : i32
    %277 = arith.muli %c3_i32, %c8_i32_144 : i32
    %278 = tpu.assume_multiple %277, 8 : i32
    %279 = arith.index_cast %278 : i32 to index
    %c0_145 = arith.constant 0 : index
    %280 = vector.load %arg15[%279, %c0_145] : memref<64x512xf32, #tpu.memory_space<vmem>>, vector<8x512xf32>
    %c0_146 = arith.constant 0 : index
    %c0_147 = arith.constant 0 : index
    %c0_148 = arith.constant 0 : index
    %281 = vector.load %arg13[%c0_146, %c0_147, %c0_148] : memref<2x8x128xf32, #tpu.memory_space<vmem>>, vector<1x8x128xf32>
    %282 = vector.shape_cast %281 : vector<1x8x128xf32> to vector<8x128xf32>
    %283 = arith.truncf %282 : vector<8x128xf32> to vector<8x128xbf16>
    %c0_149 = arith.constant 0 : index
    %c0_150 = arith.constant 0 : index
    %284 = vector.load %arg3[%c0_149, %c0_150] : memref<128x512xbf16, #tpu.memory_space<vmem>>, vector<128x512xbf16>
    %cst_151 = arith.constant dense<0.000000e+00> : vector<8x512xf32>
    %285 = tpu.matmul %283, %284, %cst_151 {dimension_numbers = #tpu.dot_dimension_numbers<[1], [0], [0], [1], [0, 0, 1, 1], [], []>} : vector<8x128xbf16>, vector<128x512xbf16>, vector<8x512xf32> -> vector<8x512xf32>
    %286 = arith.addf %280, %285 : vector<8x512xf32>
    %c0_152 = arith.constant 0 : index
    %c0_153 = arith.constant 0 : index
    %c0_154 = arith.constant 0 : index
    %287 = vector.load %arg14[%c0_152, %c0_153, %c0_154] : memref<2x8x128xf32, #tpu.memory_space<vmem>>, vector<1x8x128xf32>
    %288 = vector.shape_cast %287 : vector<1x8x128xf32> to vector<8x128xf32>
    %289 = vector.extract_strided_slice %286 {offsets = [0, 0], sizes = [8, 128], strides = [1, 1]} : vector<8x512xf32> to vector<8x128xf32>
    %290 = arith.negf %289 : vector<8x128xf32>
    %291 = math.exp %290 : vector<8x128xf32>
    %cst_155 = arith.constant 1.000000e+00 : f32
    %292 = vector.broadcast %cst_155 : f32 to vector<8x128xf32>
    %293 = arith.addf %292, %291 : vector<8x128xf32>
    %294 = arith.divf %292, %293 : vector<8x128xf32>
    %295 = vector.extract_strided_slice %286 {offsets = [0, 128], sizes = [8, 128], strides = [1, 1]} : vector<8x512xf32> to vector<8x128xf32>
    %296 = arith.negf %295 : vector<8x128xf32>
    %297 = math.exp %296 : vector<8x128xf32>
    %cst_156 = arith.constant 1.000000e+00 : f32
    %298 = vector.broadcast %cst_156 : f32 to vector<8x128xf32>
    %299 = arith.addf %298, %297 : vector<8x128xf32>
    %300 = arith.divf %298, %299 : vector<8x128xf32>
    %301 = vector.extract_strided_slice %286 {offsets = [0, 256], sizes = [8, 128], strides = [1, 1]} : vector<8x512xf32> to vector<8x128xf32>
    %302 = math.tanh %301 : vector<8x128xf32>
    %303 = vector.extract_strided_slice %286 {offsets = [0, 384], sizes = [8, 128], strides = [1, 1]} : vector<8x512xf32> to vector<8x128xf32>
    %304 = arith.negf %303 : vector<8x128xf32>
    %305 = math.exp %304 : vector<8x128xf32>
    %cst_157 = arith.constant 1.000000e+00 : f32
    %306 = vector.broadcast %cst_157 : f32 to vector<8x128xf32>
    %307 = arith.addf %306, %305 : vector<8x128xf32>
    %308 = arith.divf %306, %307 : vector<8x128xf32>
    %309 = arith.mulf %300, %288 : vector<8x128xf32>
    %310 = arith.mulf %294, %302 : vector<8x128xf32>
    %311 = arith.addf %309, %310 : vector<8x128xf32>
    %312 = math.tanh %311 : vector<8x128xf32>
    %313 = arith.mulf %308, %312 : vector<8x128xf32>
    %c0_158 = arith.constant 0 : index
    %c0_159 = arith.constant 0 : index
    %c0_160 = arith.constant 0 : index
    %314 = vector.load %arg13[%c0_158, %c0_159, %c0_160] : memref<2x8x128xf32, #tpu.memory_space<vmem>>, vector<1x8x128xf32>
    %315 = vector.shape_cast %314 : vector<1x8x128xf32> to vector<8x128xf32>
    %316 = vector.shape_cast %313 : vector<8x128xf32> to vector<1x8x128xf32>
    tpu.vector_store %arg13[%c0_158, %c0_159, %c0_160], %316 {strides = array<i32>} : memref<2x8x128xf32, #tpu.memory_space<vmem>>, vector<1x8x128xf32>,
    %c0_161 = arith.constant 0 : index
    %c0_162 = arith.constant 0 : index
    %c0_163 = arith.constant 0 : index
    %317 = vector.load %arg14[%c0_161, %c0_162, %c0_163] : memref<2x8x128xf32, #tpu.memory_space<vmem>>, vector<1x8x128xf32>
    %318 = vector.shape_cast %317 : vector<1x8x128xf32> to vector<8x128xf32>
    %319 = vector.shape_cast %311 : vector<8x128xf32> to vector<1x8x128xf32>
    tpu.vector_store %arg14[%c0_161, %c0_162, %c0_163], %319 {strides = array<i32>} : memref<2x8x128xf32, #tpu.memory_space<vmem>>, vector<1x8x128xf32>,
    %c1_164 = arith.constant 1 : index
    %c0_165 = arith.constant 0 : index
    %c0_166 = arith.constant 0 : index
    %320 = vector.load %arg13[%c1_164, %c0_165, %c0_166] : memref<2x8x128xf32, #tpu.memory_space<vmem>>, vector<1x8x128xf32>
    %321 = vector.shape_cast %320 : vector<1x8x128xf32> to vector<8x128xf32>
    %322 = arith.truncf %313 : vector<8x128xf32> to vector<8x128xbf16>
    %c0_167 = arith.constant 0 : index
    %c0_168 = arith.constant 0 : index
    %323 = vector.load %arg5[%c0_167, %c0_168] : memref<128x512xbf16, #tpu.memory_space<vmem>>, vector<128x512xbf16>
    %cst_169 = arith.constant dense<0.000000e+00> : vector<8x512xf32>
    %324 = tpu.matmul %322, %323, %cst_169 {dimension_numbers = #tpu.dot_dimension_numbers<[1], [0], [0], [1], [0, 0, 1, 1], [], []>} : vector<8x128xbf16>, vector<128x512xbf16>, vector<8x512xf32> -> vector<8x512xf32>
    %325 = arith.truncf %321 : vector<8x128xf32> to vector<8x128xbf16>
    %c0_170 = arith.constant 0 : index
    %c0_171 = arith.constant 0 : index
    %326 = vector.load %arg6[%c0_170, %c0_171] : memref<128x512xbf16, #tpu.memory_space<vmem>>, vector<128x512xbf16>
    %cst_172 = arith.constant dense<0.000000e+00> : vector<8x512xf32>
    %327 = tpu.matmul %325, %326, %cst_172 {dimension_numbers = #tpu.dot_dimension_numbers<[1], [0], [0], [1], [0, 0, 1, 1], [], []>} : vector<8x128xbf16>, vector<128x512xbf16>, vector<8x512xf32> -> vector<8x512xf32>
    %328 = arith.addf %324, %327 : vector<8x512xf32>
    %329 = arith.addf %328, %6 : vector<8x512xf32>
    %c1_173 = arith.constant 1 : index
    %c0_174 = arith.constant 0 : index
    %c0_175 = arith.constant 0 : index
    %330 = vector.load %arg14[%c1_173, %c0_174, %c0_175] : memref<2x8x128xf32, #tpu.memory_space<vmem>>, vector<1x8x128xf32>
    %331 = vector.shape_cast %330 : vector<1x8x128xf32> to vector<8x128xf32>
    %332 = vector.extract_strided_slice %329 {offsets = [0, 0], sizes = [8, 128], strides = [1, 1]} : vector<8x512xf32> to vector<8x128xf32>
    %333 = arith.negf %332 : vector<8x128xf32>
    %334 = math.exp %333 : vector<8x128xf32>
    %cst_176 = arith.constant 1.000000e+00 : f32
    %335 = vector.broadcast %cst_176 : f32 to vector<8x128xf32>
    %336 = arith.addf %335, %334 : vector<8x128xf32>
    %337 = arith.divf %335, %336 : vector<8x128xf32>
    %338 = vector.extract_strided_slice %329 {offsets = [0, 128], sizes = [8, 128], strides = [1, 1]} : vector<8x512xf32> to vector<8x128xf32>
    %339 = arith.negf %338 : vector<8x128xf32>
    %340 = math.exp %339 : vector<8x128xf32>
    %cst_177 = arith.constant 1.000000e+00 : f32
    %341 = vector.broadcast %cst_177 : f32 to vector<8x128xf32>
    %342 = arith.addf %341, %340 : vector<8x128xf32>
    %343 = arith.divf %341, %342 : vector<8x128xf32>
    %344 = vector.extract_strided_slice %329 {offsets = [0, 256], sizes = [8, 128], strides = [1, 1]} : vector<8x512xf32> to vector<8x128xf32>
    %345 = math.tanh %344 : vector<8x128xf32>
    %346 = vector.extract_strided_slice %329 {offsets = [0, 384], sizes = [8, 128], strides = [1, 1]} : vector<8x512xf32> to vector<8x128xf32>
    %347 = arith.negf %346 : vector<8x128xf32>
    %348 = math.exp %347 : vector<8x128xf32>
    %cst_178 = arith.constant 1.000000e+00 : f32
    %349 = vector.broadcast %cst_178 : f32 to vector<8x128xf32>
    %350 = arith.addf %349, %348 : vector<8x128xf32>
    %351 = arith.divf %349, %350 : vector<8x128xf32>
    %352 = arith.mulf %343, %331 : vector<8x128xf32>
    %353 = arith.mulf %337, %345 : vector<8x128xf32>
    %354 = arith.addf %352, %353 : vector<8x128xf32>
    %355 = math.tanh %354 : vector<8x128xf32>
    %356 = arith.mulf %351, %355 : vector<8x128xf32>
    %c1_179 = arith.constant 1 : index
    %c0_180 = arith.constant 0 : index
    %c0_181 = arith.constant 0 : index
    %357 = vector.load %arg13[%c1_179, %c0_180, %c0_181] : memref<2x8x128xf32, #tpu.memory_space<vmem>>, vector<1x8x128xf32>
    %358 = vector.shape_cast %357 : vector<1x8x128xf32> to vector<8x128xf32>
    %359 = vector.shape_cast %356 : vector<8x128xf32> to vector<1x8x128xf32>
    tpu.vector_store %arg13[%c1_179, %c0_180, %c0_181], %359 {strides = array<i32>} : memref<2x8x128xf32, #tpu.memory_space<vmem>>, vector<1x8x128xf32>,
    %c1_182 = arith.constant 1 : index
    %c0_183 = arith.constant 0 : index
    %c0_184 = arith.constant 0 : index
    %360 = vector.load %arg14[%c1_182, %c0_183, %c0_184] : memref<2x8x128xf32, #tpu.memory_space<vmem>>, vector<1x8x128xf32>
    %361 = vector.shape_cast %360 : vector<1x8x128xf32> to vector<8x128xf32>
    %362 = vector.shape_cast %354 : vector<8x128xf32> to vector<1x8x128xf32>
    tpu.vector_store %arg14[%c1_182, %c0_183, %c0_184], %362 {strides = array<i32>} : memref<2x8x128xf32, #tpu.memory_space<vmem>>, vector<1x8x128xf32>,
    %c4_i32 = arith.constant 4 : i32
    %c8_i32_185 = arith.constant 8 : i32
    %363 = arith.muli %c4_i32, %c8_i32_185 : i32
    %364 = tpu.assume_multiple %363, 8 : i32
    %365 = arith.index_cast %364 : i32 to index
    %c0_186 = arith.constant 0 : index
    %366 = vector.load %arg15[%365, %c0_186] : memref<64x512xf32, #tpu.memory_space<vmem>>, vector<8x512xf32>
    %c0_187 = arith.constant 0 : index
    %c0_188 = arith.constant 0 : index
    %c0_189 = arith.constant 0 : index
    %367 = vector.load %arg13[%c0_187, %c0_188, %c0_189] : memref<2x8x128xf32, #tpu.memory_space<vmem>>, vector<1x8x128xf32>
    %368 = vector.shape_cast %367 : vector<1x8x128xf32> to vector<8x128xf32>
    %369 = arith.truncf %368 : vector<8x128xf32> to vector<8x128xbf16>
    %c0_190 = arith.constant 0 : index
    %c0_191 = arith.constant 0 : index
    %370 = vector.load %arg3[%c0_190, %c0_191] : memref<128x512xbf16, #tpu.memory_space<vmem>>, vector<128x512xbf16>
    %cst_192 = arith.constant dense<0.000000e+00> : vector<8x512xf32>
    %371 = tpu.matmul %369, %370, %cst_192 {dimension_numbers = #tpu.dot_dimension_numbers<[1], [0], [0], [1], [0, 0, 1, 1], [], []>} : vector<8x128xbf16>, vector<128x512xbf16>, vector<8x512xf32> -> vector<8x512xf32>
    %372 = arith.addf %366, %371 : vector<8x512xf32>
    %c0_193 = arith.constant 0 : index
    %c0_194 = arith.constant 0 : index
    %c0_195 = arith.constant 0 : index
    %373 = vector.load %arg14[%c0_193, %c0_194, %c0_195] : memref<2x8x128xf32, #tpu.memory_space<vmem>>, vector<1x8x128xf32>
    %374 = vector.shape_cast %373 : vector<1x8x128xf32> to vector<8x128xf32>
    %375 = vector.extract_strided_slice %372 {offsets = [0, 0], sizes = [8, 128], strides = [1, 1]} : vector<8x512xf32> to vector<8x128xf32>
    %376 = arith.negf %375 : vector<8x128xf32>
    %377 = math.exp %376 : vector<8x128xf32>
    %cst_196 = arith.constant 1.000000e+00 : f32
    %378 = vector.broadcast %cst_196 : f32 to vector<8x128xf32>
    %379 = arith.addf %378, %377 : vector<8x128xf32>
    %380 = arith.divf %378, %379 : vector<8x128xf32>
    %381 = vector.extract_strided_slice %372 {offsets = [0, 128], sizes = [8, 128], strides = [1, 1]} : vector<8x512xf32> to vector<8x128xf32>
    %382 = arith.negf %381 : vector<8x128xf32>
    %383 = math.exp %382 : vector<8x128xf32>
    %cst_197 = arith.constant 1.000000e+00 : f32
    %384 = vector.broadcast %cst_197 : f32 to vector<8x128xf32>
    %385 = arith.addf %384, %383 : vector<8x128xf32>
    %386 = arith.divf %384, %385 : vector<8x128xf32>
    %387 = vector.extract_strided_slice %372 {offsets = [0, 256], sizes = [8, 128], strides = [1, 1]} : vector<8x512xf32> to vector<8x128xf32>
    %388 = math.tanh %387 : vector<8x128xf32>
    %389 = vector.extract_strided_slice %372 {offsets = [0, 384], sizes = [8, 128], strides = [1, 1]} : vector<8x512xf32> to vector<8x128xf32>
    %390 = arith.negf %389 : vector<8x128xf32>
    %391 = math.exp %390 : vector<8x128xf32>
    %cst_198 = arith.constant 1.000000e+00 : f32
    %392 = vector.broadcast %cst_198 : f32 to vector<8x128xf32>
    %393 = arith.addf %392, %391 : vector<8x128xf32>
    %394 = arith.divf %392, %393 : vector<8x128xf32>
    %395 = arith.mulf %386, %374 : vector<8x128xf32>
    %396 = arith.mulf %380, %388 : vector<8x128xf32>
    %397 = arith.addf %395, %396 : vector<8x128xf32>
    %398 = math.tanh %397 : vector<8x128xf32>
    %399 = arith.mulf %394, %398 : vector<8x128xf32>
    %c0_199 = arith.constant 0 : index
    %c0_200 = arith.constant 0 : index
    %c0_201 = arith.constant 0 : index
    %400 = vector.load %arg13[%c0_199, %c0_200, %c0_201] : memref<2x8x128xf32, #tpu.memory_space<vmem>>, vector<1x8x128xf32>
    %401 = vector.shape_cast %400 : vector<1x8x128xf32> to vector<8x128xf32>
    %402 = vector.shape_cast %399 : vector<8x128xf32> to vector<1x8x128xf32>
    tpu.vector_store %arg13[%c0_199, %c0_200, %c0_201], %402 {strides = array<i32>} : memref<2x8x128xf32, #tpu.memory_space<vmem>>, vector<1x8x128xf32>,
    %c0_202 = arith.constant 0 : index
    %c0_203 = arith.constant 0 : index
    %c0_204 = arith.constant 0 : index
    %403 = vector.load %arg14[%c0_202, %c0_203, %c0_204] : memref<2x8x128xf32, #tpu.memory_space<vmem>>, vector<1x8x128xf32>
    %404 = vector.shape_cast %403 : vector<1x8x128xf32> to vector<8x128xf32>
    %405 = vector.shape_cast %397 : vector<8x128xf32> to vector<1x8x128xf32>
    tpu.vector_store %arg14[%c0_202, %c0_203, %c0_204], %405 {strides = array<i32>} : memref<2x8x128xf32, #tpu.memory_space<vmem>>, vector<1x8x128xf32>,
    %c1_205 = arith.constant 1 : index
    %c0_206 = arith.constant 0 : index
    %c0_207 = arith.constant 0 : index
    %406 = vector.load %arg13[%c1_205, %c0_206, %c0_207] : memref<2x8x128xf32, #tpu.memory_space<vmem>>, vector<1x8x128xf32>
    %407 = vector.shape_cast %406 : vector<1x8x128xf32> to vector<8x128xf32>
    %408 = arith.truncf %399 : vector<8x128xf32> to vector<8x128xbf16>
    %c0_208 = arith.constant 0 : index
    %c0_209 = arith.constant 0 : index
    %409 = vector.load %arg5[%c0_208, %c0_209] : memref<128x512xbf16, #tpu.memory_space<vmem>>, vector<128x512xbf16>
    %cst_210 = arith.constant dense<0.000000e+00> : vector<8x512xf32>
    %410 = tpu.matmul %408, %409, %cst_210 {dimension_numbers = #tpu.dot_dimension_numbers<[1], [0], [0], [1], [0, 0, 1, 1], [], []>} : vector<8x128xbf16>, vector<128x512xbf16>, vector<8x512xf32> -> vector<8x512xf32>
    %411 = arith.truncf %407 : vector<8x128xf32> to vector<8x128xbf16>
    %c0_211 = arith.constant 0 : index
    %c0_212 = arith.constant 0 : index
    %412 = vector.load %arg6[%c0_211, %c0_212] : memref<128x512xbf16, #tpu.memory_space<vmem>>, vector<128x512xbf16>
    %cst_213 = arith.constant dense<0.000000e+00> : vector<8x512xf32>
    %413 = tpu.matmul %411, %412, %cst_213 {dimension_numbers = #tpu.dot_dimension_numbers<[1], [0], [0], [1], [0, 0, 1, 1], [], []>} : vector<8x128xbf16>, vector<128x512xbf16>, vector<8x512xf32> -> vector<8x512xf32>
    %414 = arith.addf %410, %413 : vector<8x512xf32>
    %415 = arith.addf %414, %6 : vector<8x512xf32>
    %c1_214 = arith.constant 1 : index
    %c0_215 = arith.constant 0 : index
    %c0_216 = arith.constant 0 : index
    %416 = vector.load %arg14[%c1_214, %c0_215, %c0_216] : memref<2x8x128xf32, #tpu.memory_space<vmem>>, vector<1x8x128xf32>
    %417 = vector.shape_cast %416 : vector<1x8x128xf32> to vector<8x128xf32>
    %418 = vector.extract_strided_slice %415 {offsets = [0, 0], sizes = [8, 128], strides = [1, 1]} : vector<8x512xf32> to vector<8x128xf32>
    %419 = arith.negf %418 : vector<8x128xf32>
    %420 = math.exp %419 : vector<8x128xf32>
    %cst_217 = arith.constant 1.000000e+00 : f32
    %421 = vector.broadcast %cst_217 : f32 to vector<8x128xf32>
    %422 = arith.addf %421, %420 : vector<8x128xf32>
    %423 = arith.divf %421, %422 : vector<8x128xf32>
    %424 = vector.extract_strided_slice %415 {offsets = [0, 128], sizes = [8, 128], strides = [1, 1]} : vector<8x512xf32> to vector<8x128xf32>
    %425 = arith.negf %424 : vector<8x128xf32>
    %426 = math.exp %425 : vector<8x128xf32>
    %cst_218 = arith.constant 1.000000e+00 : f32
    %427 = vector.broadcast %cst_218 : f32 to vector<8x128xf32>
    %428 = arith.addf %427, %426 : vector<8x128xf32>
    %429 = arith.divf %427, %428 : vector<8x128xf32>
    %430 = vector.extract_strided_slice %415 {offsets = [0, 256], sizes = [8, 128], strides = [1, 1]} : vector<8x512xf32> to vector<8x128xf32>
    %431 = math.tanh %430 : vector<8x128xf32>
    %432 = vector.extract_strided_slice %415 {offsets = [0, 384], sizes = [8, 128], strides = [1, 1]} : vector<8x512xf32> to vector<8x128xf32>
    %433 = arith.negf %432 : vector<8x128xf32>
    %434 = math.exp %433 : vector<8x128xf32>
    %cst_219 = arith.constant 1.000000e+00 : f32
    %435 = vector.broadcast %cst_219 : f32 to vector<8x128xf32>
    %436 = arith.addf %435, %434 : vector<8x128xf32>
    %437 = arith.divf %435, %436 : vector<8x128xf32>
    %438 = arith.mulf %429, %417 : vector<8x128xf32>
    %439 = arith.mulf %423, %431 : vector<8x128xf32>
    %440 = arith.addf %438, %439 : vector<8x128xf32>
    %441 = math.tanh %440 : vector<8x128xf32>
    %442 = arith.mulf %437, %441 : vector<8x128xf32>
    %c1_220 = arith.constant 1 : index
    %c0_221 = arith.constant 0 : index
    %c0_222 = arith.constant 0 : index
    %443 = vector.load %arg13[%c1_220, %c0_221, %c0_222] : memref<2x8x128xf32, #tpu.memory_space<vmem>>, vector<1x8x128xf32>
    %444 = vector.shape_cast %443 : vector<1x8x128xf32> to vector<8x128xf32>
    %445 = vector.shape_cast %442 : vector<8x128xf32> to vector<1x8x128xf32>
    tpu.vector_store %arg13[%c1_220, %c0_221, %c0_222], %445 {strides = array<i32>} : memref<2x8x128xf32, #tpu.memory_space<vmem>>, vector<1x8x128xf32>,
    %c1_223 = arith.constant 1 : index
    %c0_224 = arith.constant 0 : index
    %c0_225 = arith.constant 0 : index
    %446 = vector.load %arg14[%c1_223, %c0_224, %c0_225] : memref<2x8x128xf32, #tpu.memory_space<vmem>>, vector<1x8x128xf32>
    %447 = vector.shape_cast %446 : vector<1x8x128xf32> to vector<8x128xf32>
    %448 = vector.shape_cast %440 : vector<8x128xf32> to vector<1x8x128xf32>
    tpu.vector_store %arg14[%c1_223, %c0_224, %c0_225], %448 {strides = array<i32>} : memref<2x8x128xf32, #tpu.memory_space<vmem>>, vector<1x8x128xf32>,
    %c5_i32 = arith.constant 5 : i32
    %c8_i32_226 = arith.constant 8 : i32
    %449 = arith.muli %c5_i32, %c8_i32_226 : i32
    %450 = tpu.assume_multiple %449, 8 : i32
    %451 = arith.index_cast %450 : i32 to index
    %c0_227 = arith.constant 0 : index
    %452 = vector.load %arg15[%451, %c0_227] : memref<64x512xf32, #tpu.memory_space<vmem>>, vector<8x512xf32>
    %c0_228 = arith.constant 0 : index
    %c0_229 = arith.constant 0 : index
    %c0_230 = arith.constant 0 : index
    %453 = vector.load %arg13[%c0_228, %c0_229, %c0_230] : memref<2x8x128xf32, #tpu.memory_space<vmem>>, vector<1x8x128xf32>
    %454 = vector.shape_cast %453 : vector<1x8x128xf32> to vector<8x128xf32>
    %455 = arith.truncf %454 : vector<8x128xf32> to vector<8x128xbf16>
    %c0_231 = arith.constant 0 : index
    %c0_232 = arith.constant 0 : index
    %456 = vector.load %arg3[%c0_231, %c0_232] : memref<128x512xbf16, #tpu.memory_space<vmem>>, vector<128x512xbf16>
    %cst_233 = arith.constant dense<0.000000e+00> : vector<8x512xf32>
    %457 = tpu.matmul %455, %456, %cst_233 {dimension_numbers = #tpu.dot_dimension_numbers<[1], [0], [0], [1], [0, 0, 1, 1], [], []>} : vector<8x128xbf16>, vector<128x512xbf16>, vector<8x512xf32> -> vector<8x512xf32>
    %458 = arith.addf %452, %457 : vector<8x512xf32>
    %c0_234 = arith.constant 0 : index
    %c0_235 = arith.constant 0 : index
    %c0_236 = arith.constant 0 : index
    %459 = vector.load %arg14[%c0_234, %c0_235, %c0_236] : memref<2x8x128xf32, #tpu.memory_space<vmem>>, vector<1x8x128xf32>
    %460 = vector.shape_cast %459 : vector<1x8x128xf32> to vector<8x128xf32>
    %461 = vector.extract_strided_slice %458 {offsets = [0, 0], sizes = [8, 128], strides = [1, 1]} : vector<8x512xf32> to vector<8x128xf32>
    %462 = arith.negf %461 : vector<8x128xf32>
    %463 = math.exp %462 : vector<8x128xf32>
    %cst_237 = arith.constant 1.000000e+00 : f32
    %464 = vector.broadcast %cst_237 : f32 to vector<8x128xf32>
    %465 = arith.addf %464, %463 : vector<8x128xf32>
    %466 = arith.divf %464, %465 : vector<8x128xf32>
    %467 = vector.extract_strided_slice %458 {offsets = [0, 128], sizes = [8, 128], strides = [1, 1]} : vector<8x512xf32> to vector<8x128xf32>
    %468 = arith.negf %467 : vector<8x128xf32>
    %469 = math.exp %468 : vector<8x128xf32>
    %cst_238 = arith.constant 1.000000e+00 : f32
    %470 = vector.broadcast %cst_238 : f32 to vector<8x128xf32>
    %471 = arith.addf %470, %469 : vector<8x128xf32>
    %472 = arith.divf %470, %471 : vector<8x128xf32>
    %473 = vector.extract_strided_slice %458 {offsets = [0, 256], sizes = [8, 128], strides = [1, 1]} : vector<8x512xf32> to vector<8x128xf32>
    %474 = math.tanh %473 : vector<8x128xf32>
    %475 = vector.extract_strided_slice %458 {offsets = [0, 384], sizes = [8, 128], strides = [1, 1]} : vector<8x512xf32> to vector<8x128xf32>
    %476 = arith.negf %475 : vector<8x128xf32>
    %477 = math.exp %476 : vector<8x128xf32>
    %cst_239 = arith.constant 1.000000e+00 : f32
    %478 = vector.broadcast %cst_239 : f32 to vector<8x128xf32>
    %479 = arith.addf %478, %477 : vector<8x128xf32>
    %480 = arith.divf %478, %479 : vector<8x128xf32>
    %481 = arith.mulf %472, %460 : vector<8x128xf32>
    %482 = arith.mulf %466, %474 : vector<8x128xf32>
    %483 = arith.addf %481, %482 : vector<8x128xf32>
    %484 = math.tanh %483 : vector<8x128xf32>
    %485 = arith.mulf %480, %484 : vector<8x128xf32>
    %c0_240 = arith.constant 0 : index
    %c0_241 = arith.constant 0 : index
    %c0_242 = arith.constant 0 : index
    %486 = vector.load %arg13[%c0_240, %c0_241, %c0_242] : memref<2x8x128xf32, #tpu.memory_space<vmem>>, vector<1x8x128xf32>
    %487 = vector.shape_cast %486 : vector<1x8x128xf32> to vector<8x128xf32>
    %488 = vector.shape_cast %485 : vector<8x128xf32> to vector<1x8x128xf32>
    tpu.vector_store %arg13[%c0_240, %c0_241, %c0_242], %488 {strides = array<i32>} : memref<2x8x128xf32, #tpu.memory_space<vmem>>, vector<1x8x128xf32>,
    %c0_243 = arith.constant 0 : index
    %c0_244 = arith.constant 0 : index
    %c0_245 = arith.constant 0 : index
    %489 = vector.load %arg14[%c0_243, %c0_244, %c0_245] : memref<2x8x128xf32, #tpu.memory_space<vmem>>, vector<1x8x128xf32>
    %490 = vector.shape_cast %489 : vector<1x8x128xf32> to vector<8x128xf32>
    %491 = vector.shape_cast %483 : vector<8x128xf32> to vector<1x8x128xf32>
    tpu.vector_store %arg14[%c0_243, %c0_244, %c0_245], %491 {strides = array<i32>} : memref<2x8x128xf32, #tpu.memory_space<vmem>>, vector<1x8x128xf32>,
    %c1_246 = arith.constant 1 : index
    %c0_247 = arith.constant 0 : index
    %c0_248 = arith.constant 0 : index
    %492 = vector.load %arg13[%c1_246, %c0_247, %c0_248] : memref<2x8x128xf32, #tpu.memory_space<vmem>>, vector<1x8x128xf32>
    %493 = vector.shape_cast %492 : vector<1x8x128xf32> to vector<8x128xf32>
    %494 = arith.truncf %485 : vector<8x128xf32> to vector<8x128xbf16>
    %c0_249 = arith.constant 0 : index
    %c0_250 = arith.constant 0 : index
    %495 = vector.load %arg5[%c0_249, %c0_250] : memref<128x512xbf16, #tpu.memory_space<vmem>>, vector<128x512xbf16>
    %cst_251 = arith.constant dense<0.000000e+00> : vector<8x512xf32>
    %496 = tpu.matmul %494, %495, %cst_251 {dimension_numbers = #tpu.dot_dimension_numbers<[1], [0], [0], [1], [0, 0, 1, 1], [], []>} : vector<8x128xbf16>, vector<128x512xbf16>, vector<8x512xf32> -> vector<8x512xf32>
    %497 = arith.truncf %493 : vector<8x128xf32> to vector<8x128xbf16>
    %c0_252 = arith.constant 0 : index
    %c0_253 = arith.constant 0 : index
    %498 = vector.load %arg6[%c0_252, %c0_253] : memref<128x512xbf16, #tpu.memory_space<vmem>>, vector<128x512xbf16>
    %cst_254 = arith.constant dense<0.000000e+00> : vector<8x512xf32>
    %499 = tpu.matmul %497, %498, %cst_254 {dimension_numbers = #tpu.dot_dimension_numbers<[1], [0], [0], [1], [0, 0, 1, 1], [], []>} : vector<8x128xbf16>, vector<128x512xbf16>, vector<8x512xf32> -> vector<8x512xf32>
    %500 = arith.addf %496, %499 : vector<8x512xf32>
    %501 = arith.addf %500, %6 : vector<8x512xf32>
    %c1_255 = arith.constant 1 : index
    %c0_256 = arith.constant 0 : index
    %c0_257 = arith.constant 0 : index
    %502 = vector.load %arg14[%c1_255, %c0_256, %c0_257] : memref<2x8x128xf32, #tpu.memory_space<vmem>>, vector<1x8x128xf32>
    %503 = vector.shape_cast %502 : vector<1x8x128xf32> to vector<8x128xf32>
    %504 = vector.extract_strided_slice %501 {offsets = [0, 0], sizes = [8, 128], strides = [1, 1]} : vector<8x512xf32> to vector<8x128xf32>
    %505 = arith.negf %504 : vector<8x128xf32>
    %506 = math.exp %505 : vector<8x128xf32>
    %cst_258 = arith.constant 1.000000e+00 : f32
    %507 = vector.broadcast %cst_258 : f32 to vector<8x128xf32>
    %508 = arith.addf %507, %506 : vector<8x128xf32>
    %509 = arith.divf %507, %508 : vector<8x128xf32>
    %510 = vector.extract_strided_slice %501 {offsets = [0, 128], sizes = [8, 128], strides = [1, 1]} : vector<8x512xf32> to vector<8x128xf32>
    %511 = arith.negf %510 : vector<8x128xf32>
    %512 = math.exp %511 : vector<8x128xf32>
    %cst_259 = arith.constant 1.000000e+00 : f32
    %513 = vector.broadcast %cst_259 : f32 to vector<8x128xf32>
    %514 = arith.addf %513, %512 : vector<8x128xf32>
    %515 = arith.divf %513, %514 : vector<8x128xf32>
    %516 = vector.extract_strided_slice %501 {offsets = [0, 256], sizes = [8, 128], strides = [1, 1]} : vector<8x512xf32> to vector<8x128xf32>
    %517 = math.tanh %516 : vector<8x128xf32>
    %518 = vector.extract_strided_slice %501 {offsets = [0, 384], sizes = [8, 128], strides = [1, 1]} : vector<8x512xf32> to vector<8x128xf32>
    %519 = arith.negf %518 : vector<8x128xf32>
    %520 = math.exp %519 : vector<8x128xf32>
    %cst_260 = arith.constant 1.000000e+00 : f32
    %521 = vector.broadcast %cst_260 : f32 to vector<8x128xf32>
    %522 = arith.addf %521, %520 : vector<8x128xf32>
    %523 = arith.divf %521, %522 : vector<8x128xf32>
    %524 = arith.mulf %515, %503 : vector<8x128xf32>
    %525 = arith.mulf %509, %517 : vector<8x128xf32>
    %526 = arith.addf %524, %525 : vector<8x128xf32>
    %527 = math.tanh %526 : vector<8x128xf32>
    %528 = arith.mulf %523, %527 : vector<8x128xf32>
    %c1_261 = arith.constant 1 : index
    %c0_262 = arith.constant 0 : index
    %c0_263 = arith.constant 0 : index
    %529 = vector.load %arg13[%c1_261, %c0_262, %c0_263] : memref<2x8x128xf32, #tpu.memory_space<vmem>>, vector<1x8x128xf32>
    %530 = vector.shape_cast %529 : vector<1x8x128xf32> to vector<8x128xf32>
    %531 = vector.shape_cast %528 : vector<8x128xf32> to vector<1x8x128xf32>
    tpu.vector_store %arg13[%c1_261, %c0_262, %c0_263], %531 {strides = array<i32>} : memref<2x8x128xf32, #tpu.memory_space<vmem>>, vector<1x8x128xf32>,
    %c1_264 = arith.constant 1 : index
    %c0_265 = arith.constant 0 : index
    %c0_266 = arith.constant 0 : index
    %532 = vector.load %arg14[%c1_264, %c0_265, %c0_266] : memref<2x8x128xf32, #tpu.memory_space<vmem>>, vector<1x8x128xf32>
    %533 = vector.shape_cast %532 : vector<1x8x128xf32> to vector<8x128xf32>
    %534 = vector.shape_cast %526 : vector<8x128xf32> to vector<1x8x128xf32>
    tpu.vector_store %arg14[%c1_264, %c0_265, %c0_266], %534 {strides = array<i32>} : memref<2x8x128xf32, #tpu.memory_space<vmem>>, vector<1x8x128xf32>,
    %c6_i32 = arith.constant 6 : i32
    %c8_i32_267 = arith.constant 8 : i32
    %535 = arith.muli %c6_i32, %c8_i32_267 : i32
    %536 = tpu.assume_multiple %535, 8 : i32
    %537 = arith.index_cast %536 : i32 to index
    %c0_268 = arith.constant 0 : index
    %538 = vector.load %arg15[%537, %c0_268] : memref<64x512xf32, #tpu.memory_space<vmem>>, vector<8x512xf32>
    %c0_269 = arith.constant 0 : index
    %c0_270 = arith.constant 0 : index
    %c0_271 = arith.constant 0 : index
    %539 = vector.load %arg13[%c0_269, %c0_270, %c0_271] : memref<2x8x128xf32, #tpu.memory_space<vmem>>, vector<1x8x128xf32>
    %540 = vector.shape_cast %539 : vector<1x8x128xf32> to vector<8x128xf32>
    %541 = arith.truncf %540 : vector<8x128xf32> to vector<8x128xbf16>
    %c0_272 = arith.constant 0 : index
    %c0_273 = arith.constant 0 : index
    %542 = vector.load %arg3[%c0_272, %c0_273] : memref<128x512xbf16, #tpu.memory_space<vmem>>, vector<128x512xbf16>
    %cst_274 = arith.constant dense<0.000000e+00> : vector<8x512xf32>
    %543 = tpu.matmul %541, %542, %cst_274 {dimension_numbers = #tpu.dot_dimension_numbers<[1], [0], [0], [1], [0, 0, 1, 1], [], []>} : vector<8x128xbf16>, vector<128x512xbf16>, vector<8x512xf32> -> vector<8x512xf32>
    %544 = arith.addf %538, %543 : vector<8x512xf32>
    %c0_275 = arith.constant 0 : index
    %c0_276 = arith.constant 0 : index
    %c0_277 = arith.constant 0 : index
    %545 = vector.load %arg14[%c0_275, %c0_276, %c0_277] : memref<2x8x128xf32, #tpu.memory_space<vmem>>, vector<1x8x128xf32>
    %546 = vector.shape_cast %545 : vector<1x8x128xf32> to vector<8x128xf32>
    %547 = vector.extract_strided_slice %544 {offsets = [0, 0], sizes = [8, 128], strides = [1, 1]} : vector<8x512xf32> to vector<8x128xf32>
    %548 = arith.negf %547 : vector<8x128xf32>
    %549 = math.exp %548 : vector<8x128xf32>
    %cst_278 = arith.constant 1.000000e+00 : f32
    %550 = vector.broadcast %cst_278 : f32 to vector<8x128xf32>
    %551 = arith.addf %550, %549 : vector<8x128xf32>
    %552 = arith.divf %550, %551 : vector<8x128xf32>
    %553 = vector.extract_strided_slice %544 {offsets = [0, 128], sizes = [8, 128], strides = [1, 1]} : vector<8x512xf32> to vector<8x128xf32>
    %554 = arith.negf %553 : vector<8x128xf32>
    %555 = math.exp %554 : vector<8x128xf32>
    %cst_279 = arith.constant 1.000000e+00 : f32
    %556 = vector.broadcast %cst_279 : f32 to vector<8x128xf32>
    %557 = arith.addf %556, %555 : vector<8x128xf32>
    %558 = arith.divf %556, %557 : vector<8x128xf32>
    %559 = vector.extract_strided_slice %544 {offsets = [0, 256], sizes = [8, 128], strides = [1, 1]} : vector<8x512xf32> to vector<8x128xf32>
    %560 = math.tanh %559 : vector<8x128xf32>
    %561 = vector.extract_strided_slice %544 {offsets = [0, 384], sizes = [8, 128], strides = [1, 1]} : vector<8x512xf32> to vector<8x128xf32>
    %562 = arith.negf %561 : vector<8x128xf32>
    %563 = math.exp %562 : vector<8x128xf32>
    %cst_280 = arith.constant 1.000000e+00 : f32
    %564 = vector.broadcast %cst_280 : f32 to vector<8x128xf32>
    %565 = arith.addf %564, %563 : vector<8x128xf32>
    %566 = arith.divf %564, %565 : vector<8x128xf32>
    %567 = arith.mulf %558, %546 : vector<8x128xf32>
    %568 = arith.mulf %552, %560 : vector<8x128xf32>
    %569 = arith.addf %567, %568 : vector<8x128xf32>
    %570 = math.tanh %569 : vector<8x128xf32>
    %571 = arith.mulf %566, %570 : vector<8x128xf32>
    %c0_281 = arith.constant 0 : index
    %c0_282 = arith.constant 0 : index
    %c0_283 = arith.constant 0 : index
    %572 = vector.load %arg13[%c0_281, %c0_282, %c0_283] : memref<2x8x128xf32, #tpu.memory_space<vmem>>, vector<1x8x128xf32>
    %573 = vector.shape_cast %572 : vector<1x8x128xf32> to vector<8x128xf32>
    %574 = vector.shape_cast %571 : vector<8x128xf32> to vector<1x8x128xf32>
    tpu.vector_store %arg13[%c0_281, %c0_282, %c0_283], %574 {strides = array<i32>} : memref<2x8x128xf32, #tpu.memory_space<vmem>>, vector<1x8x128xf32>,
    %c0_284 = arith.constant 0 : index
    %c0_285 = arith.constant 0 : index
    %c0_286 = arith.constant 0 : index
    %575 = vector.load %arg14[%c0_284, %c0_285, %c0_286] : memref<2x8x128xf32, #tpu.memory_space<vmem>>, vector<1x8x128xf32>
    %576 = vector.shape_cast %575 : vector<1x8x128xf32> to vector<8x128xf32>
    %577 = vector.shape_cast %569 : vector<8x128xf32> to vector<1x8x128xf32>
    tpu.vector_store %arg14[%c0_284, %c0_285, %c0_286], %577 {strides = array<i32>} : memref<2x8x128xf32, #tpu.memory_space<vmem>>, vector<1x8x128xf32>,
    %c1_287 = arith.constant 1 : index
    %c0_288 = arith.constant 0 : index
    %c0_289 = arith.constant 0 : index
    %578 = vector.load %arg13[%c1_287, %c0_288, %c0_289] : memref<2x8x128xf32, #tpu.memory_space<vmem>>, vector<1x8x128xf32>
    %579 = vector.shape_cast %578 : vector<1x8x128xf32> to vector<8x128xf32>
    %580 = arith.truncf %571 : vector<8x128xf32> to vector<8x128xbf16>
    %c0_290 = arith.constant 0 : index
    %c0_291 = arith.constant 0 : index
    %581 = vector.load %arg5[%c0_290, %c0_291] : memref<128x512xbf16, #tpu.memory_space<vmem>>, vector<128x512xbf16>
    %cst_292 = arith.constant dense<0.000000e+00> : vector<8x512xf32>
    %582 = tpu.matmul %580, %581, %cst_292 {dimension_numbers = #tpu.dot_dimension_numbers<[1], [0], [0], [1], [0, 0, 1, 1], [], []>} : vector<8x128xbf16>, vector<128x512xbf16>, vector<8x512xf32> -> vector<8x512xf32>
    %583 = arith.truncf %579 : vector<8x128xf32> to vector<8x128xbf16>
    %c0_293 = arith.constant 0 : index
    %c0_294 = arith.constant 0 : index
    %584 = vector.load %arg6[%c0_293, %c0_294] : memref<128x512xbf16, #tpu.memory_space<vmem>>, vector<128x512xbf16>
    %cst_295 = arith.constant dense<0.000000e+00> : vector<8x512xf32>
    %585 = tpu.matmul %583, %584, %cst_295 {dimension_numbers = #tpu.dot_dimension_numbers<[1], [0], [0], [1], [0, 0, 1, 1], [], []>} : vector<8x128xbf16>, vector<128x512xbf16>, vector<8x512xf32> -> vector<8x512xf32>
    %586 = arith.addf %582, %585 : vector<8x512xf32>
    %587 = arith.addf %586, %6 : vector<8x512xf32>
    %c1_296 = arith.constant 1 : index
    %c0_297 = arith.constant 0 : index
    %c0_298 = arith.constant 0 : index
    %588 = vector.load %arg14[%c1_296, %c0_297, %c0_298] : memref<2x8x128xf32, #tpu.memory_space<vmem>>, vector<1x8x128xf32>
    %589 = vector.shape_cast %588 : vector<1x8x128xf32> to vector<8x128xf32>
    %590 = vector.extract_strided_slice %587 {offsets = [0, 0], sizes = [8, 128], strides = [1, 1]} : vector<8x512xf32> to vector<8x128xf32>
    %591 = arith.negf %590 : vector<8x128xf32>
    %592 = math.exp %591 : vector<8x128xf32>
    %cst_299 = arith.constant 1.000000e+00 : f32
    %593 = vector.broadcast %cst_299 : f32 to vector<8x128xf32>
    %594 = arith.addf %593, %592 : vector<8x128xf32>
    %595 = arith.divf %593, %594 : vector<8x128xf32>
    %596 = vector.extract_strided_slice %587 {offsets = [0, 128], sizes = [8, 128], strides = [1, 1]} : vector<8x512xf32> to vector<8x128xf32>
    %597 = arith.negf %596 : vector<8x128xf32>
    %598 = math.exp %597 : vector<8x128xf32>
    %cst_300 = arith.constant 1.000000e+00 : f32
    %599 = vector.broadcast %cst_300 : f32 to vector<8x128xf32>
    %600 = arith.addf %599, %598 : vector<8x128xf32>
    %601 = arith.divf %599, %600 : vector<8x128xf32>
    %602 = vector.extract_strided_slice %587 {offsets = [0, 256], sizes = [8, 128], strides = [1, 1]} : vector<8x512xf32> to vector<8x128xf32>
    %603 = math.tanh %602 : vector<8x128xf32>
    %604 = vector.extract_strided_slice %587 {offsets = [0, 384], sizes = [8, 128], strides = [1, 1]} : vector<8x512xf32> to vector<8x128xf32>
    %605 = arith.negf %604 : vector<8x128xf32>
    %606 = math.exp %605 : vector<8x128xf32>
    %cst_301 = arith.constant 1.000000e+00 : f32
    %607 = vector.broadcast %cst_301 : f32 to vector<8x128xf32>
    %608 = arith.addf %607, %606 : vector<8x128xf32>
    %609 = arith.divf %607, %608 : vector<8x128xf32>
    %610 = arith.mulf %601, %589 : vector<8x128xf32>
    %611 = arith.mulf %595, %603 : vector<8x128xf32>
    %612 = arith.addf %610, %611 : vector<8x128xf32>
    %613 = math.tanh %612 : vector<8x128xf32>
    %614 = arith.mulf %609, %613 : vector<8x128xf32>
    %c1_302 = arith.constant 1 : index
    %c0_303 = arith.constant 0 : index
    %c0_304 = arith.constant 0 : index
    %615 = vector.load %arg13[%c1_302, %c0_303, %c0_304] : memref<2x8x128xf32, #tpu.memory_space<vmem>>, vector<1x8x128xf32>
    %616 = vector.shape_cast %615 : vector<1x8x128xf32> to vector<8x128xf32>
    %617 = vector.shape_cast %614 : vector<8x128xf32> to vector<1x8x128xf32>
    tpu.vector_store %arg13[%c1_302, %c0_303, %c0_304], %617 {strides = array<i32>} : memref<2x8x128xf32, #tpu.memory_space<vmem>>, vector<1x8x128xf32>,
    %c1_305 = arith.constant 1 : index
    %c0_306 = arith.constant 0 : index
    %c0_307 = arith.constant 0 : index
    %618 = vector.load %arg14[%c1_305, %c0_306, %c0_307] : memref<2x8x128xf32, #tpu.memory_space<vmem>>, vector<1x8x128xf32>
    %619 = vector.shape_cast %618 : vector<1x8x128xf32> to vector<8x128xf32>
    %620 = vector.shape_cast %612 : vector<8x128xf32> to vector<1x8x128xf32>
    tpu.vector_store %arg14[%c1_305, %c0_306, %c0_307], %620 {strides = array<i32>} : memref<2x8x128xf32, #tpu.memory_space<vmem>>, vector<1x8x128xf32>,
    %c7_i32 = arith.constant 7 : i32
    %c8_i32_308 = arith.constant 8 : i32
    %621 = arith.muli %c7_i32, %c8_i32_308 : i32
    %622 = tpu.assume_multiple %621, 8 : i32
    %623 = arith.index_cast %622 : i32 to index
    %c0_309 = arith.constant 0 : index
    %624 = vector.load %arg15[%623, %c0_309] : memref<64x512xf32, #tpu.memory_space<vmem>>, vector<8x512xf32>
    %c0_310 = arith.constant 0 : index
    %c0_311 = arith.constant 0 : index
    %c0_312 = arith.constant 0 : index
    %625 = vector.load %arg13[%c0_310, %c0_311, %c0_312] : memref<2x8x128xf32, #tpu.memory_space<vmem>>, vector<1x8x128xf32>
    %626 = vector.shape_cast %625 : vector<1x8x128xf32> to vector<8x128xf32>
    %627 = arith.truncf %626 : vector<8x128xf32> to vector<8x128xbf16>
    %c0_313 = arith.constant 0 : index
    %c0_314 = arith.constant 0 : index
    %628 = vector.load %arg3[%c0_313, %c0_314] : memref<128x512xbf16, #tpu.memory_space<vmem>>, vector<128x512xbf16>
    %cst_315 = arith.constant dense<0.000000e+00> : vector<8x512xf32>
    %629 = tpu.matmul %627, %628, %cst_315 {dimension_numbers = #tpu.dot_dimension_numbers<[1], [0], [0], [1], [0, 0, 1, 1], [], []>} : vector<8x128xbf16>, vector<128x512xbf16>, vector<8x512xf32> -> vector<8x512xf32>
    %630 = arith.addf %624, %629 : vector<8x512xf32>
    %c0_316 = arith.constant 0 : index
    %c0_317 = arith.constant 0 : index
    %c0_318 = arith.constant 0 : index
    %631 = vector.load %arg14[%c0_316, %c0_317, %c0_318] : memref<2x8x128xf32, #tpu.memory_space<vmem>>, vector<1x8x128xf32>
    %632 = vector.shape_cast %631 : vector<1x8x128xf32> to vector<8x128xf32>
    %633 = vector.extract_strided_slice %630 {offsets = [0, 0], sizes = [8, 128], strides = [1, 1]} : vector<8x512xf32> to vector<8x128xf32>
    %634 = arith.negf %633 : vector<8x128xf32>
    %635 = math.exp %634 : vector<8x128xf32>
    %cst_319 = arith.constant 1.000000e+00 : f32
    %636 = vector.broadcast %cst_319 : f32 to vector<8x128xf32>
    %637 = arith.addf %636, %635 : vector<8x128xf32>
    %638 = arith.divf %636, %637 : vector<8x128xf32>
    %639 = vector.extract_strided_slice %630 {offsets = [0, 128], sizes = [8, 128], strides = [1, 1]} : vector<8x512xf32> to vector<8x128xf32>
    %640 = arith.negf %639 : vector<8x128xf32>
    %641 = math.exp %640 : vector<8x128xf32>
    %cst_320 = arith.constant 1.000000e+00 : f32
    %642 = vector.broadcast %cst_320 : f32 to vector<8x128xf32>
    %643 = arith.addf %642, %641 : vector<8x128xf32>
    %644 = arith.divf %642, %643 : vector<8x128xf32>
    %645 = vector.extract_strided_slice %630 {offsets = [0, 256], sizes = [8, 128], strides = [1, 1]} : vector<8x512xf32> to vector<8x128xf32>
    %646 = math.tanh %645 : vector<8x128xf32>
    %647 = vector.extract_strided_slice %630 {offsets = [0, 384], sizes = [8, 128], strides = [1, 1]} : vector<8x512xf32> to vector<8x128xf32>
    %648 = arith.negf %647 : vector<8x128xf32>
    %649 = math.exp %648 : vector<8x128xf32>
    %cst_321 = arith.constant 1.000000e+00 : f32
    %650 = vector.broadcast %cst_321 : f32 to vector<8x128xf32>
    %651 = arith.addf %650, %649 : vector<8x128xf32>
    %652 = arith.divf %650, %651 : vector<8x128xf32>
    %653 = arith.mulf %644, %632 : vector<8x128xf32>
    %654 = arith.mulf %638, %646 : vector<8x128xf32>
    %655 = arith.addf %653, %654 : vector<8x128xf32>
    %656 = math.tanh %655 : vector<8x128xf32>
    %657 = arith.mulf %652, %656 : vector<8x128xf32>
    %c0_322 = arith.constant 0 : index
    %c0_323 = arith.constant 0 : index
    %c0_324 = arith.constant 0 : index
    %658 = vector.load %arg13[%c0_322, %c0_323, %c0_324] : memref<2x8x128xf32, #tpu.memory_space<vmem>>, vector<1x8x128xf32>
    %659 = vector.shape_cast %658 : vector<1x8x128xf32> to vector<8x128xf32>
    %660 = vector.shape_cast %657 : vector<8x128xf32> to vector<1x8x128xf32>
    tpu.vector_store %arg13[%c0_322, %c0_323, %c0_324], %660 {strides = array<i32>} : memref<2x8x128xf32, #tpu.memory_space<vmem>>, vector<1x8x128xf32>,
    %c0_325 = arith.constant 0 : index
    %c0_326 = arith.constant 0 : index
    %c0_327 = arith.constant 0 : index
    %661 = vector.load %arg14[%c0_325, %c0_326, %c0_327] : memref<2x8x128xf32, #tpu.memory_space<vmem>>, vector<1x8x128xf32>
    %662 = vector.shape_cast %661 : vector<1x8x128xf32> to vector<8x128xf32>
    %663 = vector.shape_cast %655 : vector<8x128xf32> to vector<1x8x128xf32>
    tpu.vector_store %arg14[%c0_325, %c0_326, %c0_327], %663 {strides = array<i32>} : memref<2x8x128xf32, #tpu.memory_space<vmem>>, vector<1x8x128xf32>,
    %c1_328 = arith.constant 1 : index
    %c0_329 = arith.constant 0 : index
    %c0_330 = arith.constant 0 : index
    %664 = vector.load %arg13[%c1_328, %c0_329, %c0_330] : memref<2x8x128xf32, #tpu.memory_space<vmem>>, vector<1x8x128xf32>
    %665 = vector.shape_cast %664 : vector<1x8x128xf32> to vector<8x128xf32>
    %666 = arith.truncf %657 : vector<8x128xf32> to vector<8x128xbf16>
    %c0_331 = arith.constant 0 : index
    %c0_332 = arith.constant 0 : index
    %667 = vector.load %arg5[%c0_331, %c0_332] : memref<128x512xbf16, #tpu.memory_space<vmem>>, vector<128x512xbf16>
    %cst_333 = arith.constant dense<0.000000e+00> : vector<8x512xf32>
    %668 = tpu.matmul %666, %667, %cst_333 {dimension_numbers = #tpu.dot_dimension_numbers<[1], [0], [0], [1], [0, 0, 1, 1], [], []>} : vector<8x128xbf16>, vector<128x512xbf16>, vector<8x512xf32> -> vector<8x512xf32>
    %669 = arith.truncf %665 : vector<8x128xf32> to vector<8x128xbf16>
    %c0_334 = arith.constant 0 : index
    %c0_335 = arith.constant 0 : index
    %670 = vector.load %arg6[%c0_334, %c0_335] : memref<128x512xbf16, #tpu.memory_space<vmem>>, vector<128x512xbf16>
    %cst_336 = arith.constant dense<0.000000e+00> : vector<8x512xf32>
    %671 = tpu.matmul %669, %670, %cst_336 {dimension_numbers = #tpu.dot_dimension_numbers<[1], [0], [0], [1], [0, 0, 1, 1], [], []>} : vector<8x128xbf16>, vector<128x512xbf16>, vector<8x512xf32> -> vector<8x512xf32>
    %672 = arith.addf %668, %671 : vector<8x512xf32>
    %673 = arith.addf %672, %6 : vector<8x512xf32>
    %c1_337 = arith.constant 1 : index
    %c0_338 = arith.constant 0 : index
    %c0_339 = arith.constant 0 : index
    %674 = vector.load %arg14[%c1_337, %c0_338, %c0_339] : memref<2x8x128xf32, #tpu.memory_space<vmem>>, vector<1x8x128xf32>
    %675 = vector.shape_cast %674 : vector<1x8x128xf32> to vector<8x128xf32>
    %676 = vector.extract_strided_slice %673 {offsets = [0, 0], sizes = [8, 128], strides = [1, 1]} : vector<8x512xf32> to vector<8x128xf32>
    %677 = arith.negf %676 : vector<8x128xf32>
    %678 = math.exp %677 : vector<8x128xf32>
    %cst_340 = arith.constant 1.000000e+00 : f32
    %679 = vector.broadcast %cst_340 : f32 to vector<8x128xf32>
    %680 = arith.addf %679, %678 : vector<8x128xf32>
    %681 = arith.divf %679, %680 : vector<8x128xf32>
    %682 = vector.extract_strided_slice %673 {offsets = [0, 128], sizes = [8, 128], strides = [1, 1]} : vector<8x512xf32> to vector<8x128xf32>
    %683 = arith.negf %682 : vector<8x128xf32>
    %684 = math.exp %683 : vector<8x128xf32>
    %cst_341 = arith.constant 1.000000e+00 : f32
    %685 = vector.broadcast %cst_341 : f32 to vector<8x128xf32>
    %686 = arith.addf %685, %684 : vector<8x128xf32>
    %687 = arith.divf %685, %686 : vector<8x128xf32>
    %688 = vector.extract_strided_slice %673 {offsets = [0, 256], sizes = [8, 128], strides = [1, 1]} : vector<8x512xf32> to vector<8x128xf32>
    %689 = math.tanh %688 : vector<8x128xf32>
    %690 = vector.extract_strided_slice %673 {offsets = [0, 384], sizes = [8, 128], strides = [1, 1]} : vector<8x512xf32> to vector<8x128xf32>
    %691 = arith.negf %690 : vector<8x128xf32>
    %692 = math.exp %691 : vector<8x128xf32>
    %cst_342 = arith.constant 1.000000e+00 : f32
    %693 = vector.broadcast %cst_342 : f32 to vector<8x128xf32>
    %694 = arith.addf %693, %692 : vector<8x128xf32>
    %695 = arith.divf %693, %694 : vector<8x128xf32>
    %696 = arith.mulf %687, %675 : vector<8x128xf32>
    %697 = arith.mulf %681, %689 : vector<8x128xf32>
    %698 = arith.addf %696, %697 : vector<8x128xf32>
    %699 = math.tanh %698 : vector<8x128xf32>
    %700 = arith.mulf %695, %699 : vector<8x128xf32>
    %c1_343 = arith.constant 1 : index
    %c0_344 = arith.constant 0 : index
    %c0_345 = arith.constant 0 : index
    %701 = vector.load %arg13[%c1_343, %c0_344, %c0_345] : memref<2x8x128xf32, #tpu.memory_space<vmem>>, vector<1x8x128xf32>
    %702 = vector.shape_cast %701 : vector<1x8x128xf32> to vector<8x128xf32>
    %703 = vector.shape_cast %700 : vector<8x128xf32> to vector<1x8x128xf32>
    tpu.vector_store %arg13[%c1_343, %c0_344, %c0_345], %703 {strides = array<i32>} : memref<2x8x128xf32, #tpu.memory_space<vmem>>, vector<1x8x128xf32>,
    %c1_346 = arith.constant 1 : index
    %c0_347 = arith.constant 0 : index
    %c0_348 = arith.constant 0 : index
    %704 = vector.load %arg14[%c1_346, %c0_347, %c0_348] : memref<2x8x128xf32, #tpu.memory_space<vmem>>, vector<1x8x128xf32>
    %705 = vector.shape_cast %704 : vector<1x8x128xf32> to vector<8x128xf32>
    %706 = vector.shape_cast %698 : vector<8x128xf32> to vector<1x8x128xf32>
    tpu.vector_store %arg14[%c1_346, %c0_347, %c0_348], %706 {strides = array<i32>} : memref<2x8x128xf32, #tpu.memory_space<vmem>>, vector<1x8x128xf32>,
    %c8_i32_349 = arith.constant 8 : i32
    %c1_i32_350 = arith.constant 1 : i32
    %c1_351 = arith.constant 1 : index
    %c0_352 = arith.constant 0 : index
    %c0_353 = arith.constant 0 : index
    %707 = vector.load %arg13[%c1_351, %c0_352, %c0_353] : memref<2x8x128xf32, #tpu.memory_space<vmem>>, vector<1x8x128xf32>
    %708 = vector.shape_cast %707 : vector<1x8x128xf32> to vector<8x128xf32>
    %c0_354 = arith.constant 0 : index
    %c0_355 = arith.constant 0 : index
    %709 = vector.load %arg8[%c0_354, %c0_355] : memref<1x128xf32, #tpu.memory_space<vmem>>, vector<1x128xf32>
    %710 = vector.broadcast %709 : vector<1x128xf32> to vector<8x128xf32>
    %711 = arith.mulf %708, %710 : vector<8x128xf32>
    %cst_356 = arith.constant dense<0.000000e+00> : vector<8xf32>
    %712 = vector.multi_reduction <add>, %711, %cst_356 [1] : vector<8x128xf32> to vector<8xf32>
    %713 = vector.shape_cast %712 : vector<8xf32> to vector<8x1xf32>
    %c0_357 = arith.constant 0 : index
    %c0_358 = arith.constant 0 : index
    %714 = vector.load %arg9[%c0_357, %c0_358] : memref<1x1xf32, #tpu.memory_space<vmem>>, vector<1x1xf32>
    %715 = vector.broadcast %714 : vector<1x1xf32> to vector<8x1xf32>
    %716 = arith.addf %713, %715 : vector<8x1xf32>
    %717 = arith.negf %716 : vector<8x1xf32>
    %718 = math.exp %717 : vector<8x1xf32>
    %cst_359 = arith.constant 1.000000e+00 : f32
    %719 = vector.broadcast %cst_359 : f32 to vector<8x1xf32>
    %720 = arith.addf %719, %718 : vector<8x1xf32>
    %721 = arith.divf %719, %720 : vector<8x1xf32>
    %c0_360 = arith.constant 0 : index
    %c0_361 = arith.constant 0 : index
    %722 = vector.load %arg12[%c0_360, %c0_361] : memref<8x1xf32, #tpu.memory_space<vmem>>, vector<8x1xf32>
    tpu.vector_store %arg12[%c0_360, %c0_361], %721 {strides = array<i32>} : memref<8x1xf32, #tpu.memory_space<vmem>>, vector<8x1xf32>,
    return
  }
  func.func @transform_0(%arg0: i32) -> (i32, i32, i32) {
    %c0_i32 = arith.constant 0 : i32
    %c0_i32_0 = arith.constant 0 : i32
    %c0_i32_1 = arith.constant 0 : i32
    return %c0_i32, %arg0, %c0_i32_0 : i32, i32, i32
  }
  func.func @transform_1(%arg0: i32) -> (i32, i32) {
    %c0_i32 = arith.constant 0 : i32
    %c0_i32_0 = arith.constant 0 : i32
    %c0_i32_1 = arith.constant 0 : i32
    return %c0_i32, %c0_i32_0 : i32, i32
  }
  func.func @transform_2(%arg0: i32) -> (i32, i32) {
    %c0_i32 = arith.constant 0 : i32
    %c0_i32_0 = arith.constant 0 : i32
    %c0_i32_1 = arith.constant 0 : i32
    return %c0_i32, %c0_i32_0 : i32, i32
  }
  func.func @transform_3(%arg0: i32) -> (i32, i32) {
    %c0_i32 = arith.constant 0 : i32
    %c0_i32_0 = arith.constant 0 : i32
    %c0_i32_1 = arith.constant 0 : i32
    return %c0_i32, %c0_i32_0 : i32, i32
  }
  func.func @transform_4(%arg0: i32) -> (i32, i32) {
    %c0_i32 = arith.constant 0 : i32
    %c0_i32_0 = arith.constant 0 : i32
    %c0_i32_1 = arith.constant 0 : i32
    return %c0_i32, %c0_i32_0 : i32, i32
  }
  func.func @transform_5(%arg0: i32) -> (i32, i32) {
    %c0_i32 = arith.constant 0 : i32
    %c0_i32_0 = arith.constant 0 : i32
    %c0_i32_1 = arith.constant 0 : i32
    return %c0_i32, %c0_i32_0 : i32, i32
  }
  func.func @transform_6(%arg0: i32) -> (i32, i32) {
    %c0_i32 = arith.constant 0 : i32
    %c0_i32_0 = arith.constant 0 : i32
    %c0_i32_1 = arith.constant 0 : i32
    return %c0_i32, %c0_i32_0 : i32, i32
  }
  func.func @transform_7(%arg0: i32) -> (i32, i32) {
    %c0_i32 = arith.constant 0 : i32
    %c0_i32_0 = arith.constant 0 : i32
    %c0_i32_1 = arith.constant 0 : i32
    return %c0_i32, %c0_i32_0 : i32, i32
  }
  func.func @transform_8(%arg0: i32) -> (i32, i32) {
    %c0_i32 = arith.constant 0 : i32
    %c0_i32_0 = arith.constant 0 : i32
    %c0_i32_1 = arith.constant 0 : i32
    return %c0_i32, %c0_i32_0 : i32, i32
  }
  func.func @transform_9(%arg0: i32) -> (i32, i32, i32) {
    %c0_i32 = arith.constant 0 : i32
    %c0_i32_0 = arith.constant 0 : i32
    %c0_i32_1 = arith.constant 0 : i32
    return %c0_i32, %arg0, %c0_i32_0 : i32, i32, i32
  }
  func.func @transform_10(%arg0: i32) -> (i32, i32, i32) {
    %c0_i32 = arith.constant 0 : i32
    %c0_i32_0 = arith.constant 0 : i32
    %c0_i32_1 = arith.constant 0 : i32
    return %c0_i32, %arg0, %c0_i32_0 : i32, i32, i32
  }
  func.func @transform_11(%arg0: i32) -> (i32, i32) {
    %c0_i32 = arith.constant 0 : i32
    %c0_i32_0 = arith.constant 0 : i32
    return %arg0, %c0_i32 : i32, i32
  }
  func.func @transform_12(%arg0: i32) -> (i32, i32, i32) {
    %c0_i32 = arith.constant 0 : i32
    %c0_i32_0 = arith.constant 0 : i32
    %c0_i32_1 = arith.constant 0 : i32
    return %c0_i32, %arg0, %c0_i32_0 : i32, i32, i32
  }
  func.func @transform_13(%arg0: i32) -> (i32, i32, i32) {
    %c0_i32 = arith.constant 0 : i32
    %c0_i32_0 = arith.constant 0 : i32
    %c0_i32_1 = arith.constant 0 : i32
    return %c0_i32, %arg0, %c0_i32_0 : i32, i32, i32
  }
}

</mosaic_0001>

<llo_original>
// kernel: tpu_custom_call.1
$region0: #{tpu_custom_call.1}
  #allocation0 [shape = 'u32[]', space=smem, size = 0x4, offset = 0x4, fixed_abs, tag = 'smem constant byte address 0x4 - core index']
  #allocation1 [shape = 'u32[144,128]{1,0:T(1,128)}', space=vmem, size = 0x12000, scoped, tag = 'internal scratch']
  #allocation2 [shape = 'f32[64,512]{1,0:T(8,128)}', space=vmem, size = 0x20000, scoped, tag = 'scratch operand']
  #allocation3 [shape = 'f32[1,1]{1,0:T(1,128)S(1)}', space=vmem, size = 0x200, scoped, tag = 'scoped memory for tpu_custom_call.1']
  %s0 = inlined_call_operand.hbm [shape: f32[8,8,64], index: 0, kind: input, shape index: {}]
  %s1 = inlined_call_operand.hbm [shape: bf16[64,512], index: 1, kind: input, shape index: {}]
  %s2 = inlined_call_operand.hbm [shape: bf16[128,512], index: 2, kind: input, shape index: {}]
  %s3 = inlined_call_operand.hbm [shape: f32[1,512], index: 3, kind: input, shape index: {}]
  %s4 = inlined_call_operand.hbm [shape: bf16[128,512], index: 4, kind: input, shape index: {}]
  %s5 = inlined_call_operand.hbm [shape: bf16[128,512], index: 5, kind: input, shape index: {}]
  %s6 = inlined_call_operand.hbm [shape: f32[1,512], index: 6, kind: input, shape index: {}]
  %s7 = inlined_call_operand.vmem [shape: f32[1,128], index: 7, kind: input, shape index: {}]
  %s8 = inlined_call_operand.<no memory space> [shape: f32[1,1], index: 8, kind: input, shape index: {}]
  %s9 = inlined_call_operand.vmem [shape: f32[2,8,128], index: 9, kind: input, shape index: {}]
  %s10 = inlined_call_operand.vmem [shape: f32[2,8,128], index: 10, kind: input, shape index: {}]
  %s11 = inlined_call_operand.vmem [shape: f32[8,1], index: 11, kind: output, shape index: {0}]
  %s12 = inlined_call_operand.hbm [shape: f32[2,8,128], index: 12, kind: output, shape index: {1}]
  %s13 = inlined_call_operand.hbm [shape: f32[2,8,128], index: 13, kind: output, shape index: {2}]
  %14 = xla_tuple %s11, %s12, %s13
  %s15 = sld [smem:[#allocation0]]
  $region98: #{tpu_custom_call.1} parent=0
    _
  %s17 = ssub.s32 1, %s15
  %s18 = scalar_select 0, %s17, %s15
  %v19 = vstv %s8
  %20 = vst [vmem:[#allocation3] sm:$0x1] %v19
  $region1: #{tpu_custom_call.1} parent=0
    #allocation4 [shape = 'u8[32768]{0}', space=vmem, size = 0x8000, scoped, tag = 'input window, operand 0, single buffered']
    #allocation5 [shape = 's32[1]{0}', space=sflag, size = 0x4, scoped, tag = 'scoped memory for tpu_custom_call.1']
    #allocation6 [shape = 's32[1]{0}', space=sflag, size = 0x4, scoped, tag = 'scoped memory for tpu_custom_call.1']
    #allocation7 [shape = 'u8[65536]{0}', space=vmem, size = 0x10000, scoped, tag = 'input window, operand 1, single buffered']
    #allocation8 [shape = 's32[1]{0}', space=sflag, size = 0x4, scoped, tag = 'scoped memory for tpu_custom_call.1']
    #allocation9 [shape = 'u8[131072]{0}', space=vmem, size = 0x20000, scoped, tag = 'input window, operand 2, single buffered']
    #allocation10 [shape = 'u8[2048]{0}', space=vmem, size = 0x800, scoped, tag = 'input window, operand 3, single buffered']
    #allocation11 [shape = 's32[1]{0}', space=sflag, size = 0x4, scoped, tag = 'scoped memory for tpu_custom_call.1']
    #allocation12 [shape = 'u8[131072]{0}', space=vmem, size = 0x20000, scoped, tag = 'input window, operand 4, single buffered']
    #allocation13 [shape = 'u8[131072]{0}', space=vmem, size = 0x20000, scoped, tag = 'input window, operand 5, single buffered']
    #allocation14 [shape = 's32[1]{0}', space=sflag, size = 0x4, scoped, tag = 'scoped memory for tpu_custom_call.1']
    #allocation15 [shape = 'u8[2048]{0}', space=vmem, size = 0x800, scoped, tag = 'input window, operand 6, single buffered']
    #allocation16 [shape = 'u8[8192]{0}', space=vmem, size = 0x2000, scoped, tag = 'output window, operand 1, single buffered']
    #allocation17 [shape = 'u8[8192]{0}', space=vmem, size = 0x2000, scoped, tag = 'output window, operand 2, single buffered']
    #allocation18 [shape = 's32[1]{0}', space=sflag, size = 0x4, scoped, tag = 'scoped memory for tpu_custom_call.1']
    %21 = vsyncpa [#allocation5], 0
    %22 = vsyncpa [#allocation8], 0
    %23 = vsyncpa [#allocation11], 0
    %24 = vsyncpa [#allocation14], 0
    %25 = vsyncpa [#allocation6], 0
    %26 = vsyncpa [#allocation18], 0
    // Predicated region
    $region2: #{tpu_custom_call.1} parent=1 // pred_check
      _
    $region3: #{tpu_custom_call.1} parent=1 // pred_check_branch
      %28 = sbr.rel (0) target = $region5
    $region4: #{tpu_custom_call.1} parent=1 // pred_region
      %s30 = ssub.s32 1024, 1024
      %31 = vsyncadd [#allocation5], %s30
      %s32 = sshll.u32 [#allocation4], 4
      %s33 = int_to_ptr.vmem [resolvable:$true] %s32
      %38 = dma.hbm_to_vmem [thread:$0]  %s0, 1024, %s33, [#allocation5], 128, 128, 8
    $region5: #{tpu_custom_call.1} parent=1 // pred_fallthru
      _
    // Predicated region
    $region6: #{tpu_custom_call.1} parent=1 // pred_check
      _
    $region7: #{tpu_custom_call.1} parent=1 // pred_check_branch
      %40 = sbr.rel (0) target = $region9
    $region8: #{tpu_custom_call.1} parent=1 // pred_region
      %s42 = ssub.s32 2048, 2048
      %43 = vsyncadd [#allocation8], %s42
      %s44 = sshll.u32 [#allocation7], 4
      %s45 = int_to_ptr.vmem [resolvable:$true] %s44
      %50 = dma.hbm_to_vmem [thread:$0]  %s1, 2048, %s45, [#allocation8], 256, 256, 16
    $region9: #{tpu_custom_call.1} parent=1 // pred_fallthru
      _
    // Predicated region
    $region10: #{tpu_custom_call.1} parent=1 // pred_check
      _
    $region11: #{tpu_custom_call.1} parent=1 // pred_check_branch
      %52 = sbr.rel (0) target = $region13
    $region12: #{tpu_custom_call.1} parent=1 // pred_region
      %s54 = ssub.s32 4096, 4096
      %55 = vsyncadd [#allocation8], %s54
      %s56 = sshll.u32 [#allocation9], 4
      %s57 = int_to_ptr.vmem [resolvable:$true] %s56
      %62 = dma.hbm_to_vmem [thread:$0]  %s2, 4096, %s57, [#allocation8], 256, 256, 16
    $region13: #{tpu_custom_call.1} parent=1 // pred_fallthru
      _
    // Predicated region
    $region14: #{tpu_custom_call.1} parent=1 // pred_check
      _
    $region15: #{tpu_custom_call.1} parent=1 // pred_check_branch
      %64 = sbr.rel (0) target = $region17
    $region16: #{tpu_custom_call.1} parent=1 // pred_region
      %s66 = ssub.s32 64, 64
      %67 = vsyncadd [#allocation11], %s66
      %s69 = sshll.u32 [#allocation10], 4
      %s70 = int_to_ptr.vmem [resolvable:$true] %s69
      %72 = dma.hbm_to_vmem [thread:$0]  %s3, 64, %s70, [#allocation11]
    $region17: #{tpu_custom_call.1} parent=1 // pred_fallthru
      _
    // Predicated region
    $region18: #{tpu_custom_call.1} parent=1 // pred_check
      _
    $region19: #{tpu_custom_call.1} parent=1 // pred_check_branch
      %74 = sbr.rel (0) target = $region21
    $region20: #{tpu_custom_call.1} parent=1 // pred_region
      %s76 = ssub.s32 4096, 4096
      %77 = vsyncadd [#allocation11], %s76
      %s78 = sshll.u32 [#allocation12], 4
      %s79 = int_to_ptr.vmem [resolvable:$true] %s78
      %84 = dma.hbm_to_vmem [thread:$0]  %s4, 4096, %s79, [#allocation11], 256, 256, 16
    $region21: #{tpu_custom_call.1} parent=1 // pred_fallthru
      _
    // Predicated region
    $region22: #{tpu_custom_call.1} parent=1 // pred_check
      _
    $region23: #{tpu_custom_call.1} parent=1 // pred_check_branch
      %86 = sbr.rel (0) target = $region25
    $region24: #{tpu_custom_call.1} parent=1 // pred_region
      %s88 = ssub.s32 4096, 4096
      %89 = vsyncadd [#allocation14], %s88
      %s90 = sshll.u32 [#allocation13], 4
      %s91 = int_to_ptr.vmem [resolvable:$true] %s90
      %96 = dma.hbm_to_vmem [thread:$0]  %s5, 4096, %s91, [#allocation14], 256, 256, 16
    $region25: #{tpu_custom_call.1} parent=1 // pred_fallthru
      _
    // Predicated region
    $region26: #{tpu_custom_call.1} parent=1 // pred_check
      _
    $region27: #{tpu_custom_call.1} parent=1 // pred_check_branch
      %98 = sbr.rel (0) target = $region29
    $region28: #{tpu_custom_call.1} parent=1 // pred_region
      %s100 = ssub.s32 64, 64
      %101 = vsyncadd [#allocation14], %s100
      %s103 = sshll.u32 [#allocation15], 4
      %s104 = int_to_ptr.vmem [resolvable:$true] %s103
      %106 = dma.hbm_to_vmem [thread:$0]  %s6, 64, %s104, [#allocation14]
    $region29: #{tpu_custom_call.1} parent=1 // pred_fallthru
      _
    // Predicated region
    $region30: #{tpu_custom_call.1} parent=1 // pred_check
      _
    $region31: #{tpu_custom_call.1} parent=1 // pred_check_branch
      %108 = sbr.rel (0) target = $region33
    $region32: #{tpu_custom_call.1} parent=1 // pred_region
      _
    $region33: #{tpu_custom_call.1} parent=1 // pred_fallthru
      _
    // Predicated region
    $region34: #{tpu_custom_call.1} parent=1 // pred_check
      _
    $region35: #{tpu_custom_call.1} parent=1 // pred_check_branch
      %110 = sbr.rel (0) target = $region37
    $region36: #{tpu_custom_call.1} parent=1 // pred_region
      _
    $region37: #{tpu_custom_call.1} parent=1 // pred_fallthru
      _
    // Predicated region
    $region38: #{tpu_custom_call.1} parent=1 // pred_check
      _
    $region39: #{tpu_custom_call.1} parent=1 // pred_check_branch
      %112 = sbr.rel (0) target = $region41
    $region40: #{tpu_custom_call.1} parent=1 // pred_region
      _
    $region41: #{tpu_custom_call.1} parent=1 // pred_fallthru
      _
    // Predicated region
    $region42: #{tpu_custom_call.1} parent=1 // pred_check
      _
    $region43: #{tpu_custom_call.1} parent=1 // pred_check_branch
      %114 = sbr.rel (0) target = $region45
    $region44: #{tpu_custom_call.1} parent=1 // pred_region
      _
    $region45: #{tpu_custom_call.1} parent=1 // pred_fallthru
      _
    // Predicated region
    $region46: #{tpu_custom_call.1} parent=1 // pred_check
      _
    $region47: #{tpu_custom_call.1} parent=1 // pred_check_branch
      %116 = sbr.rel (0) target = $region49
    $region48: #{tpu_custom_call.1} parent=1 // pred_region
      %117 = dma.done [#allocation5], 1024
    $region49: #{tpu_custom_call.1} parent=1 // pred_fallthru
      _
    // Predicated region
    $region50: #{tpu_custom_call.1} parent=1 // pred_check
      _
    $region51: #{tpu_custom_call.1} parent=1 // pred_check_branch
      %119 = sbr.rel (0) target = $region53
    $region52: #{tpu_custom_call.1} parent=1 // pred_region
      %120 = dma.done [#allocation8], 2048
    $region53: #{tpu_custom_call.1} parent=1 // pred_fallthru
      _
    // Predicated region
    $region54: #{tpu_custom_call.1} parent=1 // pred_check
      _
    $region55: #{tpu_custom_call.1} parent=1 // pred_check_branch
      %122 = sbr.rel (0) target = $region57
    $region56: #{tpu_custom_call.1} parent=1 // pred_region
      %123 = dma.done [#allocation8], 4096
    $region57: #{tpu_custom_call.1} parent=1 // pred_fallthru
      _
    // Predicated region
    $region58: #{tpu_custom_call.1} parent=1 // pred_check
      _
    $region59: #{tpu_custom_call.1} parent=1 // pred_check_branch
      %125 = sbr.rel (0) target = $region61
    $region60: #{tpu_custom_call.1} parent=1 // pred_region
      %126 = dma.done [#allocation11], 64
    $region61: #{tpu_custom_call.1} parent=1 // pred_fallthru
      _
    // Predicated region
    $region62: #{tpu_custom_call.1} parent=1 // pred_check
      _
    $region63: #{tpu_custom_call.1} parent=1 // pred_check_branch
      %128 = sbr.rel (0) target = $region65
    $region64: #{tpu_custom_call.1} parent=1 // pred_region
      %129 = dma.done [#allocation11], 4096
    $region65: #{tpu_custom_call.1} parent=1 // pred_fallthru
      _
    // Predicated region
    $region66: #{tpu_custom_call.1} parent=1 // pred_check
      _
    $region67: #{tpu_custom_call.1} parent=1 // pred_check_branch
      %131 = sbr.rel (0) target = $region69
    $region68: #{tpu_custom_call.1} parent=1 // pred_region
      %132 = dma.done [#allocation14], 4096
    $region69: #{tpu_custom_call.1} parent=1 // pred_fallthru
      _
    // Predicated region
    $region70: #{tpu_custom_call.1} parent=1 // pred_check
      _
    $region71: #{tpu_custom_call.1} parent=1 // pred_check_branch
      %134 = sbr.rel (0) target = $region73
    $region72: #{tpu_custom_call.1} parent=1 // pred_region
      %135 = dma.done [#allocation14], 64
    $region73: #{tpu_custom_call.1} parent=1 // pred_fallthru
      _
    %v137 = vld [vmem:[%s9] sm:$0xff]
    %v138 = vld [vmem:[%s9 + $0x8] sm:$0xff]
    %139 = vst [vmem:[#allocation16] sm:$0xff] %v137
    %140 = vst [vmem:[#allocation16 + $0x8] sm:$0xff] %v138
    %v141 = vld [vmem:[%s10] sm:$0xff]
    %v142 = vld [vmem:[%s10 + $0x8] sm:$0xff]
    %143 = vst [vmem:[#allocation17] sm:$0xff] %v141
    %144 = vst [vmem:[#allocation17 + $0x8] sm:$0xff] %v142
    %v145 = vld [vmem:[#allocation15] sm:$0xf]
    %v147 = vlaneseq
    %v148 = vshrl.u32 %v147, 7
    %v149 = vsub.s32 0, %v148
    %v150 = vrot.slane %v145, %v149
    %v151 = vlaneseq
    %v152 = vshrl.u32 %v151, 7
    %v153 = vsub.s32 1, %v152
    %v154 = vrot.slane %v145, %v153
    %v155 = vlaneseq
    %v156 = vshrl.u32 %v155, 7
    %v157 = vsub.s32 2, %v156
    %v158 = vrot.slane %v145, %v157
    %v159 = vlaneseq
    %v160 = vshrl.u32 %v159, 7
    %v161 = vsub.s32 3, %v160
    %v162 = vrot.slane %v145, %v161
    %s167 = smul.u32 0, 8
    %s168 = scalar_lea.vmem [#allocation4], %s167
    %v169 = vld [vmem:[%s168] sm:$0xff]
    %v170 = vld [vmem:[%s168 + $0x8] sm:$0xff]
    %v171 = vld [vmem:[%s168 + $0x10] sm:$0xff]
    %v172 = vld [vmem:[%s168 + $0x18] sm:$0xff]
    %v173 = vld [vmem:[%s168 + $0x20] sm:$0xff]
    %v174 = vld [vmem:[%s168 + $0x28] sm:$0xff]
    %v175 = vld [vmem:[%s168 + $0x30] sm:$0xff]
    %v176 = vld [vmem:[%s168 + $0x38] sm:$0xff]
    %v177 = vpack.c.bf16 %v170, %v169
    %v178 = vpack.c.bf16 %v172, %v171
    %v179 = vpack.c.bf16 %v174, %v173
    %v180 = vpack.c.bf16 %v176, %v175
    %v181 = vld [vmem:[#allocation7] sm:$0xff]
    %v182 = vld [vmem:[#allocation7 + $0x8] sm:$0xff]
    %v183 = vld [vmem:[#allocation7 + $0x10] sm:$0xff]
    %v184 = vld [vmem:[#allocation7 + $0x18] sm:$0xff]
    %v185 = vld [vmem:[#allocation7 + $0x20] sm:$0xff]
    %v186 = vld [vmem:[#allocation7 + $0x28] sm:$0xff]
    %v187 = vld [vmem:[#allocation7 + $0x30] sm:$0xff]
    %v188 = vld [vmem:[#allocation7 + $0x38] sm:$0xff]
    %v189 = vld [vmem:[#allocation7 + $0x40] sm:$0xff]
    %v190 = vld [vmem:[#allocation7 + $0x48] sm:$0xff]
    %v191 = vld [vmem:[#allocation7 + $0x50] sm:$0xff]
    %v192 = vld [vmem:[#allocation7 + $0x58] sm:$0xff]
    %v193 = vld [vmem:[#allocation7 + $0x60] sm:$0xff]
    %v194 = vld [vmem:[#allocation7 + $0x68] sm:$0xff]
    %v195 = vld [vmem:[#allocation7 + $0x70] sm:$0xff]
    %v196 = vld [vmem:[#allocation7 + $0x78] sm:$0xff]
    %v197 = vld [vmem:[#allocation10] sm:$0xf]
    %v199 = vlaneseq
    %v200 = vshrl.u32 %v199, 7
    %v201 = vsub.s32 0, %v200
    %v202 = vrot.slane %v197, %v201
    %v203 = vlaneseq
    %v204 = vshrl.u32 %v203, 7
    %v205 = vsub.s32 1, %v204
    %v206 = vrot.slane %v197, %v205
    %v207 = vlaneseq
    %v208 = vshrl.u32 %v207, 7
    %v209 = vsub.s32 2, %v208
    %v210 = vrot.slane %v197, %v209
    %v211 = vlaneseq
    %v212 = vshrl.u32 %v211, 7
    %v213 = vsub.s32 3, %v212
    %v214 = vrot.slane %v197, %v213
    %v235 = vunpack.c.l.b16 %v181
    %v236 = vunpack.c.h.b16 %v181
    %v237 = vunpack.c.l.b16 %v182
    %v238 = vunpack.c.h.b16 %v182
    %v239 = vunpack.c.l.b16 %v183
    %v240 = vunpack.c.h.b16 %v183
    %v241 = vunpack.c.l.b16 %v184
    %v242 = vunpack.c.h.b16 %v184
    %v243 = vunpack.c.l.b16 %v185
    %v244 = vunpack.c.h.b16 %v185
    %v245 = vunpack.c.l.b16 %v186
    %v246 = vunpack.c.h.b16 %v186
    %v247 = vunpack.c.l.b16 %v187
    %v248 = vunpack.c.h.b16 %v187
    %v249 = vunpack.c.l.b16 %v188
    %v250 = vunpack.c.h.b16 %v188
    %v251 = vunpack.c.l.b16 %v189
    %v252 = vunpack.c.h.b16 %v189
    %v253 = vunpack.c.l.b16 %v190
    %v254 = vunpack.c.h.b16 %v190
    %v255 = vunpack.c.l.b16 %v191
    %v256 = vunpack.c.h.b16 %v191
    %v257 = vunpack.c.l.b16 %v192
    %v258 = vunpack.c.h.b16 %v192
    %v259 = vunpack.c.l.b16 %v193
    %v260 = vunpack.c.h.b16 %v193
    %v261 = vunpack.c.l.b16 %v194
    %v262 = vunpack.c.h.b16 %v194
    %v263 = vunpack.c.l.b16 %v195
    %v264 = vunpack.c.h.b16 %v195
    %v265 = vunpack.c.l.b16 %v196
    %v266 = vunpack.c.h.b16 %v196
    %v267 = vpack.c.b16 %v239, %v235
    %v268 = vpack.c.b16 %v240, %v236
    %v269 = vpack.c.b16 %v241, %v237
    %v270 = vpack.c.b16 %v242, %v238
    %v271 = vpack.c.b16 %v247, %v243
    %v272 = vpack.c.b16 %v248, %v244
    %v273 = vpack.c.b16 %v249, %v245
    %v274 = vpack.c.b16 %v250, %v246
    %v275 = vpack.c.b16 %v255, %v251
    %v276 = vpack.c.b16 %v256, %v252
    %v277 = vpack.c.b16 %v257, %v253
    %v278 = vpack.c.b16 %v258, %v254
    %v279 = vpack.c.b16 %v263, %v259
    %v280 = vpack.c.b16 %v264, %v260
    %v281 = vpack.c.b16 %v265, %v261
    %v282 = vpack.c.b16 %v266, %v262
    %vm299 = vcmask 523264
    %v301 = vsel %vm299, %v177, 0
    %v304 = vsel %vm299, %v178, 0
    %v307 = vsel %vm299, %v179, 0
    %v310 = vsel %vm299, %v180, 0
    %312 = vmatprep.subr.bf16.mxu0 %v268
    %313 = vmatpush1.bf16.msra.mxu0 %v267
    %314 = vmatprep.subr.bf16.mxu0 %v272
    %315 = vmatpush1.bf16.msra.mxu0 %v271
    %316 = vmatprep.subr.bf16.mxu0 %v276
    %317 = vmatpush1.bf16.msra.mxu0 %v275
    %318 = vmatprep.subr.bf16.mxu0 %v280
    %319 = vmatpush1.bf16.msra.mxu0 %v279
    %320 = vmatprep.subr.bf16.mxu0 0
    %321 = vmatpush1.bf16.msra.mxu0 0
    %322 = vmatprep.subr.bf16.mxu0 0
    %323 = vmatpush1.bf16.msra.mxu0 0
    %324 = vmatprep.subr.bf16.mxu0 0
    %325 = vmatpush1.bf16.msra.mxu0 0
    %326 = vmatprep.subr.bf16.mxu0 0
    %327 = vmatpush1.bf16.msra.mxu0 0
    %328 = vmatprep.subr.bf16.mxu0 0
    %329 = vmatpush1.bf16.msra.mxu0 0
    %330 = vmatprep.subr.bf16.mxu0 0
    %331 = vmatpush1.bf16.msra.mxu0 0
    %332 = vmatprep.subr.bf16.mxu0 0
    %333 = vmatpush1.bf16.msra.mxu0 0
    %334 = vmatprep.subr.bf16.mxu0 0
    %335 = vmatpush1.bf16.msra.mxu0 0
    %336 = vmatprep.subr.bf16.mxu0 0
    %337 = vmatpush1.bf16.msra.mxu0 0
    %338 = vmatprep.subr.bf16.mxu0 0
    %339 = vmatpush1.bf16.msra.mxu0 0
    %340 = vmatprep.subr.bf16.mxu0 0
    %341 = vmatpush1.bf16.msra.mxu0 0
    %342 = vmatprep.subr.bf16.mxu0 0
    %343 = vmatpush1.bf16.msra.mxu0 0
    %344 = vmatprep.mubr.bf16.mxu0 0
    %345 = vmatmul.mubr.bf16.gmra.mrb[0].mxu0 %v301
    %v346 = vpop.f32.mrb[0].mxu0
    %v347 = vadd.f32 %v202, %v346
    %v348 = vpop.f32.mrb[0].mxu0
    %v349 = vadd.f32 %v206, %v348
    %v350 = vpop.f32.mrb[0].mxu0
    %v351 = vadd.f32 %v202, %v350
    %v352 = vpop.f32.mrb[0].mxu0
    %v353 = vadd.f32 %v206, %v352
    %354 = vmatprep.mubr.bf16.mxu0 0
    %355 = vmatmul.mubr.bf16.gmra.mrb[0].mxu0 %v304
    %v356 = vpop.f32.mrb[0].mxu0
    %v357 = vadd.f32 %v202, %v356
    %v358 = vpop.f32.mrb[0].mxu0
    %v359 = vadd.f32 %v206, %v358
    %v360 = vpop.f32.mrb[0].mxu0
    %v361 = vadd.f32 %v202, %v360
    %v362 = vpop.f32.mrb[0].mxu0
    %v363 = vadd.f32 %v206, %v362
    %364 = vmatprep.mubr.bf16.mxu0 0
    %365 = vmatmul.mubr.bf16.gmra.mrb[0].mxu0 %v307
    %v366 = vpop.f32.mrb[0].mxu0
    %v367 = vadd.f32 %v202, %v366
    %v368 = vpop.f32.mrb[0].mxu0
    %v369 = vadd.f32 %v206, %v368
    %v370 = vpop.f32.mrb[0].mxu0
    %v371 = vadd.f32 %v202, %v370
    %v372 = vpop.f32.mrb[0].mxu0
    %v373 = vadd.f32 %v206, %v372
    %374 = vmatprep.mubr.bf16.mxu0 0
    %375 = vmatmul.mubr.bf16.gmra.mrb[0].mxu0 %v310
    %v376 = vpop.f32.mrb[0].mxu0
    %v377 = vadd.f32 %v202, %v376
    %v378 = vpop.f32.mrb[0].mxu0
    %v379 = vadd.f32 %v206, %v378
    %v380 = vpop.f32.mrb[0].mxu0
    %v381 = vadd.f32 %v202, %v380
    %v382 = vpop.f32.mrb[0].mxu0
    %v383 = vadd.f32 %v206, %v382
    %384 = vdwg.mxu0
    %385 = vmatprep.subr.bf16.mxu0 %v270
    %386 = vmatpush1.bf16.msra.mxu0 %v269
    %387 = vmatprep.subr.bf16.mxu0 %v274
    %388 = vmatpush1.bf16.msra.mxu0 %v273
    %389 = vmatprep.subr.bf16.mxu0 %v278
    %390 = vmatpush1.bf16.msra.mxu0 %v277
    %391 = vmatprep.subr.bf16.mxu0 %v282
    %392 = vmatpush1.bf16.msra.mxu0 %v281
    %393 = vmatprep.subr.bf16.mxu0 0
    %394 = vmatpush1.bf16.msra.mxu0 0
    %395 = vmatprep.subr.bf16.mxu0 0
    %396 = vmatpush1.bf16.msra.mxu0 0
    %397 = vmatprep.subr.bf16.mxu0 0
    %398 = vmatpush1.bf16.msra.mxu0 0
    %399 = vmatprep.subr.bf16.mxu0 0
    %400 = vmatpush1.bf16.msra.mxu0 0
    %401 = vmatprep.subr.bf16.mxu0 0
    %402 = vmatpush1.bf16.msra.mxu0 0
    %403 = vmatprep.subr.bf16.mxu0 0
    %404 = vmatpush1.bf16.msra.mxu0 0
    %405 = vmatprep.subr.bf16.mxu0 0
    %406 = vmatpush1.bf16.msra.mxu0 0
    %407 = vmatprep.subr.bf16.mxu0 0
    %408 = vmatpush1.bf16.msra.mxu0 0
    %409 = vmatprep.subr.bf16.mxu0 0
    %410 = vmatpush1.bf16.msra.mxu0 0
    %411 = vmatprep.subr.bf16.mxu0 0
    %412 = vmatpush1.bf16.msra.mxu0 0
    %413 = vmatprep.subr.bf16.mxu0 0
    %414 = vmatpush1.bf16.msra.mxu0 0
    %415 = vmatprep.subr.bf16.mxu0 0
    %416 = vmatpush1.bf16.msra.mxu0 0
    %417 = vmatprep.mubr.bf16.mxu0 0
    %418 = vmatmul.mubr.bf16.gmra.mrb[0].mxu0 %v301
    %v419 = vpop.f32.mrb[0].mxu0
    %v420 = vadd.f32 %v210, %v419
    %v421 = vpop.f32.mrb[0].mxu0
    %v422 = vadd.f32 %v214, %v421
    %v423 = vpop.f32.mrb[0].mxu0
    %v424 = vadd.f32 %v210, %v423
    %v425 = vpop.f32.mrb[0].mxu0
    %v426 = vadd.f32 %v214, %v425
    %427 = vmatprep.mubr.bf16.mxu0 0
    %428 = vmatmul.mubr.bf16.gmra.mrb[0].mxu0 %v304
    %v429 = vpop.f32.mrb[0].mxu0
    %v430 = vadd.f32 %v210, %v429
    %v431 = vpop.f32.mrb[0].mxu0
    %v432 = vadd.f32 %v214, %v431
    %v433 = vpop.f32.mrb[0].mxu0
    %v434 = vadd.f32 %v210, %v433
    %v435 = vpop.f32.mrb[0].mxu0
    %v436 = vadd.f32 %v214, %v435
    %437 = vmatprep.mubr.bf16.mxu0 0
    %438 = vmatmul.mubr.bf16.gmra.mrb[0].mxu0 %v307
    %v439 = vpop.f32.mrb[0].mxu0
    %v440 = vadd.f32 %v210, %v439
    %v441 = vpop.f32.mrb[0].mxu0
    %v442 = vadd.f32 %v214, %v441
    %v443 = vpop.f32.mrb[0].mxu0
    %v444 = vadd.f32 %v210, %v443
    %v445 = vpop.f32.mrb[0].mxu0
    %v446 = vadd.f32 %v214, %v445
    %447 = vmatprep.mubr.bf16.mxu0 0
    %448 = vmatmul.mubr.bf16.gmra.mrb[0].mxu0 %v310
    %v449 = vpop.f32.mrb[0].mxu0
    %v450 = vadd.f32 %v210, %v449
    %v451 = vpop.f32.mrb[0].mxu0
    %v452 = vadd.f32 %v214, %v451
    %v453 = vpop.f32.mrb[0].mxu0
    %v454 = vadd.f32 %v210, %v453
    %v455 = vpop.f32.mrb[0].mxu0
    %v456 = vadd.f32 %v214, %v455
    %457 = vdwg.mxu0
    %458 = vst [vmem:[#allocation2] sm:$0xff] %v347
    %459 = vst [vmem:[#allocation2 + $0x8] sm:$0xff] %v349
    %460 = vst [vmem:[#allocation2 + $0x10] sm:$0xff] %v420
    %461 = vst [vmem:[#allocation2 + $0x18] sm:$0xff] %v422
    %462 = vst [vmem:[#allocation2 + $0x20] sm:$0xff] %v351
    %463 = vst [vmem:[#allocation2 + $0x28] sm:$0xff] %v353
    %464 = vst [vmem:[#allocation2 + $0x30] sm:$0xff] %v424
    %465 = vst [vmem:[#allocation2 + $0x38] sm:$0xff] %v426
    %466 = vst [vmem:[#allocation2 + $0x40] sm:$0xff] %v357
    %467 = vst [vmem:[#allocation2 + $0x48] sm:$0xff] %v359
    %468 = vst [vmem:[#allocation2 + $0x50] sm:$0xff] %v430
    %469 = vst [vmem:[#allocation2 + $0x58] sm:$0xff] %v432
    %470 = vst [vmem:[#allocation2 + $0x60] sm:$0xff] %v361
    %471 = vst [vmem:[#allocation2 + $0x68] sm:$0xff] %v363
    %472 = vst [vmem:[#allocation2 + $0x70] sm:$0xff] %v434
    %473 = vst [vmem:[#allocation2 + $0x78] sm:$0xff] %v436
    %474 = vst [vmem:[#allocation2 + $0x80] sm:$0xff] %v367
    %475 = vst [vmem:[#allocation2 + $0x88] sm:$0xff] %v369
    %476 = vst [vmem:[#allocation2 + $0x90] sm:$0xff] %v440
    %477 = vst [vmem:[#allocation2 + $0x98] sm:$0xff] %v442
    %478 = vst [vmem:[#allocation2 + $0xa0] sm:$0xff] %v371
    %479 = vst [vmem:[#allocation2 + $0xa8] sm:$0xff] %v373
    %480 = vst [vmem:[#allocation2 + $0xb0] sm:$0xff] %v444
    %481 = vst [vmem:[#allocation2 + $0xb8] sm:$0xff] %v446
    %482 = vst [vmem:[#allocation2 + $0xc0] sm:$0xff] %v377
    %483 = vst [vmem:[#allocation2 + $0xc8] sm:$0xff] %v379
    %484 = vst [vmem:[#allocation2 + $0xd0] sm:$0xff] %v450
    %485 = vst [vmem:[#allocation2 + $0xd8] sm:$0xff] %v452
    %486 = vst [vmem:[#allocation2 + $0xe0] sm:$0xff] %v381
    %487 = vst [vmem:[#allocation2 + $0xe8] sm:$0xff] %v383
    %488 = vst [vmem:[#allocation2 + $0xf0] sm:$0xff] %v454
    %489 = vst [vmem:[#allocation2 + $0xf8] sm:$0xff] %v456
    %s490 = smul.u32 0, 4
    %s491 = smul.addr %s490, 8
    %s492 = scalar_lea.vmem [#allocation2], %s491
    %v493 = vld [vmem:[%s492] sm:$0xff]
    %v494 = vld [vmem:[%s492 + $0x8] sm:$0xff]
    %v495 = vld [vmem:[%s492 + $0x10] sm:$0xff]
    %v496 = vld [vmem:[%s492 + $0x18] sm:$0xff]
    %v497 = vld [vmem:[#allocation16] sm:$0xff]
    %v498 = vpack.c.bf16 %v497, %v497
    %v499 = vld [vmem:[#allocation9] sm:$0xff]
    %v500 = vld [vmem:[#allocation9 + $0x8] sm:$0xff]
    %v501 = vld [vmem:[#allocation9 + $0x10] sm:$0xff]
    %v502 = vld [vmem:[#allocation9 + $0x18] sm:$0xff]
    %v503 = vld [vmem:[#allocation9 + $0x20] sm:$0xff]
    %v504 = vld [vmem:[#allocation9 + $0x28] sm:$0xff]
    %v505 = vld [vmem:[#allocation9 + $0x30] sm:$0xff]
    %v506 = vld [vmem:[#allocation9 + $0x38] sm:$0xff]
    %v507 = vld [vmem:[#allocation9 + $0x40] sm:$0xff]
    %v508 = vld [vmem:[#allocation9 + $0x48] sm:$0xff]
    %v509 = vld [vmem:[#allocation9 + $0x50] sm:$0xff]
    %v510 = vld [vmem:[#allocation9 + $0x58] sm:$0xff]
    %v511 = vld [vmem:[#allocation9 + $0x60] sm:$0xff]
    %v512 = vld [vmem:[#allocation9 + $0x68] sm:$0xff]
    %v513 = vld [vmem:[#allocation9 + $0x70] sm:$0xff]
    %v514 = vld [vmem:[#allocation9 + $0x78] sm:$0xff]
    %v515 = vld [vmem:[#allocation9 + $0x80] sm:$0xff]
    %v516 = vld [vmem:[#allocation9 + $0x88] sm:$0xff]
    %v517 = vld [vmem:[#allocation9 + $0x90] sm:$0xff]
    %v518 = vld [vmem:[#allocation9 + $0x98] sm:$0xff]
    %v519 = vld [vmem:[#allocation9 + $0xa0] sm:$0xff]
    %v520 = vld [vmem:[#allocation9 + $0xa8] sm:$0xff]
    %v521 = vld [vmem:[#allocation9 + $0xb0] sm:$0xff]
    %v522 = vld [vmem:[#allocation9 + $0xb8] sm:$0xff]
    %v523 = vld [vmem:[#allocation9 + $0xc0] sm:$0xff]
    %v524 = vld [vmem:[#allocation9 + $0xc8] sm:$0xff]
    %v525 = vld [vmem:[#allocation9 + $0xd0] sm:$0xff]
    %v526 = vld [vmem:[#allocation9 + $0xd8] sm:$0xff]
    %v527 = vld [vmem:[#allocation9 + $0xe0] sm:$0xff]
    %v528 = vld [vmem:[#allocation9 + $0xe8] sm:$0xff]
    %v529 = vld [vmem:[#allocation9 + $0xf0] sm:$0xff]
    %v530 = vld [vmem:[#allocation9 + $0xf8] sm:$0xff]
    %v563 = vunpack.c.l.b16 %v499
    %v564 = vunpack.c.h.b16 %v499
    %v565 = vunpack.c.l.b16 %v500
    %v566 = vunpack.c.h.b16 %v500
    %v567 = vunpack.c.l.b16 %v501
    %v568 = vunpack.c.h.b16 %v501
    %v569 = vunpack.c.l.b16 %v502
    %v570 = vunpack.c.h.b16 %v502
    %v571 = vunpack.c.l.b16 %v503
    %v572 = vunpack.c.h.b16 %v503
    %v573 = vunpack.c.l.b16 %v504
    %v574 = vunpack.c.h.b16 %v504
    %v575 = vunpack.c.l.b16 %v505
    %v576 = vunpack.c.h.b16 %v505
    %v577 = vunpack.c.l.b16 %v506
    %v578 = vunpack.c.h.b16 %v506
    %v579 = vunpack.c.l.b16 %v507
    %v580 = vunpack.c.h.b16 %v507
    %v581 = vunpack.c.l.b16 %v508
    %v582 = vunpack.c.h.b16 %v508
    %v583 = vunpack.c.l.b16 %v509
    %v584 = vunpack.c.h.b16 %v509
    %v585 = vunpack.c.l.b16 %v510
    %v586 = vunpack.c.h.b16 %v510
    %v587 = vunpack.c.l.b16 %v511
    %v588 = vunpack.c.h.b16 %v511
    %v589 = vunpack.c.l.b16 %v512
    %v590 = vunpack.c.h.b16 %v512
    %v591 = vunpack.c.l.b16 %v513
    %v592 = vunpack.c.h.b16 %v513
    %v593 = vunpack.c.l.b16 %v514
    %v594 = vunpack.c.h.b16 %v514
    %v595 = vunpack.c.l.b16 %v515
    %v596 = vunpack.c.h.b16 %v515
    %v597 = vunpack.c.l.b16 %v516
    %v598 = vunpack.c.h.b16 %v516
    %v599 = vunpack.c.l.b16 %v517
    %v600 = vunpack.c.h.b16 %v517
    %v601 = vunpack.c.l.b16 %v518
    %v602 = vunpack.c.h.b16 %v518
    %v603 = vunpack.c.l.b16 %v519
    %v604 = vunpack.c.h.b16 %v519
    %v605 = vunpack.c.l.b16 %v520
    %v606 = vunpack.c.h.b16 %v520
    %v607 = vunpack.c.l.b16 %v521
    %v608 = vunpack.c.h.b16 %v521
    %v609 = vunpack.c.l.b16 %v522
    %v610 = vunpack.c.h.b16 %v522
    %v611 = vunpack.c.l.b16 %v523
    %v612 = vunpack.c.h.b16 %v523
    %v613 = vunpack.c.l.b16 %v524
    %v614 = vunpack.c.h.b16 %v524
    %v615 = vunpack.c.l.b16 %v525
    %v616 = vunpack.c.h.b16 %v525
    %v617 = vunpack.c.l.b16 %v526
    %v618 = vunpack.c.h.b16 %v526
    %v619 = vunpack.c.l.b16 %v527
    %v620 = vunpack.c.h.b16 %v527
    %v621 = vunpack.c.l.b16 %v528
    %v622 = vunpack.c.h.b16 %v528
    %v623 = vunpack.c.l.b16 %v529
    %v624 = vunpack.c.h.b16 %v529
    %v625 = vunpack.c.l.b16 %v530
    %v626 = vunpack.c.h.b16 %v530
    %v627 = vpack.c.b16 %v567, %v563
    %v628 = vpack.c.b16 %v568, %v564
    %v629 = vpack.c.b16 %v569, %v565
    %v630 = vpack.c.b16 %v570, %v566
    %v631 = vpack.c.b16 %v575, %v571
    %v632 = vpack.c.b16 %v576, %v572
    %v633 = vpack.c.b16 %v577, %v573
    %v634 = vpack.c.b16 %v578, %v574
    %v635 = vpack.c.b16 %v583, %v579
    %v636 = vpack.c.b16 %v584, %v580
    %v637 = vpack.c.b16 %v585, %v581
    %v638 = vpack.c.b16 %v586, %v582
    %v639 = vpack.c.b16 %v591, %v587
    %v640 = vpack.c.b16 %v592, %v588
    %v641 = vpack.c.b16 %v593, %v589
    %v642 = vpack.c.b16 %v594, %v590
    %v643 = vpack.c.b16 %v599, %v595
    %v644 = vpack.c.b16 %v600, %v596
    %v645 = vpack.c.b16 %v601, %v597
    %v646 = vpack.c.b16 %v602, %v598
    %v647 = vpack.c.b16 %v607, %v603
    %v648 = vpack.c.b16 %v608, %v604
    %v649 = vpack.c.b16 %v609, %v605
    %v650 = vpack.c.b16 %v610, %v606
    %v651 = vpack.c.b16 %v615, %v611
    %v652 = vpack.c.b16 %v616, %v612
    %v653 = vpack.c.b16 %v617, %v613
    %v654 = vpack.c.b16 %v618, %v614
    %v655 = vpack.c.b16 %v623, %v619
    %v656 = vpack.c.b16 %v624, %v620
    %v657 = vpack.c.b16 %v625, %v621
    %v658 = vpack.c.b16 %v626, %v622
    %691 = vmatprep.subr.bf16.mxu0 %v628
    %692 = vmatpush1.bf16.msra.mxu0 %v627
    %693 = vmatprep.subr.bf16.mxu0 %v632
    %694 = vmatpush1.bf16.msra.mxu0 %v631
    %695 = vmatprep.subr.bf16.mxu0 %v636
    %696 = vmatpush1.bf16.msra.mxu0 %v635
    %697 = vmatprep.subr.bf16.mxu0 %v640
    %698 = vmatpush1.bf16.msra.mxu0 %v639
    %699 = vmatprep.subr.bf16.mxu0 %v644
    %700 = vmatpush1.bf16.msra.mxu0 %v643
    %701 = vmatprep.subr.bf16.mxu0 %v648
    %702 = vmatpush1.bf16.msra.mxu0 %v647
    %703 = vmatprep.subr.bf16.mxu0 %v652
    %704 = vmatpush1.bf16.msra.mxu0 %v651
    %705 = vmatprep.subr.bf16.mxu0 %v656
    %706 = vmatpush1.bf16.msra.mxu0 %v655
    %707 = vmatprep.subr.bf16.mxu0 0
    %708 = vmatpush1.bf16.msra.mxu0 0
    %709 = vmatprep.subr.bf16.mxu0 0
    %710 = vmatpush1.bf16.msra.mxu0 0
    %711 = vmatprep.subr.bf16.mxu0 0
    %712 = vmatpush1.bf16.msra.mxu0 0
    %713 = vmatprep.subr.bf16.mxu0 0
    %714 = vmatpush1.bf16.msra.mxu0 0
    %715 = vmatprep.subr.bf16.mxu0 0
    %716 = vmatpush1.bf16.msra.mxu0 0
    %717 = vmatprep.subr.bf16.mxu0 0
    %718 = vmatpush1.bf16.msra.mxu0 0
    %719 = vmatprep.subr.bf16.mxu0 0
    %720 = vmatpush1.bf16.msra.mxu0 0
    %721 = vmatprep.subr.bf16.mxu0 0
    %722 = vmatpush1.bf16.msra.mxu0 0
    %723 = vmatprep.mubr.bf16.mxu0 0
    %724 = vmatmul.mubr.bf16.gmra.mrb[0].mxu0 %v498
    %v725 = vpop.f32.mrb[0].mxu0
    %v726 = vadd.f32 0.0, %v725
    %v727 = vpop.f32.mrb[0].mxu0
    %v728 = vadd.f32 0.0, %v727
    %v729 = vpop.f32.mrb[0].mxu0
    %v730 = vpop.f32.mrb[0].mxu0
    %731 = vdwg.mxu0
    %732 = vmatprep.subr.bf16.mxu0 %v630
    %733 = vmatpush1.bf16.msra.mxu0 %v629
    %734 = vmatprep.subr.bf16.mxu0 %v634
    %735 = vmatpush1.bf16.msra.mxu0 %v633
    %736 = vmatprep.subr.bf16.mxu0 %v638
    %737 = vmatpush1.bf16.msra.mxu0 %v637
    %738 = vmatprep.subr.bf16.mxu0 %v642
    %739 = vmatpush1.bf16.msra.mxu0 %v641
    %740 = vmatprep.subr.bf16.mxu0 %v646
    %741 = vmatpush1.bf16.msra.mxu0 %v645
    %742 = vmatprep.subr.bf16.mxu0 %v650
    %743 = vmatpush1.bf16.msra.mxu0 %v649
    %744 = vmatprep.subr.bf16.mxu0 %v654
    %745 = vmatpush1.bf16.msra.mxu0 %v653
    %746 = vmatprep.subr.bf16.mxu0 %v658
    %747 = vmatpush1.bf16.msra.mxu0 %v657
    %748 = vmatprep.subr.bf16.mxu0 0
    %749 = vmatpush1.bf16.msra.mxu0 0
    %750 = vmatprep.subr.bf16.mxu0 0
    %751 = vmatpush1.bf16.msra.mxu0 0
    %752 = vmatprep.subr.bf16.mxu0 0
    %753 = vmatpush1.bf16.msra.mxu0 0
    %754 = vmatprep.subr.bf16.mxu0 0
    %755 = vmatpush1.bf16.msra.mxu0 0
    %756 = vmatprep.subr.bf16.mxu0 0
    %757 = vmatpush1.bf16.msra.mxu0 0
    %758 = vmatprep.subr.bf16.mxu0 0
    %759 = vmatpush1.bf16.msra.mxu0 0
    %760 = vmatprep.subr.bf16.mxu0 0
    %761 = vmatpush1.bf16.msra.mxu0 0
    %762 = vmatprep.subr.bf16.mxu0 0
    %763 = vmatpush1.bf16.msra.mxu0 0
    %764 = vmatprep.mubr.bf16.mxu0 0
    %765 = vmatmul.mubr.bf16.gmra.mrb[0].mxu0 %v498
    %v766 = vpop.f32.mrb[0].mxu0
    %v767 = vadd.f32 0.0, %v766
    %v768 = vpop.f32.mrb[0].mxu0
    %v769 = vadd.f32 0.0, %v768
    %v770 = vpop.f32.mrb[0].mxu0
    %v771 = vpop.f32.mrb[0].mxu0
    %772 = vdwg.mxu0
    %v773 = vadd.f32 %v493, %v726
    %v774 = vadd.f32 %v494, %v728
    %v775 = vadd.f32 %v495, %v767
    %v776 = vadd.f32 %v496, %v769
    %v777 = vld [vmem:[#allocation17] sm:$0xff]
    %v778 = vxor.u32 %v773, 2147483648
    %v779 = vmul.f32 %v778, 1.442695
    %v780 = vpow.pop %v779
    %v781 = vadd.f32 %v780, 1.0
    %v782 = vrcp.pop %v781
    %v783 = vmul.f32 1.0, %v782
    %v784 = vxor.u32 %v774, 2147483648
    %v785 = vmul.f32 %v784, 1.442695
    %v786 = vpow.pop %v785
    %v787 = vadd.f32 %v786, 1.0
    %v788 = vrcp.pop %v787
    %v789 = vmul.f32 1.0, %v788
    %v790 = vtanh.pop %v775
    %v791 = vxor.u32 %v776, 2147483648
    %v792 = vmul.f32 %v791, 1.442695
    %v793 = vpow.pop %v792
    %v794 = vadd.f32 %v793, 1.0
    %v795 = vrcp.pop %v794
    %v796 = vmul.f32 1.0, %v795
    %v797 = vmul.f32 %v789, %v777
    %v798 = vmul.f32 %v783, %v790
    %v799 = vadd.f32 %v797, %v798
    %v800 = vtanh.pop %v799
    %v801 = vmul.f32 %v796, %v800
    %802 = vst [vmem:[#allocation16] sm:$0xff] %v801
    %803 = vst [vmem:[#allocation17] sm:$0xff] %v799
    %s804 = scalar_lea.vmem [#allocation16], 8
    %v805 = vld [vmem:[%s804] sm:$0xff]
    %v806 = vpack.c.bf16 %v801, %v801
    %v807 = vld [vmem:[#allocation12] sm:$0xff]
    %v808 = vld [vmem:[#allocation12 + $0x8] sm:$0xff]
    %v809 = vld [vmem:[#allocation12 + $0x10] sm:$0xff]
    %v810 = vld [vmem:[#allocation12 + $0x18] sm:$0xff]
    %v811 = vld [vmem:[#allocation12 + $0x20] sm:$0xff]
    %v812 = vld [vmem:[#allocation12 + $0x28] sm:$0xff]
    %v813 = vld [vmem:[#allocation12 + $0x30] sm:$0xff]
    %v814 = vld [vmem:[#allocation12 + $0x38] sm:$0xff]
    %v815 = vld [vmem:[#allocation12 + $0x40] sm:$0xff]
    %v816 = vld [vmem:[#allocation12 + $0x48] sm:$0xff]
    %v817 = vld [vmem:[#allocation12 + $0x50] sm:$0xff]
    %v818 = vld [vmem:[#allocation12 + $0x58] sm:$0xff]
    %v819 = vld [vmem:[#allocation12 + $0x60] sm:$0xff]
    %v820 = vld [vmem:[#allocation12 + $0x68] sm:$0xff]
    %v821 = vld [vmem:[#allocation12 + $0x70] sm:$0xff]
    %v822 = vld [vmem:[#allocation12 + $0x78] sm:$0xff]
    %v823 = vld [vmem:[#allocation12 + $0x80] sm:$0xff]
    %v824 = vld [vmem:[#allocation12 + $0x88] sm:$0xff]
    %v825 = vld [vmem:[#allocation12 + $0x90] sm:$0xff]
    %v826 = vld [vmem:[#allocation12 + $0x98] sm:$0xff]
    %v827 = vld [vmem:[#allocation12 + $0xa0] sm:$0xff]
    %v828 = vld [vmem:[#allocation12 + $0xa8] sm:$0xff]
    %v829 = vld [vmem:[#allocation12 + $0xb0] sm:$0xff]
    %v830 = vld [vmem:[#allocation12 + $0xb8] sm:$0xff]
    %v831 = vld [vmem:[#allocation12 + $0xc0] sm:$0xff]
    %v832 = vld [vmem:[#allocation12 + $0xc8] sm:$0xff]
    %v833 = vld [vmem:[#allocation12 + $0xd0] sm:$0xff]
    %v834 = vld [vmem:[#allocation12 + $0xd8] sm:$0xff]
    %v835 = vld [vmem:[#allocation12 + $0xe0] sm:$0xff]
    %v836 = vld [vmem:[#allocation12 + $0xe8] sm:$0xff]
    %v837 = vld [vmem:[#allocation12 + $0xf0] sm:$0xff]
    %v838 = vld [vmem:[#allocation12 + $0xf8] sm:$0xff]
    %v839 = vpack.c.bf16 %v805, %v805
    %v840 = vld [vmem:[#allocation13] sm:$0xff]
    %v841 = vld [vmem:[#allocation13 + $0x8] sm:$0xff]
    %v842 = vld [vmem:[#allocation13 + $0x10] sm:$0xff]
    %v843 = vld [vmem:[#allocation13 + $0x18] sm:$0xff]
    %v844 = vld [vmem:[#allocation13 + $0x20] sm:$0xff]
    %v845 = vld [vmem:[#allocation13 + $0x28] sm:$0xff]
    %v846 = vld [vmem:[#allocation13 + $0x30] sm:$0xff]
    %v847 = vld [vmem:[#allocation13 + $0x38] sm:$0xff]
    %v848 = vld [vmem:[#allocation13 + $0x40] sm:$0xff]
    %v849 = vld [vmem:[#allocation13 + $0x48] sm:$0xff]
    %v850 = vld [vmem:[#allocation13 + $0x50] sm:$0xff]
    %v851 = vld [vmem:[#allocation13 + $0x58] sm:$0xff]
    %v852 = vld [vmem:[#allocation13 + $0x60] sm:$0xff]
    %v853 = vld [vmem:[#allocation13 + $0x68] sm:$0xff]
    %v854 = vld [vmem:[#allocation13 + $0x70] sm:$0xff]
    %v855 = vld [vmem:[#allocation13 + $0x78] sm:$0xff]
    %v856 = vld [vmem:[#allocation13 + $0x80] sm:$0xff]
    %v857 = vld [vmem:[#allocation13 + $0x88] sm:$0xff]
    %v858 = vld [vmem:[#allocation13 + $0x90] sm:$0xff]
    %v859 = vld [vmem:[#allocation13 + $0x98] sm:$0xff]
    %v860 = vld [vmem:[#allocation13 + $0xa0] sm:$0xff]
    %v861 = vld [vmem:[#allocation13 + $0xa8] sm:$0xff]
    %v862 = vld [vmem:[#allocation13 + $0xb0] sm:$0xff]
    %v863 = vld [vmem:[#allocation13 + $0xb8] sm:$0xff]
    %v864 = vld [vmem:[#allocation13 + $0xc0] sm:$0xff]
    %v865 = vld [vmem:[#allocation13 + $0xc8] sm:$0xff]
    %v866 = vld [vmem:[#allocation13 + $0xd0] sm:$0xff]
    %v867 = vld [vmem:[#allocation13 + $0xd8] sm:$0xff]
    %v868 = vld [vmem:[#allocation13 + $0xe0] sm:$0xff]
    %v869 = vld [vmem:[#allocation13 + $0xe8] sm:$0xff]
    %v870 = vld [vmem:[#allocation13 + $0xf0] sm:$0xff]
    %v871 = vld [vmem:[#allocation13 + $0xf8] sm:$0xff]
    %v904 = vunpack.c.l.b16 %v840
    %v905 = vunpack.c.h.b16 %v840
    %v906 = vunpack.c.l.b16 %v841
    %v907 = vunpack.c.h.b16 %v841
    %v908 = vunpack.c.l.b16 %v842
    %v909 = vunpack.c.h.b16 %v842
    %v910 = vunpack.c.l.b16 %v843
    %v911 = vunpack.c.h.b16 %v843
    %v912 = vunpack.c.l.b16 %v844
    %v913 = vunpack.c.h.b16 %v844
    %v914 = vunpack.c.l.b16 %v845
    %v915 = vunpack.c.h.b16 %v845
    %v916 = vunpack.c.l.b16 %v846
    %v917 = vunpack.c.h.b16 %v846
    %v918 = vunpack.c.l.b16 %v847
    %v919 = vunpack.c.h.b16 %v847
    %v920 = vunpack.c.l.b16 %v848
    %v921 = vunpack.c.h.b16 %v848
    %v922 = vunpack.c.l.b16 %v849
    %v923 = vunpack.c.h.b16 %v849
    %v924 = vunpack.c.l.b16 %v850
    %v925 = vunpack.c.h.b16 %v850
    %v926 = vunpack.c.l.b16 %v851
    %v927 = vunpack.c.h.b16 %v851
    %v928 = vunpack.c.l.b16 %v852
    %v929 = vunpack.c.h.b16 %v852
    %v930 = vunpack.c.l.b16 %v853
    %v931 = vunpack.c.h.b16 %v853
    %v932 = vunpack.c.l.b16 %v854
    %v933 = vunpack.c.h.b16 %v854
    %v934 = vunpack.c.l.b16 %v855
    %v935 = vunpack.c.h.b16 %v855
    %v936 = vunpack.c.l.b16 %v856
    %v937 = vunpack.c.h.b16 %v856
    %v938 = vunpack.c.l.b16 %v857
    %v939 = vunpack.c.h.b16 %v857
    %v940 = vunpack.c.l.b16 %v858
    %v941 = vunpack.c.h.b16 %v858
    %v942 = vunpack.c.l.b16 %v859
    %v943 = vunpack.c.h.b16 %v859
    %v944 = vunpack.c.l.b16 %v860
    %v945 = vunpack.c.h.b16 %v860
    %v946 = vunpack.c.l.b16 %v861
    %v947 = vunpack.c.h.b16 %v861
    %v948 = vunpack.c.l.b16 %v862
    %v949 = vunpack.c.h.b16 %v862
    %v950 = vunpack.c.l.b16 %v863
    %v951 = vunpack.c.h.b16 %v863
    %v952 = vunpack.c.l.b16 %v864
    %v953 = vunpack.c.h.b16 %v864
    %v954 = vunpack.c.l.b16 %v865
    %v955 = vunpack.c.h.b16 %v865
    %v956 = vunpack.c.l.b16 %v866
    %v957 = vunpack.c.h.b16 %v866
    %v958 = vunpack.c.l.b16 %v867
    %v959 = vunpack.c.h.b16 %v867
    %v960 = vunpack.c.l.b16 %v868
    %v961 = vunpack.c.h.b16 %v868
    %v962 = vunpack.c.l.b16 %v869
    %v963 = vunpack.c.h.b16 %v869
    %v964 = vunpack.c.l.b16 %v870
    %v965 = vunpack.c.h.b16 %v870
    %v966 = vunpack.c.l.b16 %v871
    %v967 = vunpack.c.h.b16 %v871
    %v968 = vpack.c.b16 %v908, %v904
    %v969 = vpack.c.b16 %v909, %v905
    %v970 = vpack.c.b16 %v910, %v906
    %v971 = vpack.c.b16 %v911, %v907
    %v972 = vpack.c.b16 %v916, %v912
    %v973 = vpack.c.b16 %v917, %v913
    %v974 = vpack.c.b16 %v918, %v914
    %v975 = vpack.c.b16 %v919, %v915
    %v976 = vpack.c.b16 %v924, %v920
    %v977 = vpack.c.b16 %v925, %v921
    %v978 = vpack.c.b16 %v926, %v922
    %v979 = vpack.c.b16 %v927, %v923
    %v980 = vpack.c.b16 %v932, %v928
    %v981 = vpack.c.b16 %v933, %v929
    %v982 = vpack.c.b16 %v934, %v930
    %v983 = vpack.c.b16 %v935, %v931
    %v984 = vpack.c.b16 %v940, %v936
    %v985 = vpack.c.b16 %v941, %v937
    %v986 = vpack.c.b16 %v942, %v938
    %v987 = vpack.c.b16 %v943, %v939
    %v988 = vpack.c.b16 %v948, %v944
    %v989 = vpack.c.b16 %v949, %v945
    %v990 = vpack.c.b16 %v950, %v946
    %v991 = vpack.c.b16 %v951, %v947
    %v992 = vpack.c.b16 %v956, %v952
    %v993 = vpack.c.b16 %v957, %v953
    %v994 = vpack.c.b16 %v958, %v954
    %v995 = vpack.c.b16 %v959, %v955
    %v996 = vpack.c.b16 %v964, %v960
    %v997 = vpack.c.b16 %v965, %v961
    %v998 = vpack.c.b16 %v966, %v962
    %v999 = vpack.c.b16 %v967, %v963
    %1032 = vmatprep.subr.bf16.mxu0 %v969
    %1033 = vmatpush1.bf16.msra.mxu0 %v968
    %1034 = vmatprep.subr.bf16.mxu0 %v973
    %1035 = vmatpush1.bf16.msra.mxu0 %v972
    %1036 = vmatprep.subr.bf16.mxu0 %v977
    %1037 = vmatpush1.bf16.msra.mxu0 %v976
    %1038 = vmatprep.subr.bf16.mxu0 %v981
    %1039 = vmatpush1.bf16.msra.mxu0 %v980
    %1040 = vmatprep.subr.bf16.mxu0 %v985
    %1041 = vmatpush1.bf16.msra.mxu0 %v984
    %1042 = vmatprep.subr.bf16.mxu0 %v989
    %1043 = vmatpush1.bf16.msra.mxu0 %v988
    %1044 = vmatprep.subr.bf16.mxu0 %v993
    %1045 = vmatpush1.bf16.msra.mxu0 %v992
    %1046 = vmatprep.subr.bf16.mxu0 %v997
    %1047 = vmatpush1.bf16.msra.mxu0 %v996
    %1048 = vmatprep.subr.bf16.mxu0 0
    %1049 = vmatpush1.bf16.msra.mxu0 0
    %1050 = vmatprep.subr.bf16.mxu0 0
    %1051 = vmatpush1.bf16.msra.mxu0 0
    %1052 = vmatprep.subr.bf16.mxu0 0
    %1053 = vmatpush1.bf16.msra.mxu0 0
    %1054 = vmatprep.subr.bf16.mxu0 0
    %1055 = vmatpush1.bf16.msra.mxu0 0
    %1056 = vmatprep.subr.bf16.mxu0 0
    %1057 = vmatpush1.bf16.msra.mxu0 0
    %1058 = vmatprep.subr.bf16.mxu0 0
    %1059 = vmatpush1.bf16.msra.mxu0 0
    %1060 = vmatprep.subr.bf16.mxu0 0
    %1061 = vmatpush1.bf16.msra.mxu0 0
    %1062 = vmatprep.subr.bf16.mxu0 0
    %1063 = vmatpush1.bf16.msra.mxu0 0
    %1064 = vmatprep.mubr.bf16.mxu0 0
    %1065 = vmatmul.mubr.bf16.gmra.mrb[0].mxu0 %v839
    %v1066 = vpop.f32.mrb[0].mxu0
    %v1067 = vadd.f32 0.0, %v1066
    %v1068 = vpop.f32.mrb[0].mxu0
    %v1069 = vadd.f32 0.0, %v1068
    %v1070 = vpop.f32.mrb[0].mxu0
    %v1071 = vpop.f32.mrb[0].mxu0
    %1072 = vdwg.mxu0
    %1073 = vmatprep.subr.bf16.mxu0 %v971
    %1074 = vmatpush1.bf16.msra.mxu0 %v970
    %1075 = vmatprep.subr.bf16.mxu0 %v975
    %1076 = vmatpush1.bf16.msra.mxu0 %v974
    %1077 = vmatprep.subr.bf16.mxu0 %v979
    %1078 = vmatpush1.bf16.msra.mxu0 %v978
    %1079 = vmatprep.subr.bf16.mxu0 %v983
    %1080 = vmatpush1.bf16.msra.mxu0 %v982
    %1081 = vmatprep.subr.bf16.mxu0 %v987
    %1082 = vmatpush1.bf16.msra.mxu0 %v986
    %1083 = vmatprep.subr.bf16.mxu0 %v991
    %1084 = vmatpush1.bf16.msra.mxu0 %v990
    %1085 = vmatprep.subr.bf16.mxu0 %v995
    %1086 = vmatpush1.bf16.msra.mxu0 %v994
    %1087 = vmatprep.subr.bf16.mxu0 %v999
    %1088 = vmatpush1.bf16.msra.mxu0 %v998
    %1089 = vmatprep.subr.bf16.mxu0 0
    %1090 = vmatpush1.bf16.msra.mxu0 0
    %1091 = vmatprep.subr.bf16.mxu0 0
    %1092 = vmatpush1.bf16.msra.mxu0 0
    %1093 = vmatprep.subr.bf16.mxu0 0
    %1094 = vmatpush1.bf16.msra.mxu0 0
    %1095 = vmatprep.subr.bf16.mxu0 0
    %1096 = vmatpush1.bf16.msra.mxu0 0
    %1097 = vmatprep.subr.bf16.mxu0 0
    %1098 = vmatpush1.bf16.msra.mxu0 0
    %1099 = vmatprep.subr.bf16.mxu0 0
    %1100 = vmatpush1.bf16.msra.mxu0 0
    %1101 = vmatprep.subr.bf16.mxu0 0
    %1102 = vmatpush1.bf16.msra.mxu0 0
    %1103 = vmatprep.subr.bf16.mxu0 0
    %1104 = vmatpush1.bf16.msra.mxu0 0
    %1105 = vmatprep.mubr.bf16.mxu0 0
    %1106 = vmatmul.mubr.bf16.gmra.mrb[0].mxu0 %v839
    %v1107 = vpop.f32.mrb[0].mxu0
    %v1108 = vadd.f32 0.0, %v1107
    %v1109 = vpop.f32.mrb[0].mxu0
    %v1110 = vadd.f32 0.0, %v1109
    %v1111 = vpop.f32.mrb[0].mxu0
    %v1112 = vpop.f32.mrb[0].mxu0
    %1113 = vdwg.mxu0
    %v1146 = vunpack.c.l.b16 %v807
    %v1147 = vunpack.c.h.b16 %v807
    %v1148 = vunpack.c.l.b16 %v808
    %v1149 = vunpack.c.h.b16 %v808
    %v1150 = vunpack.c.l.b16 %v809
    %v1151 = vunpack.c.h.b16 %v809
    %v1152 = vunpack.c.l.b16 %v810
    %v1153 = vunpack.c.h.b16 %v810
    %v1154 = vunpack.c.l.b16 %v811
    %v1155 = vunpack.c.h.b16 %v811
    %v1156 = vunpack.c.l.b16 %v812
    %v1157 = vunpack.c.h.b16 %v812
    %v1158 = vunpack.c.l.b16 %v813
    %v1159 = vunpack.c.h.b16 %v813
    %v1160 = vunpack.c.l.b16 %v814
    %v1161 = vunpack.c.h.b16 %v814
    %v1162 = vunpack.c.l.b16 %v815
    %v1163 = vunpack.c.h.b16 %v815
    %v1164 = vunpack.c.l.b16 %v816
    %v1165 = vunpack.c.h.b16 %v816
    %v1166 = vunpack.c.l.b16 %v817
    %v1167 = vunpack.c.h.b16 %v817
    %v1168 = vunpack.c.l.b16 %v818
    %v1169 = vunpack.c.h.b16 %v818
    %v1170 = vunpack.c.l.b16 %v819
    %v1171 = vunpack.c.h.b16 %v819
    %v1172 = vunpack.c.l.b16 %v820
    %v1173 = vunpack.c.h.b16 %v820
    %v1174 = vunpack.c.l.b16 %v821
    %v1175 = vunpack.c.h.b16 %v821
    %v1176 = vunpack.c.l.b16 %v822
    %v1177 = vunpack.c.h.b16 %v822
    %v1178 = vunpack.c.l.b16 %v823
    %v1179 = vunpack.c.h.b16 %v823
    %v1180 = vunpack.c.l.b16 %v824
    %v1181 = vunpack.c.h.b16 %v824
    %v1182 = vunpack.c.l.b16 %v825
    %v1183 = vunpack.c.h.b16 %v825
    %v1184 = vunpack.c.l.b16 %v826
    %v1185 = vunpack.c.h.b16 %v826
    %v1186 = vunpack.c.l.b16 %v827
    %v1187 = vunpack.c.h.b16 %v827
    %v1188 = vunpack.c.l.b16 %v828
    %v1189 = vunpack.c.h.b16 %v828
    %v1190 = vunpack.c.l.b16 %v829
    %v1191 = vunpack.c.h.b16 %v829
    %v1192 = vunpack.c.l.b16 %v830
    %v1193 = vunpack.c.h.b16 %v830
    %v1194 = vunpack.c.l.b16 %v831
    %v1195 = vunpack.c.h.b16 %v831
    %v1196 = vunpack.c.l.b16 %v832
    %v1197 = vunpack.c.h.b16 %v832
    %v1198 = vunpack.c.l.b16 %v833
    %v1199 = vunpack.c.h.b16 %v833
    %v1200 = vunpack.c.l.b16 %v834
    %v1201 = vunpack.c.h.b16 %v834
    %v1202 = vunpack.c.l.b16 %v835
    %v1203 = vunpack.c.h.b16 %v835
    %v1204 = vunpack.c.l.b16 %v836
    %v1205 = vunpack.c.h.b16 %v836
    %v1206 = vunpack.c.l.b16 %v837
    %v1207 = vunpack.c.h.b16 %v837
    %v1208 = vunpack.c.l.b16 %v838
    %v1209 = vunpack.c.h.b16 %v838
    %v1210 = vpack.c.b16 %v1150, %v1146
    %v1211 = vpack.c.b16 %v1151, %v1147
    %v1212 = vpack.c.b16 %v1152, %v1148
    %v1213 = vpack.c.b16 %v1153, %v1149
    %v1214 = vpack.c.b16 %v1158, %v1154
    %v1215 = vpack.c.b16 %v1159, %v1155
    %v1216 = vpack.c.b16 %v1160, %v1156
    %v1217 = vpack.c.b16 %v1161, %v1157
    %v1218 = vpack.c.b16 %v1166, %v1162
    %v1219 = vpack.c.b16 %v1167, %v1163
    %v1220 = vpack.c.b16 %v1168, %v1164
    %v1221 = vpack.c.b16 %v1169, %v1165
    %v1222 = vpack.c.b16 %v1174, %v1170
    %v1223 = vpack.c.b16 %v1175, %v1171
    %v1224 = vpack.c.b16 %v1176, %v1172
    %v1225 = vpack.c.b16 %v1177, %v1173
    %v1226 = vpack.c.b16 %v1182, %v1178
    %v1227 = vpack.c.b16 %v1183, %v1179
    %v1228 = vpack.c.b16 %v1184, %v1180
    %v1229 = vpack.c.b16 %v1185, %v1181
    %v1230 = vpack.c.b16 %v1190, %v1186
    %v1231 = vpack.c.b16 %v1191, %v1187
    %v1232 = vpack.c.b16 %v1192, %v1188
    %v1233 = vpack.c.b16 %v1193, %v1189
    %v1234 = vpack.c.b16 %v1198, %v1194
    %v1235 = vpack.c.b16 %v1199, %v1195
    %v1236 = vpack.c.b16 %v1200, %v1196
    %v1237 = vpack.c.b16 %v1201, %v1197
    %v1238 = vpack.c.b16 %v1206, %v1202
    %v1239 = vpack.c.b16 %v1207, %v1203
    %v1240 = vpack.c.b16 %v1208, %v1204
    %v1241 = vpack.c.b16 %v1209, %v1205
    %1274 = vmatprep.subr.bf16.mxu0 %v1211
    %1275 = vmatpush1.bf16.msra.mxu0 %v1210
    %1276 = vmatprep.subr.bf16.mxu0 %v1215
    %1277 = vmatpush1.bf16.msra.mxu0 %v1214
    %1278 = vmatprep.subr.bf16.mxu0 %v1219
    %1279 = vmatpush1.bf16.msra.mxu0 %v1218
    %1280 = vmatprep.subr.bf16.mxu0 %v1223
    %1281 = vmatpush1.bf16.msra.mxu0 %v1222
    %1282 = vmatprep.subr.bf16.mxu0 %v1227
    %1283 = vmatpush1.bf16.msra.mxu0 %v1226
    %1284 = vmatprep.subr.bf16.mxu0 %v1231
    %1285 = vmatpush1.bf16.msra.mxu0 %v1230
    %1286 = vmatprep.subr.bf16.mxu0 %v1235
    %1287 = vmatpush1.bf16.msra.mxu0 %v1234
    %1288 = vmatprep.subr.bf16.mxu0 %v1239
    %1289 = vmatpush1.bf16.msra.mxu0 %v1238
    %1290 = vmatprep.subr.bf16.mxu0 0
    %1291 = vmatpush1.bf16.msra.mxu0 0
    %1292 = vmatprep.subr.bf16.mxu0 0
    %1293 = vmatpush1.bf16.msra.mxu0 0
    %1294 = vmatprep.subr.bf16.mxu0 0
    %1295 = vmatpush1.bf16.msra.mxu0 0
    %1296 = vmatprep.subr.bf16.mxu0 0
    %1297 = vmatpush1.bf16.msra.mxu0 0
    %1298 = vmatprep.subr.bf16.mxu0 0
    %1299 = vmatpush1.bf16.msra.mxu0 0
    %1300 = vmatprep.subr.bf16.mxu0 0
    %1301 = vmatpush1.bf16.msra.mxu0 0
    %1302 = vmatprep.subr.bf16.mxu0 0
    %1303 = vmatpush1.bf16.msra.mxu0 0
    %1304 = vmatprep.subr.bf16.mxu0 0
    %1305 = vmatpush1.bf16.msra.mxu0 0
    %1306 = vmatprep.mubr.bf16.mxu0 0
    %1307 = vmatmul.mubr.bf16.gmra.mrb[0].mxu0 %v806
    %v1308 = vpop.f32.mrb[0].mxu0
    %v1309 = vadd.f32 %v1067, %v1308
    %v1310 = vpop.f32.mrb[0].mxu0
    %v1311 = vadd.f32 %v1069, %v1310
    %v1312 = vpop.f32.mrb[0].mxu0
    %v1313 = vpop.f32.mrb[0].mxu0
    %1314 = vdwg.mxu0
    %1315 = vmatprep.subr.bf16.mxu0 %v1213
    %1316 = vmatpush1.bf16.msra.mxu0 %v1212
    %1317 = vmatprep.subr.bf16.mxu0 %v1217
    %1318 = vmatpush1.bf16.msra.mxu0 %v1216
    %1319 = vmatprep.subr.bf16.mxu0 %v1221
    %1320 = vmatpush1.bf16.msra.mxu0 %v1220
    %1321 = vmatprep.subr.bf16.mxu0 %v1225
    %1322 = vmatpush1.bf16.msra.mxu0 %v1224
    %1323 = vmatprep.subr.bf16.mxu0 %v1229
    %1324 = vmatpush1.bf16.msra.mxu0 %v1228
    %1325 = vmatprep.subr.bf16.mxu0 %v1233
    %1326 = vmatpush1.bf16.msra.mxu0 %v1232
    %1327 = vmatprep.subr.bf16.mxu0 %v1237
    %1328 = vmatpush1.bf16.msra.mxu0 %v1236
    %1329 = vmatprep.subr.bf16.mxu0 %v1241
    %1330 = vmatpush1.bf16.msra.mxu0 %v1240
    %1331 = vmatprep.subr.bf16.mxu0 0
    %1332 = vmatpush1.bf16.msra.mxu0 0
    %1333 = vmatprep.subr.bf16.mxu0 0
    %1334 = vmatpush1.bf16.msra.mxu0 0
    %1335 = vmatprep.subr.bf16.mxu0 0
    %1336 = vmatpush1.bf16.msra.mxu0 0
    %1337 = vmatprep.subr.bf16.mxu0 0
    %1338 = vmatpush1.bf16.msra.mxu0 0
    %1339 = vmatprep.subr.bf16.mxu0 0
    %1340 = vmatpush1.bf16.msra.mxu0 0
    %1341 = vmatprep.subr.bf16.mxu0 0
    %1342 = vmatpush1.bf16.msra.mxu0 0
    %1343 = vmatprep.subr.bf16.mxu0 0
    %1344 = vmatpush1.bf16.msra.mxu0 0
    %1345 = vmatprep.subr.bf16.mxu0 0
    %1346 = vmatpush1.bf16.msra.mxu0 0
    %1347 = vmatprep.mubr.bf16.mxu0 0
    %1348 = vmatmul.mubr.bf16.gmra.mrb[0].mxu0 %v806
    %v1349 = vpop.f32.mrb[0].mxu0
    %v1350 = vadd.f32 %v1108, %v1349
    %v1351 = vpop.f32.mrb[0].mxu0
    %v1352 = vadd.f32 %v1110, %v1351
    %v1353 = vpop.f32.mrb[0].mxu0
    %v1354 = vpop.f32.mrb[0].mxu0
    %1355 = vdwg.mxu0
    %v1356 = vadd.f32 %v1309, %v150
    %v1357 = vadd.f32 %v1311, %v154
    %v1358 = vadd.f32 %v1350, %v158
    %v1359 = vadd.f32 %v1352, %v162
    %s1360 = scalar_lea.vmem [#allocation17], 8
    %v1361 = vld [vmem:[%s1360] sm:$0xff]
    %v1362 = vxor.u32 %v1356, 2147483648
    %v1363 = vmul.f32 %v1362, 1.442695
    %v1364 = vpow.pop %v1363
    %v1365 = vadd.f32 %v1364, 1.0
    %v1366 = vrcp.pop %v1365
    %v1367 = vmul.f32 1.0, %v1366
    %v1368 = vxor.u32 %v1357, 2147483648
    %v1369 = vmul.f32 %v1368, 1.442695
    %v1370 = vpow.pop %v1369
    %v1371 = vadd.f32 %v1370, 1.0
    %v1372 = vrcp.pop %v1371
    %v1373 = vmul.f32 1.0, %v1372
    %v1374 = vtanh.pop %v1358
    %v1375 = vxor.u32 %v1359, 2147483648
    %v1376 = vmul.f32 %v1375, 1.442695
    %v1377 = vpow.pop %v1376
    %v1378 = vadd.f32 %v1377, 1.0
    %v1379 = vrcp.pop %v1378
    %v1380 = vmul.f32 1.0, %v1379
    %v1381 = vmul.f32 %v1373, %v1361
    %v1382 = vmul.f32 %v1367, %v1374
    %v1383 = vadd.f32 %v1381, %v1382
    %v1384 = vtanh.pop %v1383
    %v1385 = vmul.f32 %v1380, %v1384
    %1386 = vst [vmem:[%s804] sm:$0xff] %v1385
    %1387 = vst [vmem:[%s1360] sm:$0xff] %v1383
    %s1388 = smul.u32 1, 4
    %s1389 = smul.addr %s1388, 8
    %s1390 = scalar_lea.vmem [#allocation2], %s1389
    %v1391 = vld [vmem:[%s1390] sm:$0xff]
    %v1392 = vld [vmem:[%s1390 + $0x8] sm:$0xff]
    %v1393 = vld [vmem:[%s1390 + $0x10] sm:$0xff]
    %v1394 = vld [vmem:[%s1390 + $0x18] sm:$0xff]
    %v1395 = vld [vmem:[#allocation16] sm:$0xff]
    %v1396 = vpack.c.bf16 %v1395, %v1395
    %v1397 = vld [vmem:[#allocation9] sm:$0xff]
    %v1398 = vld [vmem:[#allocation9 + $0x8] sm:$0xff]
    %v1399 = vld [vmem:[#allocation9 + $0x10] sm:$0xff]
    %v1400 = vld [vmem:[#allocation9 + $0x18] sm:$0xff]
    %v1401 = vld [vmem:[#allocation9 + $0x20] sm:$0xff]
    %v1402 = vld [vmem:[#allocation9 + $0x28] sm:$0xff]
    %v1403 = vld [vmem:[#allocation9 + $0x30] sm:$0xff]
    %v1404 = vld [vmem:[#allocation9 + $0x38] sm:$0xff]
    %v1405 = vld [vmem:[#allocation9 + $0x40] sm:$0xff]
    %v1406 = vld [vmem:[#allocation9 + $0x48] sm:$0xff]
    %v1407 = vld [vmem:[#allocation9 + $0x50] sm:$0xff]
    %v1408 = vld [vmem:[#allocation9 + $0x58] sm:$0xff]
    %v1409 = vld [vmem:[#allocation9 + $0x60] sm:$0xff]
    %v1410 = vld [vmem:[#allocation9 + $0x68] sm:$0xff]
    %v1411 = vld [vmem:[#allocation9 + $0x70] sm:$0xff]
    %v1412 = vld [vmem:[#allocation9 + $0x78] sm:$0xff]
    %v1413 = vld [vmem:[#allocation9 + $0x80] sm:$0xff]
    %v1414 = vld [vmem:[#allocation9 + $0x88] sm:$0xff]
    %v1415 = vld [vmem:[#allocation9 + $0x90] sm:$0xff]
    %v1416 = vld [vmem:[#allocation9 + $0x98] sm:$0xff]
    %v1417 = vld [vmem:[#allocation9 + $0xa0] sm:$0xff]
    %v1418 = vld [vmem:[#allocation9 + $0xa8] sm:$0xff]
    %v1419 = vld [vmem:[#allocation9 + $0xb0] sm:$0xff]
    %v1420 = vld [vmem:[#allocation9 + $0xb8] sm:$0xff]
    %v1421 = vld [vmem:[#allocation9 + $0xc0] sm:$0xff]
    %v1422 = vld [vmem:[#allocation9 + $0xc8] sm:$0xff]
    %v1423 = vld [vmem:[#allocation9 + $0xd0] sm:$0xff]
    %v1424 = vld [vmem:[#allocation9 + $0xd8] sm:$0xff]
    %v1425 = vld [vmem:[#allocation9 + $0xe0] sm:$0xff]
    %v1426 = vld [vmem:[#allocation9 + $0xe8] sm:$0xff]
    %v1427 = vld [vmem:[#allocation9 + $0xf0] sm:$0xff]
    %v1428 = vld [vmem:[#allocation9 + $0xf8] sm:$0xff]
    %v1461 = vunpack.c.l.b16 %v1397
    %v1462 = vunpack.c.h.b16 %v1397
    %v1463 = vunpack.c.l.b16 %v1398
    %v1464 = vunpack.c.h.b16 %v1398
    %v1465 = vunpack.c.l.b16 %v1399
    %v1466 = vunpack.c.h.b16 %v1399
    %v1467 = vunpack.c.l.b16 %v1400
    %v1468 = vunpack.c.h.b16 %v1400
    %v1469 = vunpack.c.l.b16 %v1401
    %v1470 = vunpack.c.h.b16 %v1401
    %v1471 = vunpack.c.l.b16 %v1402
    %v1472 = vunpack.c.h.b16 %v1402
    %v1473 = vunpack.c.l.b16 %v1403
    %v1474 = vunpack.c.h.b16 %v1403
    %v1475 = vunpack.c.l.b16 %v1404
    %v1476 = vunpack.c.h.b16 %v1404
    %v1477 = vunpack.c.l.b16 %v1405
    %v1478 = vunpack.c.h.b16 %v1405
    %v1479 = vunpack.c.l.b16 %v1406
    %v1480 = vunpack.c.h.b16 %v1406
    %v1481 = vunpack.c.l.b16 %v1407
    %v1482 = vunpack.c.h.b16 %v1407
    %v1483 = vunpack.c.l.b16 %v1408
    %v1484 = vunpack.c.h.b16 %v1408
    %v1485 = vunpack.c.l.b16 %v1409
    %v1486 = vunpack.c.h.b16 %v1409
    %v1487 = vunpack.c.l.b16 %v1410
    %v1488 = vunpack.c.h.b16 %v1410
    %v1489 = vunpack.c.l.b16 %v1411
    %v1490 = vunpack.c.h.b16 %v1411
    %v1491 = vunpack.c.l.b16 %v1412
    %v1492 = vunpack.c.h.b16 %v1412
    %v1493 = vunpack.c.l.b16 %v1413
    %v1494 = vunpack.c.h.b16 %v1413
    %v1495 = vunpack.c.l.b16 %v1414
    %v1496 = vunpack.c.h.b16 %v1414
    %v1497 = vunpack.c.l.b16 %v1415
    %v1498 = vunpack.c.h.b16 %v1415
    %v1499 = vunpack.c.l.b16 %v1416
    %v1500 = vunpack.c.h.b16 %v1416
    %v1501 = vunpack.c.l.b16 %v1417
    %v1502 = vunpack.c.h.b16 %v1417
    %v1503 = vunpack.c.l.b16 %v1418
    %v1504 = vunpack.c.h.b16 %v1418
    %v1505 = vunpack.c.l.b16 %v1419
    %v1506 = vunpack.c.h.b16 %v1419
    %v1507 = vunpack.c.l.b16 %v1420
    %v1508 = vunpack.c.h.b16 %v1420
    %v1509 = vunpack.c.l.b16 %v1421
    %v1510 = vunpack.c.h.b16 %v1421
    %v1511 = vunpack.c.l.b16 %v1422
    %v1512 = vunpack.c.h.b16 %v1422
    %v1513 = vunpack.c.l.b16 %v1423
    %v1514 = vunpack.c.h.b16 %v1423
    %v1515 = vunpack.c.l.b16 %v1424
    %v1516 = vunpack.c.h.b16 %v1424
    %v1517 = vunpack.c.l.b16 %v1425
    %v1518 = vunpack.c.h.b16 %v1425
    %v1519 = vunpack.c.l.b16 %v1426
    %v1520 = vunpack.c.h.b16 %v1426
    %v1521 = vunpack.c.l.b16 %v1427
    %v1522 = vunpack.c.h.b16 %v1427
    %v1523 = vunpack.c.l.b16 %v1428
    %v1524 = vunpack.c.h.b16 %v1428
    %v1525 = vpack.c.b16 %v1465, %v1461
    %v1526 = vpack.c.b16 %v1466, %v1462
    %v1527 = vpack.c.b16 %v1467, %v1463
    %v1528 = vpack.c.b16 %v1468, %v1464
    %v1529 = vpack.c.b16 %v1473, %v1469
    %v1530 = vpack.c.b16 %v1474, %v1470
    %v1531 = vpack.c.b16 %v1475, %v1471
    %v1532 = vpack.c.b16 %v1476, %v1472
    %v1533 = vpack.c.b16 %v1481, %v1477
    %v1534 = vpack.c.b16 %v1482, %v1478
    %v1535 = vpack.c.b16 %v1483, %v1479
    %v1536 = vpack.c.b16 %v1484, %v1480
    %v1537 = vpack.c.b16 %v1489, %v1485
    %v1538 = vpack.c.b16 %v1490, %v1486
    %v1539 = vpack.c.b16 %v1491, %v1487
    %v1540 = vpack.c.b16 %v1492, %v1488
    %v1541 = vpack.c.b16 %v1497, %v1493
    %v1542 = vpack.c.b16 %v1498, %v1494
    %v1543 = vpack.c.b16 %v1499, %v1495
    %v1544 = vpack.c.b16 %v1500, %v1496
    %v1545 = vpack.c.b16 %v1505, %v1501
    %v1546 = vpack.c.b16 %v1506, %v1502
    %v1547 = vpack.c.b16 %v1507, %v1503
    %v1548 = vpack.c.b16 %v1508, %v1504
    %v1549 = vpack.c.b16 %v1513, %v1509
    %v1550 = vpack.c.b16 %v1514, %v1510
    %v1551 = vpack.c.b16 %v1515, %v1511
    %v1552 = vpack.c.b16 %v1516, %v1512
    %v1553 = vpack.c.b16 %v1521, %v1517
    %v1554 = vpack.c.b16 %v1522, %v1518
    %v1555 = vpack.c.b16 %v1523, %v1519
    %v1556 = vpack.c.b16 %v1524, %v1520
    %1589 = vmatprep.subr.bf16.mxu0 %v1526
    %1590 = vmatpush1.bf16.msra.mxu0 %v1525
    %1591 = vmatprep.subr.bf16.mxu0 %v1530
    %1592 = vmatpush1.bf16.msra.mxu0 %v1529
    %1593 = vmatprep.subr.bf16.mxu0 %v1534
    %1594 = vmatpush1.bf16.msra.mxu0 %v1533
    %1595 = vmatprep.subr.bf16.mxu0 %v1538
    %1596 = vmatpush1.bf16.msra.mxu0 %v1537
    %1597 = vmatprep.subr.bf16.mxu0 %v1542
    %1598 = vmatpush1.bf16.msra.mxu0 %v1541
    %1599 = vmatprep.subr.bf16.mxu0 %v1546
    %1600 = vmatpush1.bf16.msra.mxu0 %v1545
    %1601 = vmatprep.subr.bf16.mxu0 %v1550
    %1602 = vmatpush1.bf16.msra.mxu0 %v1549
    %1603 = vmatprep.subr.bf16.mxu0 %v1554
    %1604 = vmatpush1.bf16.msra.mxu0 %v1553
    %1605 = vmatprep.subr.bf16.mxu0 0
    %1606 = vmatpush1.bf16.msra.mxu0 0
    %1607 = vmatprep.subr.bf16.mxu0 0
    %1608 = vmatpush1.bf16.msra.mxu0 0
    %1609 = vmatprep.subr.bf16.mxu0 0
    %1610 = vmatpush1.bf16.msra.mxu0 0
    %1611 = vmatprep.subr.bf16.mxu0 0
    %1612 = vmatpush1.bf16.msra.mxu0 0
    %1613 = vmatprep.subr.bf16.mxu0 0
    %1614 = vmatpush1.bf16.msra.mxu0 0
    %1615 = vmatprep.subr.bf16.mxu0 0
    %1616 = vmatpush1.bf16.msra.mxu0 0
    %1617 = vmatprep.subr.bf16.mxu0 0
    %1618 = vmatpush1.bf16.msra.mxu0 0
    %1619 = vmatprep.subr.bf16.mxu0 0
    %1620 = vmatpush1.bf16.msra.mxu0 0
    %1621 = vmatprep.mubr.bf16.mxu0 0
    %1622 = vmatmul.mubr.bf16.gmra.mrb[0].mxu0 %v1396
    %v1623 = vpop.f32.mrb[0].mxu0
    %v1624 = vadd.f32 0.0, %v1623
    %v1625 = vpop.f32.mrb[0].mxu0
    %v1626 = vadd.f32 0.0, %v1625
    %v1627 = vpop.f32.mrb[0].mxu0
    %v1628 = vpop.f32.mrb[0].mxu0
    %1629 = vdwg.mxu0
    %1630 = vmatprep.subr.bf16.mxu0 %v1528
    %1631 = vmatpush1.bf16.msra.mxu0 %v1527
    %1632 = vmatprep.subr.bf16.mxu0 %v1532
    %1633 = vmatpush1.bf16.msra.mxu0 %v1531
    %1634 = vmatprep.subr.bf16.mxu0 %v1536
    %1635 = vmatpush1.bf16.msra.mxu0 %v1535
    %1636 = vmatprep.subr.bf16.mxu0 %v1540
    %1637 = vmatpush1.bf16.msra.mxu0 %v1539
    %1638 = vmatprep.subr.bf16.mxu0 %v1544
    %1639 = vmatpush1.bf16.msra.mxu0 %v1543
    %1640 = vmatprep.subr.bf16.mxu0 %v1548
    %1641 = vmatpush1.bf16.msra.mxu0 %v1547
    %1642 = vmatprep.subr.bf16.mxu0 %v1552
    %1643 = vmatpush1.bf16.msra.mxu0 %v1551
    %1644 = vmatprep.subr.bf16.mxu0 %v1556
    %1645 = vmatpush1.bf16.msra.mxu0 %v1555
    %1646 = vmatprep.subr.bf16.mxu0 0
    %1647 = vmatpush1.bf16.msra.mxu0 0
    %1648 = vmatprep.subr.bf16.mxu0 0
    %1649 = vmatpush1.bf16.msra.mxu0 0
    %1650 = vmatprep.subr.bf16.mxu0 0
    %1651 = vmatpush1.bf16.msra.mxu0 0
    %1652 = vmatprep.subr.bf16.mxu0 0
    %1653 = vmatpush1.bf16.msra.mxu0 0
    %1654 = vmatprep.subr.bf16.mxu0 0
    %1655 = vmatpush1.bf16.msra.mxu0 0
    %1656 = vmatprep.subr.bf16.mxu0 0
    %1657 = vmatpush1.bf16.msra.mxu0 0
    %1658 = vmatprep.subr.bf16.mxu0 0
    %1659 = vmatpush1.bf16.msra.mxu0 0
    %1660 = vmatprep.subr.bf16.mxu0 0
    %1661 = vmatpush1.bf16.msra.mxu0 0
    %1662 = vmatprep.mubr.bf16.mxu0 0
    %1663 = vmatmul.mubr.bf16.gmra.mrb[0].mxu0 %v1396
    %v1664 = vpop.f32.mrb[0].mxu0
    %v1665 = vadd.f32 0.0, %v1664
    %v1666 = vpop.f32.mrb[0].mxu0
    %v1667 = vadd.f32 0.0, %v1666
    %v1668 = vpop.f32.mrb[0].mxu0
    %v1669 = vpop.f32.mrb[0].mxu0
    %1670 = vdwg.mxu0
    %v1671 = vadd.f32 %v1391, %v1624
    %v1672 = vadd.f32 %v1392, %v1626
    %v1673 = vadd.f32 %v1393, %v1665
    %v1674 = vadd.f32 %v1394, %v1667
    %v1675 = vld [vmem:[#allocation17] sm:$0xff]
    %v1676 = vxor.u32 %v1671, 2147483648
    %v1677 = vmul.f32 %v1676, 1.442695
    %v1678 = vpow.pop %v1677
    %v1679 = vadd.f32 %v1678, 1.0
    %v1680 = vrcp.pop %v1679
    %v1681 = vmul.f32 1.0, %v1680
    %v1682 = vxor.u32 %v1672, 2147483648
    %v1683 = vmul.f32 %v1682, 1.442695
    %v1684 = vpow.pop %v1683
    %v1685 = vadd.f32 %v1684, 1.0
    %v1686 = vrcp.pop %v1685
    %v1687 = vmul.f32 1.0, %v1686
    %v1688 = vtanh.pop %v1673
    %v1689 = vxor.u32 %v1674, 2147483648
    %v1690 = vmul.f32 %v1689, 1.442695
    %v1691 = vpow.pop %v1690
    %v1692 = vadd.f32 %v1691, 1.0
    %v1693 = vrcp.pop %v1692
    %v1694 = vmul.f32 1.0, %v1693
    %v1695 = vmul.f32 %v1687, %v1675
    %v1696 = vmul.f32 %v1681, %v1688
    %v1697 = vadd.f32 %v1695, %v1696
    %v1698 = vtanh.pop %v1697
    %v1699 = vmul.f32 %v1694, %v1698
    %1700 = vst [vmem:[#allocation16] sm:$0xff] %v1699
    %1701 = vst [vmem:[#allocation17] sm:$0xff] %v1697
    %v1702 = vld [vmem:[%s804] sm:$0xff]
    %v1703 = vpack.c.bf16 %v1699, %v1699
    %v1704 = vld [vmem:[#allocation12] sm:$0xff]
    %v1705 = vld [vmem:[#allocation12 + $0x8] sm:$0xff]
    %v1706 = vld [vmem:[#allocation12 + $0x10] sm:$0xff]
    %v1707 = vld [vmem:[#allocation12 + $0x18] sm:$0xff]
    %v1708 = vld [vmem:[#allocation12 + $0x20] sm:$0xff]
    %v1709 = vld [vmem:[#allocation12 + $0x28] sm:$0xff]
    %v1710 = vld [vmem:[#allocation12 + $0x30] sm:$0xff]
    %v1711 = vld [vmem:[#allocation12 + $0x38] sm:$0xff]
    %v1712 = vld [vmem:[#allocation12 + $0x40] sm:$0xff]
    %v1713 = vld [vmem:[#allocation12 + $0x48] sm:$0xff]
    %v1714 = vld [vmem:[#allocation12 + $0x50] sm:$0xff]
    %v1715 = vld [vmem:[#allocation12 + $0x58] sm:$0xff]
    %v1716 = vld [vmem:[#allocation12 + $0x60] sm:$0xff]
    %v1717 = vld [vmem:[#allocation12 + $0x68] sm:$0xff]
    %v1718 = vld [vmem:[#allocation12 + $0x70] sm:$0xff]
    %v1719 = vld [vmem:[#allocation12 + $0x78] sm:$0xff]
    %v1720 = vld [vmem:[#allocation12 + $0x80] sm:$0xff]
    %v1721 = vld [vmem:[#allocation12 + $0x88] sm:$0xff]
    %v1722 = vld [vmem:[#allocation12 + $0x90] sm:$0xff]
    %v1723 = vld [vmem:[#allocation12 + $0x98] sm:$0xff]
    %v1724 = vld [vmem:[#allocation12 + $0xa0] sm:$0xff]
    %v1725 = vld [vmem:[#allocation12 + $0xa8] sm:$0xff]
    %v1726 = vld [vmem:[#allocation12 + $0xb0] sm:$0xff]
    %v1727 = vld [vmem:[#allocation12 + $0xb8] sm:$0xff]
    %v1728 = vld [vmem:[#allocation12 + $0xc0] sm:$0xff]
    %v1729 = vld [vmem:[#allocation12 + $0xc8] sm:$0xff]
    %v1730 = vld [vmem:[#allocation12 + $0xd0] sm:$0xff]
    %v1731 = vld [vmem:[#allocation12 + $0xd8] sm:$0xff]
    %v1732 = vld [vmem:[#allocation12 + $0xe0] sm:$0xff]
    %v1733 = vld [vmem:[#allocation12 + $0xe8] sm:$0xff]
    %v1734 = vld [vmem:[#allocation12 + $0xf0] sm:$0xff]
    %v1735 = vld [vmem:[#allocation12 + $0xf8] sm:$0xff]
    %v1736 = vpack.c.bf16 %v1702, %v1702
    %v1737 = vld [vmem:[#allocation13] sm:$0xff]
    %v1738 = vld [vmem:[#allocation13 + $0x8] sm:$0xff]
    %v1739 = vld [vmem:[#allocation13 + $0x10] sm:$0xff]
    %v1740 = vld [vmem:[#allocation13 + $0x18] sm:$0xff]
    %v1741 = vld [vmem:[#allocation13 + $0x20] sm:$0xff]
    %v1742 = vld [vmem:[#allocation13 + $0x28] sm:$0xff]
    %v1743 = vld [vmem:[#allocation13 + $0x30] sm:$0xff]
    %v1744 = vld [vmem:[#allocation13 + $0x38] sm:$0xff]
    %v1745 = vld [vmem:[#allocation13 + $0x40] sm:$0xff]
    %v1746 = vld [vmem:[#allocation13 + $0x48] sm:$0xff]
    %v1747 = vld [vmem:[#allocation13 + $0x50] sm:$0xff]
    %v1748 = vld [vmem:[#allocation13 + $0x58] sm:$0xff]
    %v1749 = vld [vmem:[#allocation13 + $0x60] sm:$0xff]
    %v1750 = vld [vmem:[#allocation13 + $0x68] sm:$0xff]
    %v1751 = vld [vmem:[#allocation13 + $0x70] sm:$0xff]
    %v1752 = vld [vmem:[#allocation13 + $0x78] sm:$0xff]
    %v1753 = vld [vmem:[#allocation13 + $0x80] sm:$0xff]
    %v1754 = vld [vmem:[#allocation13 + $0x88] sm:$0xff]
    %v1755 = vld [vmem:[#allocation13 + $0x90] sm:$0xff]
    %v1756 = vld [vmem:[#allocation13 + $0x98] sm:$0xff]
    %v1757 = vld [vmem:[#allocation13 + $0xa0] sm:$0xff]
    %v1758 = vld [vmem:[#allocation13 + $0xa8] sm:$0xff]
    %v1759 = vld [vmem:[#allocation13 + $0xb0] sm:$0xff]
    %v1760 = vld [vmem:[#allocation13 + $0xb8] sm:$0xff]
    %v1761 = vld [vmem:[#allocation13 + $0xc0] sm:$0xff]
    %v1762 = vld [vmem:[#allocation13 + $0xc8] sm:$0xff]
    %v1763 = vld [vmem:[#allocation13 + $0xd0] sm:$0xff]
    %v1764 = vld [vmem:[#allocation13 + $0xd8] sm:$0xff]
    %v1765 = vld [vmem:[#allocation13 + $0xe0] sm:$0xff]
    %v1766 = vld [vmem:[#allocation13 + $0xe8] sm:$0xff]
    %v1767 = vld [vmem:[#allocation13 + $0xf0] sm:$0xff]
    %v1768 = vld [vmem:[#allocation13 + $0xf8] sm:$0xff]
    %v1801 = vunpack.c.l.b16 %v1737
    %v1802 = vunpack.c.h.b16 %v1737
    %v1803 = vunpack.c.l.b16 %v1738
    %v1804 = vunpack.c.h.b16 %v1738
    %v1805 = vunpack.c.l.b16 %v1739
    %v1806 = vunpack.c.h.b16 %v1739
    %v1807 = vunpack.c.l.b16 %v1740
    %v1808 = vunpack.c.h.b16 %v1740
    %v1809 = vunpack.c.l.b16 %v1741
    %v1810 = vunpack.c.h.b16 %v1741
    %v1811 = vunpack.c.l.b16 %v1742
    %v1812 = vunpack.c.h.b16 %v1742
    %v1813 = vunpack.c.l.b16 %v1743
    %v1814 = vunpack.c.h.b16 %v1743
    %v1815 = vunpack.c.l.b16 %v1744
    %v1816 = vunpack.c.h.b16 %v1744
    %v1817 = vunpack.c.l.b16 %v1745
    %v1818 = vunpack.c.h.b16 %v1745
    %v1819 = vunpack.c.l.b16 %v1746
    %v1820 = vunpack.c.h.b16 %v1746
    %v1821 = vunpack.c.l.b16 %v1747
    %v1822 = vunpack.c.h.b16 %v1747
    %v1823 = vunpack.c.l.b16 %v1748
    %v1824 = vunpack.c.h.b16 %v1748
    %v1825 = vunpack.c.l.b16 %v1749
    %v1826 = vunpack.c.h.b16 %v1749
    %v1827 = vunpack.c.l.b16 %v1750
    %v1828 = vunpack.c.h.b16 %v1750
    %v1829 = vunpack.c.l.b16 %v1751
    %v1830 = vunpack.c.h.b16 %v1751
    %v1831 = vunpack.c.l.b16 %v1752
    %v1832 = vunpack.c.h.b16 %v1752
    %v1833 = vunpack.c.l.b16 %v1753
    %v1834 = vunpack.c.h.b16 %v1753
    %v1835 = vunpack.c.l.b16 %v1754
    %v1836 = vunpack.c.h.b16 %v1754
    %v1837 = vunpack.c.l.b16 %v1755
    %v1838 = vunpack.c.h.b16 %v1755
    %v1839 = vunpack.c.l.b16 %v1756
    %v1840 = vunpack.c.h.b16 %v1756
    %v1841 = vunpack.c.l.b16 %v1757
    %v1842 = vunpack.c.h.b16 %v1757
    %v1843 = vunpack.c.l.b16 %v1758
    %v1844 = vunpack.c.h.b16 %v1758
    %v1845 = vunpack.c.l.b16 %v1759
    %v1846 = vunpack.c.h.b16 %v1759
    %v1847 = vunpack.c.l.b16 %v1760
    %v1848 = vunpack.c.h.b16 %v1760
    %v1849 = vunpack.c.l.b16 %v1761
    %v1850 = vunpack.c.h.b16 %v1761
    %v1851 = vunpack.c.l.b16 %v1762
    %v1852 = vunpack.c.h.b16 %v1762
    %v1853 = vunpack.c.l.b16 %v1763
    %v1854 = vunpack.c.h.b16 %v1763
    %v1855 = vunpack.c.l.b16 %v1764
    %v1856 = vunpack.c.h.b16 %v1764
    %v1857 = vunpack.c.l.b16 %v1765
    %v1858 = vunpack.c.h.b16 %v1765
    %v1859 = vunpack.c.l.b16 %v1766
    %v1860 = vunpack.c.h.b16 %v1766
    %v1861 = vunpack.c.l.b16 %v1767
    %v1862 = vunpack.c.h.b16 %v1767
    %v1863 = vunpack.c.l.b16 %v1768
    %v1864 = vunpack.c.h.b16 %v1768
    %v1865 = vpack.c.b16 %v1805, %v1801
    %v1866 = vpack.c.b16 %v1806, %v1802
    %v1867 = vpack.c.b16 %v1807, %v1803
    %v1868 = vpack.c.b16 %v1808, %v1804
    %v1869 = vpack.c.b16 %v1813, %v1809
    %v1870 = vpack.c.b16 %v1814, %v1810
    %v1871 = vpack.c.b16 %v1815, %v1811
    %v1872 = vpack.c.b16 %v1816, %v1812
    %v1873 = vpack.c.b16 %v1821, %v1817
    %v1874 = vpack.c.b16 %v1822, %v1818
    %v1875 = vpack.c.b16 %v1823, %v1819
    %v1876 = vpack.c.b16 %v1824, %v1820
    %v1877 = vpack.c.b16 %v1829, %v1825
    %v1878 = vpack.c.b16 %v1830, %v1826
    %v1879 = vpack.c.b16 %v1831, %v1827
    %v1880 = vpack.c.b16 %v1832, %v1828
    %v1881 = vpack.c.b16 %v1837, %v1833
    %v1882 = vpack.c.b16 %v1838, %v1834
    %v1883 = vpack.c.b16 %v1839, %v1835
    %v1884 = vpack.c.b16 %v1840, %v1836
    %v1885 = vpack.c.b16 %v1845, %v1841
    %v1886 = vpack.c.b16 %v1846, %v1842
    %v1887 = vpack.c.b16 %v1847, %v1843
    %v1888 = vpack.c.b16 %v1848, %v1844
    %v1889 = vpack.c.b16 %v1853, %v1849
    %v1890 = vpack.c.b16 %v1854, %v1850
    %v1891 = vpack.c.b16 %v1855, %v1851
    %v1892 = vpack.c.b16 %v1856, %v1852
    %v1893 = vpack.c.b16 %v1861, %v1857
    %v1894 = vpack.c.b16 %v1862, %v1858
    %v1895 = vpack.c.b16 %v1863, %v1859
    %v1896 = vpack.c.b16 %v1864, %v1860
    %1929 = vmatprep.subr.bf16.mxu0 %v1866
    %1930 = vmatpush1.bf16.msra.mxu0 %v1865
    %1931 = vmatprep.subr.bf16.mxu0 %v1870
    %1932 = vmatpush1.bf16.msra.mxu0 %v1869
    %1933 = vmatprep.subr.bf16.mxu0 %v1874
    %1934 = vmatpush1.bf16.msra.mxu0 %v1873
    %1935 = vmatprep.subr.bf16.mxu0 %v1878
    %1936 = vmatpush1.bf16.msra.mxu0 %v1877
    %1937 = vmatprep.subr.bf16.mxu0 %v1882
    %1938 = vmatpush1.bf16.msra.mxu0 %v1881
    %1939 = vmatprep.subr.bf16.mxu0 %v1886
    %1940 = vmatpush1.bf16.msra.mxu0 %v1885
    %1941 = vmatprep.subr.bf16.mxu0 %v1890
    %1942 = vmatpush1.bf16.msra.mxu0 %v1889
    %1943 = vmatprep.subr.bf16.mxu0 %v1894
    %1944 = vmatpush1.bf16.msra.mxu0 %v1893
    %1945 = vmatprep.subr.bf16.mxu0 0
    %1946 = vmatpush1.bf16.msra.mxu0 0
    %1947 = vmatprep.subr.bf16.mxu0 0
    %1948 = vmatpush1.bf16.msra.mxu0 0
    %1949 = vmatprep.subr.bf16.mxu0 0
    %1950 = vmatpush1.bf16.msra.mxu0 0
    %1951 = vmatprep.subr.bf16.mxu0 0
    %1952 = vmatpush1.bf16.msra.mxu0 0
    %1953 = vmatprep.subr.bf16.mxu0 0
    %1954 = vmatpush1.bf16.msra.mxu0 0
    %1955 = vmatprep.subr.bf16.mxu0 0
    %1956 = vmatpush1.bf16.msra.mxu0 0
    %1957 = vmatprep.subr.bf16.mxu0 0
    %1958 = vmatpush1.bf16.msra.mxu0 0
    %1959 = vmatprep.subr.bf16.mxu0 0
    %1960 = vmatpush1.bf16.msra.mxu0 0
    %1961 = vmatprep.mubr.bf16.mxu0 0
    %1962 = vmatmul.mubr.bf16.gmra.mrb[0].mxu0 %v1736
    %v1963 = vpop.f32.mrb[0].mxu0
    %v1964 = vadd.f32 0.0, %v1963
    %v1965 = vpop.f32.mrb[0].mxu0
    %v1966 = vadd.f32 0.0, %v1965
    %v1967 = vpop.f32.mrb[0].mxu0
    %v1968 = vpop.f32.mrb[0].mxu0
    %1969 = vdwg.mxu0
    %1970 = vmatprep.subr.bf16.mxu0 %v1868
    %1971 = vmatpush1.bf16.msra.mxu0 %v1867
    %1972 = vmatprep.subr.bf16.mxu0 %v1872
    %1973 = vmatpush1.bf16.msra.mxu0 %v1871
    %1974 = vmatprep.subr.bf16.mxu0 %v1876
    %1975 = vmatpush1.bf16.msra.mxu0 %v1875
    %1976 = vmatprep.subr.bf16.mxu0 %v1880
    %1977 = vmatpush1.bf16.msra.mxu0 %v1879
    %1978 = vmatprep.subr.bf16.mxu0 %v1884
    %1979 = vmatpush1.bf16.msra.mxu0 %v1883
    %1980 = vmatprep.subr.bf16.mxu0 %v1888
    %1981 = vmatpush1.bf16.msra.mxu0 %v1887
    %1982 = vmatprep.subr.bf16.mxu0 %v1892
    %1983 = vmatpush1.bf16.msra.mxu0 %v1891
    %1984 = vmatprep.subr.bf16.mxu0 %v1896
    %1985 = vmatpush1.bf16.msra.mxu0 %v1895
    %1986 = vmatprep.subr.bf16.mxu0 0
    %1987 = vmatpush1.bf16.msra.mxu0 0
    %1988 = vmatprep.subr.bf16.mxu0 0
    %1989 = vmatpush1.bf16.msra.mxu0 0
    %1990 = vmatprep.subr.bf16.mxu0 0
    %1991 = vmatpush1.bf16.msra.mxu0 0
    %1992 = vmatprep.subr.bf16.mxu0 0
    %1993 = vmatpush1.bf16.msra.mxu0 0
    %1994 = vmatprep.subr.bf16.mxu0 0
    %1995 = vmatpush1.bf16.msra.mxu0 0
    %1996 = vmatprep.subr.bf16.mxu0 0
    %1997 = vmatpush1.bf16.msra.mxu0 0
    %1998 = vmatprep.subr.bf16.mxu0 0
    %1999 = vmatpush1.bf16.msra.mxu0 0
    %2000 = vmatprep.subr.bf16.mxu0 0
    %2001 = vmatpush1.bf16.msra.mxu0 0
    %2002 = vmatprep.mubr.bf16.mxu0 0
    %2003 = vmatmul.mubr.bf16.gmra.mrb[0].mxu0 %v1736
    %v2004 = vpop.f32.mrb[0].mxu0
    %v2005 = vadd.f32 0.0, %v2004
    %v2006 = vpop.f32.mrb[0].mxu0
    %v2007 = vadd.f32 0.0, %v2006
    %v2008 = vpop.f32.mrb[0].mxu0
    %v2009 = vpop.f32.mrb[0].mxu0
    %2010 = vdwg.mxu0
    %v2043 = vunpack.c.l.b16 %v1704
    %v2044 = vunpack.c.h.b16 %v1704
    %v2045 = vunpack.c.l.b16 %v1705
    %v2046 = vunpack.c.h.b16 %v1705
    %v2047 = vunpack.c.l.b16 %v1706
    %v2048 = vunpack.c.h.b16 %v1706
    %v2049 = vunpack.c.l.b16 %v1707
    %v2050 = vunpack.c.h.b16 %v1707
    %v2051 = vunpack.c.l.b16 %v1708
    %v2052 = vunpack.c.h.b16 %v1708
    %v2053 = vunpack.c.l.b16 %v1709
    %v2054 = vunpack.c.h.b16 %v1709
    %v2055 = vunpack.c.l.b16 %v1710
    %v2056 = vunpack.c.h.b16 %v1710
    %v2057 = vunpack.c.l.b16 %v1711
    %v2058 = vunpack.c.h.b16 %v1711
    %v2059 = vunpack.c.l.b16 %v1712
    %v2060 = vunpack.c.h.b16 %v1712
    %v2061 = vunpack.c.l.b16 %v1713
    %v2062 = vunpack.c.h.b16 %v1713
    %v2063 = vunpack.c.l.b16 %v1714
    %v2064 = vunpack.c.h.b16 %v1714
    %v2065 = vunpack.c.l.b16 %v1715
    %v2066 = vunpack.c.h.b16 %v1715
    %v2067 = vunpack.c.l.b16 %v1716
    %v2068 = vunpack.c.h.b16 %v1716
    %v2069 = vunpack.c.l.b16 %v1717
    %v2070 = vunpack.c.h.b16 %v1717
    %v2071 = vunpack.c.l.b16 %v1718
    %v2072 = vunpack.c.h.b16 %v1718
    %v2073 = vunpack.c.l.b16 %v1719
    %v2074 = vunpack.c.h.b16 %v1719
    %v2075 = vunpack.c.l.b16 %v1720
    %v2076 = vunpack.c.h.b16 %v1720
    %v2077 = vunpack.c.l.b16 %v1721
    %v2078 = vunpack.c.h.b16 %v1721
    %v2079 = vunpack.c.l.b16 %v1722
    %v2080 = vunpack.c.h.b16 %v1722
    %v2081 = vunpack.c.l.b16 %v1723
    %v2082 = vunpack.c.h.b16 %v1723
    %v2083 = vunpack.c.l.b16 %v1724
    %v2084 = vunpack.c.h.b16 %v1724
    %v2085 = vunpack.c.l.b16 %v1725
    %v2086 = vunpack.c.h.b16 %v1725
    %v2087 = vunpack.c.l.b16 %v1726
    %v2088 = vunpack.c.h.b16 %v1726
    %v2089 = vunpack.c.l.b16 %v1727
    %v2090 = vunpack.c.h.b16 %v1727
    %v2091 = vunpack.c.l.b16 %v1728
    %v2092 = vunpack.c.h.b16 %v1728
    %v2093 = vunpack.c.l.b16 %v1729
    %v2094 = vunpack.c.h.b16 %v1729
    %v2095 = vunpack.c.l.b16 %v1730
    %v2096 = vunpack.c.h.b16 %v1730
    %v2097 = vunpack.c.l.b16 %v1731
    %v2098 = vunpack.c.h.b16 %v1731
    %v2099 = vunpack.c.l.b16 %v1732
    %v2100 = vunpack.c.h.b16 %v1732
    %v2101 = vunpack.c.l.b16 %v1733
    %v2102 = vunpack.c.h.b16 %v1733
    %v2103 = vunpack.c.l.b16 %v1734
    %v2104 = vunpack.c.h.b16 %v1734
    %v2105 = vunpack.c.l.b16 %v1735
    %v2106 = vunpack.c.h.b16 %v1735
    %v2107 = vpack.c.b16 %v2047, %v2043
    %v2108 = vpack.c.b16 %v2048, %v2044
    %v2109 = vpack.c.b16 %v2049, %v2045
    %v2110 = vpack.c.b16 %v2050, %v2046
    %v2111 = vpack.c.b16 %v2055, %v2051
    %v2112 = vpack.c.b16 %v2056, %v2052
    %v2113 = vpack.c.b16 %v2057, %v2053
    %v2114 = vpack.c.b16 %v2058, %v2054
    %v2115 = vpack.c.b16 %v2063, %v2059
    %v2116 = vpack.c.b16 %v2064, %v2060
    %v2117 = vpack.c.b16 %v2065, %v2061
    %v2118 = vpack.c.b16 %v2066, %v2062
    %v2119 = vpack.c.b16 %v2071, %v2067
    %v2120 = vpack.c.b16 %v2072, %v2068
    %v2121 = vpack.c.b16 %v2073, %v2069
    %v2122 = vpack.c.b16 %v2074, %v2070
    %v2123 = vpack.c.b16 %v2079, %v2075
    %v2124 = vpack.c.b16 %v2080, %v2076
    %v2125 = vpack.c.b16 %v2081, %v2077
    %v2126 = vpack.c.b16 %v2082, %v2078
    %v2127 = vpack.c.b16 %v2087, %v2083
    %v2128 = vpack.c.b16 %v2088, %v2084
    %v2129 = vpack.c.b16 %v2089, %v2085
    %v2130 = vpack.c.b16 %v2090, %v2086
    %v2131 = vpack.c.b16 %v2095, %v2091
    %v2132 = vpack.c.b16 %v2096, %v2092
    %v2133 = vpack.c.b16 %v2097, %v2093
    %v2134 = vpack.c.b16 %v2098, %v2094
    %v2135 = vpack.c.b16 %v2103, %v2099
    %v2136 = vpack.c.b16 %v2104, %v2100
    %v2137 = vpack.c.b16 %v2105, %v2101
    %v2138 = vpack.c.b16 %v2106, %v2102
    %2171 = vmatprep.subr.bf16.mxu0 %v2108
    %2172 = vmatpush1.bf16.msra.mxu0 %v2107
    %2173 = vmatprep.subr.bf16.mxu0 %v2112
    %2174 = vmatpush1.bf16.msra.mxu0 %v2111
    %2175 = vmatprep.subr.bf16.mxu0 %v2116
    %2176 = vmatpush1.bf16.msra.mxu0 %v2115
    %2177 = vmatprep.subr.bf16.mxu0 %v2120
    %2178 = vmatpush1.bf16.msra.mxu0 %v2119
    %2179 = vmatprep.subr.bf16.mxu0 %v2124
    %2180 = vmatpush1.bf16.msra.mxu0 %v2123
    %2181 = vmatprep.subr.bf16.mxu0 %v2128
    %2182 = vmatpush1.bf16.msra.mxu0 %v2127
    %2183 = vmatprep.subr.bf16.mxu0 %v2132
    %2184 = vmatpush1.bf16.msra.mxu0 %v2131
    %2185 = vmatprep.subr.bf16.mxu0 %v2136
    %2186 = vmatpush1.bf16.msra.mxu0 %v2135
    %2187 = vmatprep.subr.bf16.mxu0 0
    %2188 = vmatpush1.bf16.msra.mxu0 0
    %2189 = vmatprep.subr.bf16.mxu0 0
    %2190 = vmatpush1.bf16.msra.mxu0 0
    %2191 = vmatprep.subr.bf16.mxu0 0
    %2192 = vmatpush1.bf16.msra.mxu0 0
    %2193 = vmatprep.subr.bf16.mxu0 0
    %2194 = vmatpush1.bf16.msra.mxu0 0
    %2195 = vmatprep.subr.bf16.mxu0 0
    %2196 = vmatpush1.bf16.msra.mxu0 0
    %2197 = vmatprep.subr.bf16.mxu0 0
    %2198 = vmatpush1.bf16.msra.mxu0 0
    %2199 = vmatprep.subr.bf16.mxu0 0
    %2200 = vmatpush1.bf16.msra.mxu0 0
    %2201 = vmatprep.subr.bf16.mxu0 0
    %2202 = vmatpush1.bf16.msra.mxu0 0
    %2203 = vmatprep.mubr.bf16.mxu0 0
    %2204 = vmatmul.mubr.bf16.gmra.mrb[0].mxu0 %v1703
    %v2205 = vpop.f32.mrb[0].mxu0
    %v2206 = vadd.f32 %v1964, %v2205
    %v2207 = vpop.f32.mrb[0].mxu0
    %v2208 = vadd.f32 %v1966, %v2207
    %v2209 = vpop.f32.mrb[0].mxu0
    %v2210 = vpop.f32.mrb[0].mxu0
    %2211 = vdwg.mxu0
    %2212 = vmatprep.subr.bf16.mxu0 %v2110
    %2213 = vmatpush1.bf16.msra.mxu0 %v2109
    %2214 = vmatprep.subr.bf16.mxu0 %v2114
    %2215 = vmatpush1.bf16.msra.mxu0 %v2113
    %2216 = vmatprep.subr.bf16.mxu0 %v2118
    %2217 = vmatpush1.bf16.msra.mxu0 %v2117
    %2218 = vmatprep.subr.bf16.mxu0 %v2122
    %2219 = vmatpush1.bf16.msra.mxu0 %v2121
    %2220 = vmatprep.subr.bf16.mxu0 %v2126
    %2221 = vmatpush1.bf16.msra.mxu0 %v2125
    %2222 = vmatprep.subr.bf16.mxu0 %v2130
    %2223 = vmatpush1.bf16.msra.mxu0 %v2129
    %2224 = vmatprep.subr.bf16.mxu0 %v2134
    %2225 = vmatpush1.bf16.msra.mxu0 %v2133
    %2226 = vmatprep.subr.bf16.mxu0 %v2138
    %2227 = vmatpush1.bf16.msra.mxu0 %v2137
    %2228 = vmatprep.subr.bf16.mxu0 0
    %2229 = vmatpush1.bf16.msra.mxu0 0
    %2230 = vmatprep.subr.bf16.mxu0 0
    %2231 = vmatpush1.bf16.msra.mxu0 0
    %2232 = vmatprep.subr.bf16.mxu0 0
    %2233 = vmatpush1.bf16.msra.mxu0 0
    %2234 = vmatprep.subr.bf16.mxu0 0
    %2235 = vmatpush1.bf16.msra.mxu0 0
    %2236 = vmatprep.subr.bf16.mxu0 0
    %2237 = vmatpush1.bf16.msra.mxu0 0
    %2238 = vmatprep.subr.bf16.mxu0 0
    %2239 = vmatpush1.bf16.msra.mxu0 0
    %2240 = vmatprep.subr.bf16.mxu0 0
    %2241 = vmatpush1.bf16.msra.mxu0 0
    %2242 = vmatprep.subr.bf16.mxu0 0
    %2243 = vmatpush1.bf16.msra.mxu0 0
    %2244 = vmatprep.mubr.bf16.mxu0 0
    %2245 = vmatmul.mubr.bf16.gmra.mrb[0].mxu0 %v1703
    %v2246 = vpop.f32.mrb[0].mxu0
    %v2247 = vadd.f32 %v2005, %v2246
    %v2248 = vpop.f32.mrb[0].mxu0
    %v2249 = vadd.f32 %v2007, %v2248
    %v2250 = vpop.f32.mrb[0].mxu0
    %v2251 = vpop.f32.mrb[0].mxu0
    %2252 = vdwg.mxu0
    %v2253 = vadd.f32 %v2206, %v150
    %v2254 = vadd.f32 %v2208, %v154
    %v2255 = vadd.f32 %v2247, %v158
    %v2256 = vadd.f32 %v2249, %v162
    %v2257 = vld [vmem:[%s1360] sm:$0xff]
    %v2258 = vxor.u32 %v2253, 2147483648
    %v2259 = vmul.f32 %v2258, 1.442695
    %v2260 = vpow.pop %v2259
    %v2261 = vadd.f32 %v2260, 1.0
    %v2262 = vrcp.pop %v2261
    %v2263 = vmul.f32 1.0, %v2262
    %v2264 = vxor.u32 %v2254, 2147483648
    %v2265 = vmul.f32 %v2264, 1.442695
    %v2266 = vpow.pop %v2265
    %v2267 = vadd.f32 %v2266, 1.0
    %v2268 = vrcp.pop %v2267
    %v2269 = vmul.f32 1.0, %v2268
    %v2270 = vtanh.pop %v2255
    %v2271 = vxor.u32 %v2256, 2147483648
    %v2272 = vmul.f32 %v2271, 1.442695
    %v2273 = vpow.pop %v2272
    %v2274 = vadd.f32 %v2273, 1.0
    %v2275 = vrcp.pop %v2274
    %v2276 = vmul.f32 1.0, %v2275
    %v2277 = vmul.f32 %v2269, %v2257
    %v2278 = vmul.f32 %v2263, %v2270
    %v2279 = vadd.f32 %v2277, %v2278
    %v2280 = vtanh.pop %v2279
    %v2281 = vmul.f32 %v2276, %v2280
    %2282 = vst [vmem:[%s804] sm:$0xff] %v2281
    %2283 = vst [vmem:[%s1360] sm:$0xff] %v2279
    %s2284 = smul.u32 2, 4
    %s2285 = smul.addr %s2284, 8
    %s2286 = scalar_lea.vmem [#allocation2], %s2285
    %v2287 = vld [vmem:[%s2286] sm:$0xff]
    %v2288 = vld [vmem:[%s2286 + $0x8] sm:$0xff]
    %v2289 = vld [vmem:[%s2286 + $0x10] sm:$0xff]
    %v2290 = vld [vmem:[%s2286 + $0x18] sm:$0xff]
    %v2291 = vld [vmem:[#allocation16] sm:$0xff]
    %v2292 = vpack.c.bf16 %v2291, %v2291
    %v2293 = vld [vmem:[#allocation9] sm:$0xff]
    %v2294 = vld [vmem:[#allocation9 + $0x8] sm:$0xff]
    %v2295 = vld [vmem:[#allocation9 + $0x10] sm:$0xff]
    %v2296 = vld [vmem:[#allocation9 + $0x18] sm:$0xff]
    %v2297 = vld [vmem:[#allocation9 + $0x20] sm:$0xff]
    %v2298 = vld [vmem:[#allocation9 + $0x28] sm:$0xff]
    %v2299 = vld [vmem:[#allocation9 + $0x30] sm:$0xff]
    %v2300 = vld [vmem:[#allocation9 + $0x38] sm:$0xff]
    %v2301 = vld [vmem:[#allocation9 + $0x40] sm:$0xff]
    %v2302 = vld [vmem:[#allocation9 + $0x48] sm:$0xff]
    %v2303 = vld [vmem:[#allocation9 + $0x50] sm:$0xff]
    %v2304 = vld [vmem:[#allocation9 + $0x58] sm:$0xff]
    %v2305 = vld [vmem:[#allocation9 + $0x60] sm:$0xff]
    %v2306 = vld [vmem:[#allocation9 + $0x68] sm:$0xff]
    %v2307 = vld [vmem:[#allocation9 + $0x70] sm:$0xff]
    %v2308 = vld [vmem:[#allocation9 + $0x78] sm:$0xff]
    %v2309 = vld [vmem:[#allocation9 + $0x80] sm:$0xff]
    %v2310 = vld [vmem:[#allocation9 + $0x88] sm:$0xff]
    %v2311 = vld [vmem:[#allocation9 + $0x90] sm:$0xff]
    %v2312 = vld [vmem:[#allocation9 + $0x98] sm:$0xff]
    %v2313 = vld [vmem:[#allocation9 + $0xa0] sm:$0xff]
    %v2314 = vld [vmem:[#allocation9 + $0xa8] sm:$0xff]
    %v2315 = vld [vmem:[#allocation9 + $0xb0] sm:$0xff]
    %v2316 = vld [vmem:[#allocation9 + $0xb8] sm:$0xff]
    %v2317 = vld [vmem:[#allocation9 + $0xc0] sm:$0xff]
    %v2318 = vld [vmem:[#allocation9 + $0xc8] sm:$0xff]
    %v2319 = vld [vmem:[#allocation9 + $0xd0] sm:$0xff]
    %v2320 = vld [vmem:[#allocation9 + $0xd8] sm:$0xff]
    %v2321 = vld [vmem:[#allocation9 + $0xe0] sm:$0xff]
    %v2322 = vld [vmem:[#allocation9 + $0xe8] sm:$0xff]
    %v2323 = vld [vmem:[#allocation9 + $0xf0] sm:$0xff]
    %v2324 = vld [vmem:[#allocation9 + $0xf8] sm:$0xff]
    %v2357 = vunpack.c.l.b16 %v2293
    %v2358 = vunpack.c.h.b16 %v2293
    %v2359 = vunpack.c.l.b16 %v2294
    %v2360 = vunpack.c.h.b16 %v2294
    %v2361 = vunpack.c.l.b16 %v2295
    %v2362 = vunpack.c.h.b16 %v2295
    %v2363 = vunpack.c.l.b16 %v2296
    %v2364 = vunpack.c.h.b16 %v2296
    %v2365 = vunpack.c.l.b16 %v2297
    %v2366 = vunpack.c.h.b16 %v2297
    %v2367 = vunpack.c.l.b16 %v2298
    %v2368 = vunpack.c.h.b16 %v2298
    %v2369 = vunpack.c.l.b16 %v2299
    %v2370 = vunpack.c.h.b16 %v2299
    %v2371 = vunpack.c.l.b16 %v2300
    %v2372 = vunpack.c.h.b16 %v2300
    %v2373 = vunpack.c.l.b16 %v2301
    %v2374 = vunpack.c.h.b16 %v2301
    %v2375 = vunpack.c.l.b16 %v2302
    %v2376 = vunpack.c.h.b16 %v2302
    %v2377 = vunpack.c.l.b16 %v2303
    %v2378 = vunpack.c.h.b16 %v2303
    %v2379 = vunpack.c.l.b16 %v2304
    %v2380 = vunpack.c.h.b16 %v2304
    %v2381 = vunpack.c.l.b16 %v2305
    %v2382 = vunpack.c.h.b16 %v2305
    %v2383 = vunpack.c.l.b16 %v2306
    %v2384 = vunpack.c.h.b16 %v2306
    %v2385 = vunpack.c.l.b16 %v2307
    %v2386 = vunpack.c.h.b16 %v2307
    %v2387 = vunpack.c.l.b16 %v2308
    %v2388 = vunpack.c.h.b16 %v2308
    %v2389 = vunpack.c.l.b16 %v2309
    %v2390 = vunpack.c.h.b16 %v2309
    %v2391 = vunpack.c.l.b16 %v2310
    %v2392 = vunpack.c.h.b16 %v2310
    %v2393 = vunpack.c.l.b16 %v2311
    %v2394 = vunpack.c.h.b16 %v2311
    %v2395 = vunpack.c.l.b16 %v2312
    %v2396 = vunpack.c.h.b16 %v2312
    %v2397 = vunpack.c.l.b16 %v2313
    %v2398 = vunpack.c.h.b16 %v2313
    %v2399 = vunpack.c.l.b16 %v2314
    %v2400 = vunpack.c.h.b16 %v2314
    %v2401 = vunpack.c.l.b16 %v2315
    %v2402 = vunpack.c.h.b16 %v2315
    %v2403 = vunpack.c.l.b16 %v2316
    %v2404 = vunpack.c.h.b16 %v2316
    %v2405 = vunpack.c.l.b16 %v2317
    %v2406 = vunpack.c.h.b16 %v2317
    %v2407 = vunpack.c.l.b16 %v2318
    %v2408 = vunpack.c.h.b16 %v2318
    %v2409 = vunpack.c.l.b16 %v2319
    %v2410 = vunpack.c.h.b16 %v2319
    %v2411 = vunpack.c.l.b16 %v2320
    %v2412 = vunpack.c.h.b16 %v2320
    %v2413 = vunpack.c.l.b16 %v2321
    %v2414 = vunpack.c.h.b16 %v2321
    %v2415 = vunpack.c.l.b16 %v2322
    %v2416 = vunpack.c.h.b16 %v2322
    %v2417 = vunpack.c.l.b16 %v2323
    %v2418 = vunpack.c.h.b16 %v2323
    %v2419 = vunpack.c.l.b16 %v2324
    %v2420 = vunpack.c.h.b16 %v2324
    %v2421 = vpack.c.b16 %v2361, %v2357
    %v2422 = vpack.c.b16 %v2362, %v2358
    %v2423 = vpack.c.b16 %v2363, %v2359
    %v2424 = vpack.c.b16 %v2364, %v2360
    %v2425 = vpack.c.b16 %v2369, %v2365
    %v2426 = vpack.c.b16 %v2370, %v2366
    %v2427 = vpack.c.b16 %v2371, %v2367
    %v2428 = vpack.c.b16 %v2372, %v2368
    %v2429 = vpack.c.b16 %v2377, %v2373
    %v2430 = vpack.c.b16 %v2378, %v2374
    %v2431 = vpack.c.b16 %v2379, %v2375
    %v2432 = vpack.c.b16 %v2380, %v2376
    %v2433 = vpack.c.b16 %v2385, %v2381
    %v2434 = vpack.c.b16 %v2386, %v2382
    %v2435 = vpack.c.b16 %v2387, %v2383
    %v2436 = vpack.c.b16 %v2388, %v2384
    %v2437 = vpack.c.b16 %v2393, %v2389
    %v2438 = vpack.c.b16 %v2394, %v2390
    %v2439 = vpack.c.b16 %v2395, %v2391
    %v2440 = vpack.c.b16 %v2396, %v2392
    %v2441 = vpack.c.b16 %v2401, %v2397
    %v2442 = vpack.c.b16 %v2402, %v2398
    %v2443 = vpack.c.b16 %v2403, %v2399
    %v2444 = vpack.c.b16 %v2404, %v2400
    %v2445 = vpack.c.b16 %v2409, %v2405
    %v2446 = vpack.c.b16 %v2410, %v2406
    %v2447 = vpack.c.b16 %v2411, %v2407
    %v2448 = vpack.c.b16 %v2412, %v2408
    %v2449 = vpack.c.b16 %v2417, %v2413
    %v2450 = vpack.c.b16 %v2418, %v2414
    %v2451 = vpack.c.b16 %v2419, %v2415
    %v2452 = vpack.c.b16 %v2420, %v2416
    %2485 = vmatprep.subr.bf16.mxu0 %v2422
    %2486 = vmatpush1.bf16.msra.mxu0 %v2421
    %2487 = vmatprep.subr.bf16.mxu0 %v2426
    %2488 = vmatpush1.bf16.msra.mxu0 %v2425
    %2489 = vmatprep.subr.bf16.mxu0 %v2430
    %2490 = vmatpush1.bf16.msra.mxu0 %v2429
    %2491 = vmatprep.subr.bf16.mxu0 %v2434
    %2492 = vmatpush1.bf16.msra.mxu0 %v2433
    %2493 = vmatprep.subr.bf16.mxu0 %v2438
    %2494 = vmatpush1.bf16.msra.mxu0 %v2437
    %2495 = vmatprep.subr.bf16.mxu0 %v2442
    %2496 = vmatpush1.bf16.msra.mxu0 %v2441
    %2497 = vmatprep.subr.bf16.mxu0 %v2446
    %2498 = vmatpush1.bf16.msra.mxu0 %v2445
    %2499 = vmatprep.subr.bf16.mxu0 %v2450
    %2500 = vmatpush1.bf16.msra.mxu0 %v2449
    %2501 = vmatprep.subr.bf16.mxu0 0
    %2502 = vmatpush1.bf16.msra.mxu0 0
    %2503 = vmatprep.subr.bf16.mxu0 0
    %2504 = vmatpush1.bf16.msra.mxu0 0
    %2505 = vmatprep.subr.bf16.mxu0 0
    %2506 = vmatpush1.bf16.msra.mxu0 0
    %2507 = vmatprep.subr.bf16.mxu0 0
    %2508 = vmatpush1.bf16.msra.mxu0 0
    %2509 = vmatprep.subr.bf16.mxu0 0
    %2510 = vmatpush1.bf16.msra.mxu0 0
    %2511 = vmatprep.subr.bf16.mxu0 0
    %2512 = vmatpush1.bf16.msra.mxu0 0
    %2513 = vmatprep.subr.bf16.mxu0 0
    %2514 = vmatpush1.bf16.msra.mxu0 0
    %2515 = vmatprep.subr.bf16.mxu0 0
    %2516 = vmatpush1.bf16.msra.mxu0 0
    %2517 = vmatprep.mubr.bf16.mxu0 0
    %2518 = vmatmul.mubr.bf16.gmra.mrb[0].mxu0 %v2292
    %v2519 = vpop.f32.mrb[0].mxu0
    %v2520 = vadd.f32 0.0, %v2519
    %v2521 = vpop.f32.mrb[0].mxu0
    %v2522 = vadd.f32 0.0, %v2521
    %v2523 = vpop.f32.mrb[0].mxu0
    %v2524 = vpop.f32.mrb[0].mxu0
    %2525 = vdwg.mxu0
    %2526 = vmatprep.subr.bf16.mxu0 %v2424
    %2527 = vmatpush1.bf16.msra.mxu0 %v2423
    %2528 = vmatprep.subr.bf16.mxu0 %v2428
    %2529 = vmatpush1.bf16.msra.mxu0 %v2427
    %2530 = vmatprep.subr.bf16.mxu0 %v2432
    %2531 = vmatpush1.bf16.msra.mxu0 %v2431
    %2532 = vmatprep.subr.bf16.mxu0 %v2436
    %2533 = vmatpush1.bf16.msra.mxu0 %v2435
    %2534 = vmatprep.subr.bf16.mxu0 %v2440
    %2535 = vmatpush1.bf16.msra.mxu0 %v2439
    %2536 = vmatprep.subr.bf16.mxu0 %v2444
    %2537 = vmatpush1.bf16.msra.mxu0 %v2443
    %2538 = vmatprep.subr.bf16.mxu0 %v2448
    %2539 = vmatpush1.bf16.msra.mxu0 %v2447
    %2540 = vmatprep.subr.bf16.mxu0 %v2452
    %2541 = vmatpush1.bf16.msra.mxu0 %v2451
    %2542 = vmatprep.subr.bf16.mxu0 0
    %2543 = vmatpush1.bf16.msra.mxu0 0
    %2544 = vmatprep.subr.bf16.mxu0 0
    %2545 = vmatpush1.bf16.msra.mxu0 0
    %2546 = vmatprep.subr.bf16.mxu0 0
    %2547 = vmatpush1.bf16.msra.mxu0 0
    %2548 = vmatprep.subr.bf16.mxu0 0
    %2549 = vmatpush1.bf16.msra.mxu0 0
    %2550 = vmatprep.subr.bf16.mxu0 0
    %2551 = vmatpush1.bf16.msra.mxu0 0
    %2552 = vmatprep.subr.bf16.mxu0 0
    %2553 = vmatpush1.bf16.msra.mxu0 0
    %2554 = vmatprep.subr.bf16.mxu0 0
    %2555 = vmatpush1.bf16.msra.mxu0 0
    %2556 = vmatprep.subr.bf16.mxu0 0
    %2557 = vmatpush1.bf16.msra.mxu0 0
    %2558 = vmatprep.mubr.bf16.mxu0 0
    %2559 = vmatmul.mubr.bf16.gmra.mrb[0].mxu0 %v2292
    %v2560 = vpop.f32.mrb[0].mxu0
    %v2561 = vadd.f32 0.0, %v2560
    %v2562 = vpop.f32.mrb[0].mxu0
    %v2563 = vadd.f32 0.0, %v2562
    %v2564 = vpop.f32.mrb[0].mxu0
    %v2565 = vpop.f32.mrb[0].mxu0
    %2566 = vdwg.mxu0
    %v2567 = vadd.f32 %v2287, %v2520
    %v2568 = vadd.f32 %v2288, %v2522
    %v2569 = vadd.f32 %v2289, %v2561
    %v2570 = vadd.f32 %v2290, %v2563
    %v2571 = vld [vmem:[#allocation17] sm:$0xff]
    %v2572 = vxor.u32 %v2567, 2147483648
    %v2573 = vmul.f32 %v2572, 1.442695
    %v2574 = vpow.pop %v2573
    %v2575 = vadd.f32 %v2574, 1.0
    %v2576 = vrcp.pop %v2575
    %v2577 = vmul.f32 1.0, %v2576
    %v2578 = vxor.u32 %v2568, 2147483648
    %v2579 = vmul.f32 %v2578, 1.442695
    %v2580 = vpow.pop %v2579
    %v2581 = vadd.f32 %v2580, 1.0
    %v2582 = vrcp.pop %v2581
    %v2583 = vmul.f32 1.0, %v2582
    %v2584 = vtanh.pop %v2569
    %v2585 = vxor.u32 %v2570, 2147483648
    %v2586 = vmul.f32 %v2585, 1.442695
    %v2587 = vpow.pop %v2586
    %v2588 = vadd.f32 %v2587, 1.0
    %v2589 = vrcp.pop %v2588
    %v2590 = vmul.f32 1.0, %v2589
    %v2591 = vmul.f32 %v2583, %v2571
    %v2592 = vmul.f32 %v2577, %v2584
    %v2593 = vadd.f32 %v2591, %v2592
    %v2594 = vtanh.pop %v2593
    %v2595 = vmul.f32 %v2590, %v2594
    %2596 = vst [vmem:[#allocation16] sm:$0xff] %v2595
    %2597 = vst [vmem:[#allocation17] sm:$0xff] %v2593
    %v2598 = vld [vmem:[%s804] sm:$0xff]
    %v2599 = vpack.c.bf16 %v2595, %v2595
    %v2600 = vld [vmem:[#allocation12] sm:$0xff]
    %v2601 = vld [vmem:[#allocation12 + $0x8] sm:$0xff]
    %v2602 = vld [vmem:[#allocation12 + $0x10] sm:$0xff]
    %v2603 = vld [vmem:[#allocation12 + $0x18] sm:$0xff]
    %v2604 = vld [vmem:[#allocation12 + $0x20] sm:$0xff]
    %v2605 = vld [vmem:[#allocation12 + $0x28] sm:$0xff]
    %v2606 = vld [vmem:[#allocation12 + $0x30] sm:$0xff]
    %v2607 = vld [vmem:[#allocation12 + $0x38] sm:$0xff]
    %v2608 = vld [vmem:[#allocation12 + $0x40] sm:$0xff]
    %v2609 = vld [vmem:[#allocation12 + $0x48] sm:$0xff]
    %v2610 = vld [vmem:[#allocation12 + $0x50] sm:$0xff]
    %v2611 = vld [vmem:[#allocation12 + $0x58] sm:$0xff]
    %v2612 = vld [vmem:[#allocation12 + $0x60] sm:$0xff]
    %v2613 = vld [vmem:[#allocation12 + $0x68] sm:$0xff]
    %v2614 = vld [vmem:[#allocation12 + $0x70] sm:$0xff]
    %v2615 = vld [vmem:[#allocation12 + $0x78] sm:$0xff]
    %v2616 = vld [vmem:[#allocation12 + $0x80] sm:$0xff]
    %v2617 = vld [vmem:[#allocation12 + $0x88] sm:$0xff]
    %v2618 = vld [vmem:[#allocation12 + $0x90] sm:$0xff]
    %v2619 = vld [vmem:[#allocation12 + $0x98] sm:$0xff]
    %v2620 = vld [vmem:[#allocation12 + $0xa0] sm:$0xff]
    %v2621 = vld [vmem:[#allocation12 + $0xa8] sm:$0xff]
    %v2622 = vld [vmem:[#allocation12 + $0xb0] sm:$0xff]
    %v2623 = vld [vmem:[#allocation12 + $0xb8] sm:$0xff]
    %v2624 = vld [vmem:[#allocation12 + $0xc0] sm:$0xff]
    %v2625 = vld [vmem:[#allocation12 + $0xc8] sm:$0xff]
    %v2626 = vld [vmem:[#allocation12 + $0xd0] sm:$0xff]
    %v2627 = vld [vmem:[#allocation12 + $0xd8] sm:$0xff]
    %v2628 = vld [vmem:[#allocation12 + $0xe0] sm:$0xff]
    %v2629 = vld [vmem:[#allocation12 + $0xe8] sm:$0xff]
    %v2630 = vld [vmem:[#allocation12 + $0xf0] sm:$0xff]
    %v2631 = vld [vmem:[#allocation12 + $0xf8] sm:$0xff]
    %v2632 = vpack.c.bf16 %v2598, %v2598
    %v2633 = vld [vmem:[#allocation13] sm:$0xff]
    %v2634 = vld [vmem:[#allocation13 + $0x8] sm:$0xff]
    %v2635 = vld [vmem:[#allocation13 + $0x10] sm:$0xff]
    %v2636 = vld [vmem:[#allocation13 + $0x18] sm:$0xff]
    %v2637 = vld [vmem:[#allocation13 + $0x20] sm:$0xff]
    %v2638 = vld [vmem:[#allocation13 + $0x28] sm:$0xff]
    %v2639 = vld [vmem:[#allocation13 + $0x30] sm:$0xff]
    %v2640 = vld [vmem:[#allocation13 + $0x38] sm:$0xff]
    %v2641 = vld [vmem:[#allocation13 + $0x40] sm:$0xff]
    %v2642 = vld [vmem:[#allocation13 + $0x48] sm:$0xff]
    %v2643 = vld [vmem:[#allocation13 + $0x50] sm:$0xff]
    %v2644 = vld [vmem:[#allocation13 + $0x58] sm:$0xff]
    %v2645 = vld [vmem:[#allocation13 + $0x60] sm:$0xff]
    %v2646 = vld [vmem:[#allocation13 + $0x68] sm:$0xff]
    %v2647 = vld [vmem:[#allocation13 + $0x70] sm:$0xff]
    %v2648 = vld [vmem:[#allocation13 + $0x78] sm:$0xff]
    %v2649 = vld [vmem:[#allocation13 + $0x80] sm:$0xff]
    %v2650 = vld [vmem:[#allocation13 + $0x88] sm:$0xff]
    %v2651 = vld [vmem:[#allocation13 + $0x90] sm:$0xff]
    %v2652 = vld [vmem:[#allocation13 + $0x98] sm:$0xff]
    %v2653 = vld [vmem:[#allocation13 + $0xa0] sm:$0xff]
    %v2654 = vld [vmem:[#allocation13 + $0xa8] sm:$0xff]
    %v2655 = vld [vmem:[#allocation13 + $0xb0] sm:$0xff]
    %v2656 = vld [vmem:[#allocation13 + $0xb8] sm:$0xff]
    %v2657 = vld [vmem:[#allocation13 + $0xc0] sm:$0xff]
    %v2658 = vld [vmem:[#allocation13 + $0xc8] sm:$0xff]
    %v2659 = vld [vmem:[#allocation13 + $0xd0] sm:$0xff]
    %v2660 = vld [vmem:[#allocation13 + $0xd8] sm:$0xff]
    %v2661 = vld [vmem:[#allocation13 + $0xe0] sm:$0xff]
    %v2662 = vld [vmem:[#allocation13 + $0xe8] sm:$0xff]
    %v2663 = vld [vmem:[#allocation13 + $0xf0] sm:$0xff]
    %v2664 = vld [vmem:[#allocation13 + $0xf8] sm:$0xff]
    %v2697 = vunpack.c.l.b16 %v2633
    %v2698 = vunpack.c.h.b16 %v2633
    %v2699 = vunpack.c.l.b16 %v2634
    %v2700 = vunpack.c.h.b16 %v2634
    %v2701 = vunpack.c.l.b16 %v2635
    %v2702 = vunpack.c.h.b16 %v2635
    %v2703 = vunpack.c.l.b16 %v2636
    %v2704 = vunpack.c.h.b16 %v2636
    %v2705 = vunpack.c.l.b16 %v2637
    %v2706 = vunpack.c.h.b16 %v2637
    %v2707 = vunpack.c.l.b16 %v2638
    %v2708 = vunpack.c.h.b16 %v2638
    %v2709 = vunpack.c.l.b16 %v2639
    %v2710 = vunpack.c.h.b16 %v2639
    %v2711 = vunpack.c.l.b16 %v2640
    %v2712 = vunpack.c.h.b16 %v2640
    %v2713 = vunpack.c.l.b16 %v2641
    %v2714 = vunpack.c.h.b16 %v2641
    %v2715 = vunpack.c.l.b16 %v2642
    %v2716 = vunpack.c.h.b16 %v2642
    %v2717 = vunpack.c.l.b16 %v2643
    %v2718 = vunpack.c.h.b16 %v2643
    %v2719 = vunpack.c.l.b16 %v2644
    %v2720 = vunpack.c.h.b16 %v2644
    %v2721 = vunpack.c.l.b16 %v2645
    %v2722 = vunpack.c.h.b16 %v2645
    %v2723 = vunpack.c.l.b16 %v2646
    %v2724 = vunpack.c.h.b16 %v2646
    %v2725 = vunpack.c.l.b16 %v2647
    %v2726 = vunpack.c.h.b16 %v2647
    %v2727 = vunpack.c.l.b16 %v2648
    %v2728 = vunpack.c.h.b16 %v2648
    %v2729 = vunpack.c.l.b16 %v2649
    %v2730 = vunpack.c.h.b16 %v2649
    %v2731 = vunpack.c.l.b16 %v2650
    %v2732 = vunpack.c.h.b16 %v2650
    %v2733 = vunpack.c.l.b16 %v2651
    %v2734 = vunpack.c.h.b16 %v2651
    %v2735 = vunpack.c.l.b16 %v2652
    %v2736 = vunpack.c.h.b16 %v2652
    %v2737 = vunpack.c.l.b16 %v2653
    %v2738 = vunpack.c.h.b16 %v2653
    %v2739 = vunpack.c.l.b16 %v2654
    %v2740 = vunpack.c.h.b16 %v2654
    %v2741 = vunpack.c.l.b16 %v2655
    %v2742 = vunpack.c.h.b16 %v2655
    %v2743 = vunpack.c.l.b16 %v2656
    %v2744 = vunpack.c.h.b16 %v2656
    %v2745 = vunpack.c.l.b16 %v2657
    %v2746 = vunpack.c.h.b16 %v2657
    %v2747 = vunpack.c.l.b16 %v2658
    %v2748 = vunpack.c.h.b16 %v2658
    %v2749 = vunpack.c.l.b16 %v2659
    %v2750 = vunpack.c.h.b16 %v2659
    %v2751 = vunpack.c.l.b16 %v2660
    %v2752 = vunpack.c.h.b16 %v2660
    %v2753 = vunpack.c.l.b16 %v2661
    %v2754 = vunpack.c.h.b16 %v2661
    %v2755 = vunpack.c.l.b16 %v2662
    %v2756 = vunpack.c.h.b16 %v2662
    %v2757 = vunpack.c.l.b16 %v2663
    %v2758 = vunpack.c.h.b16 %v2663
    %v2759 = vunpack.c.l.b16 %v2664
    %v2760 = vunpack.c.h.b16 %v2664
    %v2761 = vpack.c.b16 %v2701, %v2697
    %v2762 = vpack.c.b16 %v2702, %v2698
    %v2763 = vpack.c.b16 %v2703, %v2699
    %v2764 = vpack.c.b16 %v2704, %v2700
    %v2765 = vpack.c.b16 %v2709, %v2705
    %v2766 = vpack.c.b16 %v2710, %v2706
    %v2767 = vpack.c.b16 %v2711, %v2707
    %v2768 = vpack.c.b16 %v2712, %v2708
    %v2769 = vpack.c.b16 %v2717, %v2713
    %v2770 = vpack.c.b16 %v2718, %v2714
    %v2771 = vpack.c.b16 %v2719, %v2715
    %v2772 = vpack.c.b16 %v2720, %v2716
    %v2773 = vpack.c.b16 %v2725, %v2721
    %v2774 = vpack.c.b16 %v2726, %v2722
    %v2775 = vpack.c.b16 %v2727, %v2723
    %v2776 = vpack.c.b16 %v2728, %v2724
    %v2777 = vpack.c.b16 %v2733, %v2729
    %v2778 = vpack.c.b16 %v2734, %v2730
    %v2779 = vpack.c.b16 %v2735, %v2731
    %v2780 = vpack.c.b16 %v2736, %v2732
    %v2781 = vpack.c.b16 %v2741, %v2737
    %v2782 = vpack.c.b16 %v2742, %v2738
    %v2783 = vpack.c.b16 %v2743, %v2739
    %v2784 = vpack.c.b16 %v2744, %v2740
    %v2785 = vpack.c.b16 %v2749, %v2745
    %v2786 = vpack.c.b16 %v2750, %v2746
    %v2787 = vpack.c.b16 %v2751, %v2747
    %v2788 = vpack.c.b16 %v2752, %v2748
    %v2789 = vpack.c.b16 %v2757, %v2753
    %v2790 = vpack.c.b16 %v2758, %v2754
    %v2791 = vpack.c.b16 %v2759, %v2755
    %v2792 = vpack.c.b16 %v2760, %v2756
    %2825 = vmatprep.subr.bf16.mxu0 %v2762
    %2826 = vmatpush1.bf16.msra.mxu0 %v2761
    %2827 = vmatprep.subr.bf16.mxu0 %v2766
    %2828 = vmatpush1.bf16.msra.mxu0 %v2765
    %2829 = vmatprep.subr.bf16.mxu0 %v2770
    %2830 = vmatpush1.bf16.msra.mxu0 %v2769
    %2831 = vmatprep.subr.bf16.mxu0 %v2774
    %2832 = vmatpush1.bf16.msra.mxu0 %v2773
    %2833 = vmatprep.subr.bf16.mxu0 %v2778
    %2834 = vmatpush1.bf16.msra.mxu0 %v2777
    %2835 = vmatprep.subr.bf16.mxu0 %v2782
    %2836 = vmatpush1.bf16.msra.mxu0 %v2781
    %2837 = vmatprep.subr.bf16.mxu0 %v2786
    %2838 = vmatpush1.bf16.msra.mxu0 %v2785
    %2839 = vmatprep.subr.bf16.mxu0 %v2790
    %2840 = vmatpush1.bf16.msra.mxu0 %v2789
    %2841 = vmatprep.subr.bf16.mxu0 0
    %2842 = vmatpush1.bf16.msra.mxu0 0
    %2843 = vmatprep.subr.bf16.mxu0 0
    %2844 = vmatpush1.bf16.msra.mxu0 0
    %2845 = vmatprep.subr.bf16.mxu0 0
    %2846 = vmatpush1.bf16.msra.mxu0 0
    %2847 = vmatprep.subr.bf16.mxu0 0
    %2848 = vmatpush1.bf16.msra.mxu0 0
    %2849 = vmatprep.subr.bf16.mxu0 0
    %2850 = vmatpush1.bf16.msra.mxu0 0
    %2851 = vmatprep.subr.bf16.mxu0 0
    %2852 = vmatpush1.bf16.msra.mxu0 0
    %2853 = vmatprep.subr.bf16.mxu0 0
    %2854 = vmatpush1.bf16.msra.mxu0 0
    %2855 = vmatprep.subr.bf16.mxu0 0
    %2856 = vmatpush1.bf16.msra.mxu0 0
    %2857 = vmatprep.mubr.bf16.mxu0 0
    %2858 = vmatmul.mubr.bf16.gmra.mrb[0].mxu0 %v2632
    %v2859 = vpop.f32.mrb[0].mxu0
    %v2860 = vadd.f32 0.0, %v2859
    %v2861 = vpop.f32.mrb[0].mxu0
    %v2862 = vadd.f32 0.0, %v2861
    %v2863 = vpop.f32.mrb[0].mxu0
    %v2864 = vpop.f32.mrb[0].mxu0
    %2865 = vdwg.mxu0
    %2866 = vmatprep.subr.bf16.mxu0 %v2764
    %2867 = vmatpush1.bf16.msra.mxu0 %v2763
    %2868 = vmatprep.subr.bf16.mxu0 %v2768
    %2869 = vmatpush1.bf16.msra.mxu0 %v2767
    %2870 = vmatprep.subr.bf16.mxu0 %v2772
    %2871 = vmatpush1.bf16.msra.mxu0 %v2771
    %2872 = vmatprep.subr.bf16.mxu0 %v2776
    %2873 = vmatpush1.bf16.msra.mxu0 %v2775
    %2874 = vmatprep.subr.bf16.mxu0 %v2780
    %2875 = vmatpush1.bf16.msra.mxu0 %v2779
    %2876 = vmatprep.subr.bf16.mxu0 %v2784
    %2877 = vmatpush1.bf16.msra.mxu0 %v2783
    %2878 = vmatprep.subr.bf16.mxu0 %v2788
    %2879 = vmatpush1.bf16.msra.mxu0 %v2787
    %2880 = vmatprep.subr.bf16.mxu0 %v2792
    %2881 = vmatpush1.bf16.msra.mxu0 %v2791
    %2882 = vmatprep.subr.bf16.mxu0 0
    %2883 = vmatpush1.bf16.msra.mxu0 0
    %2884 = vmatprep.subr.bf16.mxu0 0
    %2885 = vmatpush1.bf16.msra.mxu0 0
    %2886 = vmatprep.subr.bf16.mxu0 0
    %2887 = vmatpush1.bf16.msra.mxu0 0
    %2888 = vmatprep.subr.bf16.mxu0 0
    %2889 = vmatpush1.bf16.msra.mxu0 0
    %2890 = vmatprep.subr.bf16.mxu0 0
    %2891 = vmatpush1.bf16.msra.mxu0 0
    %2892 = vmatprep.subr.bf16.mxu0 0
    %2893 = vmatpush1.bf16.msra.mxu0 0
    %2894 = vmatprep.subr.bf16.mxu0 0
    %2895 = vmatpush1.bf16.msra.mxu0 0
    %2896 = vmatprep.subr.bf16.mxu0 0
    %2897 = vmatpush1.bf16.msra.mxu0 0
    %2898 = vmatprep.mubr.bf16.mxu0 0
    %2899 = vmatmul.mubr.bf16.gmra.mrb[0].mxu0 %v2632
    %v2900 = vpop.f32.mrb[0].mxu0
    %v2901 = vadd.f32 0.0, %v2900
    %v2902 = vpop.f32.mrb[0].mxu0
    %v2903 = vadd.f32 0.0, %v2902
    %v2904 = vpop.f32.mrb[0].mxu0
    %v2905 = vpop.f32.mrb[0].mxu0
    %2906 = vdwg.mxu0
    %v2939 = vunpack.c.l.b16 %v2600
    %v2940 = vunpack.c.h.b16 %v2600
    %v2941 = vunpack.c.l.b16 %v2601
    %v2942 = vunpack.c.h.b16 %v2601
    %v2943 = vunpack.c.l.b16 %v2602
    %v2944 = vunpack.c.h.b16 %v2602
    %v2945 = vunpack.c.l.b16 %v2603
    %v2946 = vunpack.c.h.b16 %v2603
    %v2947 = vunpack.c.l.b16 %v2604
    %v2948 = vunpack.c.h.b16 %v2604
    %v2949 = vunpack.c.l.b16 %v2605
    %v2950 = vunpack.c.h.b16 %v2605
    %v2951 = vunpack.c.l.b16 %v2606
    %v2952 = vunpack.c.h.b16 %v2606
    %v2953 = vunpack.c.l.b16 %v2607
    %v2954 = vunpack.c.h.b16 %v2607
    %v2955 = vunpack.c.l.b16 %v2608
    %v2956 = vunpack.c.h.b16 %v2608
    %v2957 = vunpack.c.l.b16 %v2609
    %v2958 = vunpack.c.h.b16 %v2609
    %v2959 = vunpack.c.l.b16 %v2610
    %v2960 = vunpack.c.h.b16 %v2610
    %v2961 = vunpack.c.l.b16 %v2611
    %v2962 = vunpack.c.h.b16 %v2611
    %v2963 = vunpack.c.l.b16 %v2612
    %v2964 = vunpack.c.h.b16 %v2612
    %v2965 = vunpack.c.l.b16 %v2613
    %v2966 = vunpack.c.h.b16 %v2613
    %v2967 = vunpack.c.l.b16 %v2614
    %v2968 = vunpack.c.h.b16 %v2614
    %v2969 = vunpack.c.l.b16 %v2615
    %v2970 = vunpack.c.h.b16 %v2615
    %v2971 = vunpack.c.l.b16 %v2616
    %v2972 = vunpack.c.h.b16 %v2616
    %v2973 = vunpack.c.l.b16 %v2617
    %v2974 = vunpack.c.h.b16 %v2617
    %v2975 = vunpack.c.l.b16 %v2618
    %v2976 = vunpack.c.h.b16 %v2618
    %v2977 = vunpack.c.l.b16 %v2619
    %v2978 = vunpack.c.h.b16 %v2619
    %v2979 = vunpack.c.l.b16 %v2620
    %v2980 = vunpack.c.h.b16 %v2620
    %v2981 = vunpack.c.l.b16 %v2621
    %v2982 = vunpack.c.h.b16 %v2621
    %v2983 = vunpack.c.l.b16 %v2622
    %v2984 = vunpack.c.h.b16 %v2622
    %v2985 = vunpack.c.l.b16 %v2623
    %v2986 = vunpack.c.h.b16 %v2623
    %v2987 = vunpack.c.l.b16 %v2624
    %v2988 = vunpack.c.h.b16 %v2624
    %v2989 = vunpack.c.l.b16 %v2625
    %v2990 = vunpack.c.h.b16 %v2625
    %v2991 = vunpack.c.l.b16 %v2626
    %v2992 = vunpack.c.h.b16 %v2626
    %v2993 = vunpack.c.l.b16 %v2627
    %v2994 = vunpack.c.h.b16 %v2627
    %v2995 = vunpack.c.l.b16 %v2628
    %v2996 = vunpack.c.h.b16 %v2628
    %v2997 = vunpack.c.l.b16 %v2629
    %v2998 = vunpack.c.h.b16 %v2629
    %v2999 = vunpack.c.l.b16 %v2630
    %v3000 = vunpack.c.h.b16 %v2630
    %v3001 = vunpack.c.l.b16 %v2631
    %v3002 = vunpack.c.h.b16 %v2631
    %v3003 = vpack.c.b16 %v2943, %v2939
    %v3004 = vpack.c.b16 %v2944, %v2940
    %v3005 = vpack.c.b16 %v2945, %v2941
    %v3006 = vpack.c.b16 %v2946, %v2942
    %v3007 = vpack.c.b16 %v2951, %v2947
    %v3008 = vpack.c.b16 %v2952, %v2948
    %v3009 = vpack.c.b16 %v2953, %v2949
    %v3010 = vpack.c.b16 %v2954, %v2950
    %v3011 = vpack.c.b16 %v2959, %v2955
    %v3012 = vpack.c.b16 %v2960, %v2956
    %v3013 = vpack.c.b16 %v2961, %v2957
    %v3014 = vpack.c.b16 %v2962, %v2958
    %v3015 = vpack.c.b16 %v2967, %v2963
    %v3016 = vpack.c.b16 %v2968, %v2964
    %v3017 = vpack.c.b16 %v2969, %v2965
    %v3018 = vpack.c.b16 %v2970, %v2966
    %v3019 = vpack.c.b16 %v2975, %v2971
    %v3020 = vpack.c.b16 %v2976, %v2972
    %v3021 = vpack.c.b16 %v2977, %v2973
    %v3022 = vpack.c.b16 %v2978, %v2974
    %v3023 = vpack.c.b16 %v2983, %v2979
    %v3024 = vpack.c.b16 %v2984, %v2980
    %v3025 = vpack.c.b16 %v2985, %v2981
    %v3026 = vpack.c.b16 %v2986, %v2982
    %v3027 = vpack.c.b16 %v2991, %v2987
    %v3028 = vpack.c.b16 %v2992, %v2988
    %v3029 = vpack.c.b16 %v2993, %v2989
    %v3030 = vpack.c.b16 %v2994, %v2990
    %v3031 = vpack.c.b16 %v2999, %v2995
    %v3032 = vpack.c.b16 %v3000, %v2996
    %v3033 = vpack.c.b16 %v3001, %v2997
    %v3034 = vpack.c.b16 %v3002, %v2998
    %3067 = vmatprep.subr.bf16.mxu0 %v3004
    %3068 = vmatpush1.bf16.msra.mxu0 %v3003
    %3069 = vmatprep.subr.bf16.mxu0 %v3008
    %3070 = vmatpush1.bf16.msra.mxu0 %v3007
    %3071 = vmatprep.subr.bf16.mxu0 %v3012
    %3072 = vmatpush1.bf16.msra.mxu0 %v3011
    %3073 = vmatprep.subr.bf16.mxu0 %v3016
    %3074 = vmatpush1.bf16.msra.mxu0 %v3015
    %3075 = vmatprep.subr.bf16.mxu0 %v3020
    %3076 = vmatpush1.bf16.msra.mxu0 %v3019
    %3077 = vmatprep.subr.bf16.mxu0 %v3024
    %3078 = vmatpush1.bf16.msra.mxu0 %v3023
    %3079 = vmatprep.subr.bf16.mxu0 %v3028
    %3080 = vmatpush1.bf16.msra.mxu0 %v3027
    %3081 = vmatprep.subr.bf16.mxu0 %v3032
    %3082 = vmatpush1.bf16.msra.mxu0 %v3031
    %3083 = vmatprep.subr.bf16.mxu0 0
    %3084 = vmatpush1.bf16.msra.mxu0 0
    %3085 = vmatprep.subr.bf16.mxu0 0
    %3086 = vmatpush1.bf16.msra.mxu0 0
    %3087 = vmatprep.subr.bf16.mxu0 0
    %3088 = vmatpush1.bf16.msra.mxu0 0
    %3089 = vmatprep.subr.bf16.mxu0 0
    %3090 = vmatpush1.bf16.msra.mxu0 0
    %3091 = vmatprep.subr.bf16.mxu0 0
    %3092 = vmatpush1.bf16.msra.mxu0 0
    %3093 = vmatprep.subr.bf16.mxu0 0
    %3094 = vmatpush1.bf16.msra.mxu0 0
    %3095 = vmatprep.subr.bf16.mxu0 0
    %3096 = vmatpush1.bf16.msra.mxu0 0
    %3097 = vmatprep.subr.bf16.mxu0 0
    %3098 = vmatpush1.bf16.msra.mxu0 0
    %3099 = vmatprep.mubr.bf16.mxu0 0
    %3100 = vmatmul.mubr.bf16.gmra.mrb[0].mxu0 %v2599
    %v3101 = vpop.f32.mrb[0].mxu0
    %v3102 = vadd.f32 %v2860, %v3101
    %v3103 = vpop.f32.mrb[0].mxu0
    %v3104 = vadd.f32 %v2862, %v3103
    %v3105 = vpop.f32.mrb[0].mxu0
    %v3106 = vpop.f32.mrb[0].mxu0
    %3107 = vdwg.mxu0
    %3108 = vmatprep.subr.bf16.mxu0 %v3006
    %3109 = vmatpush1.bf16.msra.mxu0 %v3005
    %3110 = vmatprep.subr.bf16.mxu0 %v3010
    %3111 = vmatpush1.bf16.msra.mxu0 %v3009
    %3112 = vmatprep.subr.bf16.mxu0 %v3014
    %3113 = vmatpush1.bf16.msra.mxu0 %v3013
    %3114 = vmatprep.subr.bf16.mxu0 %v3018
    %3115 = vmatpush1.bf16.msra.mxu0 %v3017
    %3116 = vmatprep.subr.bf16.mxu0 %v3022
    %3117 = vmatpush1.bf16.msra.mxu0 %v3021
    %3118 = vmatprep.subr.bf16.mxu0 %v3026
    %3119 = vmatpush1.bf16.msra.mxu0 %v3025
    %3120 = vmatprep.subr.bf16.mxu0 %v3030
    %3121 = vmatpush1.bf16.msra.mxu0 %v3029
    %3122 = vmatprep.subr.bf16.mxu0 %v3034
    %3123 = vmatpush1.bf16.msra.mxu0 %v3033
    %3124 = vmatprep.subr.bf16.mxu0 0
    %3125 = vmatpush1.bf16.msra.mxu0 0
    %3126 = vmatprep.subr.bf16.mxu0 0
    %3127 = vmatpush1.bf16.msra.mxu0 0
    %3128 = vmatprep.subr.bf16.mxu0 0
    %3129 = vmatpush1.bf16.msra.mxu0 0
    %3130 = vmatprep.subr.bf16.mxu0 0
    %3131 = vmatpush1.bf16.msra.mxu0 0
    %3132 = vmatprep.subr.bf16.mxu0 0
    %3133 = vmatpush1.bf16.msra.mxu0 0
    %3134 = vmatprep.subr.bf16.mxu0 0
    %3135 = vmatpush1.bf16.msra.mxu0 0
    %3136 = vmatprep.subr.bf16.mxu0 0
    %3137 = vmatpush1.bf16.msra.mxu0 0
    %3138 = vmatprep.subr.bf16.mxu0 0
    %3139 = vmatpush1.bf16.msra.mxu0 0
    %3140 = vmatprep.mubr.bf16.mxu0 0
    %3141 = vmatmul.mubr.bf16.gmra.mrb[0].mxu0 %v2599
    %v3142 = vpop.f32.mrb[0].mxu0
    %v3143 = vadd.f32 %v2901, %v3142
    %v3144 = vpop.f32.mrb[0].mxu0
    %v3145 = vadd.f32 %v2903, %v3144
    %v3146 = vpop.f32.mrb[0].mxu0
    %v3147 = vpop.f32.mrb[0].mxu0
    %3148 = vdwg.mxu0
    %v3149 = vadd.f32 %v3102, %v150
    %v3150 = vadd.f32 %v3104, %v154
    %v3151 = vadd.f32 %v3143, %v158
    %v3152 = vadd.f32 %v3145, %v162
    %v3153 = vld [vmem:[%s1360] sm:$0xff]
    %v3154 = vxor.u32 %v3149, 2147483648
    %v3155 = vmul.f32 %v3154, 1.442695
    %v3156 = vpow.pop %v3155
    %v3157 = vadd.f32 %v3156, 1.0
    %v3158 = vrcp.pop %v3157
    %v3159 = vmul.f32 1.0, %v3158
    %v3160 = vxor.u32 %v3150, 2147483648
    %v3161 = vmul.f32 %v3160, 1.442695
    %v3162 = vpow.pop %v3161
    %v3163 = vadd.f32 %v3162, 1.0
    %v3164 = vrcp.pop %v3163
    %v3165 = vmul.f32 1.0, %v3164
    %v3166 = vtanh.pop %v3151
    %v3167 = vxor.u32 %v3152, 2147483648
    %v3168 = vmul.f32 %v3167, 1.442695
    %v3169 = vpow.pop %v3168
    %v3170 = vadd.f32 %v3169, 1.0
    %v3171 = vrcp.pop %v3170
    %v3172 = vmul.f32 1.0, %v3171
    %v3173 = vmul.f32 %v3165, %v3153
    %v3174 = vmul.f32 %v3159, %v3166
    %v3175 = vadd.f32 %v3173, %v3174
    %v3176 = vtanh.pop %v3175
    %v3177 = vmul.f32 %v3172, %v3176
    %3178 = vst [vmem:[%s804] sm:$0xff] %v3177
    %3179 = vst [vmem:[%s1360] sm:$0xff] %v3175
    %s3180 = smul.u32 3, 4
    %s3181 = smul.addr %s3180, 8
    %s3182 = scalar_lea.vmem [#allocation2], %s3181
    %v3183 = vld [vmem:[%s3182] sm:$0xff]
    %v3184 = vld [vmem:[%s3182 + $0x8] sm:$0xff]
    %v3185 = vld [vmem:[%s3182 + $0x10] sm:$0xff]
    %v3186 = vld [vmem:[%s3182 + $0x18] sm:$0xff]
    %v3187 = vld [vmem:[#allocation16] sm:$0xff]
    %v3188 = vpack.c.bf16 %v3187, %v3187
    %v3189 = vld [vmem:[#allocation9] sm:$0xff]
    %v3190 = vld [vmem:[#allocation9 + $0x8] sm:$0xff]
    %v3191 = vld [vmem:[#allocation9 + $0x10] sm:$0xff]
    %v3192 = vld [vmem:[#allocation9 + $0x18] sm:$0xff]
    %v3193 = vld [vmem:[#allocation9 + $0x20] sm:$0xff]
    %v3194 = vld [vmem:[#allocation9 + $0x28] sm:$0xff]
    %v3195 = vld [vmem:[#allocation9 + $0x30] sm:$0xff]
    %v3196 = vld [vmem:[#allocation9 + $0x38] sm:$0xff]
    %v3197 = vld [vmem:[#allocation9 + $0x40] sm:$0xff]
    %v3198 = vld [vmem:[#allocation9 + $0x48] sm:$0xff]
    %v3199 = vld [vmem:[#allocation9 + $0x50] sm:$0xff]
    %v3200 = vld [vmem:[#allocation9 + $0x58] sm:$0xff]
    %v3201 = vld [vmem:[#allocation9 + $0x60] sm:$0xff]
    %v3202 = vld [vmem:[#allocation9 + $0x68] sm:$0xff]
    %v3203 = vld [vmem:[#allocation9 + $0x70] sm:$0xff]
    %v3204 = vld [vmem:[#allocation9 + $0x78] sm:$0xff]
    %v3205 = vld [vmem:[#allocation9 + $0x80] sm:$0xff]
    %v3206 = vld [vmem:[#allocation9 + $0x88] sm:$0xff]
    %v3207 = vld [vmem:[#allocation9 + $0x90] sm:$0xff]
    %v3208 = vld [vmem:[#allocation9 + $0x98] sm:$0xff]
    %v3209 = vld [vmem:[#allocation9 + $0xa0] sm:$0xff]
    %v3210 = vld [vmem:[#allocation9 + $0xa8] sm:$0xff]
    %v3211 = vld [vmem:[#allocation9 + $0xb0] sm:$0xff]
    %v3212 = vld [vmem:[#allocation9 + $0xb8] sm:$0xff]
    %v3213 = vld [vmem:[#allocation9 + $0xc0] sm:$0xff]
    %v3214 = vld [vmem:[#allocation9 + $0xc8] sm:$0xff]
    %v3215 = vld [vmem:[#allocation9 + $0xd0] sm:$0xff]
    %v3216 = vld [vmem:[#allocation9 + $0xd8] sm:$0xff]
    %v3217 = vld [vmem:[#allocation9 + $0xe0] sm:$0xff]
    %v3218 = vld [vmem:[#allocation9 + $0xe8] sm:$0xff]
    %v3219 = vld [vmem:[#allocation9 + $0xf0] sm:$0xff]
    %v3220 = vld [vmem:[#allocation9 + $0xf8] sm:$0xff]
    %v3253 = vunpack.c.l.b16 %v3189
    %v3254 = vunpack.c.h.b16 %v3189
    %v3255 = vunpack.c.l.b16 %v3190
    %v3256 = vunpack.c.h.b16 %v3190
    %v3257 = vunpack.c.l.b16 %v3191
    %v3258 = vunpack.c.h.b16 %v3191
    %v3259 = vunpack.c.l.b16 %v3192
    %v3260 = vunpack.c.h.b16 %v3192
    %v3261 = vunpack.c.l.b16 %v3193
    %v3262 = vunpack.c.h.b16 %v3193
    %v3263 = vunpack.c.l.b16 %v3194
    %v3264 = vunpack.c.h.b16 %v3194
    %v3265 = vunpack.c.l.b16 %v3195
    %v3266 = vunpack.c.h.b16 %v3195
    %v3267 = vunpack.c.l.b16 %v3196
    %v3268 = vunpack.c.h.b16 %v3196
    %v3269 = vunpack.c.l.b16 %v3197
    %v3270 = vunpack.c.h.b16 %v3197
    %v3271 = vunpack.c.l.b16 %v3198
    %v3272 = vunpack.c.h.b16 %v3198
    %v3273 = vunpack.c.l.b16 %v3199
    %v3274 = vunpack.c.h.b16 %v3199
    %v3275 = vunpack.c.l.b16 %v3200
    %v3276 = vunpack.c.h.b16 %v3200
    %v3277 = vunpack.c.l.b16 %v3201
    %v3278 = vunpack.c.h.b16 %v3201
    %v3279 = vunpack.c.l.b16 %v3202
    %v3280 = vunpack.c.h.b16 %v3202
    %v3281 = vunpack.c.l.b16 %v3203
    %v3282 = vunpack.c.h.b16 %v3203
    %v3283 = vunpack.c.l.b16 %v3204
    %v3284 = vunpack.c.h.b16 %v3204
    %v3285 = vunpack.c.l.b16 %v3205
    %v3286 = vunpack.c.h.b16 %v3205
    %v3287 = vunpack.c.l.b16 %v3206
    %v3288 = vunpack.c.h.b16 %v3206
    %v3289 = vunpack.c.l.b16 %v3207
    %v3290 = vunpack.c.h.b16 %v3207
    %v3291 = vunpack.c.l.b16 %v3208
    %v3292 = vunpack.c.h.b16 %v3208
    %v3293 = vunpack.c.l.b16 %v3209
    %v3294 = vunpack.c.h.b16 %v3209
    %v3295 = vunpack.c.l.b16 %v3210
    %v3296 = vunpack.c.h.b16 %v3210
    %v3297 = vunpack.c.l.b16 %v3211
    %v3298 = vunpack.c.h.b16 %v3211
    %v3299 = vunpack.c.l.b16 %v3212
    %v3300 = vunpack.c.h.b16 %v3212
    %v3301 = vunpack.c.l.b16 %v3213
    %v3302 = vunpack.c.h.b16 %v3213
    %v3303 = vunpack.c.l.b16 %v3214
    %v3304 = vunpack.c.h.b16 %v3214
    %v3305 = vunpack.c.l.b16 %v3215
    %v3306 = vunpack.c.h.b16 %v3215
    %v3307 = vunpack.c.l.b16 %v3216
    %v3308 = vunpack.c.h.b16 %v3216
    %v3309 = vunpack.c.l.b16 %v3217
    %v3310 = vunpack.c.h.b16 %v3217
    %v3311 = vunpack.c.l.b16 %v3218
    %v3312 = vunpack.c.h.b16 %v3218
    %v3313 = vunpack.c.l.b16 %v3219
    %v3314 = vunpack.c.h.b16 %v3219
    %v3315 = vunpack.c.l.b16 %v3220
    %v3316 = vunpack.c.h.b16 %v3220
    %v3317 = vpack.c.b16 %v3257, %v3253
    %v3318 = vpack.c.b16 %v3258, %v3254
    %v3319 = vpack.c.b16 %v3259, %v3255
    %v3320 = vpack.c.b16 %v3260, %v3256
    %v3321 = vpack.c.b16 %v3265, %v3261
    %v3322 = vpack.c.b16 %v3266, %v3262
    %v3323 = vpack.c.b16 %v3267, %v3263
    %v3324 = vpack.c.b16 %v3268, %v3264
    %v3325 = vpack.c.b16 %v3273, %v3269
    %v3326 = vpack.c.b16 %v3274, %v3270
    %v3327 = vpack.c.b16 %v3275, %v3271
    %v3328 = vpack.c.b16 %v3276, %v3272
    %v3329 = vpack.c.b16 %v3281, %v3277
    %v3330 = vpack.c.b16 %v3282, %v3278
    %v3331 = vpack.c.b16 %v3283, %v3279
    %v3332 = vpack.c.b16 %v3284, %v3280
    %v3333 = vpack.c.b16 %v3289, %v3285
    %v3334 = vpack.c.b16 %v3290, %v3286
    %v3335 = vpack.c.b16 %v3291, %v3287
    %v3336 = vpack.c.b16 %v3292, %v3288
    %v3337 = vpack.c.b16 %v3297, %v3293
    %v3338 = vpack.c.b16 %v3298, %v3294
    %v3339 = vpack.c.b16 %v3299, %v3295
    %v3340 = vpack.c.b16 %v3300, %v3296
    %v3341 = vpack.c.b16 %v3305, %v3301
    %v3342 = vpack.c.b16 %v3306, %v3302
    %v3343 = vpack.c.b16 %v3307, %v3303
    %v3344 = vpack.c.b16 %v3308, %v3304
    %v3345 = vpack.c.b16 %v3313, %v3309
    %v3346 = vpack.c.b16 %v3314, %v3310
    %v3347 = vpack.c.b16 %v3315, %v3311
    %v3348 = vpack.c.b16 %v3316, %v3312
    %3381 = vmatprep.subr.bf16.mxu0 %v3318
    %3382 = vmatpush1.bf16.msra.mxu0 %v3317
    %3383 = vmatprep.subr.bf16.mxu0 %v3322
    %3384 = vmatpush1.bf16.msra.mxu0 %v3321
    %3385 = vmatprep.subr.bf16.mxu0 %v3326
    %3386 = vmatpush1.bf16.msra.mxu0 %v3325
    %3387 = vmatprep.subr.bf16.mxu0 %v3330
    %3388 = vmatpush1.bf16.msra.mxu0 %v3329
    %3389 = vmatprep.subr.bf16.mxu0 %v3334
    %3390 = vmatpush1.bf16.msra.mxu0 %v3333
    %3391 = vmatprep.subr.bf16.mxu0 %v3338
    %3392 = vmatpush1.bf16.msra.mxu0 %v3337
    %3393 = vmatprep.subr.bf16.mxu0 %v3342
    %3394 = vmatpush1.bf16.msra.mxu0 %v3341
    %3395 = vmatprep.subr.bf16.mxu0 %v3346
    %3396 = vmatpush1.bf16.msra.mxu0 %v3345
    %3397 = vmatprep.subr.bf16.mxu0 0
    %3398 = vmatpush1.bf16.msra.mxu0 0
    %3399 = vmatprep.subr.bf16.mxu0 0
    %3400 = vmatpush1.bf16.msra.mxu0 0
    %3401 = vmatprep.subr.bf16.mxu0 0
    %3402 = vmatpush1.bf16.msra.mxu0 0
    %3403 = vmatprep.subr.bf16.mxu0 0
    %3404 = vmatpush1.bf16.msra.mxu0 0
    %3405 = vmatprep.subr.bf16.mxu0 0
    %3406 = vmatpush1.bf16.msra.mxu0 0
    %3407 = vmatprep.subr.bf16.mxu0 0
    %3408 = vmatpush1.bf16.msra.mxu0 0
    %3409 = vmatprep.subr.bf16.mxu0 0
    %3410 = vmatpush1.bf16.msra.mxu0 0
    %3411 = vmatprep.subr.bf16.mxu0 0
    %3412 = vmatpush1.bf16.msra.mxu0 0
    %3413 = vmatprep.mubr.bf16.mxu0 0
    %3414 = vmatmul.mubr.bf16.gmra.mrb[0].mxu0 %v3188
    %v3415 = vpop.f32.mrb[0].mxu0
    %v3416 = vadd.f32 0.0, %v3415
    %v3417 = vpop.f32.mrb[0].mxu0
    %v3418 = vadd.f32 0.0, %v3417
    %v3419 = vpop.f32.mrb[0].mxu0
    %v3420 = vpop.f32.mrb[0].mxu0
    %3421 = vdwg.mxu0
    %3422 = vmatprep.subr.bf16.mxu0 %v3320
    %3423 = vmatpush1.bf16.msra.mxu0 %v3319
    %3424 = vmatprep.subr.bf16.mxu0 %v3324
    %3425 = vmatpush1.bf16.msra.mxu0 %v3323
    %3426 = vmatprep.subr.bf16.mxu0 %v3328
    %3427 = vmatpush1.bf16.msra.mxu0 %v3327
    %3428 = vmatprep.subr.bf16.mxu0 %v3332
    %3429 = vmatpush1.bf16.msra.mxu0 %v3331
    %3430 = vmatprep.subr.bf16.mxu0 %v3336
    %3431 = vmatpush1.bf16.msra.mxu0 %v3335
    %3432 = vmatprep.subr.bf16.mxu0 %v3340
    %3433 = vmatpush1.bf16.msra.mxu0 %v3339
    %3434 = vmatprep.subr.bf16.mxu0 %v3344
    %3435 = vmatpush1.bf16.msra.mxu0 %v3343
    %3436 = vmatprep.subr.bf16.mxu0 %v3348
    %3437 = vmatpush1.bf16.msra.mxu0 %v3347
    %3438 = vmatprep.subr.bf16.mxu0 0
    %3439 = vmatpush1.bf16.msra.mxu0 0
    %3440 = vmatprep.subr.bf16.mxu0 0
    %3441 = vmatpush1.bf16.msra.mxu0 0
    %3442 = vmatprep.subr.bf16.mxu0 0
    %3443 = vmatpush1.bf16.msra.mxu0 0
    %3444 = vmatprep.subr.bf16.mxu0 0
    %3445 = vmatpush1.bf16.msra.mxu0 0
    %3446 = vmatprep.subr.bf16.mxu0 0
    %3447 = vmatpush1.bf16.msra.mxu0 0
    %3448 = vmatprep.subr.bf16.mxu0 0
    %3449 = vmatpush1.bf16.msra.mxu0 0
    %3450 = vmatprep.subr.bf16.mxu0 0
    %3451 = vmatpush1.bf16.msra.mxu0 0
    %3452 = vmatprep.subr.bf16.mxu0 0
    %3453 = vmatpush1.bf16.msra.mxu0 0
    %3454 = vmatprep.mubr.bf16.mxu0 0
    %3455 = vmatmul.mubr.bf16.gmra.mrb[0].mxu0 %v3188
    %v3456 = vpop.f32.mrb[0].mxu0
    %v3457 = vadd.f32 0.0, %v3456
    %v3458 = vpop.f32.mrb[0].mxu0
    %v3459 = vadd.f32 0.0, %v3458
    %v3460 = vpop.f32.mrb[0].mxu0
    %v3461 = vpop.f32.mrb[0].mxu0
    %3462 = vdwg.mxu0
    %v3463 = vadd.f32 %v3183, %v3416
    %v3464 = vadd.f32 %v3184, %v3418
    %v3465 = vadd.f32 %v3185, %v3457
    %v3466 = vadd.f32 %v3186, %v3459
    %v3467 = vld [vmem:[#allocation17] sm:$0xff]
    %v3468 = vxor.u32 %v3463, 2147483648
    %v3469 = vmul.f32 %v3468, 1.442695
    %v3470 = vpow.pop %v3469
    %v3471 = vadd.f32 %v3470, 1.0
    %v3472 = vrcp.pop %v3471
    %v3473 = vmul.f32 1.0, %v3472
    %v3474 = vxor.u32 %v3464, 2147483648
    %v3475 = vmul.f32 %v3474, 1.442695
    %v3476 = vpow.pop %v3475
    %v3477 = vadd.f32 %v3476, 1.0
    %v3478 = vrcp.pop %v3477
    %v3479 = vmul.f32 1.0, %v3478
    %v3480 = vtanh.pop %v3465
    %v3481 = vxor.u32 %v3466, 2147483648
    %v3482 = vmul.f32 %v3481, 1.442695
    %v3483 = vpow.pop %v3482
    %v3484 = vadd.f32 %v3483, 1.0
    %v3485 = vrcp.pop %v3484
    %v3486 = vmul.f32 1.0, %v3485
    %v3487 = vmul.f32 %v3479, %v3467
    %v3488 = vmul.f32 %v3473, %v3480
    %v3489 = vadd.f32 %v3487, %v3488
    %v3490 = vtanh.pop %v3489
    %v3491 = vmul.f32 %v3486, %v3490
    %3492 = vst [vmem:[#allocation16] sm:$0xff] %v3491
    %3493 = vst [vmem:[#allocation17] sm:$0xff] %v3489
    %v3494 = vld [vmem:[%s804] sm:$0xff]
    %v3495 = vpack.c.bf16 %v3491, %v3491
    %v3496 = vld [vmem:[#allocation12] sm:$0xff]
    %v3497 = vld [vmem:[#allocation12 + $0x8] sm:$0xff]
    %v3498 = vld [vmem:[#allocation12 + $0x10] sm:$0xff]
    %v3499 = vld [vmem:[#allocation12 + $0x18] sm:$0xff]
    %v3500 = vld [vmem:[#allocation12 + $0x20] sm:$0xff]
    %v3501 = vld [vmem:[#allocation12 + $0x28] sm:$0xff]
    %v3502 = vld [vmem:[#allocation12 + $0x30] sm:$0xff]
    %v3503 = vld [vmem:[#allocation12 + $0x38] sm:$0xff]
    %v3504 = vld [vmem:[#allocation12 + $0x40] sm:$0xff]
    %v3505 = vld [vmem:[#allocation12 + $0x48] sm:$0xff]
    %v3506 = vld [vmem:[#allocation12 + $0x50] sm:$0xff]
    %v3507 = vld [vmem:[#allocation12 + $0x58] sm:$0xff]
    %v3508 = vld [vmem:[#allocation12 + $0x60] sm:$0xff]
    %v3509 = vld [vmem:[#allocation12 + $0x68] sm:$0xff]
    %v3510 = vld [vmem:[#allocation12 + $0x70] sm:$0xff]
    %v3511 = vld [vmem:[#allocation12 + $0x78] sm:$0xff]
    %v3512 = vld [vmem:[#allocation12 + $0x80] sm:$0xff]
    %v3513 = vld [vmem:[#allocation12 + $0x88] sm:$0xff]
    %v3514 = vld [vmem:[#allocation12 + $0x90] sm:$0xff]
    %v3515 = vld [vmem:[#allocation12 + $0x98] sm:$0xff]
    %v3516 = vld [vmem:[#allocation12 + $0xa0] sm:$0xff]
    %v3517 = vld [vmem:[#allocation12 + $0xa8] sm:$0xff]
    %v3518 = vld [vmem:[#allocation12 + $0xb0] sm:$0xff]
    %v3519 = vld [vmem:[#allocation12 + $0xb8] sm:$0xff]
    %v3520 = vld [vmem:[#allocation12 + $0xc0] sm:$0xff]
    %v3521 = vld [vmem:[#allocation12 + $0xc8] sm:$0xff]
    %v3522 = vld [vmem:[#allocation12 + $0xd0] sm:$0xff]
    %v3523 = vld [vmem:[#allocation12 + $0xd8] sm:$0xff]
    %v3524 = vld [vmem:[#allocation12 + $0xe0] sm:$0xff]
    %v3525 = vld [vmem:[#allocation12 + $0xe8] sm:$0xff]
    %v3526 = vld [vmem:[#allocation12 + $0xf0] sm:$0xff]
    %v3527 = vld [vmem:[#allocation12 + $0xf8] sm:$0xff]
    %v3528 = vpack.c.bf16 %v3494, %v3494
    %v3529 = vld [vmem:[#allocation13] sm:$0xff]
    %v3530 = vld [vmem:[#allocation13 + $0x8] sm:$0xff]
    %v3531 = vld [vmem:[#allocation13 + $0x10] sm:$0xff]
    %v3532 = vld [vmem:[#allocation13 + $0x18] sm:$0xff]
    %v3533 = vld [vmem:[#allocation13 + $0x20] sm:$0xff]
    %v3534 = vld [vmem:[#allocation13 + $0x28] sm:$0xff]
    %v3535 = vld [vmem:[#allocation13 + $0x30] sm:$0xff]
    %v3536 = vld [vmem:[#allocation13 + $0x38] sm:$0xff]
    %v3537 = vld [vmem:[#allocation13 + $0x40] sm:$0xff]
    %v3538 = vld [vmem:[#allocation13 + $0x48] sm:$0xff]
    %v3539 = vld [vmem:[#allocation13 + $0x50] sm:$0xff]
    %v3540 = vld [vmem:[#allocation13 + $0x58] sm:$0xff]
    %v3541 = vld [vmem:[#allocation13 + $0x60] sm:$0xff]
    %v3542 = vld [vmem:[#allocation13 + $0x68] sm:$0xff]
    %v3543 = vld [vmem:[#allocation13 + $0x70] sm:$0xff]
    %v3544 = vld [vmem:[#allocation13 + $0x78] sm:$0xff]
    %v3545 = vld [vmem:[#allocation13 + $0x80] sm:$0xff]
    %v3546 = vld [vmem:[#allocation13 + $0x88] sm:$0xff]
    %v3547 = vld [vmem:[#allocation13 + $0x90] sm:$0xff]
    %v3548 = vld [vmem:[#allocation13 + $0x98] sm:$0xff]
    %v3549 = vld [vmem:[#allocation13 + $0xa0] sm:$0xff]
    %v3550 = vld [vmem:[#allocation13 + $0xa8] sm:$0xff]
    %v3551 = vld [vmem:[#allocation13 + $0xb0] sm:$0xff]
    %v3552 = vld [vmem:[#allocation13 + $0xb8] sm:$0xff]
    %v3553 = vld [vmem:[#allocation13 + $0xc0] sm:$0xff]
    %v3554 = vld [vmem:[#allocation13 + $0xc8] sm:$0xff]
    %v3555 = vld [vmem:[#allocation13 + $0xd0] sm:$0xff]
    %v3556 = vld [vmem:[#allocation13 + $0xd8] sm:$0xff]
    %v3557 = vld [vmem:[#allocation13 + $0xe0] sm:$0xff]
    %v3558 = vld [vmem:[#allocation13 + $0xe8] sm:$0xff]
    %v3559 = vld [vmem:[#allocation13 + $0xf0] sm:$0xff]
    %v3560 = vld [vmem:[#allocation13 + $0xf8] sm:$0xff]
    %v3593 = vunpack.c.l.b16 %v3529
    %v3594 = vunpack.c.h.b16 %v3529
    %v3595 = vunpack.c.l.b16 %v3530
    %v3596 = vunpack.c.h.b16 %v3530
    %v3597 = vunpack.c.l.b16 %v3531
    %v3598 = vunpack.c.h.b16 %v3531
    %v3599 = vunpack.c.l.b16 %v3532
    %v3600 = vunpack.c.h.b16 %v3532
    %v3601 = vunpack.c.l.b16 %v3533
    %v3602 = vunpack.c.h.b16 %v3533
    %v3603 = vunpack.c.l.b16 %v3534
    %v3604 = vunpack.c.h.b16 %v3534
    %v3605 = vunpack.c.l.b16 %v3535
    %v3606 = vunpack.c.h.b16 %v3535
    %v3607 = vunpack.c.l.b16 %v3536
    %v3608 = vunpack.c.h.b16 %v3536
    %v3609 = vunpack.c.l.b16 %v3537
    %v3610 = vunpack.c.h.b16 %v3537
    %v3611 = vunpack.c.l.b16 %v3538
    %v3612 = vunpack.c.h.b16 %v3538
    %v3613 = vunpack.c.l.b16 %v3539
    %v3614 = vunpack.c.h.b16 %v3539
    %v3615 = vunpack.c.l.b16 %v3540
    %v3616 = vunpack.c.h.b16 %v3540
    %v3617 = vunpack.c.l.b16 %v3541
    %v3618 = vunpack.c.h.b16 %v3541
    %v3619 = vunpack.c.l.b16 %v3542
    %v3620 = vunpack.c.h.b16 %v3542
    %v3621 = vunpack.c.l.b16 %v3543
    %v3622 = vunpack.c.h.b16 %v3543
    %v3623 = vunpack.c.l.b16 %v3544
    %v3624 = vunpack.c.h.b16 %v3544
    %v3625 = vunpack.c.l.b16 %v3545
    %v3626 = vunpack.c.h.b16 %v3545
    %v3627 = vunpack.c.l.b16 %v3546
    %v3628 = vunpack.c.h.b16 %v3546
    %v3629 = vunpack.c.l.b16 %v3547
    %v3630 = vunpack.c.h.b16 %v3547
    %v3631 = vunpack.c.l.b16 %v3548
    %v3632 = vunpack.c.h.b16 %v3548
    %v3633 = vunpack.c.l.b16 %v3549
    %v3634 = vunpack.c.h.b16 %v3549
    %v3635 = vunpack.c.l.b16 %v3550
    %v3636 = vunpack.c.h.b16 %v3550
    %v3637 = vunpack.c.l.b16 %v3551
    %v3638 = vunpack.c.h.b16 %v3551
    %v3639 = vunpack.c.l.b16 %v3552
    %v3640 = vunpack.c.h.b16 %v3552
    %v3641 = vunpack.c.l.b16 %v3553
    %v3642 = vunpack.c.h.b16 %v3553
    %v3643 = vunpack.c.l.b16 %v3554
    %v3644 = vunpack.c.h.b16 %v3554
    %v3645 = vunpack.c.l.b16 %v3555
    %v3646 = vunpack.c.h.b16 %v3555
    %v3647 = vunpack.c.l.b16 %v3556
    %v3648 = vunpack.c.h.b16 %v3556
    %v3649 = vunpack.c.l.b16 %v3557
    %v3650 = vunpack.c.h.b16 %v3557
    %v3651 = vunpack.c.l.b16 %v3558
    %v3652 = vunpack.c.h.b16 %v3558
    %v3653 = vunpack.c.l.b16 %v3559
    %v3654 = vunpack.c.h.b16 %v3559
    %v3655 = vunpack.c.l.b16 %v3560
    %v3656 = vunpack.c.h.b16 %v3560
    %v3657 = vpack.c.b16 %v3597, %v3593
    %v3658 = vpack.c.b16 %v3598, %v3594
    %v3659 = vpack.c.b16 %v3599, %v3595
    %v3660 = vpack.c.b16 %v3600, %v3596
    %v3661 = vpack.c.b16 %v3605, %v3601
    %v3662 = vpack.c.b16 %v3606, %v3602
    %v3663 = vpack.c.b16 %v3607, %v3603
    %v3664 = vpack.c.b16 %v3608, %v3604
    %v3665 = vpack.c.b16 %v3613, %v3609
    %v3666 = vpack.c.b16 %v3614, %v3610
    %v3667 = vpack.c.b16 %v3615, %v3611
    %v3668 = vpack.c.b16 %v3616, %v3612
    %v3669 = vpack.c.b16 %v3621, %v3617
    %v3670 = vpack.c.b16 %v3622, %v3618
    %v3671 = vpack.c.b16 %v3623, %v3619
    %v3672 = vpack.c.b16 %v3624, %v3620
    %v3673 = vpack.c.b16 %v3629, %v3625
    %v3674 = vpack.c.b16 %v3630, %v3626
    %v3675 = vpack.c.b16 %v3631, %v3627
    %v3676 = vpack.c.b16 %v3632, %v3628
    %v3677 = vpack.c.b16 %v3637, %v3633
    %v3678 = vpack.c.b16 %v3638, %v3634
    %v3679 = vpack.c.b16 %v3639, %v3635
    %v3680 = vpack.c.b16 %v3640, %v3636
    %v3681 = vpack.c.b16 %v3645, %v3641
    %v3682 = vpack.c.b16 %v3646, %v3642
    %v3683 = vpack.c.b16 %v3647, %v3643
    %v3684 = vpack.c.b16 %v3648, %v3644
    %v3685 = vpack.c.b16 %v3653, %v3649
    %v3686 = vpack.c.b16 %v3654, %v3650
    %v3687 = vpack.c.b16 %v3655, %v3651
    %v3688 = vpack.c.b16 %v3656, %v3652
    %3721 = vmatprep.subr.bf16.mxu0 %v3658
    %3722 = vmatpush1.bf16.msra.mxu0 %v3657
    %3723 = vmatprep.subr.bf16.mxu0 %v3662
    %3724 = vmatpush1.bf16.msra.mxu0 %v3661
    %3725 = vmatprep.subr.bf16.mxu0 %v3666
    %3726 = vmatpush1.bf16.msra.mxu0 %v3665
    %3727 = vmatprep.subr.bf16.mxu0 %v3670
    %3728 = vmatpush1.bf16.msra.mxu0 %v3669
    %3729 = vmatprep.subr.bf16.mxu0 %v3674
    %3730 = vmatpush1.bf16.msra.mxu0 %v3673
    %3731 = vmatprep.subr.bf16.mxu0 %v3678
    %3732 = vmatpush1.bf16.msra.mxu0 %v3677
    %3733 = vmatprep.subr.bf16.mxu0 %v3682
    %3734 = vmatpush1.bf16.msra.mxu0 %v3681
    %3735 = vmatprep.subr.bf16.mxu0 %v3686
    %3736 = vmatpush1.bf16.msra.mxu0 %v3685
    %3737 = vmatprep.subr.bf16.mxu0 0
    %3738 = vmatpush1.bf16.msra.mxu0 0
    %3739 = vmatprep.subr.bf16.mxu0 0
    %3740 = vmatpush1.bf16.msra.mxu0 0
    %3741 = vmatprep.subr.bf16.mxu0 0
    %3742 = vmatpush1.bf16.msra.mxu0 0
    %3743 = vmatprep.subr.bf16.mxu0 0
    %3744 = vmatpush1.bf16.msra.mxu0 0
    %3745 = vmatprep.subr.bf16.mxu0 0
    %3746 = vmatpush1.bf16.msra.mxu0 0
    %3747 = vmatprep.subr.bf16.mxu0 0
    %3748 = vmatpush1.bf16.msra.mxu0 0
    %3749 = vmatprep.subr.bf16.mxu0 0
    %3750 = vmatpush1.bf16.msra.mxu0 0
    %3751 = vmatprep.subr.bf16.mxu0 0
    %3752 = vmatpush1.bf16.msra.mxu0 0
    %3753 = vmatprep.mubr.bf16.mxu0 0
    %3754 = vmatmul.mubr.bf16.gmra.mrb[0].mxu0 %v3528
    %v3755 = vpop.f32.mrb[0].mxu0
    %v3756 = vadd.f32 0.0, %v3755
    %v3757 = vpop.f32.mrb[0].mxu0
    %v3758 = vadd.f32 0.0, %v3757
    %v3759 = vpop.f32.mrb[0].mxu0
    %v3760 = vpop.f32.mrb[0].mxu0
    %3761 = vdwg.mxu0
    %3762 = vmatprep.subr.bf16.mxu0 %v3660
    %3763 = vmatpush1.bf16.msra.mxu0 %v3659
    %3764 = vmatprep.subr.bf16.mxu0 %v3664
    %3765 = vmatpush1.bf16.msra.mxu0 %v3663
    %3766 = vmatprep.subr.bf16.mxu0 %v3668
    %3767 = vmatpush1.bf16.msra.mxu0 %v3667
    %3768 = vmatprep.subr.bf16.mxu0 %v3672
    %3769 = vmatpush1.bf16.msra.mxu0 %v3671
    %3770 = vmatprep.subr.bf16.mxu0 %v3676
    %3771 = vmatpush1.bf16.msra.mxu0 %v3675
    %3772 = vmatprep.subr.bf16.mxu0 %v3680
    %3773 = vmatpush1.bf16.msra.mxu0 %v3679
    %3774 = vmatprep.subr.bf16.mxu0 %v3684
    %3775 = vmatpush1.bf16.msra.mxu0 %v3683
    %3776 = vmatprep.subr.bf16.mxu0 %v3688
    %3777 = vmatpush1.bf16.msra.mxu0 %v3687
    %3778 = vmatprep.subr.bf16.mxu0 0
    %3779 = vmatpush1.bf16.msra.mxu0 0
    %3780 = vmatprep.subr.bf16.mxu0 0
    %3781 = vmatpush1.bf16.msra.mxu0 0
    %3782 = vmatprep.subr.bf16.mxu0 0
    %3783 = vmatpush1.bf16.msra.mxu0 0
    %3784 = vmatprep.subr.bf16.mxu0 0
    %3785 = vmatpush1.bf16.msra.mxu0 0
    %3786 = vmatprep.subr.bf16.mxu0 0
    %3787 = vmatpush1.bf16.msra.mxu0 0
    %3788 = vmatprep.subr.bf16.mxu0 0
    %3789 = vmatpush1.bf16.msra.mxu0 0
    %3790 = vmatprep.subr.bf16.mxu0 0
    %3791 = vmatpush1.bf16.msra.mxu0 0
    %3792 = vmatprep.subr.bf16.mxu0 0
    %3793 = vmatpush1.bf16.msra.mxu0 0
    %3794 = vmatprep.mubr.bf16.mxu0 0
    %3795 = vmatmul.mubr.bf16.gmra.mrb[0].mxu0 %v3528
    %v3796 = vpop.f32.mrb[0].mxu0
    %v3797 = vadd.f32 0.0, %v3796
    %v3798 = vpop.f32.mrb[0].mxu0
    %v3799 = vadd.f32 0.0, %v3798
    %v3800 = vpop.f32.mrb[0].mxu0
    %v3801 = vpop.f32.mrb[0].mxu0
    %3802 = vdwg.mxu0
    %v3835 = vunpack.c.l.b16 %v3496
    %v3836 = vunpack.c.h.b16 %v3496
    %v3837 = vunpack.c.l.b16 %v3497
    %v3838 = vunpack.c.h.b16 %v3497
    %v3839 = vunpack.c.l.b16 %v3498
    %v3840 = vunpack.c.h.b16 %v3498
    %v3841 = vunpack.c.l.b16 %v3499
    %v3842 = vunpack.c.h.b16 %v3499
    %v3843 = vunpack.c.l.b16 %v3500
    %v3844 = vunpack.c.h.b16 %v3500
    %v3845 = vunpack.c.l.b16 %v3501
    %v3846 = vunpack.c.h.b16 %v3501
    %v3847 = vunpack.c.l.b16 %v3502
    %v3848 = vunpack.c.h.b16 %v3502
    %v3849 = vunpack.c.l.b16 %v3503
    %v3850 = vunpack.c.h.b16 %v3503
    %v3851 = vunpack.c.l.b16 %v3504
    %v3852 = vunpack.c.h.b16 %v3504
    %v3853 = vunpack.c.l.b16 %v3505
    %v3854 = vunpack.c.h.b16 %v3505
    %v3855 = vunpack.c.l.b16 %v3506
    %v3856 = vunpack.c.h.b16 %v3506
    %v3857 = vunpack.c.l.b16 %v3507
    %v3858 = vunpack.c.h.b16 %v3507
    %v3859 = vunpack.c.l.b16 %v3508
    %v3860 = vunpack.c.h.b16 %v3508
    %v3861 = vunpack.c.l.b16 %v3509
    %v3862 = vunpack.c.h.b16 %v3509
    %v3863 = vunpack.c.l.b16 %v3510
    %v3864 = vunpack.c.h.b16 %v3510
    %v3865 = vunpack.c.l.b16 %v3511
    %v3866 = vunpack.c.h.b16 %v3511
    %v3867 = vunpack.c.l.b16 %v3512
    %v3868 = vunpack.c.h.b16 %v3512
    %v3869 = vunpack.c.l.b16 %v3513
    %v3870 = vunpack.c.h.b16 %v3513
    %v3871 = vunpack.c.l.b16 %v3514
    %v3872 = vunpack.c.h.b16 %v3514
    %v3873 = vunpack.c.l.b16 %v3515
    %v3874 = vunpack.c.h.b16 %v3515
    %v3875 = vunpack.c.l.b16 %v3516
    %v3876 = vunpack.c.h.b16 %v3516
    %v3877 = vunpack.c.l.b16 %v3517
    %v3878 = vunpack.c.h.b16 %v3517
    %v3879 = vunpack.c.l.b16 %v3518
    %v3880 = vunpack.c.h.b16 %v3518
    %v3881 = vunpack.c.l.b16 %v3519
    %v3882 = vunpack.c.h.b16 %v3519
    %v3883 = vunpack.c.l.b16 %v3520
    %v3884 = vunpack.c.h.b16 %v3520
    %v3885 = vunpack.c.l.b16 %v3521
    %v3886 = vunpack.c.h.b16 %v3521
    %v3887 = vunpack.c.l.b16 %v3522
    %v3888 = vunpack.c.h.b16 %v3522
    %v3889 = vunpack.c.l.b16 %v3523
    %v3890 = vunpack.c.h.b16 %v3523
    %v3891 = vunpack.c.l.b16 %v3524
    %v3892 = vunpack.c.h.b16 %v3524
    %v3893 = vunpack.c.l.b16 %v3525
    %v3894 = vunpack.c.h.b16 %v3525
    %v3895 = vunpack.c.l.b16 %v3526
    %v3896 = vunpack.c.h.b16 %v3526
    %v3897 = vunpack.c.l.b16 %v3527
    %v3898 = vunpack.c.h.b16 %v3527
    %v3899 = vpack.c.b16 %v3839, %v3835
    %v3900 = vpack.c.b16 %v3840, %v3836
    %v3901 = vpack.c.b16 %v3841, %v3837
    %v3902 = vpack.c.b16 %v3842, %v3838
    %v3903 = vpack.c.b16 %v3847, %v3843
    %v3904 = vpack.c.b16 %v3848, %v3844
    %v3905 = vpack.c.b16 %v3849, %v3845
    %v3906 = vpack.c.b16 %v3850, %v3846
    %v3907 = vpack.c.b16 %v3855, %v3851
    %v3908 = vpack.c.b16 %v3856, %v3852
    %v3909 = vpack.c.b16 %v3857, %v3853
    %v3910 = vpack.c.b16 %v3858, %v3854
    %v3911 = vpack.c.b16 %v3863, %v3859
    %v3912 = vpack.c.b16 %v3864, %v3860
    %v3913 = vpack.c.b16 %v3865, %v3861
    %v3914 = vpack.c.b16 %v3866, %v3862
    %v3915 = vpack.c.b16 %v3871, %v3867
    %v3916 = vpack.c.b16 %v3872, %v3868
    %v3917 = vpack.c.b16 %v3873, %v3869
    %v3918 = vpack.c.b16 %v3874, %v3870
    %v3919 = vpack.c.b16 %v3879, %v3875
    %v3920 = vpack.c.b16 %v3880, %v3876
    %v3921 = vpack.c.b16 %v3881, %v3877
    %v3922 = vpack.c.b16 %v3882, %v3878
    %v3923 = vpack.c.b16 %v3887, %v3883
    %v3924 = vpack.c.b16 %v3888, %v3884
    %v3925 = vpack.c.b16 %v3889, %v3885
    %v3926 = vpack.c.b16 %v3890, %v3886
    %v3927 = vpack.c.b16 %v3895, %v3891
    %v3928 = vpack.c.b16 %v3896, %v3892
    %v3929 = vpack.c.b16 %v3897, %v3893
    %v3930 = vpack.c.b16 %v3898, %v3894
    %3963 = vmatprep.subr.bf16.mxu0 %v3900
    %3964 = vmatpush1.bf16.msra.mxu0 %v3899
    %3965 = vmatprep.subr.bf16.mxu0 %v3904
    %3966 = vmatpush1.bf16.msra.mxu0 %v3903
    %3967 = vmatprep.subr.bf16.mxu0 %v3908
    %3968 = vmatpush1.bf16.msra.mxu0 %v3907
    %3969 = vmatprep.subr.bf16.mxu0 %v3912
    %3970 = vmatpush1.bf16.msra.mxu0 %v3911
    %3971 = vmatprep.subr.bf16.mxu0 %v3916
    %3972 = vmatpush1.bf16.msra.mxu0 %v3915
    %3973 = vmatprep.subr.bf16.mxu0 %v3920
    %3974 = vmatpush1.bf16.msra.mxu0 %v3919
    %3975 = vmatprep.subr.bf16.mxu0 %v3924
    %3976 = vmatpush1.bf16.msra.mxu0 %v3923
    %3977 = vmatprep.subr.bf16.mxu0 %v3928
    %3978 = vmatpush1.bf16.msra.mxu0 %v3927
    %3979 = vmatprep.subr.bf16.mxu0 0
    %3980 = vmatpush1.bf16.msra.mxu0 0
    %3981 = vmatprep.subr.bf16.mxu0 0
    %3982 = vmatpush1.bf16.msra.mxu0 0
    %3983 = vmatprep.subr.bf16.mxu0 0
    %3984 = vmatpush1.bf16.msra.mxu0 0
    %3985 = vmatprep.subr.bf16.mxu0 0
    %3986 = vmatpush1.bf16.msra.mxu0 0
    %3987 = vmatprep.subr.bf16.mxu0 0
    %3988 = vmatpush1.bf16.msra.mxu0 0
    %3989 = vmatprep.subr.bf16.mxu0 0
    %3990 = vmatpush1.bf16.msra.mxu0 0
    %3991 = vmatprep.subr.bf16.mxu0 0
    %3992 = vmatpush1.bf16.msra.mxu0 0
    %3993 = vmatprep.subr.bf16.mxu0 0
    %3994 = vmatpush1.bf16.msra.mxu0 0
    %3995 = vmatprep.mubr.bf16.mxu0 0
    %3996 = vmatmul.mubr.bf16.gmra.mrb[0].mxu0 %v3495
    %v3997 = vpop.f32.mrb[0].mxu0
    %v3998 = vadd.f32 %v3756, %v3997
    %v3999 = vpop.f32.mrb[0].mxu0
    %v4000 = vadd.f32 %v3758, %v3999
    %v4001 = vpop.f32.mrb[0].mxu0
    %v4002 = vpop.f32.mrb[0].mxu0
    %4003 = vdwg.mxu0
    %4004 = vmatprep.subr.bf16.mxu0 %v3902
    %4005 = vmatpush1.bf16.msra.mxu0 %v3901
    %4006 = vmatprep.subr.bf16.mxu0 %v3906
    %4007 = vmatpush1.bf16.msra.mxu0 %v3905
    %4008 = vmatprep.subr.bf16.mxu0 %v3910
    %4009 = vmatpush1.bf16.msra.mxu0 %v3909
    %4010 = vmatprep.subr.bf16.mxu0 %v3914
    %4011 = vmatpush1.bf16.msra.mxu0 %v3913
    %4012 = vmatprep.subr.bf16.mxu0 %v3918
    %4013 = vmatpush1.bf16.msra.mxu0 %v3917
    %4014 = vmatprep.subr.bf16.mxu0 %v3922
    %4015 = vmatpush1.bf16.msra.mxu0 %v3921
    %4016 = vmatprep.subr.bf16.mxu0 %v3926
    %4017 = vmatpush1.bf16.msra.mxu0 %v3925
    %4018 = vmatprep.subr.bf16.mxu0 %v3930
    %4019 = vmatpush1.bf16.msra.mxu0 %v3929
    %4020 = vmatprep.subr.bf16.mxu0 0
    %4021 = vmatpush1.bf16.msra.mxu0 0
    %4022 = vmatprep.subr.bf16.mxu0 0
    %4023 = vmatpush1.bf16.msra.mxu0 0
    %4024 = vmatprep.subr.bf16.mxu0 0
    %4025 = vmatpush1.bf16.msra.mxu0 0
    %4026 = vmatprep.subr.bf16.mxu0 0
    %4027 = vmatpush1.bf16.msra.mxu0 0
    %4028 = vmatprep.subr.bf16.mxu0 0
    %4029 = vmatpush1.bf16.msra.mxu0 0
    %4030 = vmatprep.subr.bf16.mxu0 0
    %4031 = vmatpush1.bf16.msra.mxu0 0
    %4032 = vmatprep.subr.bf16.mxu0 0
    %4033 = vmatpush1.bf16.msra.mxu0 0
    %4034 = vmatprep.subr.bf16.mxu0 0
    %4035 = vmatpush1.bf16.msra.mxu0 0
    %4036 = vmatprep.mubr.bf16.mxu0 0
    %4037 = vmatmul.mubr.bf16.gmra.mrb[0].mxu0 %v3495
    %v4038 = vpop.f32.mrb[0].mxu0
    %v4039 = vadd.f32 %v3797, %v4038
    %v4040 = vpop.f32.mrb[0].mxu0
    %v4041 = vadd.f32 %v3799, %v4040
    %v4042 = vpop.f32.mrb[0].mxu0
    %v4043 = vpop.f32.mrb[0].mxu0
    %4044 = vdwg.mxu0
    %v4045 = vadd.f32 %v3998, %v150
    %v4046 = vadd.f32 %v4000, %v154
    %v4047 = vadd.f32 %v4039, %v158
    %v4048 = vadd.f32 %v4041, %v162
    %v4049 = vld [vmem:[%s1360] sm:$0xff]
    %v4050 = vxor.u32 %v4045, 2147483648
    %v4051 = vmul.f32 %v4050, 1.442695
    %v4052 = vpow.pop %v4051
    %v4053 = vadd.f32 %v4052, 1.0
    %v4054 = vrcp.pop %v4053
    %v4055 = vmul.f32 1.0, %v4054
    %v4056 = vxor.u32 %v4046, 2147483648
    %v4057 = vmul.f32 %v4056, 1.442695
    %v4058 = vpow.pop %v4057
    %v4059 = vadd.f32 %v4058, 1.0
    %v4060 = vrcp.pop %v4059
    %v4061 = vmul.f32 1.0, %v4060
    %v4062 = vtanh.pop %v4047
    %v4063 = vxor.u32 %v4048, 2147483648
    %v4064 = vmul.f32 %v4063, 1.442695
    %v4065 = vpow.pop %v4064
    %v4066 = vadd.f32 %v4065, 1.0
    %v4067 = vrcp.pop %v4066
    %v4068 = vmul.f32 1.0, %v4067
    %v4069 = vmul.f32 %v4061, %v4049
    %v4070 = vmul.f32 %v4055, %v4062
    %v4071 = vadd.f32 %v4069, %v4070
    %v4072 = vtanh.pop %v4071
    %v4073 = vmul.f32 %v4068, %v4072
    %4074 = vst [vmem:[%s804] sm:$0xff] %v4073
    %4075 = vst [vmem:[%s1360] sm:$0xff] %v4071
    %s4076 = smul.u32 4, 4
    %s4077 = smul.addr %s4076, 8
    %s4078 = scalar_lea.vmem [#allocation2], %s4077
    %v4079 = vld [vmem:[%s4078] sm:$0xff]
    %v4080 = vld [vmem:[%s4078 + $0x8] sm:$0xff]
    %v4081 = vld [vmem:[%s4078 + $0x10] sm:$0xff]
    %v4082 = vld [vmem:[%s4078 + $0x18] sm:$0xff]
    %v4083 = vld [vmem:[#allocation16] sm:$0xff]
    %v4084 = vpack.c.bf16 %v4083, %v4083
    %v4085 = vld [vmem:[#allocation9] sm:$0xff]
    %v4086 = vld [vmem:[#allocation9 + $0x8] sm:$0xff]
    %v4087 = vld [vmem:[#allocation9 + $0x10] sm:$0xff]
    %v4088 = vld [vmem:[#allocation9 + $0x18] sm:$0xff]
    %v4089 = vld [vmem:[#allocation9 + $0x20] sm:$0xff]
    %v4090 = vld [vmem:[#allocation9 + $0x28] sm:$0xff]
    %v4091 = vld [vmem:[#allocation9 + $0x30] sm:$0xff]
    %v4092 = vld [vmem:[#allocation9 + $0x38] sm:$0xff]
    %v4093 = vld [vmem:[#allocation9 + $0x40] sm:$0xff]
    %v4094 = vld [vmem:[#allocation9 + $0x48] sm:$0xff]
    %v4095 = vld [vmem:[#allocation9 + $0x50] sm:$0xff]
    %v4096 = vld [vmem:[#allocation9 + $0x58] sm:$0xff]
    %v4097 = vld [vmem:[#allocation9 + $0x60] sm:$0xff]
    %v4098 = vld [vmem:[#allocation9 + $0x68] sm:$0xff]
    %v4099 = vld [vmem:[#allocation9 + $0x70] sm:$0xff]
    %v4100 = vld [vmem:[#allocation9 + $0x78] sm:$0xff]
    %v4101 = vld [vmem:[#allocation9 + $0x80] sm:$0xff]
    %v4102 = vld [vmem:[#allocation9 + $0x88] sm:$0xff]
    %v4103 = vld [vmem:[#allocation9 + $0x90] sm:$0xff]
    %v4104 = vld [vmem:[#allocation9 + $0x98] sm:$0xff]
    %v4105 = vld [vmem:[#allocation9 + $0xa0] sm:$0xff]
    %v4106 = vld [vmem:[#allocation9 + $0xa8] sm:$0xff]
    %v4107 = vld [vmem:[#allocation9 + $0xb0] sm:$0xff]
    %v4108 = vld [vmem:[#allocation9 + $0xb8] sm:$0xff]
    %v4109 = vld [vmem:[#allocation9 + $0xc0] sm:$0xff]
    %v4110 = vld [vmem:[#allocation9 + $0xc8] sm:$0xff]
    %v4111 = vld [vmem:[#allocation9 + $0xd0] sm:$0xff]
    %v4112 = vld [vmem:[#allocation9 + $0xd8] sm:$0xff]
    %v4113 = vld [vmem:[#allocation9 + $0xe0] sm:$0xff]
    %v4114 = vld [vmem:[#allocation9 + $0xe8] sm:$0xff]
    %v4115 = vld [vmem:[#allocation9 + $0xf0] sm:$0xff]
    %v4116 = vld [vmem:[#allocation9 + $0xf8] sm:$0xff]
    %v4149 = vunpack.c.l.b16 %v4085
    %v4150 = vunpack.c.h.b16 %v4085
    %v4151 = vunpack.c.l.b16 %v4086
    %v4152 = vunpack.c.h.b16 %v4086
    %v4153 = vunpack.c.l.b16 %v4087
    %v4154 = vunpack.c.h.b16 %v4087
    %v4155 = vunpack.c.l.b16 %v4088
    %v4156 = vunpack.c.h.b16 %v4088
    %v4157 = vunpack.c.l.b16 %v4089
    %v4158 = vunpack.c.h.b16 %v4089
    %v4159 = vunpack.c.l.b16 %v4090
    %v4160 = vunpack.c.h.b16 %v4090
    %v4161 = vunpack.c.l.b16 %v4091
    %v4162 = vunpack.c.h.b16 %v4091
    %v4163 = vunpack.c.l.b16 %v4092
    %v4164 = vunpack.c.h.b16 %v4092
    %v4165 = vunpack.c.l.b16 %v4093
    %v4166 = vunpack.c.h.b16 %v4093
    %v4167 = vunpack.c.l.b16 %v4094
    %v4168 = vunpack.c.h.b16 %v4094
    %v4169 = vunpack.c.l.b16 %v4095
    %v4170 = vunpack.c.h.b16 %v4095
    %v4171 = vunpack.c.l.b16 %v4096
    %v4172 = vunpack.c.h.b16 %v4096
    %v4173 = vunpack.c.l.b16 %v4097
    %v4174 = vunpack.c.h.b16 %v4097
    %v4175 = vunpack.c.l.b16 %v4098
    %v4176 = vunpack.c.h.b16 %v4098
    %v4177 = vunpack.c.l.b16 %v4099
    %v4178 = vunpack.c.h.b16 %v4099
    %v4179 = vunpack.c.l.b16 %v4100
    %v4180 = vunpack.c.h.b16 %v4100
    %v4181 = vunpack.c.l.b16 %v4101
    %v4182 = vunpack.c.h.b16 %v4101
    %v4183 = vunpack.c.l.b16 %v4102
    %v4184 = vunpack.c.h.b16 %v4102
    %v4185 = vunpack.c.l.b16 %v4103
    %v4186 = vunpack.c.h.b16 %v4103
    %v4187 = vunpack.c.l.b16 %v4104
    %v4188 = vunpack.c.h.b16 %v4104
    %v4189 = vunpack.c.l.b16 %v4105
    %v4190 = vunpack.c.h.b16 %v4105
    %v4191 = vunpack.c.l.b16 %v4106
    %v4192 = vunpack.c.h.b16 %v4106
    %v4193 = vunpack.c.l.b16 %v4107
    %v4194 = vunpack.c.h.b16 %v4107
    %v4195 = vunpack.c.l.b16 %v4108
    %v4196 = vunpack.c.h.b16 %v4108
    %v4197 = vunpack.c.l.b16 %v4109
    %v4198 = vunpack.c.h.b16 %v4109
    %v4199 = vunpack.c.l.b16 %v4110
    %v4200 = vunpack.c.h.b16 %v4110
    %v4201 = vunpack.c.l.b16 %v4111
    %v4202 = vunpack.c.h.b16 %v4111
    %v4203 = vunpack.c.l.b16 %v4112
    %v4204 = vunpack.c.h.b16 %v4112
    %v4205 = vunpack.c.l.b16 %v4113
    %v4206 = vunpack.c.h.b16 %v4113
    %v4207 = vunpack.c.l.b16 %v4114
    %v4208 = vunpack.c.h.b16 %v4114
    %v4209 = vunpack.c.l.b16 %v4115
    %v4210 = vunpack.c.h.b16 %v4115
    %v4211 = vunpack.c.l.b16 %v4116
    %v4212 = vunpack.c.h.b16 %v4116
    %v4213 = vpack.c.b16 %v4153, %v4149
    %v4214 = vpack.c.b16 %v4154, %v4150
    %v4215 = vpack.c.b16 %v4155, %v4151
    %v4216 = vpack.c.b16 %v4156, %v4152
    %v4217 = vpack.c.b16 %v4161, %v4157
    %v4218 = vpack.c.b16 %v4162, %v4158
    %v4219 = vpack.c.b16 %v4163, %v4159
    %v4220 = vpack.c.b16 %v4164, %v4160
    %v4221 = vpack.c.b16 %v4169, %v4165
    %v4222 = vpack.c.b16 %v4170, %v4166
    %v4223 = vpack.c.b16 %v4171, %v4167
    %v4224 = vpack.c.b16 %v4172, %v4168
    %v4225 = vpack.c.b16 %v4177, %v4173
    %v4226 = vpack.c.b16 %v4178, %v4174
    %v4227 = vpack.c.b16 %v4179, %v4175
    %v4228 = vpack.c.b16 %v4180, %v4176
    %v4229 = vpack.c.b16 %v4185, %v4181
    %v4230 = vpack.c.b16 %v4186, %v4182
    %v4231 = vpack.c.b16 %v4187, %v4183
    %v4232 = vpack.c.b16 %v4188, %v4184
    %v4233 = vpack.c.b16 %v4193, %v4189
    %v4234 = vpack.c.b16 %v4194, %v4190
    %v4235 = vpack.c.b16 %v4195, %v4191
    %v4236 = vpack.c.b16 %v4196, %v4192
    %v4237 = vpack.c.b16 %v4201, %v4197
    %v4238 = vpack.c.b16 %v4202, %v4198
    %v4239 = vpack.c.b16 %v4203, %v4199
    %v4240 = vpack.c.b16 %v4204, %v4200
    %v4241 = vpack.c.b16 %v4209, %v4205
    %v4242 = vpack.c.b16 %v4210, %v4206
    %v4243 = vpack.c.b16 %v4211, %v4207
    %v4244 = vpack.c.b16 %v4212, %v4208
    %4277 = vmatprep.subr.bf16.mxu0 %v4214
    %4278 = vmatpush1.bf16.msra.mxu0 %v4213
    %4279 = vmatprep.subr.bf16.mxu0 %v4218
    %4280 = vmatpush1.bf16.msra.mxu0 %v4217
    %4281 = vmatprep.subr.bf16.mxu0 %v4222
    %4282 = vmatpush1.bf16.msra.mxu0 %v4221
    %4283 = vmatprep.subr.bf16.mxu0 %v4226
    %4284 = vmatpush1.bf16.msra.mxu0 %v4225
    %4285 = vmatprep.subr.bf16.mxu0 %v4230
    %4286 = vmatpush1.bf16.msra.mxu0 %v4229
    %4287 = vmatprep.subr.bf16.mxu0 %v4234
    %4288 = vmatpush1.bf16.msra.mxu0 %v4233
    %4289 = vmatprep.subr.bf16.mxu0 %v4238
    %4290 = vmatpush1.bf16.msra.mxu0 %v4237
    %4291 = vmatprep.subr.bf16.mxu0 %v4242
    %4292 = vmatpush1.bf16.msra.mxu0 %v4241
    %4293 = vmatprep.subr.bf16.mxu0 0
    %4294 = vmatpush1.bf16.msra.mxu0 0
    %4295 = vmatprep.subr.bf16.mxu0 0
    %4296 = vmatpush1.bf16.msra.mxu0 0
    %4297 = vmatprep.subr.bf16.mxu0 0
    %4298 = vmatpush1.bf16.msra.mxu0 0
    %4299 = vmatprep.subr.bf16.mxu0 0
    %4300 = vmatpush1.bf16.msra.mxu0 0
    %4301 = vmatprep.subr.bf16.mxu0 0
    %4302 = vmatpush1.bf16.msra.mxu0 0
    %4303 = vmatprep.subr.bf16.mxu0 0
    %4304 = vmatpush1.bf16.msra.mxu0 0
    %4305 = vmatprep.subr.bf16.mxu0 0
    %4306 = vmatpush1.bf16.msra.mxu0 0
    %4307 = vmatprep.subr.bf16.mxu0 0
    %4308 = vmatpush1.bf16.msra.mxu0 0
    %4309 = vmatprep.mubr.bf16.mxu0 0
    %4310 = vmatmul.mubr.bf16.gmra.mrb[0].mxu0 %v4084
    %v4311 = vpop.f32.mrb[0].mxu0
    %v4312 = vadd.f32 0.0, %v4311
    %v4313 = vpop.f32.mrb[0].mxu0
    %v4314 = vadd.f32 0.0, %v4313
    %v4315 = vpop.f32.mrb[0].mxu0
    %v4316 = vpop.f32.mrb[0].mxu0
    %4317 = vdwg.mxu0
    %4318 = vmatprep.subr.bf16.mxu0 %v4216
    %4319 = vmatpush1.bf16.msra.mxu0 %v4215
    %4320 = vmatprep.subr.bf16.mxu0 %v4220
    %4321 = vmatpush1.bf16.msra.mxu0 %v4219
    %4322 = vmatprep.subr.bf16.mxu0 %v4224
    %4323 = vmatpush1.bf16.msra.mxu0 %v4223
    %4324 = vmatprep.subr.bf16.mxu0 %v4228
    %4325 = vmatpush1.bf16.msra.mxu0 %v4227
    %4326 = vmatprep.subr.bf16.mxu0 %v4232
    %4327 = vmatpush1.bf16.msra.mxu0 %v4231
    %4328 = vmatprep.subr.bf16.mxu0 %v4236
    %4329 = vmatpush1.bf16.msra.mxu0 %v4235
    %4330 = vmatprep.subr.bf16.mxu0 %v4240
    %4331 = vmatpush1.bf16.msra.mxu0 %v4239
    %4332 = vmatprep.subr.bf16.mxu0 %v4244
    %4333 = vmatpush1.bf16.msra.mxu0 %v4243
    %4334 = vmatprep.subr.bf16.mxu0 0
    %4335 = vmatpush1.bf16.msra.mxu0 0
    %4336 = vmatprep.subr.bf16.mxu0 0
    %4337 = vmatpush1.bf16.msra.mxu0 0
    %4338 = vmatprep.subr.bf16.mxu0 0
    %4339 = vmatpush1.bf16.msra.mxu0 0
    %4340 = vmatprep.subr.bf16.mxu0 0
    %4341 = vmatpush1.bf16.msra.mxu0 0
    %4342 = vmatprep.subr.bf16.mxu0 0
    %4343 = vmatpush1.bf16.msra.mxu0 0
    %4344 = vmatprep.subr.bf16.mxu0 0
    %4345 = vmatpush1.bf16.msra.mxu0 0
    %4346 = vmatprep.subr.bf16.mxu0 0
    %4347 = vmatpush1.bf16.msra.mxu0 0
    %4348 = vmatprep.subr.bf16.mxu0 0
    %4349 = vmatpush1.bf16.msra.mxu0 0
    %4350 = vmatprep.mubr.bf16.mxu0 0
    %4351 = vmatmul.mubr.bf16.gmra.mrb[0].mxu0 %v4084
    %v4352 = vpop.f32.mrb[0].mxu0
    %v4353 = vadd.f32 0.0, %v4352
    %v4354 = vpop.f32.mrb[0].mxu0
    %v4355 = vadd.f32 0.0, %v4354
    %v4356 = vpop.f32.mrb[0].mxu0
    %v4357 = vpop.f32.mrb[0].mxu0
    %4358 = vdwg.mxu0
    %v4359 = vadd.f32 %v4079, %v4312
    %v4360 = vadd.f32 %v4080, %v4314
    %v4361 = vadd.f32 %v4081, %v4353
    %v4362 = vadd.f32 %v4082, %v4355
    %v4363 = vld [vmem:[#allocation17] sm:$0xff]
    %v4364 = vxor.u32 %v4359, 2147483648
    %v4365 = vmul.f32 %v4364, 1.442695
    %v4366 = vpow.pop %v4365
    %v4367 = vadd.f32 %v4366, 1.0
    %v4368 = vrcp.pop %v4367
    %v4369 = vmul.f32 1.0, %v4368
    %v4370 = vxor.u32 %v4360, 2147483648
    %v4371 = vmul.f32 %v4370, 1.442695
    %v4372 = vpow.pop %v4371
    %v4373 = vadd.f32 %v4372, 1.0
    %v4374 = vrcp.pop %v4373
    %v4375 = vmul.f32 1.0, %v4374
    %v4376 = vtanh.pop %v4361
    %v4377 = vxor.u32 %v4362, 2147483648
    %v4378 = vmul.f32 %v4377, 1.442695
    %v4379 = vpow.pop %v4378
    %v4380 = vadd.f32 %v4379, 1.0
    %v4381 = vrcp.pop %v4380
    %v4382 = vmul.f32 1.0, %v4381
    %v4383 = vmul.f32 %v4375, %v4363
    %v4384 = vmul.f32 %v4369, %v4376
    %v4385 = vadd.f32 %v4383, %v4384
    %v4386 = vtanh.pop %v4385
    %v4387 = vmul.f32 %v4382, %v4386
    %4388 = vst [vmem:[#allocation16] sm:$0xff] %v4387
    %4389 = vst [vmem:[#allocation17] sm:$0xff] %v4385
    %v4390 = vld [vmem:[%s804] sm:$0xff]
    %v4391 = vpack.c.bf16 %v4387, %v4387
    %v4392 = vld [vmem:[#allocation12] sm:$0xff]
    %v4393 = vld [vmem:[#allocation12 + $0x8] sm:$0xff]
    %v4394 = vld [vmem:[#allocation12 + $0x10] sm:$0xff]
    %v4395 = vld [vmem:[#allocation12 + $0x18] sm:$0xff]
    %v4396 = vld [vmem:[#allocation12 + $0x20] sm:$0xff]
    %v4397 = vld [vmem:[#allocation12 + $0x28] sm:$0xff]
    %v4398 = vld [vmem:[#allocation12 + $0x30] sm:$0xff]
    %v4399 = vld [vmem:[#allocation12 + $0x38] sm:$0xff]
    %v4400 = vld [vmem:[#allocation12 + $0x40] sm:$0xff]
    %v4401 = vld [vmem:[#allocation12 + $0x48] sm:$0xff]
    %v4402 = vld [vmem:[#allocation12 + $0x50] sm:$0xff]
    %v4403 = vld [vmem:[#allocation12 + $0x58] sm:$0xff]
    %v4404 = vld [vmem:[#allocation12 + $0x60] sm:$0xff]
    %v4405 = vld [vmem:[#allocation12 + $0x68] sm:$0xff]
    %v4406 = vld [vmem:[#allocation12 + $0x70] sm:$0xff]
    %v4407 = vld [vmem:[#allocation12 + $0x78] sm:$0xff]
    %v4408 = vld [vmem:[#allocation12 + $0x80] sm:$0xff]
    %v4409 = vld [vmem:[#allocation12 + $0x88] sm:$0xff]
    %v4410 = vld [vmem:[#allocation12 + $0x90] sm:$0xff]
    %v4411 = vld [vmem:[#allocation12 + $0x98] sm:$0xff]
    %v4412 = vld [vmem:[#allocation12 + $0xa0] sm:$0xff]
    %v4413 = vld [vmem:[#allocation12 + $0xa8] sm:$0xff]
    %v4414 = vld [vmem:[#allocation12 + $0xb0] sm:$0xff]
    %v4415 = vld [vmem:[#allocation12 + $0xb8] sm:$0xff]
    %v4416 = vld [vmem:[#allocation12 + $0xc0] sm:$0xff]
    %v4417 = vld [vmem:[#allocation12 + $0xc8] sm:$0xff]
    %v4418 = vld [vmem:[#allocation12 + $0xd0] sm:$0xff]
    %v4419 = vld [vmem:[#allocation12 + $0xd8] sm:$0xff]
    %v4420 = vld [vmem:[#allocation12 + $0xe0] sm:$0xff]
    %v4421 = vld [vmem:[#allocation12 + $0xe8] sm:$0xff]
    %v4422 = vld [vmem:[#allocation12 + $0xf0] sm:$0xff]
    %v4423 = vld [vmem:[#allocation12 + $0xf8] sm:$0xff]
    %v4424 = vpack.c.bf16 %v4390, %v4390
    %v4425 = vld [vmem:[#allocation13] sm:$0xff]
    %v4426 = vld [vmem:[#allocation13 + $0x8] sm:$0xff]
    %v4427 = vld [vmem:[#allocation13 + $0x10] sm:$0xff]
    %v4428 = vld [vmem:[#allocation13 + $0x18] sm:$0xff]
    %v4429 = vld [vmem:[#allocation13 + $0x20] sm:$0xff]
    %v4430 = vld [vmem:[#allocation13 + $0x28] sm:$0xff]
    %v4431 = vld [vmem:[#allocation13 + $0x30] sm:$0xff]
    %v4432 = vld [vmem:[#allocation13 + $0x38] sm:$0xff]
    %v4433 = vld [vmem:[#allocation13 + $0x40] sm:$0xff]
    %v4434 = vld [vmem:[#allocation13 + $0x48] sm:$0xff]
    %v4435 = vld [vmem:[#allocation13 + $0x50] sm:$0xff]
    %v4436 = vld [vmem:[#allocation13 + $0x58] sm:$0xff]
    %v4437 = vld [vmem:[#allocation13 + $0x60] sm:$0xff]
    %v4438 = vld [vmem:[#allocation13 + $0x68] sm:$0xff]
    %v4439 = vld [vmem:[#allocation13 + $0x70] sm:$0xff]
    %v4440 = vld [vmem:[#allocation13 + $0x78] sm:$0xff]
    %v4441 = vld [vmem:[#allocation13 + $0x80] sm:$0xff]
    %v4442 = vld [vmem:[#allocation13 + $0x88] sm:$0xff]
    %v4443 = vld [vmem:[#allocation13 + $0x90] sm:$0xff]
    %v4444 = vld [vmem:[#allocation13 + $0x98] sm:$0xff]
    %v4445 = vld [vmem:[#allocation13 + $0xa0] sm:$0xff]
    %v4446 = vld [vmem:[#allocation13 + $0xa8] sm:$0xff]
    %v4447 = vld [vmem:[#allocation13 + $0xb0] sm:$0xff]
    %v4448 = vld [vmem:[#allocation13 + $0xb8] sm:$0xff]
    %v4449 = vld [vmem:[#allocation13 + $0xc0] sm:$0xff]
    %v4450 = vld [vmem:[#allocation13 + $0xc8] sm:$0xff]
    %v4451 = vld [vmem:[#allocation13 + $0xd0] sm:$0xff]
    %v4452 = vld [vmem:[#allocation13 + $0xd8] sm:$0xff]
    %v4453 = vld [vmem:[#allocation13 + $0xe0] sm:$0xff]
    %v4454 = vld [vmem:[#allocation13 + $0xe8] sm:$0xff]
    %v4455 = vld [vmem:[#allocation13 + $0xf0] sm:$0xff]
    %v4456 = vld [vmem:[#allocation13 + $0xf8] sm:$0xff]
    %v4489 = vunpack.c.l.b16 %v4425
    %v4490 = vunpack.c.h.b16 %v4425
    %v4491 = vunpack.c.l.b16 %v4426
    %v4492 = vunpack.c.h.b16 %v4426
    %v4493 = vunpack.c.l.b16 %v4427
    %v4494 = vunpack.c.h.b16 %v4427
    %v4495 = vunpack.c.l.b16 %v4428
    %v4496 = vunpack.c.h.b16 %v4428
    %v4497 = vunpack.c.l.b16 %v4429
    %v4498 = vunpack.c.h.b16 %v4429
    %v4499 = vunpack.c.l.b16 %v4430
    %v4500 = vunpack.c.h.b16 %v4430
    %v4501 = vunpack.c.l.b16 %v4431
    %v4502 = vunpack.c.h.b16 %v4431
    %v4503 = vunpack.c.l.b16 %v4432
    %v4504 = vunpack.c.h.b16 %v4432
    %v4505 = vunpack.c.l.b16 %v4433
    %v4506 = vunpack.c.h.b16 %v4433
    %v4507 = vunpack.c.l.b16 %v4434
    %v4508 = vunpack.c.h.b16 %v4434
    %v4509 = vunpack.c.l.b16 %v4435
    %v4510 = vunpack.c.h.b16 %v4435
    %v4511 = vunpack.c.l.b16 %v4436
    %v4512 = vunpack.c.h.b16 %v4436
    %v4513 = vunpack.c.l.b16 %v4437
    %v4514 = vunpack.c.h.b16 %v4437
    %v4515 = vunpack.c.l.b16 %v4438
    %v4516 = vunpack.c.h.b16 %v4438
    %v4517 = vunpack.c.l.b16 %v4439
    %v4518 = vunpack.c.h.b16 %v4439
    %v4519 = vunpack.c.l.b16 %v4440
    %v4520 = vunpack.c.h.b16 %v4440
    %v4521 = vunpack.c.l.b16 %v4441
    %v4522 = vunpack.c.h.b16 %v4441
    %v4523 = vunpack.c.l.b16 %v4442
    %v4524 = vunpack.c.h.b16 %v4442
    %v4525 = vunpack.c.l.b16 %v4443
    %v4526 = vunpack.c.h.b16 %v4443
    %v4527 = vunpack.c.l.b16 %v4444
    %v4528 = vunpack.c.h.b16 %v4444
    %v4529 = vunpack.c.l.b16 %v4445
    %v4530 = vunpack.c.h.b16 %v4445
    %v4531 = vunpack.c.l.b16 %v4446
    %v4532 = vunpack.c.h.b16 %v4446
    %v4533 = vunpack.c.l.b16 %v4447
    %v4534 = vunpack.c.h.b16 %v4447
    %v4535 = vunpack.c.l.b16 %v4448
    %v4536 = vunpack.c.h.b16 %v4448
    %v4537 = vunpack.c.l.b16 %v4449
    %v4538 = vunpack.c.h.b16 %v4449
    %v4539 = vunpack.c.l.b16 %v4450
    %v4540 = vunpack.c.h.b16 %v4450
    %v4541 = vunpack.c.l.b16 %v4451
    %v4542 = vunpack.c.h.b16 %v4451
    %v4543 = vunpack.c.l.b16 %v4452
    %v4544 = vunpack.c.h.b16 %v4452
    %v4545 = vunpack.c.l.b16 %v4453
    %v4546 = vunpack.c.h.b16 %v4453
    %v4547 = vunpack.c.l.b16 %v4454
    %v4548 = vunpack.c.h.b16 %v4454
    %v4549 = vunpack.c.l.b16 %v4455
    %v4550 = vunpack.c.h.b16 %v4455
    %v4551 = vunpack.c.l.b16 %v4456
    %v4552 = vunpack.c.h.b16 %v4456
    %v4553 = vpack.c.b16 %v4493, %v4489
    %v4554 = vpack.c.b16 %v4494, %v4490
    %v4555 = vpack.c.b16 %v4495, %v4491
    %v4556 = vpack.c.b16 %v4496, %v4492
    %v4557 = vpack.c.b16 %v4501, %v4497
    %v4558 = vpack.c.b16 %v4502, %v4498
    %v4559 = vpack.c.b16 %v4503, %v4499
    %v4560 = vpack.c.b16 %v4504, %v4500
    %v4561 = vpack.c.b16 %v4509, %v4505
    %v4562 = vpack.c.b16 %v4510, %v4506
    %v4563 = vpack.c.b16 %v4511, %v4507
    %v4564 = vpack.c.b16 %v4512, %v4508
    %v4565 = vpack.c.b16 %v4517, %v4513
    %v4566 = vpack.c.b16 %v4518, %v4514
    %v4567 = vpack.c.b16 %v4519, %v4515
    %v4568 = vpack.c.b16 %v4520, %v4516
    %v4569 = vpack.c.b16 %v4525, %v4521
    %v4570 = vpack.c.b16 %v4526, %v4522
    %v4571 = vpack.c.b16 %v4527, %v4523
    %v4572 = vpack.c.b16 %v4528, %v4524
    %v4573 = vpack.c.b16 %v4533, %v4529
    %v4574 = vpack.c.b16 %v4534, %v4530
    %v4575 = vpack.c.b16 %v4535, %v4531
    %v4576 = vpack.c.b16 %v4536, %v4532
    %v4577 = vpack.c.b16 %v4541, %v4537
    %v4578 = vpack.c.b16 %v4542, %v4538
    %v4579 = vpack.c.b16 %v4543, %v4539
    %v4580 = vpack.c.b16 %v4544, %v4540
    %v4581 = vpack.c.b16 %v4549, %v4545
    %v4582 = vpack.c.b16 %v4550, %v4546
    %v4583 = vpack.c.b16 %v4551, %v4547
    %v4584 = vpack.c.b16 %v4552, %v4548
    %4617 = vmatprep.subr.bf16.mxu0 %v4554
    %4618 = vmatpush1.bf16.msra.mxu0 %v4553
    %4619 = vmatprep.subr.bf16.mxu0 %v4558
    %4620 = vmatpush1.bf16.msra.mxu0 %v4557
    %4621 = vmatprep.subr.bf16.mxu0 %v4562
    %4622 = vmatpush1.bf16.msra.mxu0 %v4561
    %4623 = vmatprep.subr.bf16.mxu0 %v4566
    %4624 = vmatpush1.bf16.msra.mxu0 %v4565
    %4625 = vmatprep.subr.bf16.mxu0 %v4570
    %4626 = vmatpush1.bf16.msra.mxu0 %v4569
    %4627 = vmatprep.subr.bf16.mxu0 %v4574
    %4628 = vmatpush1.bf16.msra.mxu0 %v4573
    %4629 = vmatprep.subr.bf16.mxu0 %v4578
    %4630 = vmatpush1.bf16.msra.mxu0 %v4577
    %4631 = vmatprep.subr.bf16.mxu0 %v4582
    %4632 = vmatpush1.bf16.msra.mxu0 %v4581
    %4633 = vmatprep.subr.bf16.mxu0 0
    %4634 = vmatpush1.bf16.msra.mxu0 0
    %4635 = vmatprep.subr.bf16.mxu0 0
    %4636 = vmatpush1.bf16.msra.mxu0 0
    %4637 = vmatprep.subr.bf16.mxu0 0
    %4638 = vmatpush1.bf16.msra.mxu0 0
    %4639 = vmatprep.subr.bf16.mxu0 0
    %4640 = vmatpush1.bf16.msra.mxu0 0
    %4641 = vmatprep.subr.bf16.mxu0 0
    %4642 = vmatpush1.bf16.msra.mxu0 0
    %4643 = vmatprep.subr.bf16.mxu0 0
    %4644 = vmatpush1.bf16.msra.mxu0 0
    %4645 = vmatprep.subr.bf16.mxu0 0
    %4646 = vmatpush1.bf16.msra.mxu0 0
    %4647 = vmatprep.subr.bf16.mxu0 0
    %4648 = vmatpush1.bf16.msra.mxu0 0
    %4649 = vmatprep.mubr.bf16.mxu0 0
    %4650 = vmatmul.mubr.bf16.gmra.mrb[0].mxu0 %v4424
    %v4651 = vpop.f32.mrb[0].mxu0
    %v4652 = vadd.f32 0.0, %v4651
    %v4653 = vpop.f32.mrb[0].mxu0
    %v4654 = vadd.f32 0.0, %v4653
    %v4655 = vpop.f32.mrb[0].mxu0
    %v4656 = vpop.f32.mrb[0].mxu0
    %4657 = vdwg.mxu0
    %4658 = vmatprep.subr.bf16.mxu0 %v4556
    %4659 = vmatpush1.bf16.msra.mxu0 %v4555
    %4660 = vmatprep.subr.bf16.mxu0 %v4560
    %4661 = vmatpush1.bf16.msra.mxu0 %v4559
    %4662 = vmatprep.subr.bf16.mxu0 %v4564
    %4663 = vmatpush1.bf16.msra.mxu0 %v4563
    %4664 = vmatprep.subr.bf16.mxu0 %v4568
    %4665 = vmatpush1.bf16.msra.mxu0 %v4567
    %4666 = vmatprep.subr.bf16.mxu0 %v4572
    %4667 = vmatpush1.bf16.msra.mxu0 %v4571
    %4668 = vmatprep.subr.bf16.mxu0 %v4576
    %4669 = vmatpush1.bf16.msra.mxu0 %v4575
    %4670 = vmatprep.subr.bf16.mxu0 %v4580
    %4671 = vmatpush1.bf16.msra.mxu0 %v4579
    %4672 = vmatprep.subr.bf16.mxu0 %v4584
    %4673 = vmatpush1.bf16.msra.mxu0 %v4583
    %4674 = vmatprep.subr.bf16.mxu0 0
    %4675 = vmatpush1.bf16.msra.mxu0 0
    %4676 = vmatprep.subr.bf16.mxu0 0
    %4677 = vmatpush1.bf16.msra.mxu0 0
    %4678 = vmatprep.subr.bf16.mxu0 0
    %4679 = vmatpush1.bf16.msra.mxu0 0
    %4680 = vmatprep.subr.bf16.mxu0 0
    %4681 = vmatpush1.bf16.msra.mxu0 0
    %4682 = vmatprep.subr.bf16.mxu0 0
    %4683 = vmatpush1.bf16.msra.mxu0 0
    %4684 = vmatprep.subr.bf16.mxu0 0
    %4685 = vmatpush1.bf16.msra.mxu0 0
    %4686 = vmatprep.subr.bf16.mxu0 0
    %4687 = vmatpush1.bf16.msra.mxu0 0
    %4688 = vmatprep.subr.bf16.mxu0 0
    %4689 = vmatpush1.bf16.msra.mxu0 0
    %4690 = vmatprep.mubr.bf16.mxu0 0
    %4691 = vmatmul.mubr.bf16.gmra.mrb[0].mxu0 %v4424
    %v4692 = vpop.f32.mrb[0].mxu0
    %v4693 = vadd.f32 0.0, %v4692
    %v4694 = vpop.f32.mrb[0].mxu0
    %v4695 = vadd.f32 0.0, %v4694
    %v4696 = vpop.f32.mrb[0].mxu0
    %v4697 = vpop.f32.mrb[0].mxu0
    %4698 = vdwg.mxu0
    %v4731 = vunpack.c.l.b16 %v4392
    %v4732 = vunpack.c.h.b16 %v4392
    %v4733 = vunpack.c.l.b16 %v4393
    %v4734 = vunpack.c.h.b16 %v4393
    %v4735 = vunpack.c.l.b16 %v4394
    %v4736 = vunpack.c.h.b16 %v4394
    %v4737 = vunpack.c.l.b16 %v4395
    %v4738 = vunpack.c.h.b16 %v4395
    %v4739 = vunpack.c.l.b16 %v4396
    %v4740 = vunpack.c.h.b16 %v4396
    %v4741 = vunpack.c.l.b16 %v4397
    %v4742 = vunpack.c.h.b16 %v4397
    %v4743 = vunpack.c.l.b16 %v4398
    %v4744 = vunpack.c.h.b16 %v4398
    %v4745 = vunpack.c.l.b16 %v4399
    %v4746 = vunpack.c.h.b16 %v4399
    %v4747 = vunpack.c.l.b16 %v4400
    %v4748 = vunpack.c.h.b16 %v4400
    %v4749 = vunpack.c.l.b16 %v4401
    %v4750 = vunpack.c.h.b16 %v4401
    %v4751 = vunpack.c.l.b16 %v4402
    %v4752 = vunpack.c.h.b16 %v4402
    %v4753 = vunpack.c.l.b16 %v4403
    %v4754 = vunpack.c.h.b16 %v4403
    %v4755 = vunpack.c.l.b16 %v4404
    %v4756 = vunpack.c.h.b16 %v4404
    %v4757 = vunpack.c.l.b16 %v4405
    %v4758 = vunpack.c.h.b16 %v4405
    %v4759 = vunpack.c.l.b16 %v4406
    %v4760 = vunpack.c.h.b16 %v4406
    %v4761 = vunpack.c.l.b16 %v4407
    %v4762 = vunpack.c.h.b16 %v4407
    %v4763 = vunpack.c.l.b16 %v4408
    %v4764 = vunpack.c.h.b16 %v4408
    %v4765 = vunpack.c.l.b16 %v4409
    %v4766 = vunpack.c.h.b16 %v4409
    %v4767 = vunpack.c.l.b16 %v4410
    %v4768 = vunpack.c.h.b16 %v4410
    %v4769 = vunpack.c.l.b16 %v4411
    %v4770 = vunpack.c.h.b16 %v4411
    %v4771 = vunpack.c.l.b16 %v4412
    %v4772 = vunpack.c.h.b16 %v4412
    %v4773 = vunpack.c.l.b16 %v4413
    %v4774 = vunpack.c.h.b16 %v4413
    %v4775 = vunpack.c.l.b16 %v4414
    %v4776 = vunpack.c.h.b16 %v4414
    %v4777 = vunpack.c.l.b16 %v4415
    %v4778 = vunpack.c.h.b16 %v4415
    %v4779 = vunpack.c.l.b16 %v4416
    %v4780 = vunpack.c.h.b16 %v4416
    %v4781 = vunpack.c.l.b16 %v4417
    %v4782 = vunpack.c.h.b16 %v4417
    %v4783 = vunpack.c.l.b16 %v4418
    %v4784 = vunpack.c.h.b16 %v4418
    %v4785 = vunpack.c.l.b16 %v4419
    %v4786 = vunpack.c.h.b16 %v4419
    %v4787 = vunpack.c.l.b16 %v4420
    %v4788 = vunpack.c.h.b16 %v4420
    %v4789 = vunpack.c.l.b16 %v4421
    %v4790 = vunpack.c.h.b16 %v4421
    %v4791 = vunpack.c.l.b16 %v4422
    %v4792 = vunpack.c.h.b16 %v4422
    %v4793 = vunpack.c.l.b16 %v4423
    %v4794 = vunpack.c.h.b16 %v4423
    %v4795 = vpack.c.b16 %v4735, %v4731
    %v4796 = vpack.c.b16 %v4736, %v4732
    %v4797 = vpack.c.b16 %v4737, %v4733
    %v4798 = vpack.c.b16 %v4738, %v4734
    %v4799 = vpack.c.b16 %v4743, %v4739
    %v4800 = vpack.c.b16 %v4744, %v4740
    %v4801 = vpack.c.b16 %v4745, %v4741
    %v4802 = vpack.c.b16 %v4746, %v4742
    %v4803 = vpack.c.b16 %v4751, %v4747
    %v4804 = vpack.c.b16 %v4752, %v4748
    %v4805 = vpack.c.b16 %v4753, %v4749
    %v4806 = vpack.c.b16 %v4754, %v4750
    %v4807 = vpack.c.b16 %v4759, %v4755
    %v4808 = vpack.c.b16 %v4760, %v4756
    %v4809 = vpack.c.b16 %v4761, %v4757
    %v4810 = vpack.c.b16 %v4762, %v4758
    %v4811 = vpack.c.b16 %v4767, %v4763
    %v4812 = vpack.c.b16 %v4768, %v4764
    %v4813 = vpack.c.b16 %v4769, %v4765
    %v4814 = vpack.c.b16 %v4770, %v4766
    %v4815 = vpack.c.b16 %v4775, %v4771
    %v4816 = vpack.c.b16 %v4776, %v4772
    %v4817 = vpack.c.b16 %v4777, %v4773
    %v4818 = vpack.c.b16 %v4778, %v4774
    %v4819 = vpack.c.b16 %v4783, %v4779
    %v4820 = vpack.c.b16 %v4784, %v4780
    %v4821 = vpack.c.b16 %v4785, %v4781
    %v4822 = vpack.c.b16 %v4786, %v4782
    %v4823 = vpack.c.b16 %v4791, %v4787
    %v4824 = vpack.c.b16 %v4792, %v4788
    %v4825 = vpack.c.b16 %v4793, %v4789
    %v4826 = vpack.c.b16 %v4794, %v4790
    %4859 = vmatprep.subr.bf16.mxu0 %v4796
    %4860 = vmatpush1.bf16.msra.mxu0 %v4795
    %4861 = vmatprep.subr.bf16.mxu0 %v4800
    %4862 = vmatpush1.bf16.msra.mxu0 %v4799
    %4863 = vmatprep.subr.bf16.mxu0 %v4804
    %4864 = vmatpush1.bf16.msra.mxu0 %v4803
    %4865 = vmatprep.subr.bf16.mxu0 %v4808
    %4866 = vmatpush1.bf16.msra.mxu0 %v4807
    %4867 = vmatprep.subr.bf16.mxu0 %v4812
    %4868 = vmatpush1.bf16.msra.mxu0 %v4811
    %4869 = vmatprep.subr.bf16.mxu0 %v4816
    %4870 = vmatpush1.bf16.msra.mxu0 %v4815
    %4871 = vmatprep.subr.bf16.mxu0 %v4820
    %4872 = vmatpush1.bf16.msra.mxu0 %v4819
    %4873 = vmatprep.subr.bf16.mxu0 %v4824
    %4874 = vmatpush1.bf16.msra.mxu0 %v4823
    %4875 = vmatprep.subr.bf16.mxu0 0
    %4876 = vmatpush1.bf16.msra.mxu0 0
    %4877 = vmatprep.subr.bf16.mxu0 0
    %4878 = vmatpush1.bf16.msra.mxu0 0
    %4879 = vmatprep.subr.bf16.mxu0 0
    %4880 = vmatpush1.bf16.msra.mxu0 0
    %4881 = vmatprep.subr.bf16.mxu0 0
    %4882 = vmatpush1.bf16.msra.mxu0 0
    %4883 = vmatprep.subr.bf16.mxu0 0
    %4884 = vmatpush1.bf16.msra.mxu0 0
    %4885 = vmatprep.subr.bf16.mxu0 0
    %4886 = vmatpush1.bf16.msra.mxu0 0
    %4887 = vmatprep.subr.bf16.mxu0 0
    %4888 = vmatpush1.bf16.msra.mxu0 0
    %4889 = vmatprep.subr.bf16.mxu0 0
    %4890 = vmatpush1.bf16.msra.mxu0 0
    %4891 = vmatprep.mubr.bf16.mxu0 0
    %4892 = vmatmul.mubr.bf16.gmra.mrb[0].mxu0 %v4391
    %v4893 = vpop.f32.mrb[0].mxu0
    %v4894 = vadd.f32 %v4652, %v4893
    %v4895 = vpop.f32.mrb[0].mxu0
    %v4896 = vadd.f32 %v4654, %v4895
    %v4897 = vpop.f32.mrb[0].mxu0
    %v4898 = vpop.f32.mrb[0].mxu0
    %4899 = vdwg.mxu0
    %4900 = vmatprep.subr.bf16.mxu0 %v4798
    %4901 = vmatpush1.bf16.msra.mxu0 %v4797
    %4902 = vmatprep.subr.bf16.mxu0 %v4802
    %4903 = vmatpush1.bf16.msra.mxu0 %v4801
    %4904 = vmatprep.subr.bf16.mxu0 %v4806
    %4905 = vmatpush1.bf16.msra.mxu0 %v4805
    %4906 = vmatprep.subr.bf16.mxu0 %v4810
    %4907 = vmatpush1.bf16.msra.mxu0 %v4809
    %4908 = vmatprep.subr.bf16.mxu0 %v4814
    %4909 = vmatpush1.bf16.msra.mxu0 %v4813
    %4910 = vmatprep.subr.bf16.mxu0 %v4818
    %4911 = vmatpush1.bf16.msra.mxu0 %v4817
    %4912 = vmatprep.subr.bf16.mxu0 %v4822
    %4913 = vmatpush1.bf16.msra.mxu0 %v4821
    %4914 = vmatprep.subr.bf16.mxu0 %v4826
    %4915 = vmatpush1.bf16.msra.mxu0 %v4825
    %4916 = vmatprep.subr.bf16.mxu0 0
    %4917 = vmatpush1.bf16.msra.mxu0 0
    %4918 = vmatprep.subr.bf16.mxu0 0
    %4919 = vmatpush1.bf16.msra.mxu0 0
    %4920 = vmatprep.subr.bf16.mxu0 0
    %4921 = vmatpush1.bf16.msra.mxu0 0
    %4922 = vmatprep.subr.bf16.mxu0 0
    %4923 = vmatpush1.bf16.msra.mxu0 0
    %4924 = vmatprep.subr.bf16.mxu0 0
    %4925 = vmatpush1.bf16.msra.mxu0 0
    %4926 = vmatprep.subr.bf16.mxu0 0
    %4927 = vmatpush1.bf16.msra.mxu0 0
    %4928 = vmatprep.subr.bf16.mxu0 0
    %4929 = vmatpush1.bf16.msra.mxu0 0
    %4930 = vmatprep.subr.bf16.mxu0 0
    %4931 = vmatpush1.bf16.msra.mxu0 0
    %4932 = vmatprep.mubr.bf16.mxu0 0
    %4933 = vmatmul.mubr.bf16.gmra.mrb[0].mxu0 %v4391
    %v4934 = vpop.f32.mrb[0].mxu0
    %v4935 = vadd.f32 %v4693, %v4934
    %v4936 = vpop.f32.mrb[0].mxu0
    %v4937 = vadd.f32 %v4695, %v4936
    %v4938 = vpop.f32.mrb[0].mxu0
    %v4939 = vpop.f32.mrb[0].mxu0
    %4940 = vdwg.mxu0
    %v4941 = vadd.f32 %v4894, %v150
    %v4942 = vadd.f32 %v4896, %v154
    %v4943 = vadd.f32 %v4935, %v158
    %v4944 = vadd.f32 %v4937, %v162
    %v4945 = vld [vmem:[%s1360] sm:$0xff]
    %v4946 = vxor.u32 %v4941, 2147483648
    %v4947 = vmul.f32 %v4946, 1.442695
    %v4948 = vpow.pop %v4947
    %v4949 = vadd.f32 %v4948, 1.0
    %v4950 = vrcp.pop %v4949
    %v4951 = vmul.f32 1.0, %v4950
    %v4952 = vxor.u32 %v4942, 2147483648
    %v4953 = vmul.f32 %v4952, 1.442695
    %v4954 = vpow.pop %v4953
    %v4955 = vadd.f32 %v4954, 1.0
    %v4956 = vrcp.pop %v4955
    %v4957 = vmul.f32 1.0, %v4956
    %v4958 = vtanh.pop %v4943
    %v4959 = vxor.u32 %v4944, 2147483648
    %v4960 = vmul.f32 %v4959, 1.442695
    %v4961 = vpow.pop %v4960
    %v4962 = vadd.f32 %v4961, 1.0
    %v4963 = vrcp.pop %v4962
    %v4964 = vmul.f32 1.0, %v4963
    %v4965 = vmul.f32 %v4957, %v4945
    %v4966 = vmul.f32 %v4951, %v4958
    %v4967 = vadd.f32 %v4965, %v4966
    %v4968 = vtanh.pop %v4967
    %v4969 = vmul.f32 %v4964, %v4968
    %4970 = vst [vmem:[%s804] sm:$0xff] %v4969
    %4971 = vst [vmem:[%s1360] sm:$0xff] %v4967
    %s4972 = smul.u32 5, 4
    %s4973 = smul.addr %s4972, 8
    %s4974 = scalar_lea.vmem [#allocation2], %s4973
    %v4975 = vld [vmem:[%s4974] sm:$0xff]
    %v4976 = vld [vmem:[%s4974 + $0x8] sm:$0xff]
    %v4977 = vld [vmem:[%s4974 + $0x10] sm:$0xff]
    %v4978 = vld [vmem:[%s4974 + $0x18] sm:$0xff]
    %v4979 = vld [vmem:[#allocation16] sm:$0xff]
    %v4980 = vpack.c.bf16 %v4979, %v4979
    %v4981 = vld [vmem:[#allocation9] sm:$0xff]
    %v4982 = vld [vmem:[#allocation9 + $0x8] sm:$0xff]
    %v4983 = vld [vmem:[#allocation9 + $0x10] sm:$0xff]
    %v4984 = vld [vmem:[#allocation9 + $0x18] sm:$0xff]
    %v4985 = vld [vmem:[#allocation9 + $0x20] sm:$0xff]
    %v4986 = vld [vmem:[#allocation9 + $0x28] sm:$0xff]
    %v4987 = vld [vmem:[#allocation9 + $0x30] sm:$0xff]
    %v4988 = vld [vmem:[#allocation9 + $0x38] sm:$0xff]
    %v4989 = vld [vmem:[#allocation9 + $0x40] sm:$0xff]
    %v4990 = vld [vmem:[#allocation9 + $0x48] sm:$0xff]
    %v4991 = vld [vmem:[#allocation9 + $0x50] sm:$0xff]
    %v4992 = vld [vmem:[#allocation9 + $0x58] sm:$0xff]
    %v4993 = vld [vmem:[#allocation9 + $0x60] sm:$0xff]
    %v4994 = vld [vmem:[#allocation9 + $0x68] sm:$0xff]
    %v4995 = vld [vmem:[#allocation9 + $0x70] sm:$0xff]
    %v4996 = vld [vmem:[#allocation9 + $0x78] sm:$0xff]
    %v4997 = vld [vmem:[#allocation9 + $0x80] sm:$0xff]
    %v4998 = vld [vmem:[#allocation9 + $0x88] sm:$0xff]
    %v4999 = vld [vmem:[#allocation9 + $0x90] sm:$0xff]
    %v5000 = vld [vmem:[#allocation9 + $0x98] sm:$0xff]
    %v5001 = vld [vmem:[#allocation9 + $0xa0] sm:$0xff]
    %v5002 = vld [vmem:[#allocation9 + $0xa8] sm:$0xff]
    %v5003 = vld [vmem:[#allocation9 + $0xb0] sm:$0xff]
    %v5004 = vld [vmem:[#allocation9 + $0xb8] sm:$0xff]
    %v5005 = vld [vmem:[#allocation9 + $0xc0] sm:$0xff]
    %v5006 = vld [vmem:[#allocation9 + $0xc8] sm:$0xff]
    %v5007 = vld [vmem:[#allocation9 + $0xd0] sm:$0xff]
    %v5008 = vld [vmem:[#allocation9 + $0xd8] sm:$0xff]
    %v5009 = vld [vmem:[#allocation9 + $0xe0] sm:$0xff]
    %v5010 = vld [vmem:[#allocation9 + $0xe8] sm:$0xff]
    %v5011 = vld [vmem:[#allocation9 + $0xf0] sm:$0xff]
    %v5012 = vld [vmem:[#allocation9 + $0xf8] sm:$0xff]
    %v5045 = vunpack.c.l.b16 %v4981
    %v5046 = vunpack.c.h.b16 %v4981
    %v5047 = vunpack.c.l.b16 %v4982
    %v5048 = vunpack.c.h.b16 %v4982
    %v5049 = vunpack.c.l.b16 %v4983
    %v5050 = vunpack.c.h.b16 %v4983
    %v5051 = vunpack.c.l.b16 %v4984
    %v5052 = vunpack.c.h.b16 %v4984
    %v5053 = vunpack.c.l.b16 %v4985
    %v5054 = vunpack.c.h.b16 %v4985
    %v5055 = vunpack.c.l.b16 %v4986
    %v5056 = vunpack.c.h.b16 %v4986
    %v5057 = vunpack.c.l.b16 %v4987
    %v5058 = vunpack.c.h.b16 %v4987
    %v5059 = vunpack.c.l.b16 %v4988
    %v5060 = vunpack.c.h.b16 %v4988
    %v5061 = vunpack.c.l.b16 %v4989
    %v5062 = vunpack.c.h.b16 %v4989
    %v5063 = vunpack.c.l.b16 %v4990
    %v5064 = vunpack.c.h.b16 %v4990
    %v5065 = vunpack.c.l.b16 %v4991
    %v5066 = vunpack.c.h.b16 %v4991
    %v5067 = vunpack.c.l.b16 %v4992
    %v5068 = vunpack.c.h.b16 %v4992
    %v5069 = vunpack.c.l.b16 %v4993
    %v5070 = vunpack.c.h.b16 %v4993
    %v5071 = vunpack.c.l.b16 %v4994
    %v5072 = vunpack.c.h.b16 %v4994
    %v5073 = vunpack.c.l.b16 %v4995
    %v5074 = vunpack.c.h.b16 %v4995
    %v5075 = vunpack.c.l.b16 %v4996
    %v5076 = vunpack.c.h.b16 %v4996
    %v5077 = vunpack.c.l.b16 %v4997
    %v5078 = vunpack.c.h.b16 %v4997
    %v5079 = vunpack.c.l.b16 %v4998
    %v5080 = vunpack.c.h.b16 %v4998
    %v5081 = vunpack.c.l.b16 %v4999
    %v5082 = vunpack.c.h.b16 %v4999
    %v5083 = vunpack.c.l.b16 %v5000
    %v5084 = vunpack.c.h.b16 %v5000
    %v5085 = vunpack.c.l.b16 %v5001
    %v5086 = vunpack.c.h.b16 %v5001
    %v5087 = vunpack.c.l.b16 %v5002
    %v5088 = vunpack.c.h.b16 %v5002
    %v5089 = vunpack.c.l.b16 %v5003
    %v5090 = vunpack.c.h.b16 %v5003
    %v5091 = vunpack.c.l.b16 %v5004
    %v5092 = vunpack.c.h.b16 %v5004
    %v5093 = vunpack.c.l.b16 %v5005
    %v5094 = vunpack.c.h.b16 %v5005
    %v5095 = vunpack.c.l.b16 %v5006
    %v5096 = vunpack.c.h.b16 %v5006
    %v5097 = vunpack.c.l.b16 %v5007
    %v5098 = vunpack.c.h.b16 %v5007
    %v5099 = vunpack.c.l.b16 %v5008
    %v5100 = vunpack.c.h.b16 %v5008
    %v5101 = vunpack.c.l.b16 %v5009
    %v5102 = vunpack.c.h.b16 %v5009
    %v5103 = vunpack.c.l.b16 %v5010
    %v5104 = vunpack.c.h.b16 %v5010
    %v5105 = vunpack.c.l.b16 %v5011
    %v5106 = vunpack.c.h.b16 %v5011
    %v5107 = vunpack.c.l.b16 %v5012
    %v5108 = vunpack.c.h.b16 %v5012
    %v5109 = vpack.c.b16 %v5049, %v5045
    %v5110 = vpack.c.b16 %v5050, %v5046
    %v5111 = vpack.c.b16 %v5051, %v5047
    %v5112 = vpack.c.b16 %v5052, %v5048
    %v5113 = vpack.c.b16 %v5057, %v5053
    %v5114 = vpack.c.b16 %v5058, %v5054
    %v5115 = vpack.c.b16 %v5059, %v5055
    %v5116 = vpack.c.b16 %v5060, %v5056
    %v5117 = vpack.c.b16 %v5065, %v5061
    %v5118 = vpack.c.b16 %v5066, %v5062
    %v5119 = vpack.c.b16 %v5067, %v5063
    %v5120 = vpack.c.b16 %v5068, %v5064
    %v5121 = vpack.c.b16 %v5073, %v5069
    %v5122 = vpack.c.b16 %v5074, %v5070
    %v5123 = vpack.c.b16 %v5075, %v5071
    %v5124 = vpack.c.b16 %v5076, %v5072
    %v5125 = vpack.c.b16 %v5081, %v5077
    %v5126 = vpack.c.b16 %v5082, %v5078
    %v5127 = vpack.c.b16 %v5083, %v5079
    %v5128 = vpack.c.b16 %v5084, %v5080
    %v5129 = vpack.c.b16 %v5089, %v5085
    %v5130 = vpack.c.b16 %v5090, %v5086
    %v5131 = vpack.c.b16 %v5091, %v5087
    %v5132 = vpack.c.b16 %v5092, %v5088
    %v5133 = vpack.c.b16 %v5097, %v5093
    %v5134 = vpack.c.b16 %v5098, %v5094
    %v5135 = vpack.c.b16 %v5099, %v5095
    %v5136 = vpack.c.b16 %v5100, %v5096
    %v5137 = vpack.c.b16 %v5105, %v5101
    %v5138 = vpack.c.b16 %v5106, %v5102
    %v5139 = vpack.c.b16 %v5107, %v5103
    %v5140 = vpack.c.b16 %v5108, %v5104
    %5173 = vmatprep.subr.bf16.mxu0 %v5110
    %5174 = vmatpush1.bf16.msra.mxu0 %v5109
    %5175 = vmatprep.subr.bf16.mxu0 %v5114
    %5176 = vmatpush1.bf16.msra.mxu0 %v5113
    %5177 = vmatprep.subr.bf16.mxu0 %v5118
    %5178 = vmatpush1.bf16.msra.mxu0 %v5117
    %5179 = vmatprep.subr.bf16.mxu0 %v5122
    %5180 = vmatpush1.bf16.msra.mxu0 %v5121
    %5181 = vmatprep.subr.bf16.mxu0 %v5126
    %5182 = vmatpush1.bf16.msra.mxu0 %v5125
    %5183 = vmatprep.subr.bf16.mxu0 %v5130
    %5184 = vmatpush1.bf16.msra.mxu0 %v5129
    %5185 = vmatprep.subr.bf16.mxu0 %v5134
    %5186 = vmatpush1.bf16.msra.mxu0 %v5133
    %5187 = vmatprep.subr.bf16.mxu0 %v5138
    %5188 = vmatpush1.bf16.msra.mxu0 %v5137
    %5189 = vmatprep.subr.bf16.mxu0 0
    %5190 = vmatpush1.bf16.msra.mxu0 0
    %5191 = vmatprep.subr.bf16.mxu0 0
    %5192 = vmatpush1.bf16.msra.mxu0 0
    %5193 = vmatprep.subr.bf16.mxu0 0
    %5194 = vmatpush1.bf16.msra.mxu0 0
    %5195 = vmatprep.subr.bf16.mxu0 0
    %5196 = vmatpush1.bf16.msra.mxu0 0
    %5197 = vmatprep.subr.bf16.mxu0 0
    %5198 = vmatpush1.bf16.msra.mxu0 0
    %5199 = vmatprep.subr.bf16.mxu0 0
    %5200 = vmatpush1.bf16.msra.mxu0 0
    %5201 = vmatprep.subr.bf16.mxu0 0
    %5202 = vmatpush1.bf16.msra.mxu0 0
    %5203 = vmatprep.subr.bf16.mxu0 0
    %5204 = vmatpush1.bf16.msra.mxu0 0
    %5205 = vmatprep.mubr.bf16.mxu0 0
    %5206 = vmatmul.mubr.bf16.gmra.mrb[0].mxu0 %v4980
    %v5207 = vpop.f32.mrb[0].mxu0
    %v5208 = vadd.f32 0.0, %v5207
    %v5209 = vpop.f32.mrb[0].mxu0
    %v5210 = vadd.f32 0.0, %v5209
    %v5211 = vpop.f32.mrb[0].mxu0
    %v5212 = vpop.f32.mrb[0].mxu0
    %5213 = vdwg.mxu0
    %5214 = vmatprep.subr.bf16.mxu0 %v5112
    %5215 = vmatpush1.bf16.msra.mxu0 %v5111
    %5216 = vmatprep.subr.bf16.mxu0 %v5116
    %5217 = vmatpush1.bf16.msra.mxu0 %v5115
    %5218 = vmatprep.subr.bf16.mxu0 %v5120
    %5219 = vmatpush1.bf16.msra.mxu0 %v5119
    %5220 = vmatprep.subr.bf16.mxu0 %v5124
    %5221 = vmatpush1.bf16.msra.mxu0 %v5123
    %5222 = vmatprep.subr.bf16.mxu0 %v5128
    %5223 = vmatpush1.bf16.msra.mxu0 %v5127
    %5224 = vmatprep.subr.bf16.mxu0 %v5132
    %5225 = vmatpush1.bf16.msra.mxu0 %v5131
    %5226 = vmatprep.subr.bf16.mxu0 %v5136
    %5227 = vmatpush1.bf16.msra.mxu0 %v5135
    %5228 = vmatprep.subr.bf16.mxu0 %v5140
    %5229 = vmatpush1.bf16.msra.mxu0 %v5139
    %5230 = vmatprep.subr.bf16.mxu0 0
    %5231 = vmatpush1.bf16.msra.mxu0 0
    %5232 = vmatprep.subr.bf16.mxu0 0
    %5233 = vmatpush1.bf16.msra.mxu0 0
    %5234 = vmatprep.subr.bf16.mxu0 0
    %5235 = vmatpush1.bf16.msra.mxu0 0
    %5236 = vmatprep.subr.bf16.mxu0 0
    %5237 = vmatpush1.bf16.msra.mxu0 0
    %5238 = vmatprep.subr.bf16.mxu0 0
    %5239 = vmatpush1.bf16.msra.mxu0 0
    %5240 = vmatprep.subr.bf16.mxu0 0
    %5241 = vmatpush1.bf16.msra.mxu0 0
    %5242 = vmatprep.subr.bf16.mxu0 0
    %5243 = vmatpush1.bf16.msra.mxu0 0
    %5244 = vmatprep.subr.bf16.mxu0 0
    %5245 = vmatpush1.bf16.msra.mxu0 0
    %5246 = vmatprep.mubr.bf16.mxu0 0
    %5247 = vmatmul.mubr.bf16.gmra.mrb[0].mxu0 %v4980
    %v5248 = vpop.f32.mrb[0].mxu0
    %v5249 = vadd.f32 0.0, %v5248
    %v5250 = vpop.f32.mrb[0].mxu0
    %v5251 = vadd.f32 0.0, %v5250
    %v5252 = vpop.f32.mrb[0].mxu0
    %v5253 = vpop.f32.mrb[0].mxu0
    %5254 = vdwg.mxu0
    %v5255 = vadd.f32 %v4975, %v5208
    %v5256 = vadd.f32 %v4976, %v5210
    %v5257 = vadd.f32 %v4977, %v5249
    %v5258 = vadd.f32 %v4978, %v5251
    %v5259 = vld [vmem:[#allocation17] sm:$0xff]
    %v5260 = vxor.u32 %v5255, 2147483648
    %v5261 = vmul.f32 %v5260, 1.442695
    %v5262 = vpow.pop %v5261
    %v5263 = vadd.f32 %v5262, 1.0
    %v5264 = vrcp.pop %v5263
    %v5265 = vmul.f32 1.0, %v5264
    %v5266 = vxor.u32 %v5256, 2147483648
    %v5267 = vmul.f32 %v5266, 1.442695
    %v5268 = vpow.pop %v5267
    %v5269 = vadd.f32 %v5268, 1.0
    %v5270 = vrcp.pop %v5269
    %v5271 = vmul.f32 1.0, %v5270
    %v5272 = vtanh.pop %v5257
    %v5273 = vxor.u32 %v5258, 2147483648
    %v5274 = vmul.f32 %v5273, 1.442695
    %v5275 = vpow.pop %v5274
    %v5276 = vadd.f32 %v5275, 1.0
    %v5277 = vrcp.pop %v5276
    %v5278 = vmul.f32 1.0, %v5277
    %v5279 = vmul.f32 %v5271, %v5259
    %v5280 = vmul.f32 %v5265, %v5272
    %v5281 = vadd.f32 %v5279, %v5280
    %v5282 = vtanh.pop %v5281
    %v5283 = vmul.f32 %v5278, %v5282
    %5284 = vst [vmem:[#allocation16] sm:$0xff] %v5283
    %5285 = vst [vmem:[#allocation17] sm:$0xff] %v5281
    %v5286 = vld [vmem:[%s804] sm:$0xff]
    %v5287 = vpack.c.bf16 %v5283, %v5283
    %v5288 = vld [vmem:[#allocation12] sm:$0xff]
    %v5289 = vld [vmem:[#allocation12 + $0x8] sm:$0xff]
    %v5290 = vld [vmem:[#allocation12 + $0x10] sm:$0xff]
    %v5291 = vld [vmem:[#allocation12 + $0x18] sm:$0xff]
    %v5292 = vld [vmem:[#allocation12 + $0x20] sm:$0xff]
    %v5293 = vld [vmem:[#allocation12 + $0x28] sm:$0xff]
    %v5294 = vld [vmem:[#allocation12 + $0x30] sm:$0xff]
    %v5295 = vld [vmem:[#allocation12 + $0x38] sm:$0xff]
    %v5296 = vld [vmem:[#allocation12 + $0x40] sm:$0xff]
    %v5297 = vld [vmem:[#allocation12 + $0x48] sm:$0xff]
    %v5298 = vld [vmem:[#allocation12 + $0x50] sm:$0xff]
    %v5299 = vld [vmem:[#allocation12 + $0x58] sm:$0xff]
    %v5300 = vld [vmem:[#allocation12 + $0x60] sm:$0xff]
    %v5301 = vld [vmem:[#allocation12 + $0x68] sm:$0xff]
    %v5302 = vld [vmem:[#allocation12 + $0x70] sm:$0xff]
    %v5303 = vld [vmem:[#allocation12 + $0x78] sm:$0xff]
    %v5304 = vld [vmem:[#allocation12 + $0x80] sm:$0xff]
    %v5305 = vld [vmem:[#allocation12 + $0x88] sm:$0xff]
    %v5306 = vld [vmem:[#allocation12 + $0x90] sm:$0xff]
    %v5307 = vld [vmem:[#allocation12 + $0x98] sm:$0xff]
    %v5308 = vld [vmem:[#allocation12 + $0xa0] sm:$0xff]
    %v5309 = vld [vmem:[#allocation12 + $0xa8] sm:$0xff]
    %v5310 = vld [vmem:[#allocation12 + $0xb0] sm:$0xff]
    %v5311 = vld [vmem:[#allocation12 + $0xb8] sm:$0xff]
    %v5312 = vld [vmem:[#allocation12 + $0xc0] sm:$0xff]
    %v5313 = vld [vmem:[#allocation12 + $0xc8] sm:$0xff]
    %v5314 = vld [vmem:[#allocation12 + $0xd0] sm:$0xff]
    %v5315 = vld [vmem:[#allocation12 + $0xd8] sm:$0xff]
    %v5316 = vld [vmem:[#allocation12 + $0xe0] sm:$0xff]
    %v5317 = vld [vmem:[#allocation12 + $0xe8] sm:$0xff]
    %v5318 = vld [vmem:[#allocation12 + $0xf0] sm:$0xff]
    %v5319 = vld [vmem:[#allocation12 + $0xf8] sm:$0xff]
    %v5320 = vpack.c.bf16 %v5286, %v5286
    %v5321 = vld [vmem:[#allocation13] sm:$0xff]
    %v5322 = vld [vmem:[#allocation13 + $0x8] sm:$0xff]
    %v5323 = vld [vmem:[#allocation13 + $0x10] sm:$0xff]
    %v5324 = vld [vmem:[#allocation13 + $0x18] sm:$0xff]
    %v5325 = vld [vmem:[#allocation13 + $0x20] sm:$0xff]
    %v5326 = vld [vmem:[#allocation13 + $0x28] sm:$0xff]
    %v5327 = vld [vmem:[#allocation13 + $0x30] sm:$0xff]
    %v5328 = vld [vmem:[#allocation13 + $0x38] sm:$0xff]
    %v5329 = vld [vmem:[#allocation13 + $0x40] sm:$0xff]
    %v5330 = vld [vmem:[#allocation13 + $0x48] sm:$0xff]
    %v5331 = vld [vmem:[#allocation13 + $0x50] sm:$0xff]
    %v5332 = vld [vmem:[#allocation13 + $0x58] sm:$0xff]
    %v5333 = vld [vmem:[#allocation13 + $0x60] sm:$0xff]
    %v5334 = vld [vmem:[#allocation13 + $0x68] sm:$0xff]
    %v5335 = vld [vmem:[#allocation13 + $0x70] sm:$0xff]
    %v5336 = vld [vmem:[#allocation13 + $0x78] sm:$0xff]
    %v5337 = vld [vmem:[#allocation13 + $0x80] sm:$0xff]
    %v5338 = vld [vmem:[#allocation13 + $0x88] sm:$0xff]
    %v5339 = vld [vmem:[#allocation13 + $0x90] sm:$0xff]
    %v5340 = vld [vmem:[#allocation13 + $0x98] sm:$0xff]
    %v5341 = vld [vmem:[#allocation13 + $0xa0] sm:$0xff]
    %v5342 = vld [vmem:[#allocation13 + $0xa8] sm:$0xff]
    %v5343 = vld [vmem:[#allocation13 + $0xb0] sm:$0xff]
    %v5344 = vld [vmem:[#allocation13 + $0xb8] sm:$0xff]
    %v5345 = vld [vmem:[#allocation13 + $0xc0] sm:$0xff]
    %v5346 = vld [vmem:[#allocation13 + $0xc8] sm:$0xff]
    %v5347 = vld [vmem:[#allocation13 + $0xd0] sm:$0xff]
    %v5348 = vld [vmem:[#allocation13 + $0xd8] sm:$0xff]
    %v5349 = vld [vmem:[#allocation13 + $0xe0] sm:$0xff]
    %v5350 = vld [vmem:[#allocation13 + $0xe8] sm:$0xff]
    %v5351 = vld [vmem:[#allocation13 + $0xf0] sm:$0xff]
    %v5352 = vld [vmem:[#allocation13 + $0xf8] sm:$0xff]
    %v5385 = vunpack.c.l.b16 %v5321
    %v5386 = vunpack.c.h.b16 %v5321
    %v5387 = vunpack.c.l.b16 %v5322
    %v5388 = vunpack.c.h.b16 %v5322
    %v5389 = vunpack.c.l.b16 %v5323
    %v5390 = vunpack.c.h.b16 %v5323
    %v5391 = vunpack.c.l.b16 %v5324
    %v5392 = vunpack.c.h.b16 %v5324
    %v5393 = vunpack.c.l.b16 %v5325
    %v5394 = vunpack.c.h.b16 %v5325
    %v5395 = vunpack.c.l.b16 %v5326
    %v5396 = vunpack.c.h.b16 %v5326
    %v5397 = vunpack.c.l.b16 %v5327
    %v5398 = vunpack.c.h.b16 %v5327
    %v5399 = vunpack.c.l.b16 %v5328
    %v5400 = vunpack.c.h.b16 %v5328
    %v5401 = vunpack.c.l.b16 %v5329
    %v5402 = vunpack.c.h.b16 %v5329
    %v5403 = vunpack.c.l.b16 %v5330
    %v5404 = vunpack.c.h.b16 %v5330
    %v5405 = vunpack.c.l.b16 %v5331
    %v5406 = vunpack.c.h.b16 %v5331
    %v5407 = vunpack.c.l.b16 %v5332
    %v5408 = vunpack.c.h.b16 %v5332
    %v5409 = vunpack.c.l.b16 %v5333
    %v5410 = vunpack.c.h.b16 %v5333
    %v5411 = vunpack.c.l.b16 %v5334
    %v5412 = vunpack.c.h.b16 %v5334
    %v5413 = vunpack.c.l.b16 %v5335
    %v5414 = vunpack.c.h.b16 %v5335
    %v5415 = vunpack.c.l.b16 %v5336
    %v5416 = vunpack.c.h.b16 %v5336
    %v5417 = vunpack.c.l.b16 %v5337
    %v5418 = vunpack.c.h.b16 %v5337
    %v5419 = vunpack.c.l.b16 %v5338
    %v5420 = vunpack.c.h.b16 %v5338
    %v5421 = vunpack.c.l.b16 %v5339
    %v5422 = vunpack.c.h.b16 %v5339
    %v5423 = vunpack.c.l.b16 %v5340
    %v5424 = vunpack.c.h.b16 %v5340
    %v5425 = vunpack.c.l.b16 %v5341
    %v5426 = vunpack.c.h.b16 %v5341
    %v5427 = vunpack.c.l.b16 %v5342
    %v5428 = vunpack.c.h.b16 %v5342
    %v5429 = vunpack.c.l.b16 %v5343
    %v5430 = vunpack.c.h.b16 %v5343
    %v5431 = vunpack.c.l.b16 %v5344
    %v5432 = vunpack.c.h.b16 %v5344
    %v5433 = vunpack.c.l.b16 %v5345
    %v5434 = vunpack.c.h.b16 %v5345
    %v5435 = vunpack.c.l.b16 %v5346
    %v5436 = vunpack.c.h.b16 %v5346
    %v5437 = vunpack.c.l.b16 %v5347
    %v5438 = vunpack.c.h.b16 %v5347
    %v5439 = vunpack.c.l.b16 %v5348
    %v5440 = vunpack.c.h.b16 %v5348
    %v5441 = vunpack.c.l.b16 %v5349
    %v5442 = vunpack.c.h.b16 %v5349
    %v5443 = vunpack.c.l.b16 %v5350
    %v5444 = vunpack.c.h.b16 %v5350
    %v5445 = vunpack.c.l.b16 %v5351
    %v5446 = vunpack.c.h.b16 %v5351
    %v5447 = vunpack.c.l.b16 %v5352
    %v5448 = vunpack.c.h.b16 %v5352
    %v5449 = vpack.c.b16 %v5389, %v5385
    %v5450 = vpack.c.b16 %v5390, %v5386
    %v5451 = vpack.c.b16 %v5391, %v5387
    %v5452 = vpack.c.b16 %v5392, %v5388
    %v5453 = vpack.c.b16 %v5397, %v5393
    %v5454 = vpack.c.b16 %v5398, %v5394
    %v5455 = vpack.c.b16 %v5399, %v5395
    %v5456 = vpack.c.b16 %v5400, %v5396
    %v5457 = vpack.c.b16 %v5405, %v5401
    %v5458 = vpack.c.b16 %v5406, %v5402
    %v5459 = vpack.c.b16 %v5407, %v5403
    %v5460 = vpack.c.b16 %v5408, %v5404
    %v5461 = vpack.c.b16 %v5413, %v5409
    %v5462 = vpack.c.b16 %v5414, %v5410
    %v5463 = vpack.c.b16 %v5415, %v5411
    %v5464 = vpack.c.b16 %v5416, %v5412
    %v5465 = vpack.c.b16 %v5421, %v5417
    %v5466 = vpack.c.b16 %v5422, %v5418
    %v5467 = vpack.c.b16 %v5423, %v5419
    %v5468 = vpack.c.b16 %v5424, %v5420
    %v5469 = vpack.c.b16 %v5429, %v5425
    %v5470 = vpack.c.b16 %v5430, %v5426
    %v5471 = vpack.c.b16 %v5431, %v5427
    %v5472 = vpack.c.b16 %v5432, %v5428
    %v5473 = vpack.c.b16 %v5437, %v5433
    %v5474 = vpack.c.b16 %v5438, %v5434
    %v5475 = vpack.c.b16 %v5439, %v5435
    %v5476 = vpack.c.b16 %v5440, %v5436
    %v5477 = vpack.c.b16 %v5445, %v5441
    %v5478 = vpack.c.b16 %v5446, %v5442
    %v5479 = vpack.c.b16 %v5447, %v5443
    %v5480 = vpack.c.b16 %v5448, %v5444
    %5513 = vmatprep.subr.bf16.mxu0 %v5450
    %5514 = vmatpush1.bf16.msra.mxu0 %v5449
    %5515 = vmatprep.subr.bf16.mxu0 %v5454
    %5516 = vmatpush1.bf16.msra.mxu0 %v5453
    %5517 = vmatprep.subr.bf16.mxu0 %v5458
    %5518 = vmatpush1.bf16.msra.mxu0 %v5457
    %5519 = vmatprep.subr.bf16.mxu0 %v5462
    %5520 = vmatpush1.bf16.msra.mxu0 %v5461
    %5521 = vmatprep.subr.bf16.mxu0 %v5466
    %5522 = vmatpush1.bf16.msra.mxu0 %v5465
    %5523 = vmatprep.subr.bf16.mxu0 %v5470
    %5524 = vmatpush1.bf16.msra.mxu0 %v5469
    %5525 = vmatprep.subr.bf16.mxu0 %v5474
    %5526 = vmatpush1.bf16.msra.mxu0 %v5473
    %5527 = vmatprep.subr.bf16.mxu0 %v5478
    %5528 = vmatpush1.bf16.msra.mxu0 %v5477
    %5529 = vmatprep.subr.bf16.mxu0 0
    %5530 = vmatpush1.bf16.msra.mxu0 0
    %5531 = vmatprep.subr.bf16.mxu0 0
    %5532 = vmatpush1.bf16.msra.mxu0 0
    %5533 = vmatprep.subr.bf16.mxu0 0
    %5534 = vmatpush1.bf16.msra.mxu0 0
    %5535 = vmatprep.subr.bf16.mxu0 0
    %5536 = vmatpush1.bf16.msra.mxu0 0
    %5537 = vmatprep.subr.bf16.mxu0 0
    %5538 = vmatpush1.bf16.msra.mxu0 0
    %5539 = vmatprep.subr.bf16.mxu0 0
    %5540 = vmatpush1.bf16.msra.mxu0 0
    %5541 = vmatprep.subr.bf16.mxu0 0
    %5542 = vmatpush1.bf16.msra.mxu0 0
    %5543 = vmatprep.subr.bf16.mxu0 0
    %5544 = vmatpush1.bf16.msra.mxu0 0
    %5545 = vmatprep.mubr.bf16.mxu0 0
    %5546 = vmatmul.mubr.bf16.gmra.mrb[0].mxu0 %v5320
    %v5547 = vpop.f32.mrb[0].mxu0
    %v5548 = vadd.f32 0.0, %v5547
    %v5549 = vpop.f32.mrb[0].mxu0
    %v5550 = vadd.f32 0.0, %v5549
    %v5551 = vpop.f32.mrb[0].mxu0
    %v5552 = vpop.f32.mrb[0].mxu0
    %5553 = vdwg.mxu0
    %5554 = vmatprep.subr.bf16.mxu0 %v5452
    %5555 = vmatpush1.bf16.msra.mxu0 %v5451
    %5556 = vmatprep.subr.bf16.mxu0 %v5456
    %5557 = vmatpush1.bf16.msra.mxu0 %v5455
    %5558 = vmatprep.subr.bf16.mxu0 %v5460
    %5559 = vmatpush1.bf16.msra.mxu0 %v5459
    %5560 = vmatprep.subr.bf16.mxu0 %v5464
    %5561 = vmatpush1.bf16.msra.mxu0 %v5463
    %5562 = vmatprep.subr.bf16.mxu0 %v5468
    %5563 = vmatpush1.bf16.msra.mxu0 %v5467
    %5564 = vmatprep.subr.bf16.mxu0 %v5472
    %5565 = vmatpush1.bf16.msra.mxu0 %v5471
    %5566 = vmatprep.subr.bf16.mxu0 %v5476
    %5567 = vmatpush1.bf16.msra.mxu0 %v5475
    %5568 = vmatprep.subr.bf16.mxu0 %v5480
    %5569 = vmatpush1.bf16.msra.mxu0 %v5479
    %5570 = vmatprep.subr.bf16.mxu0 0
    %5571 = vmatpush1.bf16.msra.mxu0 0
    %5572 = vmatprep.subr.bf16.mxu0 0
    %5573 = vmatpush1.bf16.msra.mxu0 0
    %5574 = vmatprep.subr.bf16.mxu0 0
    %5575 = vmatpush1.bf16.msra.mxu0 0
    %5576 = vmatprep.subr.bf16.mxu0 0
    %5577 = vmatpush1.bf16.msra.mxu0 0
    %5578 = vmatprep.subr.bf16.mxu0 0
    %5579 = vmatpush1.bf16.msra.mxu0 0
    %5580 = vmatprep.subr.bf16.mxu0 0
    %5581 = vmatpush1.bf16.msra.mxu0 0
    %5582 = vmatprep.subr.bf16.mxu0 0
    %5583 = vmatpush1.bf16.msra.mxu0 0
    %5584 = vmatprep.subr.bf16.mxu0 0
    %5585 = vmatpush1.bf16.msra.mxu0 0
    %5586 = vmatprep.mubr.bf16.mxu0 0
    %5587 = vmatmul.mubr.bf16.gmra.mrb[0].mxu0 %v5320
    %v5588 = vpop.f32.mrb[0].mxu0
    %v5589 = vadd.f32 0.0, %v5588
    %v5590 = vpop.f32.mrb[0].mxu0
    %v5591 = vadd.f32 0.0, %v5590
    %v5592 = vpop.f32.mrb[0].mxu0
    %v5593 = vpop.f32.mrb[0].mxu0
    %5594 = vdwg.mxu0
    %v5627 = vunpack.c.l.b16 %v5288
    %v5628 = vunpack.c.h.b16 %v5288
    %v5629 = vunpack.c.l.b16 %v5289
    %v5630 = vunpack.c.h.b16 %v5289
    %v5631 = vunpack.c.l.b16 %v5290
    %v5632 = vunpack.c.h.b16 %v5290
    %v5633 = vunpack.c.l.b16 %v5291
    %v5634 = vunpack.c.h.b16 %v5291
    %v5635 = vunpack.c.l.b16 %v5292
    %v5636 = vunpack.c.h.b16 %v5292
    %v5637 = vunpack.c.l.b16 %v5293
    %v5638 = vunpack.c.h.b16 %v5293
    %v5639 = vunpack.c.l.b16 %v5294
    %v5640 = vunpack.c.h.b16 %v5294
    %v5641 = vunpack.c.l.b16 %v5295
    %v5642 = vunpack.c.h.b16 %v5295
    %v5643 = vunpack.c.l.b16 %v5296
    %v5644 = vunpack.c.h.b16 %v5296
    %v5645 = vunpack.c.l.b16 %v5297
    %v5646 = vunpack.c.h.b16 %v5297
    %v5647 = vunpack.c.l.b16 %v5298
    %v5648 = vunpack.c.h.b16 %v5298
    %v5649 = vunpack.c.l.b16 %v5299
    %v5650 = vunpack.c.h.b16 %v5299
    %v5651 = vunpack.c.l.b16 %v5300
    %v5652 = vunpack.c.h.b16 %v5300
    %v5653 = vunpack.c.l.b16 %v5301
    %v5654 = vunpack.c.h.b16 %v5301
    %v5655 = vunpack.c.l.b16 %v5302
    %v5656 = vunpack.c.h.b16 %v5302
    %v5657 = vunpack.c.l.b16 %v5303
    %v5658 = vunpack.c.h.b16 %v5303
    %v5659 = vunpack.c.l.b16 %v5304
    %v5660 = vunpack.c.h.b16 %v5304
    %v5661 = vunpack.c.l.b16 %v5305
    %v5662 = vunpack.c.h.b16 %v5305
    %v5663 = vunpack.c.l.b16 %v5306
    %v5664 = vunpack.c.h.b16 %v5306
    %v5665 = vunpack.c.l.b16 %v5307
    %v5666 = vunpack.c.h.b16 %v5307
    %v5667 = vunpack.c.l.b16 %v5308
    %v5668 = vunpack.c.h.b16 %v5308
    %v5669 = vunpack.c.l.b16 %v5309
    %v5670 = vunpack.c.h.b16 %v5309
    %v5671 = vunpack.c.l.b16 %v5310
    %v5672 = vunpack.c.h.b16 %v5310
    %v5673 = vunpack.c.l.b16 %v5311
    %v5674 = vunpack.c.h.b16 %v5311
    %v5675 = vunpack.c.l.b16 %v5312
    %v5676 = vunpack.c.h.b16 %v5312
    %v5677 = vunpack.c.l.b16 %v5313
    %v5678 = vunpack.c.h.b16 %v5313
    %v5679 = vunpack.c.l.b16 %v5314
    %v5680 = vunpack.c.h.b16 %v5314
    %v5681 = vunpack.c.l.b16 %v5315
    %v5682 = vunpack.c.h.b16 %v5315
    %v5683 = vunpack.c.l.b16 %v5316
    %v5684 = vunpack.c.h.b16 %v5316
    %v5685 = vunpack.c.l.b16 %v5317
    %v5686 = vunpack.c.h.b16 %v5317
    %v5687 = vunpack.c.l.b16 %v5318
    %v5688 = vunpack.c.h.b16 %v5318
    %v5689 = vunpack.c.l.b16 %v5319
    %v5690 = vunpack.c.h.b16 %v5319
    %v5691 = vpack.c.b16 %v5631, %v5627
    %v5692 = vpack.c.b16 %v5632, %v5628
    %v5693 = vpack.c.b16 %v5633, %v5629
    %v5694 = vpack.c.b16 %v5634, %v5630
    %v5695 = vpack.c.b16 %v5639, %v5635
    %v5696 = vpack.c.b16 %v5640, %v5636
    %v5697 = vpack.c.b16 %v5641, %v5637
    %v5698 = vpack.c.b16 %v5642, %v5638
    %v5699 = vpack.c.b16 %v5647, %v5643
    %v5700 = vpack.c.b16 %v5648, %v5644
    %v5701 = vpack.c.b16 %v5649, %v5645
    %v5702 = vpack.c.b16 %v5650, %v5646
    %v5703 = vpack.c.b16 %v5655, %v5651
    %v5704 = vpack.c.b16 %v5656, %v5652
    %v5705 = vpack.c.b16 %v5657, %v5653
    %v5706 = vpack.c.b16 %v5658, %v5654
    %v5707 = vpack.c.b16 %v5663, %v5659
    %v5708 = vpack.c.b16 %v5664, %v5660
    %v5709 = vpack.c.b16 %v5665, %v5661
    %v5710 = vpack.c.b16 %v5666, %v5662
    %v5711 = vpack.c.b16 %v5671, %v5667
    %v5712 = vpack.c.b16 %v5672, %v5668
    %v5713 = vpack.c.b16 %v5673, %v5669
    %v5714 = vpack.c.b16 %v5674, %v5670
    %v5715 = vpack.c.b16 %v5679, %v5675
    %v5716 = vpack.c.b16 %v5680, %v5676
    %v5717 = vpack.c.b16 %v5681, %v5677
    %v5718 = vpack.c.b16 %v5682, %v5678
    %v5719 = vpack.c.b16 %v5687, %v5683
    %v5720 = vpack.c.b16 %v5688, %v5684
    %v5721 = vpack.c.b16 %v5689, %v5685
    %v5722 = vpack.c.b16 %v5690, %v5686
    %5755 = vmatprep.subr.bf16.mxu0 %v5692
    %5756 = vmatpush1.bf16.msra.mxu0 %v5691
    %5757 = vmatprep.subr.bf16.mxu0 %v5696
    %5758 = vmatpush1.bf16.msra.mxu0 %v5695
    %5759 = vmatprep.subr.bf16.mxu0 %v5700
    %5760 = vmatpush1.bf16.msra.mxu0 %v5699
    %5761 = vmatprep.subr.bf16.mxu0 %v5704
    %5762 = vmatpush1.bf16.msra.mxu0 %v5703
    %5763 = vmatprep.subr.bf16.mxu0 %v5708
    %5764 = vmatpush1.bf16.msra.mxu0 %v5707
    %5765 = vmatprep.subr.bf16.mxu0 %v5712
    %5766 = vmatpush1.bf16.msra.mxu0 %v5711
    %5767 = vmatprep.subr.bf16.mxu0 %v5716
    %5768 = vmatpush1.bf16.msra.mxu0 %v5715
    %5769 = vmatprep.subr.bf16.mxu0 %v5720
    %5770 = vmatpush1.bf16.msra.mxu0 %v5719
    %5771 = vmatprep.subr.bf16.mxu0 0
    %5772 = vmatpush1.bf16.msra.mxu0 0
    %5773 = vmatprep.subr.bf16.mxu0 0
    %5774 = vmatpush1.bf16.msra.mxu0 0
    %5775 = vmatprep.subr.bf16.mxu0 0
    %5776 = vmatpush1.bf16.msra.mxu0 0
    %5777 = vmatprep.subr.bf16.mxu0 0
    %5778 = vmatpush1.bf16.msra.mxu0 0
    %5779 = vmatprep.subr.bf16.mxu0 0
    %5780 = vmatpush1.bf16.msra.mxu0 0
    %5781 = vmatprep.subr.bf16.mxu0 0
    %5782 = vmatpush1.bf16.msra.mxu0 0
    %5783 = vmatprep.subr.bf16.mxu0 0
    %5784 = vmatpush1.bf16.msra.mxu0 0
    %5785 = vmatprep.subr.bf16.mxu0 0
    %5786 = vmatpush1.bf16.msra.mxu0 0
    %5787 = vmatprep.mubr.bf16.mxu0 0
    %5788 = vmatmul.mubr.bf16.gmra.mrb[0].mxu0 %v5287
    %v5789 = vpop.f32.mrb[0].mxu0
    %v5790 = vadd.f32 %v5548, %v5789
    %v5791 = vpop.f32.mrb[0].mxu0
    %v5792 = vadd.f32 %v5550, %v5791
    %v5793 = vpop.f32.mrb[0].mxu0
    %v5794 = vpop.f32.mrb[0].mxu0
    %5795 = vdwg.mxu0
    %5796 = vmatprep.subr.bf16.mxu0 %v5694
    %5797 = vmatpush1.bf16.msra.mxu0 %v5693
    %5798 = vmatprep.subr.bf16.mxu0 %v5698
    %5799 = vmatpush1.bf16.msra.mxu0 %v5697
    %5800 = vmatprep.subr.bf16.mxu0 %v5702
    %5801 = vmatpush1.bf16.msra.mxu0 %v5701
    %5802 = vmatprep.subr.bf16.mxu0 %v5706
    %5803 = vmatpush1.bf16.msra.mxu0 %v5705
    %5804 = vmatprep.subr.bf16.mxu0 %v5710
    %5805 = vmatpush1.bf16.msra.mxu0 %v5709
    %5806 = vmatprep.subr.bf16.mxu0 %v5714
    %5807 = vmatpush1.bf16.msra.mxu0 %v5713
    %5808 = vmatprep.subr.bf16.mxu0 %v5718
    %5809 = vmatpush1.bf16.msra.mxu0 %v5717
    %5810 = vmatprep.subr.bf16.mxu0 %v5722
    %5811 = vmatpush1.bf16.msra.mxu0 %v5721
    %5812 = vmatprep.subr.bf16.mxu0 0
    %5813 = vmatpush1.bf16.msra.mxu0 0
    %5814 = vmatprep.subr.bf16.mxu0 0
    %5815 = vmatpush1.bf16.msra.mxu0 0
    %5816 = vmatprep.subr.bf16.mxu0 0
    %5817 = vmatpush1.bf16.msra.mxu0 0
    %5818 = vmatprep.subr.bf16.mxu0 0
    %5819 = vmatpush1.bf16.msra.mxu0 0
    %5820 = vmatprep.subr.bf16.mxu0 0
    %5821 = vmatpush1.bf16.msra.mxu0 0
    %5822 = vmatprep.subr.bf16.mxu0 0
    %5823 = vmatpush1.bf16.msra.mxu0 0
    %5824 = vmatprep.subr.bf16.mxu0 0
    %5825 = vmatpush1.bf16.msra.mxu0 0
    %5826 = vmatprep.subr.bf16.mxu0 0
    %5827 = vmatpush1.bf16.msra.mxu0 0
    %5828 = vmatprep.mubr.bf16.mxu0 0
    %5829 = vmatmul.mubr.bf16.gmra.mrb[0].mxu0 %v5287
    %v5830 = vpop.f32.mrb[0].mxu0
    %v5831 = vadd.f32 %v5589, %v5830
    %v5832 = vpop.f32.mrb[0].mxu0
    %v5833 = vadd.f32 %v5591, %v5832
    %v5834 = vpop.f32.mrb[0].mxu0
    %v5835 = vpop.f32.mrb[0].mxu0
    %5836 = vdwg.mxu0
    %v5837 = vadd.f32 %v5790, %v150
    %v5838 = vadd.f32 %v5792, %v154
    %v5839 = vadd.f32 %v5831, %v158
    %v5840 = vadd.f32 %v5833, %v162
    %v5841 = vld [vmem:[%s1360] sm:$0xff]
    %v5842 = vxor.u32 %v5837, 2147483648
    %v5843 = vmul.f32 %v5842, 1.442695
    %v5844 = vpow.pop %v5843
    %v5845 = vadd.f32 %v5844, 1.0
    %v5846 = vrcp.pop %v5845
    %v5847 = vmul.f32 1.0, %v5846
    %v5848 = vxor.u32 %v5838, 2147483648
    %v5849 = vmul.f32 %v5848, 1.442695
    %v5850 = vpow.pop %v5849
    %v5851 = vadd.f32 %v5850, 1.0
    %v5852 = vrcp.pop %v5851
    %v5853 = vmul.f32 1.0, %v5852
    %v5854 = vtanh.pop %v5839
    %v5855 = vxor.u32 %v5840, 2147483648
    %v5856 = vmul.f32 %v5855, 1.442695
    %v5857 = vpow.pop %v5856
    %v5858 = vadd.f32 %v5857, 1.0
    %v5859 = vrcp.pop %v5858
    %v5860 = vmul.f32 1.0, %v5859
    %v5861 = vmul.f32 %v5853, %v5841
    %v5862 = vmul.f32 %v5847, %v5854
    %v5863 = vadd.f32 %v5861, %v5862
    %v5864 = vtanh.pop %v5863
    %v5865 = vmul.f32 %v5860, %v5864
    %5866 = vst [vmem:[%s804] sm:$0xff] %v5865
    %5867 = vst [vmem:[%s1360] sm:$0xff] %v5863
    %s5868 = smul.u32 6, 4
    %s5869 = smul.addr %s5868, 8
    %s5870 = scalar_lea.vmem [#allocation2], %s5869
    %v5871 = vld [vmem:[%s5870] sm:$0xff]
    %v5872 = vld [vmem:[%s5870 + $0x8] sm:$0xff]
    %v5873 = vld [vmem:[%s5870 + $0x10] sm:$0xff]
    %v5874 = vld [vmem:[%s5870 + $0x18] sm:$0xff]
    %v5875 = vld [vmem:[#allocation16] sm:$0xff]
    %v5876 = vpack.c.bf16 %v5875, %v5875
    %v5877 = vld [vmem:[#allocation9] sm:$0xff]
    %v5878 = vld [vmem:[#allocation9 + $0x8] sm:$0xff]
    %v5879 = vld [vmem:[#allocation9 + $0x10] sm:$0xff]
    %v5880 = vld [vmem:[#allocation9 + $0x18] sm:$0xff]
    %v5881 = vld [vmem:[#allocation9 + $0x20] sm:$0xff]
    %v5882 = vld [vmem:[#allocation9 + $0x28] sm:$0xff]
    %v5883 = vld [vmem:[#allocation9 + $0x30] sm:$0xff]
    %v5884 = vld [vmem:[#allocation9 + $0x38] sm:$0xff]
    %v5885 = vld [vmem:[#allocation9 + $0x40] sm:$0xff]
    %v5886 = vld [vmem:[#allocation9 + $0x48] sm:$0xff]
    %v5887 = vld [vmem:[#allocation9 + $0x50] sm:$0xff]
    %v5888 = vld [vmem:[#allocation9 + $0x58] sm:$0xff]
    %v5889 = vld [vmem:[#allocation9 + $0x60] sm:$0xff]
    %v5890 = vld [vmem:[#allocation9 + $0x68] sm:$0xff]
    %v5891 = vld [vmem:[#allocation9 + $0x70] sm:$0xff]
    %v5892 = vld [vmem:[#allocation9 + $0x78] sm:$0xff]
    %v5893 = vld [vmem:[#allocation9 + $0x80] sm:$0xff]
    %v5894 = vld [vmem:[#allocation9 + $0x88] sm:$0xff]
    %v5895 = vld [vmem:[#allocation9 + $0x90] sm:$0xff]
    %v5896 = vld [vmem:[#allocation9 + $0x98] sm:$0xff]
    %v5897 = vld [vmem:[#allocation9 + $0xa0] sm:$0xff]
    %v5898 = vld [vmem:[#allocation9 + $0xa8] sm:$0xff]
    %v5899 = vld [vmem:[#allocation9 + $0xb0] sm:$0xff]
    %v5900 = vld [vmem:[#allocation9 + $0xb8] sm:$0xff]
    %v5901 = vld [vmem:[#allocation9 + $0xc0] sm:$0xff]
    %v5902 = vld [vmem:[#allocation9 + $0xc8] sm:$0xff]
    %v5903 = vld [vmem:[#allocation9 + $0xd0] sm:$0xff]
    %v5904 = vld [vmem:[#allocation9 + $0xd8] sm:$0xff]
    %v5905 = vld [vmem:[#allocation9 + $0xe0] sm:$0xff]
    %v5906 = vld [vmem:[#allocation9 + $0xe8] sm:$0xff]
    %v5907 = vld [vmem:[#allocation9 + $0xf0] sm:$0xff]
    %v5908 = vld [vmem:[#allocation9 + $0xf8] sm:$0xff]
    %v5941 = vunpack.c.l.b16 %v5877
    %v5942 = vunpack.c.h.b16 %v5877
    %v5943 = vunpack.c.l.b16 %v5878
    %v5944 = vunpack.c.h.b16 %v5878
    %v5945 = vunpack.c.l.b16 %v5879
    %v5946 = vunpack.c.h.b16 %v5879
    %v5947 = vunpack.c.l.b16 %v5880
    %v5948 = vunpack.c.h.b16 %v5880
    %v5949 = vunpack.c.l.b16 %v5881
    %v5950 = vunpack.c.h.b16 %v5881
    %v5951 = vunpack.c.l.b16 %v5882
    %v5952 = vunpack.c.h.b16 %v5882
    %v5953 = vunpack.c.l.b16 %v5883
    %v5954 = vunpack.c.h.b16 %v5883
    %v5955 = vunpack.c.l.b16 %v5884
    %v5956 = vunpack.c.h.b16 %v5884
    %v5957 = vunpack.c.l.b16 %v5885
    %v5958 = vunpack.c.h.b16 %v5885
    %v5959 = vunpack.c.l.b16 %v5886
    %v5960 = vunpack.c.h.b16 %v5886
    %v5961 = vunpack.c.l.b16 %v5887
    %v5962 = vunpack.c.h.b16 %v5887
    %v5963 = vunpack.c.l.b16 %v5888
    %v5964 = vunpack.c.h.b16 %v5888
    %v5965 = vunpack.c.l.b16 %v5889
    %v5966 = vunpack.c.h.b16 %v5889
    %v5967 = vunpack.c.l.b16 %v5890
    %v5968 = vunpack.c.h.b16 %v5890
    %v5969 = vunpack.c.l.b16 %v5891
    %v5970 = vunpack.c.h.b16 %v5891
    %v5971 = vunpack.c.l.b16 %v5892
    %v5972 = vunpack.c.h.b16 %v5892
    %v5973 = vunpack.c.l.b16 %v5893
    %v5974 = vunpack.c.h.b16 %v5893
    %v5975 = vunpack.c.l.b16 %v5894
    %v5976 = vunpack.c.h.b16 %v5894
    %v5977 = vunpack.c.l.b16 %v5895
    %v5978 = vunpack.c.h.b16 %v5895
    %v5979 = vunpack.c.l.b16 %v5896
    %v5980 = vunpack.c.h.b16 %v5896
    %v5981 = vunpack.c.l.b16 %v5897
    %v5982 = vunpack.c.h.b16 %v5897
    %v5983 = vunpack.c.l.b16 %v5898
    %v5984 = vunpack.c.h.b16 %v5898
    %v5985 = vunpack.c.l.b16 %v5899
    %v5986 = vunpack.c.h.b16 %v5899
    %v5987 = vunpack.c.l.b16 %v5900
    %v5988 = vunpack.c.h.b16 %v5900
    %v5989 = vunpack.c.l.b16 %v5901
    %v5990 = vunpack.c.h.b16 %v5901
    %v5991 = vunpack.c.l.b16 %v5902
    %v5992 = vunpack.c.h.b16 %v5902
    %v5993 = vunpack.c.l.b16 %v5903
    %v5994 = vunpack.c.h.b16 %v5903
    %v5995 = vunpack.c.l.b16 %v5904
    %v5996 = vunpack.c.h.b16 %v5904
    %v5997 = vunpack.c.l.b16 %v5905
    %v5998 = vunpack.c.h.b16 %v5905
    %v5999 = vunpack.c.l.b16 %v5906
    %v6000 = vunpack.c.h.b16 %v5906
    %v6001 = vunpack.c.l.b16 %v5907
    %v6002 = vunpack.c.h.b16 %v5907
    %v6003 = vunpack.c.l.b16 %v5908
    %v6004 = vunpack.c.h.b16 %v5908
    %v6005 = vpack.c.b16 %v5945, %v5941
    %v6006 = vpack.c.b16 %v5946, %v5942
    %v6007 = vpack.c.b16 %v5947, %v5943
    %v6008 = vpack.c.b16 %v5948, %v5944
    %v6009 = vpack.c.b16 %v5953, %v5949
    %v6010 = vpack.c.b16 %v5954, %v5950
    %v6011 = vpack.c.b16 %v5955, %v5951
    %v6012 = vpack.c.b16 %v5956, %v5952
    %v6013 = vpack.c.b16 %v5961, %v5957
    %v6014 = vpack.c.b16 %v5962, %v5958
    %v6015 = vpack.c.b16 %v5963, %v5959
    %v6016 = vpack.c.b16 %v5964, %v5960
    %v6017 = vpack.c.b16 %v5969, %v5965
    %v6018 = vpack.c.b16 %v5970, %v5966
    %v6019 = vpack.c.b16 %v5971, %v5967
    %v6020 = vpack.c.b16 %v5972, %v5968
    %v6021 = vpack.c.b16 %v5977, %v5973
    %v6022 = vpack.c.b16 %v5978, %v5974
    %v6023 = vpack.c.b16 %v5979, %v5975
    %v6024 = vpack.c.b16 %v5980, %v5976
    %v6025 = vpack.c.b16 %v5985, %v5981
    %v6026 = vpack.c.b16 %v5986, %v5982
    %v6027 = vpack.c.b16 %v5987, %v5983
    %v6028 = vpack.c.b16 %v5988, %v5984
    %v6029 = vpack.c.b16 %v5993, %v5989
    %v6030 = vpack.c.b16 %v5994, %v5990
    %v6031 = vpack.c.b16 %v5995, %v5991
    %v6032 = vpack.c.b16 %v5996, %v5992
    %v6033 = vpack.c.b16 %v6001, %v5997
    %v6034 = vpack.c.b16 %v6002, %v5998
    %v6035 = vpack.c.b16 %v6003, %v5999
    %v6036 = vpack.c.b16 %v6004, %v6000
    %6069 = vmatprep.subr.bf16.mxu0 %v6006
    %6070 = vmatpush1.bf16.msra.mxu0 %v6005
    %6071 = vmatprep.subr.bf16.mxu0 %v6010
    %6072 = vmatpush1.bf16.msra.mxu0 %v6009
    %6073 = vmatprep.subr.bf16.mxu0 %v6014
    %6074 = vmatpush1.bf16.msra.mxu0 %v6013
    %6075 = vmatprep.subr.bf16.mxu0 %v6018
    %6076 = vmatpush1.bf16.msra.mxu0 %v6017
    %6077 = vmatprep.subr.bf16.mxu0 %v6022
    %6078 = vmatpush1.bf16.msra.mxu0 %v6021
    %6079 = vmatprep.subr.bf16.mxu0 %v6026
    %6080 = vmatpush1.bf16.msra.mxu0 %v6025
    %6081 = vmatprep.subr.bf16.mxu0 %v6030
    %6082 = vmatpush1.bf16.msra.mxu0 %v6029
    %6083 = vmatprep.subr.bf16.mxu0 %v6034
    %6084 = vmatpush1.bf16.msra.mxu0 %v6033
    %6085 = vmatprep.subr.bf16.mxu0 0
    %6086 = vmatpush1.bf16.msra.mxu0 0
    %6087 = vmatprep.subr.bf16.mxu0 0
    %6088 = vmatpush1.bf16.msra.mxu0 0
    %6089 = vmatprep.subr.bf16.mxu0 0
    %6090 = vmatpush1.bf16.msra.mxu0 0
    %6091 = vmatprep.subr.bf16.mxu0 0
    %6092 = vmatpush1.bf16.msra.mxu0 0
    %6093 = vmatprep.subr.bf16.mxu0 0
    %6094 = vmatpush1.bf16.msra.mxu0 0
    %6095 = vmatprep.subr.bf16.mxu0 0
    %6096 = vmatpush1.bf16.msra.mxu0 0
    %6097 = vmatprep.subr.bf16.mxu0 0
    %6098 = vmatpush1.bf16.msra.mxu0 0
    %6099 = vmatprep.subr.bf16.mxu0 0
    %6100 = vmatpush1.bf16.msra.mxu0 0
    %6101 = vmatprep.mubr.bf16.mxu0 0
    %6102 = vmatmul.mubr.bf16.gmra.mrb[0].mxu0 %v5876
    %v6103 = vpop.f32.mrb[0].mxu0
    %v6104 = vadd.f32 0.0, %v6103
    %v6105 = vpop.f32.mrb[0].mxu0
    %v6106 = vadd.f32 0.0, %v6105
    %v6107 = vpop.f32.mrb[0].mxu0
    %v6108 = vpop.f32.mrb[0].mxu0
    %6109 = vdwg.mxu0
    %6110 = vmatprep.subr.bf16.mxu0 %v6008
    %6111 = vmatpush1.bf16.msra.mxu0 %v6007
    %6112 = vmatprep.subr.bf16.mxu0 %v6012
    %6113 = vmatpush1.bf16.msra.mxu0 %v6011
    %6114 = vmatprep.subr.bf16.mxu0 %v6016
    %6115 = vmatpush1.bf16.msra.mxu0 %v6015
    %6116 = vmatprep.subr.bf16.mxu0 %v6020
    %6117 = vmatpush1.bf16.msra.mxu0 %v6019
    %6118 = vmatprep.subr.bf16.mxu0 %v6024
    %6119 = vmatpush1.bf16.msra.mxu0 %v6023
    %6120 = vmatprep.subr.bf16.mxu0 %v6028
    %6121 = vmatpush1.bf16.msra.mxu0 %v6027
    %6122 = vmatprep.subr.bf16.mxu0 %v6032
    %6123 = vmatpush1.bf16.msra.mxu0 %v6031
    %6124 = vmatprep.subr.bf16.mxu0 %v6036
    %6125 = vmatpush1.bf16.msra.mxu0 %v6035
    %6126 = vmatprep.subr.bf16.mxu0 0
    %6127 = vmatpush1.bf16.msra.mxu0 0
    %6128 = vmatprep.subr.bf16.mxu0 0
    %6129 = vmatpush1.bf16.msra.mxu0 0
    %6130 = vmatprep.subr.bf16.mxu0 0
    %6131 = vmatpush1.bf16.msra.mxu0 0
    %6132 = vmatprep.subr.bf16.mxu0 0
    %6133 = vmatpush1.bf16.msra.mxu0 0
    %6134 = vmatprep.subr.bf16.mxu0 0
    %6135 = vmatpush1.bf16.msra.mxu0 0
    %6136 = vmatprep.subr.bf16.mxu0 0
    %6137 = vmatpush1.bf16.msra.mxu0 0
    %6138 = vmatprep.subr.bf16.mxu0 0
    %6139 = vmatpush1.bf16.msra.mxu0 0
    %6140 = vmatprep.subr.bf16.mxu0 0
    %6141 = vmatpush1.bf16.msra.mxu0 0
    %6142 = vmatprep.mubr.bf16.mxu0 0
    %6143 = vmatmul.mubr.bf16.gmra.mrb[0].mxu0 %v5876
    %v6144 = vpop.f32.mrb[0].mxu0
    %v6145 = vadd.f32 0.0, %v6144
    %v6146 = vpop.f32.mrb[0].mxu0
    %v6147 = vadd.f32 0.0, %v6146
    %v6148 = vpop.f32.mrb[0].mxu0
    %v6149 = vpop.f32.mrb[0].mxu0
    %6150 = vdwg.mxu0
    %v6151 = vadd.f32 %v5871, %v6104
    %v6152 = vadd.f32 %v5872, %v6106
    %v6153 = vadd.f32 %v5873, %v6145
    %v6154 = vadd.f32 %v5874, %v6147
    %v6155 = vld [vmem:[#allocation17] sm:$0xff]
    %v6156 = vxor.u32 %v6151, 2147483648
    %v6157 = vmul.f32 %v6156, 1.442695
    %v6158 = vpow.pop %v6157
    %v6159 = vadd.f32 %v6158, 1.0
    %v6160 = vrcp.pop %v6159
    %v6161 = vmul.f32 1.0, %v6160
    %v6162 = vxor.u32 %v6152, 2147483648
    %v6163 = vmul.f32 %v6162, 1.442695
    %v6164 = vpow.pop %v6163
    %v6165 = vadd.f32 %v6164, 1.0
    %v6166 = vrcp.pop %v6165
    %v6167 = vmul.f32 1.0, %v6166
    %v6168 = vtanh.pop %v6153
    %v6169 = vxor.u32 %v6154, 2147483648
    %v6170 = vmul.f32 %v6169, 1.442695
    %v6171 = vpow.pop %v6170
    %v6172 = vadd.f32 %v6171, 1.0
    %v6173 = vrcp.pop %v6172
    %v6174 = vmul.f32 1.0, %v6173
    %v6175 = vmul.f32 %v6167, %v6155
    %v6176 = vmul.f32 %v6161, %v6168
    %v6177 = vadd.f32 %v6175, %v6176
    %v6178 = vtanh.pop %v6177
    %v6179 = vmul.f32 %v6174, %v6178
    %6180 = vst [vmem:[#allocation16] sm:$0xff] %v6179
    %6181 = vst [vmem:[#allocation17] sm:$0xff] %v6177
    %v6182 = vld [vmem:[%s804] sm:$0xff]
    %v6183 = vpack.c.bf16 %v6179, %v6179
    %v6184 = vld [vmem:[#allocation12] sm:$0xff]
    %v6185 = vld [vmem:[#allocation12 + $0x8] sm:$0xff]
    %v6186 = vld [vmem:[#allocation12 + $0x10] sm:$0xff]
    %v6187 = vld [vmem:[#allocation12 + $0x18] sm:$0xff]
    %v6188 = vld [vmem:[#allocation12 + $0x20] sm:$0xff]
    %v6189 = vld [vmem:[#allocation12 + $0x28] sm:$0xff]
    %v6190 = vld [vmem:[#allocation12 + $0x30] sm:$0xff]
    %v6191 = vld [vmem:[#allocation12 + $0x38] sm:$0xff]
    %v6192 = vld [vmem:[#allocation12 + $0x40] sm:$0xff]
    %v6193 = vld [vmem:[#allocation12 + $0x48] sm:$0xff]
    %v6194 = vld [vmem:[#allocation12 + $0x50] sm:$0xff]
    %v6195 = vld [vmem:[#allocation12 + $0x58] sm:$0xff]
    %v6196 = vld [vmem:[#allocation12 + $0x60] sm:$0xff]
    %v6197 = vld [vmem:[#allocation12 + $0x68] sm:$0xff]
    %v6198 = vld [vmem:[#allocation12 + $0x70] sm:$0xff]
    %v6199 = vld [vmem:[#allocation12 + $0x78] sm:$0xff]
    %v6200 = vld [vmem:[#allocation12 + $0x80] sm:$0xff]
    %v6201 = vld [vmem:[#allocation12 + $0x88] sm:$0xff]
    %v6202 = vld [vmem:[#allocation12 + $0x90] sm:$0xff]
    %v6203 = vld [vmem:[#allocation12 + $0x98] sm:$0xff]
    %v6204 = vld [vmem:[#allocation12 + $0xa0] sm:$0xff]
    %v6205 = vld [vmem:[#allocation12 + $0xa8] sm:$0xff]
    %v6206 = vld [vmem:[#allocation12 + $0xb0] sm:$0xff]
    %v6207 = vld [vmem:[#allocation12 + $0xb8] sm:$0xff]
    %v6208 = vld [vmem:[#allocation12 + $0xc0] sm:$0xff]
    %v6209 = vld [vmem:[#allocation12 + $0xc8] sm:$0xff]
    %v6210 = vld [vmem:[#allocation12 + $0xd0] sm:$0xff]
    %v6211 = vld [vmem:[#allocation12 + $0xd8] sm:$0xff]
    %v6212 = vld [vmem:[#allocation12 + $0xe0] sm:$0xff]
    %v6213 = vld [vmem:[#allocation12 + $0xe8] sm:$0xff]
    %v6214 = vld [vmem:[#allocation12 + $0xf0] sm:$0xff]
    %v6215 = vld [vmem:[#allocation12 + $0xf8] sm:$0xff]
    %v6216 = vpack.c.bf16 %v6182, %v6182
    %v6217 = vld [vmem:[#allocation13] sm:$0xff]
    %v6218 = vld [vmem:[#allocation13 + $0x8] sm:$0xff]
    %v6219 = vld [vmem:[#allocation13 + $0x10] sm:$0xff]
    %v6220 = vld [vmem:[#allocation13 + $0x18] sm:$0xff]
    %v6221 = vld [vmem:[#allocation13 + $0x20] sm:$0xff]
    %v6222 = vld [vmem:[#allocation13 + $0x28] sm:$0xff]
    %v6223 = vld [vmem:[#allocation13 + $0x30] sm:$0xff]
    %v6224 = vld [vmem:[#allocation13 + $0x38] sm:$0xff]
    %v6225 = vld [vmem:[#allocation13 + $0x40] sm:$0xff]
    %v6226 = vld [vmem:[#allocation13 + $0x48] sm:$0xff]
    %v6227 = vld [vmem:[#allocation13 + $0x50] sm:$0xff]
    %v6228 = vld [vmem:[#allocation13 + $0x58] sm:$0xff]
    %v6229 = vld [vmem:[#allocation13 + $0x60] sm:$0xff]
    %v6230 = vld [vmem:[#allocation13 + $0x68] sm:$0xff]
    %v6231 = vld [vmem:[#allocation13 + $0x70] sm:$0xff]
    %v6232 = vld [vmem:[#allocation13 + $0x78] sm:$0xff]
    %v6233 = vld [vmem:[#allocation13 + $0x80] sm:$0xff]
    %v6234 = vld [vmem:[#allocation13 + $0x88] sm:$0xff]
    %v6235 = vld [vmem:[#allocation13 + $0x90] sm:$0xff]
    %v6236 = vld [vmem:[#allocation13 + $0x98] sm:$0xff]
    %v6237 = vld [vmem:[#allocation13 + $0xa0] sm:$0xff]
    %v6238 = vld [vmem:[#allocation13 + $0xa8] sm:$0xff]
    %v6239 = vld [vmem:[#allocation13 + $0xb0] sm:$0xff]
    %v6240 = vld [vmem:[#allocation13 + $0xb8] sm:$0xff]
    %v6241 = vld [vmem:[#allocation13 + $0xc0] sm:$0xff]
    %v6242 = vld [vmem:[#allocation13 + $0xc8] sm:$0xff]
    %v6243 = vld [vmem:[#allocation13 + $0xd0] sm:$0xff]
    %v6244 = vld [vmem:[#allocation13 + $0xd8] sm:$0xff]
    %v6245 = vld [vmem:[#allocation13 + $0xe0] sm:$0xff]
    %v6246 = vld [vmem:[#allocation13 + $0xe8] sm:$0xff]
    %v6247 = vld [vmem:[#allocation13 + $0xf0] sm:$0xff]
    %v6248 = vld [vmem:[#allocation13 + $0xf8] sm:$0xff]
    %v6281 = vunpack.c.l.b16 %v6217
    %v6282 = vunpack.c.h.b16 %v6217
    %v6283 = vunpack.c.l.b16 %v6218
    %v6284 = vunpack.c.h.b16 %v6218
    %v6285 = vunpack.c.l.b16 %v6219
    %v6286 = vunpack.c.h.b16 %v6219
    %v6287 = vunpack.c.l.b16 %v6220
    %v6288 = vunpack.c.h.b16 %v6220
    %v6289 = vunpack.c.l.b16 %v6221
    %v6290 = vunpack.c.h.b16 %v6221
    %v6291 = vunpack.c.l.b16 %v6222
    %v6292 = vunpack.c.h.b16 %v6222
    %v6293 = vunpack.c.l.b16 %v6223
    %v6294 = vunpack.c.h.b16 %v6223
    %v6295 = vunpack.c.l.b16 %v6224
    %v6296 = vunpack.c.h.b16 %v6224
    %v6297 = vunpack.c.l.b16 %v6225
    %v6298 = vunpack.c.h.b16 %v6225
    %v6299 = vunpack.c.l.b16 %v6226
    %v6300 = vunpack.c.h.b16 %v6226
    %v6301 = vunpack.c.l.b16 %v6227
    %v6302 = vunpack.c.h.b16 %v6227
    %v6303 = vunpack.c.l.b16 %v6228
    %v6304 = vunpack.c.h.b16 %v6228
    %v6305 = vunpack.c.l.b16 %v6229
    %v6306 = vunpack.c.h.b16 %v6229
    %v6307 = vunpack.c.l.b16 %v6230
    %v6308 = vunpack.c.h.b16 %v6230
    %v6309 = vunpack.c.l.b16 %v6231
    %v6310 = vunpack.c.h.b16 %v6231
    %v6311 = vunpack.c.l.b16 %v6232
    %v6312 = vunpack.c.h.b16 %v6232
    %v6313 = vunpack.c.l.b16 %v6233
    %v6314 = vunpack.c.h.b16 %v6233
    %v6315 = vunpack.c.l.b16 %v6234
    %v6316 = vunpack.c.h.b16 %v6234
    %v6317 = vunpack.c.l.b16 %v6235
    %v6318 = vunpack.c.h.b16 %v6235
    %v6319 = vunpack.c.l.b16 %v6236
    %v6320 = vunpack.c.h.b16 %v6236
    %v6321 = vunpack.c.l.b16 %v6237
    %v6322 = vunpack.c.h.b16 %v6237
    %v6323 = vunpack.c.l.b16 %v6238
    %v6324 = vunpack.c.h.b16 %v6238
    %v6325 = vunpack.c.l.b16 %v6239
    %v6326 = vunpack.c.h.b16 %v6239
    %v6327 = vunpack.c.l.b16 %v6240
    %v6328 = vunpack.c.h.b16 %v6240
    %v6329 = vunpack.c.l.b16 %v6241
    %v6330 = vunpack.c.h.b16 %v6241
    %v6331 = vunpack.c.l.b16 %v6242
    %v6332 = vunpack.c.h.b16 %v6242
    %v6333 = vunpack.c.l.b16 %v6243
    %v6334 = vunpack.c.h.b16 %v6243
    %v6335 = vunpack.c.l.b16 %v6244
    %v6336 = vunpack.c.h.b16 %v6244
    %v6337 = vunpack.c.l.b16 %v6245
    %v6338 = vunpack.c.h.b16 %v6245
    %v6339 = vunpack.c.l.b16 %v6246
    %v6340 = vunpack.c.h.b16 %v6246
    %v6341 = vunpack.c.l.b16 %v6247
    %v6342 = vunpack.c.h.b16 %v6247
    %v6343 = vunpack.c.l.b16 %v6248
    %v6344 = vunpack.c.h.b16 %v6248
    %v6345 = vpack.c.b16 %v6285, %v6281
    %v6346 = vpack.c.b16 %v6286, %v6282
    %v6347 = vpack.c.b16 %v6287, %v6283
    %v6348 = vpack.c.b16 %v6288, %v6284
    %v6349 = vpack.c.b16 %v6293, %v6289
    %v6350 = vpack.c.b16 %v6294, %v6290
    %v6351 = vpack.c.b16 %v6295, %v6291
    %v6352 = vpack.c.b16 %v6296, %v6292
    %v6353 = vpack.c.b16 %v6301, %v6297
    %v6354 = vpack.c.b16 %v6302, %v6298
    %v6355 = vpack.c.b16 %v6303, %v6299
    %v6356 = vpack.c.b16 %v6304, %v6300
    %v6357 = vpack.c.b16 %v6309, %v6305
    %v6358 = vpack.c.b16 %v6310, %v6306
    %v6359 = vpack.c.b16 %v6311, %v6307
    %v6360 = vpack.c.b16 %v6312, %v6308
    %v6361 = vpack.c.b16 %v6317, %v6313
    %v6362 = vpack.c.b16 %v6318, %v6314
    %v6363 = vpack.c.b16 %v6319, %v6315
    %v6364 = vpack.c.b16 %v6320, %v6316
    %v6365 = vpack.c.b16 %v6325, %v6321
    %v6366 = vpack.c.b16 %v6326, %v6322
    %v6367 = vpack.c.b16 %v6327, %v6323
    %v6368 = vpack.c.b16 %v6328, %v6324
    %v6369 = vpack.c.b16 %v6333, %v6329
    %v6370 = vpack.c.b16 %v6334, %v6330
    %v6371 = vpack.c.b16 %v6335, %v6331
    %v6372 = vpack.c.b16 %v6336, %v6332
    %v6373 = vpack.c.b16 %v6341, %v6337
    %v6374 = vpack.c.b16 %v6342, %v6338
    %v6375 = vpack.c.b16 %v6343, %v6339
    %v6376 = vpack.c.b16 %v6344, %v6340
    %6409 = vmatprep.subr.bf16.mxu0 %v6346
    %6410 = vmatpush1.bf16.msra.mxu0 %v6345
    %6411 = vmatprep.subr.bf16.mxu0 %v6350
    %6412 = vmatpush1.bf16.msra.mxu0 %v6349
    %6413 = vmatprep.subr.bf16.mxu0 %v6354
    %6414 = vmatpush1.bf16.msra.mxu0 %v6353
    %6415 = vmatprep.subr.bf16.mxu0 %v6358
    %6416 = vmatpush1.bf16.msra.mxu0 %v6357
    %6417 = vmatprep.subr.bf16.mxu0 %v6362
    %6418 = vmatpush1.bf16.msra.mxu0 %v6361
    %6419 = vmatprep.subr.bf16.mxu0 %v6366
    %6420 = vmatpush1.bf16.msra.mxu0 %v6365
    %6421 = vmatprep.subr.bf16.mxu0 %v6370
    %6422 = vmatpush1.bf16.msra.mxu0 %v6369
    %6423 = vmatprep.subr.bf16.mxu0 %v6374
    %6424 = vmatpush1.bf16.msra.mxu0 %v6373
    %6425 = vmatprep.subr.bf16.mxu0 0
    %6426 = vmatpush1.bf16.msra.mxu0 0
    %6427 = vmatprep.subr.bf16.mxu0 0
    %6428 = vmatpush1.bf16.msra.mxu0 0
    %6429 = vmatprep.subr.bf16.mxu0 0
    %6430 = vmatpush1.bf16.msra.mxu0 0
    %6431 = vmatprep.subr.bf16.mxu0 0
    %6432 = vmatpush1.bf16.msra.mxu0 0
    %6433 = vmatprep.subr.bf16.mxu0 0
    %6434 = vmatpush1.bf16.msra.mxu0 0
    %6435 = vmatprep.subr.bf16.mxu0 0
    %6436 = vmatpush1.bf16.msra.mxu0 0
    %6437 = vmatprep.subr.bf16.mxu0 0
    %6438 = vmatpush1.bf16.msra.mxu0 0
    %6439 = vmatprep.subr.bf16.mxu0 0
    %6440 = vmatpush1.bf16.msra.mxu0 0
    %6441 = vmatprep.mubr.bf16.mxu0 0
    %6442 = vmatmul.mubr.bf16.gmra.mrb[0].mxu0 %v6216
    %v6443 = vpop.f32.mrb[0].mxu0
    %v6444 = vadd.f32 0.0, %v6443
    %v6445 = vpop.f32.mrb[0].mxu0
    %v6446 = vadd.f32 0.0, %v6445
    %v6447 = vpop.f32.mrb[0].mxu0
    %v6448 = vpop.f32.mrb[0].mxu0
    %6449 = vdwg.mxu0
    %6450 = vmatprep.subr.bf16.mxu0 %v6348
    %6451 = vmatpush1.bf16.msra.mxu0 %v6347
    %6452 = vmatprep.subr.bf16.mxu0 %v6352
    %6453 = vmatpush1.bf16.msra.mxu0 %v6351
    %6454 = vmatprep.subr.bf16.mxu0 %v6356
    %6455 = vmatpush1.bf16.msra.mxu0 %v6355
    %6456 = vmatprep.subr.bf16.mxu0 %v6360
    %6457 = vmatpush1.bf16.msra.mxu0 %v6359
    %6458 = vmatprep.subr.bf16.mxu0 %v6364
    %6459 = vmatpush1.bf16.msra.mxu0 %v6363
    %6460 = vmatprep.subr.bf16.mxu0 %v6368
    %6461 = vmatpush1.bf16.msra.mxu0 %v6367
    %6462 = vmatprep.subr.bf16.mxu0 %v6372
    %6463 = vmatpush1.bf16.msra.mxu0 %v6371
    %6464 = vmatprep.subr.bf16.mxu0 %v6376
    %6465 = vmatpush1.bf16.msra.mxu0 %v6375
    %6466 = vmatprep.subr.bf16.mxu0 0
    %6467 = vmatpush1.bf16.msra.mxu0 0
    %6468 = vmatprep.subr.bf16.mxu0 0
    %6469 = vmatpush1.bf16.msra.mxu0 0
    %6470 = vmatprep.subr.bf16.mxu0 0
    %6471 = vmatpush1.bf16.msra.mxu0 0
    %6472 = vmatprep.subr.bf16.mxu0 0
    %6473 = vmatpush1.bf16.msra.mxu0 0
    %6474 = vmatprep.subr.bf16.mxu0 0
    %6475 = vmatpush1.bf16.msra.mxu0 0
    %6476 = vmatprep.subr.bf16.mxu0 0
    %6477 = vmatpush1.bf16.msra.mxu0 0
    %6478 = vmatprep.subr.bf16.mxu0 0
    %6479 = vmatpush1.bf16.msra.mxu0 0
    %6480 = vmatprep.subr.bf16.mxu0 0
    %6481 = vmatpush1.bf16.msra.mxu0 0
    %6482 = vmatprep.mubr.bf16.mxu0 0
    %6483 = vmatmul.mubr.bf16.gmra.mrb[0].mxu0 %v6216
    %v6484 = vpop.f32.mrb[0].mxu0
    %v6485 = vadd.f32 0.0, %v6484
    %v6486 = vpop.f32.mrb[0].mxu0
    %v6487 = vadd.f32 0.0, %v6486
    %v6488 = vpop.f32.mrb[0].mxu0
    %v6489 = vpop.f32.mrb[0].mxu0
    %6490 = vdwg.mxu0
    %v6523 = vunpack.c.l.b16 %v6184
    %v6524 = vunpack.c.h.b16 %v6184
    %v6525 = vunpack.c.l.b16 %v6185
    %v6526 = vunpack.c.h.b16 %v6185
    %v6527 = vunpack.c.l.b16 %v6186
    %v6528 = vunpack.c.h.b16 %v6186
    %v6529 = vunpack.c.l.b16 %v6187
    %v6530 = vunpack.c.h.b16 %v6187
    %v6531 = vunpack.c.l.b16 %v6188
    %v6532 = vunpack.c.h.b16 %v6188
    %v6533 = vunpack.c.l.b16 %v6189
    %v6534 = vunpack.c.h.b16 %v6189
    %v6535 = vunpack.c.l.b16 %v6190
    %v6536 = vunpack.c.h.b16 %v6190
    %v6537 = vunpack.c.l.b16 %v6191
    %v6538 = vunpack.c.h.b16 %v6191
    %v6539 = vunpack.c.l.b16 %v6192
    %v6540 = vunpack.c.h.b16 %v6192
    %v6541 = vunpack.c.l.b16 %v6193
    %v6542 = vunpack.c.h.b16 %v6193
    %v6543 = vunpack.c.l.b16 %v6194
    %v6544 = vunpack.c.h.b16 %v6194
    %v6545 = vunpack.c.l.b16 %v6195
    %v6546 = vunpack.c.h.b16 %v6195
    %v6547 = vunpack.c.l.b16 %v6196
    %v6548 = vunpack.c.h.b16 %v6196
    %v6549 = vunpack.c.l.b16 %v6197
    %v6550 = vunpack.c.h.b16 %v6197
    %v6551 = vunpack.c.l.b16 %v6198
    %v6552 = vunpack.c.h.b16 %v6198
    %v6553 = vunpack.c.l.b16 %v6199
    %v6554 = vunpack.c.h.b16 %v6199
    %v6555 = vunpack.c.l.b16 %v6200
    %v6556 = vunpack.c.h.b16 %v6200
    %v6557 = vunpack.c.l.b16 %v6201
    %v6558 = vunpack.c.h.b16 %v6201
    %v6559 = vunpack.c.l.b16 %v6202
    %v6560 = vunpack.c.h.b16 %v6202
    %v6561 = vunpack.c.l.b16 %v6203
    %v6562 = vunpack.c.h.b16 %v6203
    %v6563 = vunpack.c.l.b16 %v6204
    %v6564 = vunpack.c.h.b16 %v6204
    %v6565 = vunpack.c.l.b16 %v6205
    %v6566 = vunpack.c.h.b16 %v6205
    %v6567 = vunpack.c.l.b16 %v6206
    %v6568 = vunpack.c.h.b16 %v6206
    %v6569 = vunpack.c.l.b16 %v6207
    %v6570 = vunpack.c.h.b16 %v6207
    %v6571 = vunpack.c.l.b16 %v6208
    %v6572 = vunpack.c.h.b16 %v6208
    %v6573 = vunpack.c.l.b16 %v6209
    %v6574 = vunpack.c.h.b16 %v6209
    %v6575 = vunpack.c.l.b16 %v6210
    %v6576 = vunpack.c.h.b16 %v6210
    %v6577 = vunpack.c.l.b16 %v6211
    %v6578 = vunpack.c.h.b16 %v6211
    %v6579 = vunpack.c.l.b16 %v6212
    %v6580 = vunpack.c.h.b16 %v6212
    %v6581 = vunpack.c.l.b16 %v6213
    %v6582 = vunpack.c.h.b16 %v6213
    %v6583 = vunpack.c.l.b16 %v6214
    %v6584 = vunpack.c.h.b16 %v6214
    %v6585 = vunpack.c.l.b16 %v6215
    %v6586 = vunpack.c.h.b16 %v6215
    %v6587 = vpack.c.b16 %v6527, %v6523
    %v6588 = vpack.c.b16 %v6528, %v6524
    %v6589 = vpack.c.b16 %v6529, %v6525
    %v6590 = vpack.c.b16 %v6530, %v6526
    %v6591 = vpack.c.b16 %v6535, %v6531
    %v6592 = vpack.c.b16 %v6536, %v6532
    %v6593 = vpack.c.b16 %v6537, %v6533
    %v6594 = vpack.c.b16 %v6538, %v6534
    %v6595 = vpack.c.b16 %v6543, %v6539
    %v6596 = vpack.c.b16 %v6544, %v6540
    %v6597 = vpack.c.b16 %v6545, %v6541
    %v6598 = vpack.c.b16 %v6546, %v6542
    %v6599 = vpack.c.b16 %v6551, %v6547
    %v6600 = vpack.c.b16 %v6552, %v6548
    %v6601 = vpack.c.b16 %v6553, %v6549
    %v6602 = vpack.c.b16 %v6554, %v6550
    %v6603 = vpack.c.b16 %v6559, %v6555
    %v6604 = vpack.c.b16 %v6560, %v6556
    %v6605 = vpack.c.b16 %v6561, %v6557
    %v6606 = vpack.c.b16 %v6562, %v6558
    %v6607 = vpack.c.b16 %v6567, %v6563
    %v6608 = vpack.c.b16 %v6568, %v6564
    %v6609 = vpack.c.b16 %v6569, %v6565
    %v6610 = vpack.c.b16 %v6570, %v6566
    %v6611 = vpack.c.b16 %v6575, %v6571
    %v6612 = vpack.c.b16 %v6576, %v6572
    %v6613 = vpack.c.b16 %v6577, %v6573
    %v6614 = vpack.c.b16 %v6578, %v6574
    %v6615 = vpack.c.b16 %v6583, %v6579
    %v6616 = vpack.c.b16 %v6584, %v6580
    %v6617 = vpack.c.b16 %v6585, %v6581
    %v6618 = vpack.c.b16 %v6586, %v6582
    %6651 = vmatprep.subr.bf16.mxu0 %v6588
    %6652 = vmatpush1.bf16.msra.mxu0 %v6587
    %6653 = vmatprep.subr.bf16.mxu0 %v6592
    %6654 = vmatpush1.bf16.msra.mxu0 %v6591
    %6655 = vmatprep.subr.bf16.mxu0 %v6596
    %6656 = vmatpush1.bf16.msra.mxu0 %v6595
    %6657 = vmatprep.subr.bf16.mxu0 %v6600
    %6658 = vmatpush1.bf16.msra.mxu0 %v6599
    %6659 = vmatprep.subr.bf16.mxu0 %v6604
    %6660 = vmatpush1.bf16.msra.mxu0 %v6603
    %6661 = vmatprep.subr.bf16.mxu0 %v6608
    %6662 = vmatpush1.bf16.msra.mxu0 %v6607
    %6663 = vmatprep.subr.bf16.mxu0 %v6612
    %6664 = vmatpush1.bf16.msra.mxu0 %v6611
    %6665 = vmatprep.subr.bf16.mxu0 %v6616
    %6666 = vmatpush1.bf16.msra.mxu0 %v6615
    %6667 = vmatprep.subr.bf16.mxu0 0
    %6668 = vmatpush1.bf16.msra.mxu0 0
    %6669 = vmatprep.subr.bf16.mxu0 0
    %6670 = vmatpush1.bf16.msra.mxu0 0
    %6671 = vmatprep.subr.bf16.mxu0 0
    %6672 = vmatpush1.bf16.msra.mxu0 0
    %6673 = vmatprep.subr.bf16.mxu0 0
    %6674 = vmatpush1.bf16.msra.mxu0 0
    %6675 = vmatprep.subr.bf16.mxu0 0
    %6676 = vmatpush1.bf16.msra.mxu0 0
    %6677 = vmatprep.subr.bf16.mxu0 0
    %6678 = vmatpush1.bf16.msra.mxu0 0
    %6679 = vmatprep.subr.bf16.mxu0 0
    %6680 = vmatpush1.bf16.msra.mxu0 0
    %6681 = vmatprep.subr.bf16.mxu0 0
    %6682 = vmatpush1.bf16.msra.mxu0 0
    %6683 = vmatprep.mubr.bf16.mxu0 0
    %6684 = vmatmul.mubr.bf16.gmra.mrb[0].mxu0 %v6183
    %v6685 = vpop.f32.mrb[0].mxu0
    %v6686 = vadd.f32 %v6444, %v6685
    %v6687 = vpop.f32.mrb[0].mxu0
    %v6688 = vadd.f32 %v6446, %v6687
    %v6689 = vpop.f32.mrb[0].mxu0
    %v6690 = vpop.f32.mrb[0].mxu0
    %6691 = vdwg.mxu0
    %6692 = vmatprep.subr.bf16.mxu0 %v6590
    %6693 = vmatpush1.bf16.msra.mxu0 %v6589
    %6694 = vmatprep.subr.bf16.mxu0 %v6594
    %6695 = vmatpush1.bf16.msra.mxu0 %v6593
    %6696 = vmatprep.subr.bf16.mxu0 %v6598
    %6697 = vmatpush1.bf16.msra.mxu0 %v6597
    %6698 = vmatprep.subr.bf16.mxu0 %v6602
    %6699 = vmatpush1.bf16.msra.mxu0 %v6601
    %6700 = vmatprep.subr.bf16.mxu0 %v6606
    %6701 = vmatpush1.bf16.msra.mxu0 %v6605
    %6702 = vmatprep.subr.bf16.mxu0 %v6610
    %6703 = vmatpush1.bf16.msra.mxu0 %v6609
    %6704 = vmatprep.subr.bf16.mxu0 %v6614
    %6705 = vmatpush1.bf16.msra.mxu0 %v6613
    %6706 = vmatprep.subr.bf16.mxu0 %v6618
    %6707 = vmatpush1.bf16.msra.mxu0 %v6617
    %6708 = vmatprep.subr.bf16.mxu0 0
    %6709 = vmatpush1.bf16.msra.mxu0 0
    %6710 = vmatprep.subr.bf16.mxu0 0
    %6711 = vmatpush1.bf16.msra.mxu0 0
    %6712 = vmatprep.subr.bf16.mxu0 0
    %6713 = vmatpush1.bf16.msra.mxu0 0
    %6714 = vmatprep.subr.bf16.mxu0 0
    %6715 = vmatpush1.bf16.msra.mxu0 0
    %6716 = vmatprep.subr.bf16.mxu0 0
    %6717 = vmatpush1.bf16.msra.mxu0 0
    %6718 = vmatprep.subr.bf16.mxu0 0
    %6719 = vmatpush1.bf16.msra.mxu0 0
    %6720 = vmatprep.subr.bf16.mxu0 0
    %6721 = vmatpush1.bf16.msra.mxu0 0
    %6722 = vmatprep.subr.bf16.mxu0 0
    %6723 = vmatpush1.bf16.msra.mxu0 0
    %6724 = vmatprep.mubr.bf16.mxu0 0
    %6725 = vmatmul.mubr.bf16.gmra.mrb[0].mxu0 %v6183
    %v6726 = vpop.f32.mrb[0].mxu0
    %v6727 = vadd.f32 %v6485, %v6726
    %v6728 = vpop.f32.mrb[0].mxu0
    %v6729 = vadd.f32 %v6487, %v6728
    %v6730 = vpop.f32.mrb[0].mxu0
    %v6731 = vpop.f32.mrb[0].mxu0
    %6732 = vdwg.mxu0
    %v6733 = vadd.f32 %v6686, %v150
    %v6734 = vadd.f32 %v6688, %v154
    %v6735 = vadd.f32 %v6727, %v158
    %v6736 = vadd.f32 %v6729, %v162
    %v6737 = vld [vmem:[%s1360] sm:$0xff]
    %v6738 = vxor.u32 %v6733, 2147483648
    %v6739 = vmul.f32 %v6738, 1.442695
    %v6740 = vpow.pop %v6739
    %v6741 = vadd.f32 %v6740, 1.0
    %v6742 = vrcp.pop %v6741
    %v6743 = vmul.f32 1.0, %v6742
    %v6744 = vxor.u32 %v6734, 2147483648
    %v6745 = vmul.f32 %v6744, 1.442695
    %v6746 = vpow.pop %v6745
    %v6747 = vadd.f32 %v6746, 1.0
    %v6748 = vrcp.pop %v6747
    %v6749 = vmul.f32 1.0, %v6748
    %v6750 = vtanh.pop %v6735
    %v6751 = vxor.u32 %v6736, 2147483648
    %v6752 = vmul.f32 %v6751, 1.442695
    %v6753 = vpow.pop %v6752
    %v6754 = vadd.f32 %v6753, 1.0
    %v6755 = vrcp.pop %v6754
    %v6756 = vmul.f32 1.0, %v6755
    %v6757 = vmul.f32 %v6749, %v6737
    %v6758 = vmul.f32 %v6743, %v6750
    %v6759 = vadd.f32 %v6757, %v6758
    %v6760 = vtanh.pop %v6759
    %v6761 = vmul.f32 %v6756, %v6760
    %6762 = vst [vmem:[%s804] sm:$0xff] %v6761
    %6763 = vst [vmem:[%s1360] sm:$0xff] %v6759
    %s6764 = smul.u32 7, 4
    %s6765 = smul.addr %s6764, 8
    %s6766 = scalar_lea.vmem [#allocation2], %s6765
    %v6767 = vld [vmem:[%s6766] sm:$0xff]
    %v6768 = vld [vmem:[%s6766 + $0x8] sm:$0xff]
    %v6769 = vld [vmem:[%s6766 + $0x10] sm:$0xff]
    %v6770 = vld [vmem:[%s6766 + $0x18] sm:$0xff]
    %v6771 = vld [vmem:[#allocation16] sm:$0xff]
    %v6772 = vpack.c.bf16 %v6771, %v6771
    %v6773 = vld [vmem:[#allocation9] sm:$0xff]
    %v6774 = vld [vmem:[#allocation9 + $0x8] sm:$0xff]
    %v6775 = vld [vmem:[#allocation9 + $0x10] sm:$0xff]
    %v6776 = vld [vmem:[#allocation9 + $0x18] sm:$0xff]
    %v6777 = vld [vmem:[#allocation9 + $0x20] sm:$0xff]
    %v6778 = vld [vmem:[#allocation9 + $0x28] sm:$0xff]
    %v6779 = vld [vmem:[#allocation9 + $0x30] sm:$0xff]
    %v6780 = vld [vmem:[#allocation9 + $0x38] sm:$0xff]
    %v6781 = vld [vmem:[#allocation9 + $0x40] sm:$0xff]
    %v6782 = vld [vmem:[#allocation9 + $0x48] sm:$0xff]
    %v6783 = vld [vmem:[#allocation9 + $0x50] sm:$0xff]
    %v6784 = vld [vmem:[#allocation9 + $0x58] sm:$0xff]
    %v6785 = vld [vmem:[#allocation9 + $0x60] sm:$0xff]
    %v6786 = vld [vmem:[#allocation9 + $0x68] sm:$0xff]
    %v6787 = vld [vmem:[#allocation9 + $0x70] sm:$0xff]
    %v6788 = vld [vmem:[#allocation9 + $0x78] sm:$0xff]
    %v6789 = vld [vmem:[#allocation9 + $0x80] sm:$0xff]
    %v6790 = vld [vmem:[#allocation9 + $0x88] sm:$0xff]
    %v6791 = vld [vmem:[#allocation9 + $0x90] sm:$0xff]
    %v6792 = vld [vmem:[#allocation9 + $0x98] sm:$0xff]
    %v6793 = vld [vmem:[#allocation9 + $0xa0] sm:$0xff]
    %v6794 = vld [vmem:[#allocation9 + $0xa8] sm:$0xff]
    %v6795 = vld [vmem:[#allocation9 + $0xb0] sm:$0xff]
    %v6796 = vld [vmem:[#allocation9 + $0xb8] sm:$0xff]
    %v6797 = vld [vmem:[#allocation9 + $0xc0] sm:$0xff]
    %v6798 = vld [vmem:[#allocation9 + $0xc8] sm:$0xff]
    %v6799 = vld [vmem:[#allocation9 + $0xd0] sm:$0xff]
    %v6800 = vld [vmem:[#allocation9 + $0xd8] sm:$0xff]
    %v6801 = vld [vmem:[#allocation9 + $0xe0] sm:$0xff]
    %v6802 = vld [vmem:[#allocation9 + $0xe8] sm:$0xff]
    %v6803 = vld [vmem:[#allocation9 + $0xf0] sm:$0xff]
    %v6804 = vld [vmem:[#allocation9 + $0xf8] sm:$0xff]
    %v6837 = vunpack.c.l.b16 %v6773
    %v6838 = vunpack.c.h.b16 %v6773
    %v6839 = vunpack.c.l.b16 %v6774
    %v6840 = vunpack.c.h.b16 %v6774
    %v6841 = vunpack.c.l.b16 %v6775
    %v6842 = vunpack.c.h.b16 %v6775
    %v6843 = vunpack.c.l.b16 %v6776
    %v6844 = vunpack.c.h.b16 %v6776
    %v6845 = vunpack.c.l.b16 %v6777
    %v6846 = vunpack.c.h.b16 %v6777
    %v6847 = vunpack.c.l.b16 %v6778
    %v6848 = vunpack.c.h.b16 %v6778
    %v6849 = vunpack.c.l.b16 %v6779
    %v6850 = vunpack.c.h.b16 %v6779
    %v6851 = vunpack.c.l.b16 %v6780
    %v6852 = vunpack.c.h.b16 %v6780
    %v6853 = vunpack.c.l.b16 %v6781
    %v6854 = vunpack.c.h.b16 %v6781
    %v6855 = vunpack.c.l.b16 %v6782
    %v6856 = vunpack.c.h.b16 %v6782
    %v6857 = vunpack.c.l.b16 %v6783
    %v6858 = vunpack.c.h.b16 %v6783
    %v6859 = vunpack.c.l.b16 %v6784
    %v6860 = vunpack.c.h.b16 %v6784
    %v6861 = vunpack.c.l.b16 %v6785
    %v6862 = vunpack.c.h.b16 %v6785
    %v6863 = vunpack.c.l.b16 %v6786
    %v6864 = vunpack.c.h.b16 %v6786
    %v6865 = vunpack.c.l.b16 %v6787
    %v6866 = vunpack.c.h.b16 %v6787
    %v6867 = vunpack.c.l.b16 %v6788
    %v6868 = vunpack.c.h.b16 %v6788
    %v6869 = vunpack.c.l.b16 %v6789
    %v6870 = vunpack.c.h.b16 %v6789
    %v6871 = vunpack.c.l.b16 %v6790
    %v6872 = vunpack.c.h.b16 %v6790
    %v6873 = vunpack.c.l.b16 %v6791
    %v6874 = vunpack.c.h.b16 %v6791
    %v6875 = vunpack.c.l.b16 %v6792
    %v6876 = vunpack.c.h.b16 %v6792
    %v6877 = vunpack.c.l.b16 %v6793
    %v6878 = vunpack.c.h.b16 %v6793
    %v6879 = vunpack.c.l.b16 %v6794
    %v6880 = vunpack.c.h.b16 %v6794
    %v6881 = vunpack.c.l.b16 %v6795
    %v6882 = vunpack.c.h.b16 %v6795
    %v6883 = vunpack.c.l.b16 %v6796
    %v6884 = vunpack.c.h.b16 %v6796
    %v6885 = vunpack.c.l.b16 %v6797
    %v6886 = vunpack.c.h.b16 %v6797
    %v6887 = vunpack.c.l.b16 %v6798
    %v6888 = vunpack.c.h.b16 %v6798
    %v6889 = vunpack.c.l.b16 %v6799
    %v6890 = vunpack.c.h.b16 %v6799
    %v6891 = vunpack.c.l.b16 %v6800
    %v6892 = vunpack.c.h.b16 %v6800
    %v6893 = vunpack.c.l.b16 %v6801
    %v6894 = vunpack.c.h.b16 %v6801
    %v6895 = vunpack.c.l.b16 %v6802
    %v6896 = vunpack.c.h.b16 %v6802
    %v6897 = vunpack.c.l.b16 %v6803
    %v6898 = vunpack.c.h.b16 %v6803
    %v6899 = vunpack.c.l.b16 %v6804
    %v6900 = vunpack.c.h.b16 %v6804
    %v6901 = vpack.c.b16 %v6841, %v6837
    %v6902 = vpack.c.b16 %v6842, %v6838
    %v6903 = vpack.c.b16 %v6843, %v6839
    %v6904 = vpack.c.b16 %v6844, %v6840
    %v6905 = vpack.c.b16 %v6849, %v6845
    %v6906 = vpack.c.b16 %v6850, %v6846
    %v6907 = vpack.c.b16 %v6851, %v6847
    %v6908 = vpack.c.b16 %v6852, %v6848
    %v6909 = vpack.c.b16 %v6857, %v6853
    %v6910 = vpack.c.b16 %v6858, %v6854
    %v6911 = vpack.c.b16 %v6859, %v6855
    %v6912 = vpack.c.b16 %v6860, %v6856
    %v6913 = vpack.c.b16 %v6865, %v6861
    %v6914 = vpack.c.b16 %v6866, %v6862
    %v6915 = vpack.c.b16 %v6867, %v6863
    %v6916 = vpack.c.b16 %v6868, %v6864
    %v6917 = vpack.c.b16 %v6873, %v6869
    %v6918 = vpack.c.b16 %v6874, %v6870
    %v6919 = vpack.c.b16 %v6875, %v6871
    %v6920 = vpack.c.b16 %v6876, %v6872
    %v6921 = vpack.c.b16 %v6881, %v6877
    %v6922 = vpack.c.b16 %v6882, %v6878
    %v6923 = vpack.c.b16 %v6883, %v6879
    %v6924 = vpack.c.b16 %v6884, %v6880
    %v6925 = vpack.c.b16 %v6889, %v6885
    %v6926 = vpack.c.b16 %v6890, %v6886
    %v6927 = vpack.c.b16 %v6891, %v6887
    %v6928 = vpack.c.b16 %v6892, %v6888
    %v6929 = vpack.c.b16 %v6897, %v6893
    %v6930 = vpack.c.b16 %v6898, %v6894
    %v6931 = vpack.c.b16 %v6899, %v6895
    %v6932 = vpack.c.b16 %v6900, %v6896
    %6965 = vmatprep.subr.bf16.mxu0 %v6902
    %6966 = vmatpush1.bf16.msra.mxu0 %v6901
    %6967 = vmatprep.subr.bf16.mxu0 %v6906
    %6968 = vmatpush1.bf16.msra.mxu0 %v6905
    %6969 = vmatprep.subr.bf16.mxu0 %v6910
    %6970 = vmatpush1.bf16.msra.mxu0 %v6909
    %6971 = vmatprep.subr.bf16.mxu0 %v6914
    %6972 = vmatpush1.bf16.msra.mxu0 %v6913
    %6973 = vmatprep.subr.bf16.mxu0 %v6918
    %6974 = vmatpush1.bf16.msra.mxu0 %v6917
    %6975 = vmatprep.subr.bf16.mxu0 %v6922
    %6976 = vmatpush1.bf16.msra.mxu0 %v6921
    %6977 = vmatprep.subr.bf16.mxu0 %v6926
    %6978 = vmatpush1.bf16.msra.mxu0 %v6925
    %6979 = vmatprep.subr.bf16.mxu0 %v6930
    %6980 = vmatpush1.bf16.msra.mxu0 %v6929
    %6981 = vmatprep.subr.bf16.mxu0 0
    %6982 = vmatpush1.bf16.msra.mxu0 0
    %6983 = vmatprep.subr.bf16.mxu0 0
    %6984 = vmatpush1.bf16.msra.mxu0 0
    %6985 = vmatprep.subr.bf16.mxu0 0
    %6986 = vmatpush1.bf16.msra.mxu0 0
    %6987 = vmatprep.subr.bf16.mxu0 0
    %6988 = vmatpush1.bf16.msra.mxu0 0
    %6989 = vmatprep.subr.bf16.mxu0 0
    %6990 = vmatpush1.bf16.msra.mxu0 0
    %6991 = vmatprep.subr.bf16.mxu0 0
    %6992 = vmatpush1.bf16.msra.mxu0 0
    %6993 = vmatprep.subr.bf16.mxu0 0
    %6994 = vmatpush1.bf16.msra.mxu0 0
    %6995 = vmatprep.subr.bf16.mxu0 0
    %6996 = vmatpush1.bf16.msra.mxu0 0
    %6997 = vmatprep.mubr.bf16.mxu0 0
    %6998 = vmatmul.mubr.bf16.gmra.mrb[0].mxu0 %v6772
    %v6999 = vpop.f32.mrb[0].mxu0
    %v7000 = vadd.f32 0.0, %v6999
    %v7001 = vpop.f32.mrb[0].mxu0
    %v7002 = vadd.f32 0.0, %v7001
    %v7003 = vpop.f32.mrb[0].mxu0
    %v7004 = vpop.f32.mrb[0].mxu0
    %7005 = vdwg.mxu0
    %7006 = vmatprep.subr.bf16.mxu0 %v6904
    %7007 = vmatpush1.bf16.msra.mxu0 %v6903
    %7008 = vmatprep.subr.bf16.mxu0 %v6908
    %7009 = vmatpush1.bf16.msra.mxu0 %v6907
    %7010 = vmatprep.subr.bf16.mxu0 %v6912
    %7011 = vmatpush1.bf16.msra.mxu0 %v6911
    %7012 = vmatprep.subr.bf16.mxu0 %v6916
    %7013 = vmatpush1.bf16.msra.mxu0 %v6915
    %7014 = vmatprep.subr.bf16.mxu0 %v6920
    %7015 = vmatpush1.bf16.msra.mxu0 %v6919
    %7016 = vmatprep.subr.bf16.mxu0 %v6924
    %7017 = vmatpush1.bf16.msra.mxu0 %v6923
    %7018 = vmatprep.subr.bf16.mxu0 %v6928
    %7019 = vmatpush1.bf16.msra.mxu0 %v6927
    %7020 = vmatprep.subr.bf16.mxu0 %v6932
    %7021 = vmatpush1.bf16.msra.mxu0 %v6931
    %7022 = vmatprep.subr.bf16.mxu0 0
    %7023 = vmatpush1.bf16.msra.mxu0 0
    %7024 = vmatprep.subr.bf16.mxu0 0
    %7025 = vmatpush1.bf16.msra.mxu0 0
    %7026 = vmatprep.subr.bf16.mxu0 0
    %7027 = vmatpush1.bf16.msra.mxu0 0
    %7028 = vmatprep.subr.bf16.mxu0 0
    %7029 = vmatpush1.bf16.msra.mxu0 0
    %7030 = vmatprep.subr.bf16.mxu0 0
    %7031 = vmatpush1.bf16.msra.mxu0 0
    %7032 = vmatprep.subr.bf16.mxu0 0
    %7033 = vmatpush1.bf16.msra.mxu0 0
    %7034 = vmatprep.subr.bf16.mxu0 0
    %7035 = vmatpush1.bf16.msra.mxu0 0
    %7036 = vmatprep.subr.bf16.mxu0 0
    %7037 = vmatpush1.bf16.msra.mxu0 0
    %7038 = vmatprep.mubr.bf16.mxu0 0
    %7039 = vmatmul.mubr.bf16.gmra.mrb[0].mxu0 %v6772
    %v7040 = vpop.f32.mrb[0].mxu0
    %v7041 = vadd.f32 0.0, %v7040
    %v7042 = vpop.f32.mrb[0].mxu0
    %v7043 = vadd.f32 0.0, %v7042
    %v7044 = vpop.f32.mrb[0].mxu0
    %v7045 = vpop.f32.mrb[0].mxu0
    %7046 = vdwg.mxu0
    %v7047 = vadd.f32 %v6767, %v7000
    %v7048 = vadd.f32 %v6768, %v7002
    %v7049 = vadd.f32 %v6769, %v7041
    %v7050 = vadd.f32 %v6770, %v7043
    %v7051 = vld [vmem:[#allocation17] sm:$0xff]
    %v7052 = vxor.u32 %v7047, 2147483648
    %v7053 = vmul.f32 %v7052, 1.442695
    %v7054 = vpow.pop %v7053
    %v7055 = vadd.f32 %v7054, 1.0
    %v7056 = vrcp.pop %v7055
    %v7057 = vmul.f32 1.0, %v7056
    %v7058 = vxor.u32 %v7048, 2147483648
    %v7059 = vmul.f32 %v7058, 1.442695
    %v7060 = vpow.pop %v7059
    %v7061 = vadd.f32 %v7060, 1.0
    %v7062 = vrcp.pop %v7061
    %v7063 = vmul.f32 1.0, %v7062
    %v7064 = vtanh.pop %v7049
    %v7065 = vxor.u32 %v7050, 2147483648
    %v7066 = vmul.f32 %v7065, 1.442695
    %v7067 = vpow.pop %v7066
    %v7068 = vadd.f32 %v7067, 1.0
    %v7069 = vrcp.pop %v7068
    %v7070 = vmul.f32 1.0, %v7069
    %v7071 = vmul.f32 %v7063, %v7051
    %v7072 = vmul.f32 %v7057, %v7064
    %v7073 = vadd.f32 %v7071, %v7072
    %v7074 = vtanh.pop %v7073
    %v7075 = vmul.f32 %v7070, %v7074
    %7076 = vst [vmem:[#allocation16] sm:$0xff] %v7075
    %7077 = vst [vmem:[#allocation17] sm:$0xff] %v7073
    %v7078 = vld [vmem:[%s804] sm:$0xff]
    %v7079 = vpack.c.bf16 %v7075, %v7075
    %v7080 = vld [vmem:[#allocation12] sm:$0xff]
    %v7081 = vld [vmem:[#allocation12 + $0x8] sm:$0xff]
    %v7082 = vld [vmem:[#allocation12 + $0x10] sm:$0xff]
    %v7083 = vld [vmem:[#allocation12 + $0x18] sm:$0xff]
    %v7084 = vld [vmem:[#allocation12 + $0x20] sm:$0xff]
    %v7085 = vld [vmem:[#allocation12 + $0x28] sm:$0xff]
    %v7086 = vld [vmem:[#allocation12 + $0x30] sm:$0xff]
    %v7087 = vld [vmem:[#allocation12 + $0x38] sm:$0xff]
    %v7088 = vld [vmem:[#allocation12 + $0x40] sm:$0xff]
    %v7089 = vld [vmem:[#allocation12 + $0x48] sm:$0xff]
    %v7090 = vld [vmem:[#allocation12 + $0x50] sm:$0xff]
    %v7091 = vld [vmem:[#allocation12 + $0x58] sm:$0xff]
    %v7092 = vld [vmem:[#allocation12 + $0x60] sm:$0xff]
    %v7093 = vld [vmem:[#allocation12 + $0x68] sm:$0xff]
    %v7094 = vld [vmem:[#allocation12 + $0x70] sm:$0xff]
    %v7095 = vld [vmem:[#allocation12 + $0x78] sm:$0xff]
    %v7096 = vld [vmem:[#allocation12 + $0x80] sm:$0xff]
    %v7097 = vld [vmem:[#allocation12 + $0x88] sm:$0xff]
    %v7098 = vld [vmem:[#allocation12 + $0x90] sm:$0xff]
    %v7099 = vld [vmem:[#allocation12 + $0x98] sm:$0xff]
    %v7100 = vld [vmem:[#allocation12 + $0xa0] sm:$0xff]
    %v7101 = vld [vmem:[#allocation12 + $0xa8] sm:$0xff]
    %v7102 = vld [vmem:[#allocation12 + $0xb0] sm:$0xff]
    %v7103 = vld [vmem:[#allocation12 + $0xb8] sm:$0xff]
    %v7104 = vld [vmem:[#allocation12 + $0xc0] sm:$0xff]
    %v7105 = vld [vmem:[#allocation12 + $0xc8] sm:$0xff]
    %v7106 = vld [vmem:[#allocation12 + $0xd0] sm:$0xff]
    %v7107 = vld [vmem:[#allocation12 + $0xd8] sm:$0xff]
    %v7108 = vld [vmem:[#allocation12 + $0xe0] sm:$0xff]
    %v7109 = vld [vmem:[#allocation12 + $0xe8] sm:$0xff]
    %v7110 = vld [vmem:[#allocation12 + $0xf0] sm:$0xff]
    %v7111 = vld [vmem:[#allocation12 + $0xf8] sm:$0xff]
    %v7112 = vpack.c.bf16 %v7078, %v7078
    %v7113 = vld [vmem:[#allocation13] sm:$0xff]
    %v7114 = vld [vmem:[#allocation13 + $0x8] sm:$0xff]
    %v7115 = vld [vmem:[#allocation13 + $0x10] sm:$0xff]
    %v7116 = vld [vmem:[#allocation13 + $0x18] sm:$0xff]
    %v7117 = vld [vmem:[#allocation13 + $0x20] sm:$0xff]
    %v7118 = vld [vmem:[#allocation13 + $0x28] sm:$0xff]
    %v7119 = vld [vmem:[#allocation13 + $0x30] sm:$0xff]
    %v7120 = vld [vmem:[#allocation13 + $0x38] sm:$0xff]
    %v7121 = vld [vmem:[#allocation13 + $0x40] sm:$0xff]
    %v7122 = vld [vmem:[#allocation13 + $0x48] sm:$0xff]
    %v7123 = vld [vmem:[#allocation13 + $0x50] sm:$0xff]
    %v7124 = vld [vmem:[#allocation13 + $0x58] sm:$0xff]
    %v7125 = vld [vmem:[#allocation13 + $0x60] sm:$0xff]
    %v7126 = vld [vmem:[#allocation13 + $0x68] sm:$0xff]
    %v7127 = vld [vmem:[#allocation13 + $0x70] sm:$0xff]
    %v7128 = vld [vmem:[#allocation13 + $0x78] sm:$0xff]
    %v7129 = vld [vmem:[#allocation13 + $0x80] sm:$0xff]
    %v7130 = vld [vmem:[#allocation13 + $0x88] sm:$0xff]
    %v7131 = vld [vmem:[#allocation13 + $0x90] sm:$0xff]
    %v7132 = vld [vmem:[#allocation13 + $0x98] sm:$0xff]
    %v7133 = vld [vmem:[#allocation13 + $0xa0] sm:$0xff]
    %v7134 = vld [vmem:[#allocation13 + $0xa8] sm:$0xff]
    %v7135 = vld [vmem:[#allocation13 + $0xb0] sm:$0xff]
    %v7136 = vld [vmem:[#allocation13 + $0xb8] sm:$0xff]
    %v7137 = vld [vmem:[#allocation13 + $0xc0] sm:$0xff]
    %v7138 = vld [vmem:[#allocation13 + $0xc8] sm:$0xff]
    %v7139 = vld [vmem:[#allocation13 + $0xd0] sm:$0xff]
    %v7140 = vld [vmem:[#allocation13 + $0xd8] sm:$0xff]
    %v7141 = vld [vmem:[#allocation13 + $0xe0] sm:$0xff]
    %v7142 = vld [vmem:[#allocation13 + $0xe8] sm:$0xff]
    %v7143 = vld [vmem:[#allocation13 + $0xf0] sm:$0xff]
    %v7144 = vld [vmem:[#allocation13 + $0xf8] sm:$0xff]
    %v7177 = vunpack.c.l.b16 %v7113
    %v7178 = vunpack.c.h.b16 %v7113
    %v7179 = vunpack.c.l.b16 %v7114
    %v7180 = vunpack.c.h.b16 %v7114
    %v7181 = vunpack.c.l.b16 %v7115
    %v7182 = vunpack.c.h.b16 %v7115
    %v7183 = vunpack.c.l.b16 %v7116
    %v7184 = vunpack.c.h.b16 %v7116
    %v7185 = vunpack.c.l.b16 %v7117
    %v7186 = vunpack.c.h.b16 %v7117
    %v7187 = vunpack.c.l.b16 %v7118
    %v7188 = vunpack.c.h.b16 %v7118
    %v7189 = vunpack.c.l.b16 %v7119
    %v7190 = vunpack.c.h.b16 %v7119
    %v7191 = vunpack.c.l.b16 %v7120
    %v7192 = vunpack.c.h.b16 %v7120
    %v7193 = vunpack.c.l.b16 %v7121
    %v7194 = vunpack.c.h.b16 %v7121
    %v7195 = vunpack.c.l.b16 %v7122
    %v7196 = vunpack.c.h.b16 %v7122
    %v7197 = vunpack.c.l.b16 %v7123
    %v7198 = vunpack.c.h.b16 %v7123
    %v7199 = vunpack.c.l.b16 %v7124
    %v7200 = vunpack.c.h.b16 %v7124
    %v7201 = vunpack.c.l.b16 %v7125
    %v7202 = vunpack.c.h.b16 %v7125
    %v7203 = vunpack.c.l.b16 %v7126
    %v7204 = vunpack.c.h.b16 %v7126
    %v7205 = vunpack.c.l.b16 %v7127
    %v7206 = vunpack.c.h.b16 %v7127
    %v7207 = vunpack.c.l.b16 %v7128
    %v7208 = vunpack.c.h.b16 %v7128
    %v7209 = vunpack.c.l.b16 %v7129
    %v7210 = vunpack.c.h.b16 %v7129
    %v7211 = vunpack.c.l.b16 %v7130
    %v7212 = vunpack.c.h.b16 %v7130
    %v7213 = vunpack.c.l.b16 %v7131
    %v7214 = vunpack.c.h.b16 %v7131
    %v7215 = vunpack.c.l.b16 %v7132
    %v7216 = vunpack.c.h.b16 %v7132
    %v7217 = vunpack.c.l.b16 %v7133
    %v7218 = vunpack.c.h.b16 %v7133
    %v7219 = vunpack.c.l.b16 %v7134
    %v7220 = vunpack.c.h.b16 %v7134
    %v7221 = vunpack.c.l.b16 %v7135
    %v7222 = vunpack.c.h.b16 %v7135
    %v7223 = vunpack.c.l.b16 %v7136
    %v7224 = vunpack.c.h.b16 %v7136
    %v7225 = vunpack.c.l.b16 %v7137
    %v7226 = vunpack.c.h.b16 %v7137
    %v7227 = vunpack.c.l.b16 %v7138
    %v7228 = vunpack.c.h.b16 %v7138
    %v7229 = vunpack.c.l.b16 %v7139
    %v7230 = vunpack.c.h.b16 %v7139
    %v7231 = vunpack.c.l.b16 %v7140
    %v7232 = vunpack.c.h.b16 %v7140
    %v7233 = vunpack.c.l.b16 %v7141
    %v7234 = vunpack.c.h.b16 %v7141
    %v7235 = vunpack.c.l.b16 %v7142
    %v7236 = vunpack.c.h.b16 %v7142
    %v7237 = vunpack.c.l.b16 %v7143
    %v7238 = vunpack.c.h.b16 %v7143
    %v7239 = vunpack.c.l.b16 %v7144
    %v7240 = vunpack.c.h.b16 %v7144
    %v7241 = vpack.c.b16 %v7181, %v7177
    %v7242 = vpack.c.b16 %v7182, %v7178
    %v7243 = vpack.c.b16 %v7183, %v7179
    %v7244 = vpack.c.b16 %v7184, %v7180
    %v7245 = vpack.c.b16 %v7189, %v7185
    %v7246 = vpack.c.b16 %v7190, %v7186
    %v7247 = vpack.c.b16 %v7191, %v7187
    %v7248 = vpack.c.b16 %v7192, %v7188
    %v7249 = vpack.c.b16 %v7197, %v7193
    %v7250 = vpack.c.b16 %v7198, %v7194
    %v7251 = vpack.c.b16 %v7199, %v7195
    %v7252 = vpack.c.b16 %v7200, %v7196
    %v7253 = vpack.c.b16 %v7205, %v7201
    %v7254 = vpack.c.b16 %v7206, %v7202
    %v7255 = vpack.c.b16 %v7207, %v7203
    %v7256 = vpack.c.b16 %v7208, %v7204
    %v7257 = vpack.c.b16 %v7213, %v7209
    %v7258 = vpack.c.b16 %v7214, %v7210
    %v7259 = vpack.c.b16 %v7215, %v7211
    %v7260 = vpack.c.b16 %v7216, %v7212
    %v7261 = vpack.c.b16 %v7221, %v7217
    %v7262 = vpack.c.b16 %v7222, %v7218
    %v7263 = vpack.c.b16 %v7223, %v7219
    %v7264 = vpack.c.b16 %v7224, %v7220
    %v7265 = vpack.c.b16 %v7229, %v7225
    %v7266 = vpack.c.b16 %v7230, %v7226
    %v7267 = vpack.c.b16 %v7231, %v7227
    %v7268 = vpack.c.b16 %v7232, %v7228
    %v7269 = vpack.c.b16 %v7237, %v7233
    %v7270 = vpack.c.b16 %v7238, %v7234
    %v7271 = vpack.c.b16 %v7239, %v7235
    %v7272 = vpack.c.b16 %v7240, %v7236
    %7305 = vmatprep.subr.bf16.mxu0 %v7242
    %7306 = vmatpush1.bf16.msra.mxu0 %v7241
    %7307 = vmatprep.subr.bf16.mxu0 %v7246
    %7308 = vmatpush1.bf16.msra.mxu0 %v7245
    %7309 = vmatprep.subr.bf16.mxu0 %v7250
    %7310 = vmatpush1.bf16.msra.mxu0 %v7249
    %7311 = vmatprep.subr.bf16.mxu0 %v7254
    %7312 = vmatpush1.bf16.msra.mxu0 %v7253
    %7313 = vmatprep.subr.bf16.mxu0 %v7258
    %7314 = vmatpush1.bf16.msra.mxu0 %v7257
    %7315 = vmatprep.subr.bf16.mxu0 %v7262
    %7316 = vmatpush1.bf16.msra.mxu0 %v7261
    %7317 = vmatprep.subr.bf16.mxu0 %v7266
    %7318 = vmatpush1.bf16.msra.mxu0 %v7265
    %7319 = vmatprep.subr.bf16.mxu0 %v7270
    %7320 = vmatpush1.bf16.msra.mxu0 %v7269
    %7321 = vmatprep.subr.bf16.mxu0 0
    %7322 = vmatpush1.bf16.msra.mxu0 0
    %7323 = vmatprep.subr.bf16.mxu0 0
    %7324 = vmatpush1.bf16.msra.mxu0 0
    %7325 = vmatprep.subr.bf16.mxu0 0
    %7326 = vmatpush1.bf16.msra.mxu0 0
    %7327 = vmatprep.subr.bf16.mxu0 0
    %7328 = vmatpush1.bf16.msra.mxu0 0
    %7329 = vmatprep.subr.bf16.mxu0 0
    %7330 = vmatpush1.bf16.msra.mxu0 0
    %7331 = vmatprep.subr.bf16.mxu0 0
    %7332 = vmatpush1.bf16.msra.mxu0 0
    %7333 = vmatprep.subr.bf16.mxu0 0
    %7334 = vmatpush1.bf16.msra.mxu0 0
    %7335 = vmatprep.subr.bf16.mxu0 0
    %7336 = vmatpush1.bf16.msra.mxu0 0
    %7337 = vmatprep.mubr.bf16.mxu0 0
    %7338 = vmatmul.mubr.bf16.gmra.mrb[0].mxu0 %v7112
    %v7339 = vpop.f32.mrb[0].mxu0
    %v7340 = vadd.f32 0.0, %v7339
    %v7341 = vpop.f32.mrb[0].mxu0
    %v7342 = vadd.f32 0.0, %v7341
    %v7343 = vpop.f32.mrb[0].mxu0
    %v7344 = vpop.f32.mrb[0].mxu0
    %7345 = vdwg.mxu0
    %7346 = vmatprep.subr.bf16.mxu0 %v7244
    %7347 = vmatpush1.bf16.msra.mxu0 %v7243
    %7348 = vmatprep.subr.bf16.mxu0 %v7248
    %7349 = vmatpush1.bf16.msra.mxu0 %v7247
    %7350 = vmatprep.subr.bf16.mxu0 %v7252
    %7351 = vmatpush1.bf16.msra.mxu0 %v7251
    %7352 = vmatprep.subr.bf16.mxu0 %v7256
    %7353 = vmatpush1.bf16.msra.mxu0 %v7255
    %7354 = vmatprep.subr.bf16.mxu0 %v7260
    %7355 = vmatpush1.bf16.msra.mxu0 %v7259
    %7356 = vmatprep.subr.bf16.mxu0 %v7264
    %7357 = vmatpush1.bf16.msra.mxu0 %v7263
    %7358 = vmatprep.subr.bf16.mxu0 %v7268
    %7359 = vmatpush1.bf16.msra.mxu0 %v7267
    %7360 = vmatprep.subr.bf16.mxu0 %v7272
    %7361 = vmatpush1.bf16.msra.mxu0 %v7271
    %7362 = vmatprep.subr.bf16.mxu0 0
    %7363 = vmatpush1.bf16.msra.mxu0 0
    %7364 = vmatprep.subr.bf16.mxu0 0
    %7365 = vmatpush1.bf16.msra.mxu0 0
    %7366 = vmatprep.subr.bf16.mxu0 0
    %7367 = vmatpush1.bf16.msra.mxu0 0
    %7368 = vmatprep.subr.bf16.mxu0 0
    %7369 = vmatpush1.bf16.msra.mxu0 0
    %7370 = vmatprep.subr.bf16.mxu0 0
    %7371 = vmatpush1.bf16.msra.mxu0 0
    %7372 = vmatprep.subr.bf16.mxu0 0
    %7373 = vmatpush1.bf16.msra.mxu0 0
    %7374 = vmatprep.subr.bf16.mxu0 0
    %7375 = vmatpush1.bf16.msra.mxu0 0
    %7376 = vmatprep.subr.bf16.mxu0 0
    %7377 = vmatpush1.bf16.msra.mxu0 0
    %7378 = vmatprep.mubr.bf16.mxu0 0
    %7379 = vmatmul.mubr.bf16.gmra.mrb[0].mxu0 %v7112
    %v7380 = vpop.f32.mrb[0].mxu0
    %v7381 = vadd.f32 0.0, %v7380
    %v7382 = vpop.f32.mrb[0].mxu0
    %v7383 = vadd.f32 0.0, %v7382
    %v7384 = vpop.f32.mrb[0].mxu0
    %v7385 = vpop.f32.mrb[0].mxu0
    %7386 = vdwg.mxu0
    %v7419 = vunpack.c.l.b16 %v7080
    %v7420 = vunpack.c.h.b16 %v7080
    %v7421 = vunpack.c.l.b16 %v7081
    %v7422 = vunpack.c.h.b16 %v7081
    %v7423 = vunpack.c.l.b16 %v7082
    %v7424 = vunpack.c.h.b16 %v7082
    %v7425 = vunpack.c.l.b16 %v7083
    %v7426 = vunpack.c.h.b16 %v7083
    %v7427 = vunpack.c.l.b16 %v7084
    %v7428 = vunpack.c.h.b16 %v7084
    %v7429 = vunpack.c.l.b16 %v7085
    %v7430 = vunpack.c.h.b16 %v7085
    %v7431 = vunpack.c.l.b16 %v7086
    %v7432 = vunpack.c.h.b16 %v7086
    %v7433 = vunpack.c.l.b16 %v7087
    %v7434 = vunpack.c.h.b16 %v7087
    %v7435 = vunpack.c.l.b16 %v7088
    %v7436 = vunpack.c.h.b16 %v7088
    %v7437 = vunpack.c.l.b16 %v7089
    %v7438 = vunpack.c.h.b16 %v7089
    %v7439 = vunpack.c.l.b16 %v7090
    %v7440 = vunpack.c.h.b16 %v7090
    %v7441 = vunpack.c.l.b16 %v7091
    %v7442 = vunpack.c.h.b16 %v7091
    %v7443 = vunpack.c.l.b16 %v7092
    %v7444 = vunpack.c.h.b16 %v7092
    %v7445 = vunpack.c.l.b16 %v7093
    %v7446 = vunpack.c.h.b16 %v7093
    %v7447 = vunpack.c.l.b16 %v7094
    %v7448 = vunpack.c.h.b16 %v7094
    %v7449 = vunpack.c.l.b16 %v7095
    %v7450 = vunpack.c.h.b16 %v7095
    %v7451 = vunpack.c.l.b16 %v7096
    %v7452 = vunpack.c.h.b16 %v7096
    %v7453 = vunpack.c.l.b16 %v7097
    %v7454 = vunpack.c.h.b16 %v7097
    %v7455 = vunpack.c.l.b16 %v7098
    %v7456 = vunpack.c.h.b16 %v7098
    %v7457 = vunpack.c.l.b16 %v7099
    %v7458 = vunpack.c.h.b16 %v7099
    %v7459 = vunpack.c.l.b16 %v7100
    %v7460 = vunpack.c.h.b16 %v7100
    %v7461 = vunpack.c.l.b16 %v7101
    %v7462 = vunpack.c.h.b16 %v7101
    %v7463 = vunpack.c.l.b16 %v7102
    %v7464 = vunpack.c.h.b16 %v7102
    %v7465 = vunpack.c.l.b16 %v7103
    %v7466 = vunpack.c.h.b16 %v7103
    %v7467 = vunpack.c.l.b16 %v7104
    %v7468 = vunpack.c.h.b16 %v7104
    %v7469 = vunpack.c.l.b16 %v7105
    %v7470 = vunpack.c.h.b16 %v7105
    %v7471 = vunpack.c.l.b16 %v7106
    %v7472 = vunpack.c.h.b16 %v7106
    %v7473 = vunpack.c.l.b16 %v7107
    %v7474 = vunpack.c.h.b16 %v7107
    %v7475 = vunpack.c.l.b16 %v7108
    %v7476 = vunpack.c.h.b16 %v7108
    %v7477 = vunpack.c.l.b16 %v7109
    %v7478 = vunpack.c.h.b16 %v7109
    %v7479 = vunpack.c.l.b16 %v7110
    %v7480 = vunpack.c.h.b16 %v7110
    %v7481 = vunpack.c.l.b16 %v7111
    %v7482 = vunpack.c.h.b16 %v7111
    %v7483 = vpack.c.b16 %v7423, %v7419
    %v7484 = vpack.c.b16 %v7424, %v7420
    %v7485 = vpack.c.b16 %v7425, %v7421
    %v7486 = vpack.c.b16 %v7426, %v7422
    %v7487 = vpack.c.b16 %v7431, %v7427
    %v7488 = vpack.c.b16 %v7432, %v7428
    %v7489 = vpack.c.b16 %v7433, %v7429
    %v7490 = vpack.c.b16 %v7434, %v7430
    %v7491 = vpack.c.b16 %v7439, %v7435
    %v7492 = vpack.c.b16 %v7440, %v7436
    %v7493 = vpack.c.b16 %v7441, %v7437
    %v7494 = vpack.c.b16 %v7442, %v7438
    %v7495 = vpack.c.b16 %v7447, %v7443
    %v7496 = vpack.c.b16 %v7448, %v7444
    %v7497 = vpack.c.b16 %v7449, %v7445
    %v7498 = vpack.c.b16 %v7450, %v7446
    %v7499 = vpack.c.b16 %v7455, %v7451
    %v7500 = vpack.c.b16 %v7456, %v7452
    %v7501 = vpack.c.b16 %v7457, %v7453
    %v7502 = vpack.c.b16 %v7458, %v7454
    %v7503 = vpack.c.b16 %v7463, %v7459
    %v7504 = vpack.c.b16 %v7464, %v7460
    %v7505 = vpack.c.b16 %v7465, %v7461
    %v7506 = vpack.c.b16 %v7466, %v7462
    %v7507 = vpack.c.b16 %v7471, %v7467
    %v7508 = vpack.c.b16 %v7472, %v7468
    %v7509 = vpack.c.b16 %v7473, %v7469
    %v7510 = vpack.c.b16 %v7474, %v7470
    %v7511 = vpack.c.b16 %v7479, %v7475
    %v7512 = vpack.c.b16 %v7480, %v7476
    %v7513 = vpack.c.b16 %v7481, %v7477
    %v7514 = vpack.c.b16 %v7482, %v7478
    %7547 = vmatprep.subr.bf16.mxu0 %v7484
    %7548 = vmatpush1.bf16.msra.mxu0 %v7483
    %7549 = vmatprep.subr.bf16.mxu0 %v7488
    %7550 = vmatpush1.bf16.msra.mxu0 %v7487
    %7551 = vmatprep.subr.bf16.mxu0 %v7492
    %7552 = vmatpush1.bf16.msra.mxu0 %v7491
    %7553 = vmatprep.subr.bf16.mxu0 %v7496
    %7554 = vmatpush1.bf16.msra.mxu0 %v7495
    %7555 = vmatprep.subr.bf16.mxu0 %v7500
    %7556 = vmatpush1.bf16.msra.mxu0 %v7499
    %7557 = vmatprep.subr.bf16.mxu0 %v7504
    %7558 = vmatpush1.bf16.msra.mxu0 %v7503
    %7559 = vmatprep.subr.bf16.mxu0 %v7508
    %7560 = vmatpush1.bf16.msra.mxu0 %v7507
    %7561 = vmatprep.subr.bf16.mxu0 %v7512
    %7562 = vmatpush1.bf16.msra.mxu0 %v7511
    %7563 = vmatprep.subr.bf16.mxu0 0
    %7564 = vmatpush1.bf16.msra.mxu0 0
    %7565 = vmatprep.subr.bf16.mxu0 0
    %7566 = vmatpush1.bf16.msra.mxu0 0
    %7567 = vmatprep.subr.bf16.mxu0 0
    %7568 = vmatpush1.bf16.msra.mxu0 0
    %7569 = vmatprep.subr.bf16.mxu0 0
    %7570 = vmatpush1.bf16.msra.mxu0 0
    %7571 = vmatprep.subr.bf16.mxu0 0
    %7572 = vmatpush1.bf16.msra.mxu0 0
    %7573 = vmatprep.subr.bf16.mxu0 0
    %7574 = vmatpush1.bf16.msra.mxu0 0
    %7575 = vmatprep.subr.bf16.mxu0 0
    %7576 = vmatpush1.bf16.msra.mxu0 0
    %7577 = vmatprep.subr.bf16.mxu0 0
    %7578 = vmatpush1.bf16.msra.mxu0 0
    %7579 = vmatprep.mubr.bf16.mxu0 0
    %7580 = vmatmul.mubr.bf16.gmra.mrb[0].mxu0 %v7079
    %v7581 = vpop.f32.mrb[0].mxu0
    %v7582 = vadd.f32 %v7340, %v7581
    %v7583 = vpop.f32.mrb[0].mxu0
    %v7584 = vadd.f32 %v7342, %v7583
    %v7585 = vpop.f32.mrb[0].mxu0
    %v7586 = vpop.f32.mrb[0].mxu0
    %7587 = vdwg.mxu0
    %7588 = vmatprep.subr.bf16.mxu0 %v7486
    %7589 = vmatpush1.bf16.msra.mxu0 %v7485
    %7590 = vmatprep.subr.bf16.mxu0 %v7490
    %7591 = vmatpush1.bf16.msra.mxu0 %v7489
    %7592 = vmatprep.subr.bf16.mxu0 %v7494
    %7593 = vmatpush1.bf16.msra.mxu0 %v7493
    %7594 = vmatprep.subr.bf16.mxu0 %v7498
    %7595 = vmatpush1.bf16.msra.mxu0 %v7497
    %7596 = vmatprep.subr.bf16.mxu0 %v7502
    %7597 = vmatpush1.bf16.msra.mxu0 %v7501
    %7598 = vmatprep.subr.bf16.mxu0 %v7506
    %7599 = vmatpush1.bf16.msra.mxu0 %v7505
    %7600 = vmatprep.subr.bf16.mxu0 %v7510
    %7601 = vmatpush1.bf16.msra.mxu0 %v7509
    %7602 = vmatprep.subr.bf16.mxu0 %v7514
    %7603 = vmatpush1.bf16.msra.mxu0 %v7513
    %7604 = vmatprep.subr.bf16.mxu0 0
    %7605 = vmatpush1.bf16.msra.mxu0 0
    %7606 = vmatprep.subr.bf16.mxu0 0
    %7607 = vmatpush1.bf16.msra.mxu0 0
    %7608 = vmatprep.subr.bf16.mxu0 0
    %7609 = vmatpush1.bf16.msra.mxu0 0
    %7610 = vmatprep.subr.bf16.mxu0 0
    %7611 = vmatpush1.bf16.msra.mxu0 0
    %7612 = vmatprep.subr.bf16.mxu0 0
    %7613 = vmatpush1.bf16.msra.mxu0 0
    %7614 = vmatprep.subr.bf16.mxu0 0
    %7615 = vmatpush1.bf16.msra.mxu0 0
    %7616 = vmatprep.subr.bf16.mxu0 0
    %7617 = vmatpush1.bf16.msra.mxu0 0
    %7618 = vmatprep.subr.bf16.mxu0 0
    %7619 = vmatpush1.bf16.msra.mxu0 0
    %7620 = vmatprep.mubr.bf16.mxu0 0
    %7621 = vmatmul.mubr.bf16.gmra.mrb[0].mxu0 %v7079
    %v7622 = vpop.f32.mrb[0].mxu0
    %v7623 = vadd.f32 %v7381, %v7622
    %v7624 = vpop.f32.mrb[0].mxu0
    %v7625 = vadd.f32 %v7383, %v7624
    %v7626 = vpop.f32.mrb[0].mxu0
    %v7627 = vpop.f32.mrb[0].mxu0
    %7628 = vdwg.mxu0
    %v7629 = vadd.f32 %v7582, %v150
    %v7630 = vadd.f32 %v7584, %v154
    %v7631 = vadd.f32 %v7623, %v158
    %v7632 = vadd.f32 %v7625, %v162
    %v7633 = vld [vmem:[%s1360] sm:$0xff]
    %v7634 = vxor.u32 %v7629, 2147483648
    %v7635 = vmul.f32 %v7634, 1.442695
    %v7636 = vpow.pop %v7635
    %v7637 = vadd.f32 %v7636, 1.0
    %v7638 = vrcp.pop %v7637
    %v7639 = vmul.f32 1.0, %v7638
    %v7640 = vxor.u32 %v7630, 2147483648
    %v7641 = vmul.f32 %v7640, 1.442695
    %v7642 = vpow.pop %v7641
    %v7643 = vadd.f32 %v7642, 1.0
    %v7644 = vrcp.pop %v7643
    %v7645 = vmul.f32 1.0, %v7644
    %v7646 = vtanh.pop %v7631
    %v7647 = vxor.u32 %v7632, 2147483648
    %v7648 = vmul.f32 %v7647, 1.442695
    %v7649 = vpow.pop %v7648
    %v7650 = vadd.f32 %v7649, 1.0
    %v7651 = vrcp.pop %v7650
    %v7652 = vmul.f32 1.0, %v7651
    %v7653 = vmul.f32 %v7645, %v7633
    %v7654 = vmul.f32 %v7639, %v7646
    %v7655 = vadd.f32 %v7653, %v7654
    %v7656 = vtanh.pop %v7655
    %v7657 = vmul.f32 %v7652, %v7656
    %7658 = vst [vmem:[%s804] sm:$0xff] %v7657
    %7659 = vst [vmem:[%s1360] sm:$0xff] %v7655
    %v7660 = vld [vmem:[%s804] sm:$0xff]
    %v7661 = vld [vmem:[%s7] sm:$0x1]
    %v7663 = vlaneseq
    %v7664 = vshrl.u32 %v7663, 7
    %v7665 = vsub.s32 0, %v7664
    %v7666 = vrot.slane %v7661, %v7665
    %v7668 = vmul.f32 %v7660, %v7666
    %7669 = vadd.xlane.f32.xlu0 %v7668
    %v7670 = vpop.xlane.xlu0 %7669
    %v7671 = vld [vmem:[#allocation3] sm:$0x1]
    %v7673 = vlaneseq
    %v7674 = vshrl.u32 %v7673, 7
    %v7675 = vsub.s32 0, %v7674
    %v7676 = vrot.slane %v7671, %v7675
    %v7678 = vadd.f32 %v7670, %v7676
    %v7679 = vxor.u32 %v7678, 2147483648
    %v7680 = vmul.f32 %v7679, 1.442695
    %v7681 = vpow.pop %v7680
    %v7682 = vadd.f32 %v7681, 1.0
    %v7683 = vrcp.pop %v7682
    %v7684 = vmul.f32 1.0, %v7683
    %vm7685 = vcmask 7168
    %7686 = vst.msk [vmem:[%s11] sm:$0xff] %vm7685, %v7684
    // Predicated region
    $region74: #{tpu_custom_call.1} parent=1 // pred_check
      _
    $region75: #{tpu_custom_call.1} parent=1 // pred_check_branch
      %7688 = sbr.rel (0) target = $region77
    $region76: #{tpu_custom_call.1} parent=1 // pred_region
      _
    $region77: #{tpu_custom_call.1} parent=1 // pred_fallthru
      _
    // Predicated region
    $region78: #{tpu_custom_call.1} parent=1 // pred_check
      _
    $region79: #{tpu_custom_call.1} parent=1 // pred_check_branch
      %7690 = sbr.rel (0) target = $region81
    $region80: #{tpu_custom_call.1} parent=1 // pred_region
      %s7692 = ssub.s32 256, 256
      %7693 = vsyncadd [#allocation6], %s7692
      %s7694 = sshll.u32 [#allocation16], 4
      %s7695 = int_to_ptr.vmem [resolvable:$true] %s7694
      %7700 = dma.vmem_to_hbm [thread:$0]  %s7695, 256, %s12, [#allocation6], 128, 128, 8
    $region81: #{tpu_custom_call.1} parent=1 // pred_fallthru
      _
    // Predicated region
    $region82: #{tpu_custom_call.1} parent=1 // pred_check
      _
    $region83: #{tpu_custom_call.1} parent=1 // pred_check_branch
      %7702 = sbr.rel (0) target = $region85
    $region84: #{tpu_custom_call.1} parent=1 // pred_region
      %s7704 = ssub.s32 256, 256
      %7705 = vsyncadd [#allocation18], %s7704
      %s7706 = sshll.u32 [#allocation17], 4
      %s7707 = int_to_ptr.vmem [resolvable:$true] %s7706
      %7712 = dma.vmem_to_hbm [thread:$0]  %s7707, 256, %s13, [#allocation18], 128, 128, 8
    $region85: #{tpu_custom_call.1} parent=1 // pred_fallthru
      _
    // Predicated region
    $region86: #{tpu_custom_call.1} parent=1 // pred_check
      _
    $region87: #{tpu_custom_call.1} parent=1 // pred_check_branch
      %7714 = sbr.rel (0) target = $region89
    $region88: #{tpu_custom_call.1} parent=1 // pred_region
      _
    $region89: #{tpu_custom_call.1} parent=1 // pred_fallthru
      _
    // Predicated region
    $region90: #{tpu_custom_call.1} parent=1 // pred_check
      _
    $region91: #{tpu_custom_call.1} parent=1 // pred_check_branch
      %7716 = sbr.rel (0) target = $region93
    $region92: #{tpu_custom_call.1} parent=1 // pred_region
      %7717 = dma.done [#allocation6], 256
    $region93: #{tpu_custom_call.1} parent=1 // pred_fallthru
      _
    // Predicated region
    $region94: #{tpu_custom_call.1} parent=1 // pred_check
      _
    $region95: #{tpu_custom_call.1} parent=1 // pred_check_branch
      %7719 = sbr.rel (0) target = $region97
    $region96: #{tpu_custom_call.1} parent=1 // pred_region
      %7720 = dma.done [#allocation18], 256
    $region97: #{tpu_custom_call.1} parent=1 // pred_fallthru
      _
    %7721 = vsyncpa [#allocation5], 1
    %7722 = vsyncpa [#allocation8], 1
    %7723 = vsyncpa [#allocation11], 1
    %7724 = vsyncpa [#allocation14], 1
    %7725 = vsyncpa [#allocation6], 1
    %7726 = vsyncpa [#allocation18], 1

</llo_original>
